<compile_context>
chip_gen: v5e
topology: v5e:2x2
jax: 0.10.0
libtpu: 0.0.40
codegen_flags: <defaults>
</compile_context>

<pallas_src>
import jax
import jax.numpy as jnp
from jax.experimental import pallas as pl
from jax.experimental.pallas import tpu as pltpu


def _round_up(x, m):
    return (x + m - 1) // m * m


def _make_kernel(num_layers, num_filters, heights, grid_w, m0_rows):
    """heights[l]   : output height of conv layer l (l = 0..num_layers-1)
       grid_w       : layer-0 output width (common flat-grid width)
       m0_rows      : H1*W1 rows written by layer 0"""
    L, F, Wg = num_layers, num_filters, grid_w

    def kernel(x_ref, w1_ref, b1_ref, wr_ref, br_ref, out_ref, buf_a, buf_b):
        # x_ref : (1, H1*W1, 9*Cin)   pre-im2col'd, /255 folded into w1
        # w1_ref: (9*Cin, F)          b1_ref: (1, F)
        # wr_ref: (L-1, 9*F, F)       br_ref: (L-1, 1, F)
        # out_ref: (1, H_L*W1, F)     final conv output on the common W1-grid
        # buf_a/buf_b: (m_pad, F)     ping-pong activation scratch

        # ---- layer 0: one im2col matmul + bias + ReLU ----
        a0 = jnp.dot(x_ref[0], w1_ref[...],
                     preferred_element_type=jnp.float32,
                     precision=jax.lax.Precision.HIGHEST)
        buf_a[0:m0_rows, :] = jnp.maximum(a0 + b1_ref[...], 0.0)

        bufs = (buf_a, buf_b)
        # ---- layers 1..L-1: one K=9F matmul per layer on the common grid ----
        for li in range(L - 1):
            src = bufs[li % 2]
            m = heights[li + 1] * Wg                       # rows incl. junk columns
            patch = jnp.concatenate(
                [src[ky * Wg + kx: ky * Wg + kx + m, :]    # contiguous tap slices
                 for ky in range(3) for kx in range(3)],
                axis=-1)                                   # (m, 9F)
            res = jnp.dot(patch, wr_ref[li],
                          preferred_element_type=jnp.float32,
                          precision=jax.lax.Precision.HIGHEST) + br_ref[li]
            if li == L - 2:
                out_ref[0, :, :] = res                     # final conv: no ReLU
            else:
                bufs[(li + 1) % 2][0:m, :] = jnp.maximum(res, 0.0)

    return kernel


def shared_cnn_pallas(x_nchw, params, *, num_layers, num_filters):
    """Forward of SharedCNN.  x_nchw: (B, C, H, W); params[i] = (w, b) in PyTorch
    layout ((Cout, Cin, 3, 3), (Cout,)).  Returns flattened features (B, out_dim)."""
    assert num_layers >= 2 and len(params) == num_layers
    B, c_in, H, W = x_nchw.shape
    F = num_filters

    # Per-layer output spatial sizes (VALID conv, first layer stride 2).
    sizes = [((H - 3) // 2 + 1, (W - 3) // 2 + 1)]
    for _ in range(1, num_layers):
        sizes.append((sizes[-1][0] - 2, sizes[-1][1] - 2))
    heights = [h for h, _ in sizes]
    H1, W1 = sizes[0]
    HL, WL = sizes[-1]
    m0 = H1 * W1                        # layer-0 rows on the common grid
    mL = HL * W1                        # last-layer rows (incl. throw-away columns)
    m_pad = _round_up(m0 + 2, 8)        # scratch rows (+2 rows of tap over-read)

    # ---- one-time layout glue in plain JAX ----
    xf = jnp.transpose(x_nchw, (0, 2, 3, 1)).astype(jnp.float32)          # NHWC
    taps = [xf[:, ky:ky + 2 * H1 - 1:2, kx:kx + 2 * W1 - 1:2, :]
            for ky in range(3) for kx in range(3)]
    p0 = jnp.concatenate(taps, axis=-1).reshape(B, m0, 9 * c_in)          # im2col L0

    w1, b1 = params[0]
    w1_mat = (jnp.transpose(w1, (2, 3, 1, 0)).reshape(9 * c_in, F)
              * (1.0 / 255.0)).astype(jnp.float32)                        # fold /255
    b1_mat = b1.reshape(1, F).astype(jnp.float32)
    wr_mat = jnp.stack([jnp.transpose(w, (2, 3, 1, 0)).reshape(9 * F, F)
                        for (w, _) in params[1:]]).astype(jnp.float32)
    br_mat = jnp.stack([b.reshape(1, F) for (_, b) in params[1:]]).astype(jnp.float32)

    kernel = _make_kernel(num_layers, F, heights, W1, m0)

    grid_spec = pltpu.PrefetchScalarGridSpec(
        num_scalar_prefetch=0,
        grid=(B,),
        in_specs=[
            pl.BlockSpec((1, m0, 9 * c_in), lambda b: (b, 0, 0)),
            pl.BlockSpec((9 * c_in, F), lambda b: (0, 0)),
            pl.BlockSpec((1, F), lambda b: (0, 0)),
            pl.BlockSpec((num_layers - 1, 9 * F, F), lambda b: (0, 0, 0)),
            pl.BlockSpec((num_layers - 1, 1, F), lambda b: (0, 0, 0)),
        ],
        out_specs=pl.BlockSpec((1, mL, F), lambda b: (b, 0, 0)),
        scratch_shapes=[pltpu.VMEM((m_pad, F), jnp.float32),
                        pltpu.VMEM((m_pad, F), jnp.float32)],
    )

    y = pl.pallas_call(
        kernel,
        out_shape=jax.ShapeDtypeStruct((B, mL, F), jnp.float32),
        grid_spec=grid_spec,
        compiler_params=pltpu.CompilerParams(
            dimension_semantics=("parallel",)),
    )(p0, w1_mat, b1_mat, wr_mat, br_mat)

    # Drop throw-away columns, then PyTorch Flatten of NCHW: (B,C,H,W) -> (B, C*H*W).
    y = y.reshape(B, HL, W1, F)[:, :, :WL, :]
    return jnp.transpose(y, (0, 3, 1, 2)).reshape(B, F * HL * WL)


def shared_cnn_ref(x_nchw, params):
    """Plain-JAX reference matching the PyTorch module exactly."""
    out = x_nchw.astype(jnp.float32) / 255.0
    for i, (w, b) in enumerate(params):
        if i > 0:
            out = jnp.maximum(out, 0.0)
        out = jax.lax.conv_general_dilated(
            out, w,
            window_strides=(2, 2) if i == 0 else (1, 1),
            padding="VALID",
            dimension_numbers=("NCHW", "OIHW", "NCHW"),
            precision=jax.lax.Precision.HIGHEST,
        ) + b.reshape(1, -1, 1, 1)
    return out.reshape(out.shape[0], -1)


if __name__ == "__main__":
    # Small shapes consistent with the module (num_layers shrunk so the VALID
    # convs fit a 32x32 observation; default module is num_layers=11 on 84x84).
    B, C_IN, H, W = 2, 4, 32, 32
    NUM_LAYERS, NUM_FILTERS = 4, 32

    key = jax.random.PRNGKey(0)
    k_x, k_p = jax.random.split(key)
    # uint8-style image observations in [0, 255]
    x = jnp.floor(jax.random.uniform(k_x, (B, C_IN, H, W), jnp.float32, 0.0, 256.0))

    params = []
    c_prev = C_IN
    wkeys = jax.random.split(k_p, 2 * NUM_LAYERS)
    for i in range(NUM_LAYERS):
        s = 1.0 / float(c_prev * 9) ** 0.5
        w = jax.random.uniform(wkeys[2 * i], (NUM_FILTERS, c_prev, 3, 3),
                               jnp.float32, -s, s)
        b = jax.random.uniform(wkeys[2 * i + 1], (NUM_FILTERS,), jnp.float32, -s, s)
        params.append((w, b))
        c_prev = NUM_FILTERS

    out = shared_cnn_pallas(x, params, num_layers=NUM_LAYERS, num_filters=NUM_FILTERS)
    jax.block_until_ready(out)

    ref = shared_cnn_ref(x, params)
    assert out.shape == ref.shape, (out.shape, ref.shape)
    assert jnp.allclose(out, ref, atol=2e-3, rtol=2e-3), \
        float(jnp.max(jnp.abs(out - ref)))

    print("KERNEL_OK")
</pallas_src>

<mosaic_0001>
module attributes {stable_mosaic.version = 11 : i64} {
  func.func @kernel(%arg0: i32, %arg1: memref<1x225x36xf32, #tpu.memory_space<vmem>>, %arg2: memref<36x32xf32, #tpu.memory_space<vmem>>, %arg3: memref<1x32xf32, #tpu.memory_space<vmem>>, %arg4: memref<3x288x32xf32, #tpu.memory_space<vmem>>, %arg5: memref<3x1x32xf32, #tpu.memory_space<vmem>>, %arg6: memref<1x135x32xf32, #tpu.memory_space<vmem>>, %arg7: memref<232x32xf32, #tpu.memory_space<vmem>>, %arg8: memref<232x32xf32, #tpu.memory_space<vmem>>) attributes {dimension_semantics = [#tpu.dimension_semantics<parallel>], iteration_bounds = array<i64: 2>, scalar_prefetch = 0 : i64, scratch_operands = 2 : i64, tpu.core_type = #tpu.core_type<tc>, window_params = [{transform_indices = @transform_0, window_bounds = array<i64: 1, 225, 36>}, {pipeline_mode = #tpu.pipeline_mode<synchronous>, transform_indices = @transform_1, window_bounds = array<i64: 36, 32>}, {pipeline_mode = #tpu.pipeline_mode<synchronous>, transform_indices = @transform_2, window_bounds = array<i64: 1, 32>}, {pipeline_mode = #tpu.pipeline_mode<synchronous>, transform_indices = @transform_3, window_bounds = array<i64: 3, 288, 32>}, {pipeline_mode = #tpu.pipeline_mode<synchronous>, transform_indices = @transform_4, window_bounds = array<i64: 3, 1, 32>}, {transform_indices = @transform_5, window_bounds = array<i64: 1, 135, 32>}]} {
    %c0 = arith.constant 0 : index
    %c0_0 = arith.constant 0 : index
    %c0_1 = arith.constant 0 : index
    %0 = vector.load %arg1[%c0, %c0_0, %c0_1] : memref<1x225x36xf32, #tpu.memory_space<vmem>>, vector<1x225x36xf32>
    %1 = vector.shape_cast %0 : vector<1x225x36xf32> to vector<225x36xf32>
    %c0_2 = arith.constant 0 : index
    %c0_3 = arith.constant 0 : index
    %2 = vector.load %arg2[%c0_2, %c0_3] : memref<36x32xf32, #tpu.memory_space<vmem>>, vector<36x32xf32>
    %cst = arith.constant dense<0.000000e+00> : vector<225x32xf32>
    %3 = tpu.matmul %1, %2, %cst {dimension_numbers = #tpu.dot_dimension_numbers<[1], [0], [0], [1], [0, 0, 1, 1], [], []>, precision = #tpu.contract_precision<fp32>} : vector<225x36xf32>, vector<36x32xf32>, vector<225x32xf32> -> vector<225x32xf32>
    %c0_4 = arith.constant 0 : index
    %c0_5 = arith.constant 0 : index
    %4 = vector.load %arg3[%c0_4, %c0_5] : memref<1x32xf32, #tpu.memory_space<vmem>>, vector<1x32xf32>
    %5 = vector.broadcast %4 : vector<1x32xf32> to vector<225x32xf32>
    %6 = arith.addf %3, %5 : vector<225x32xf32>
    %cst_6 = arith.constant 0.000000e+00 : f32
    %7 = vector.broadcast %cst_6 : f32 to vector<225x32xf32>
    %8 = arith.maximumf %6, %7 : vector<225x32xf32>
    %c0_7 = arith.constant 0 : index
    %c0_8 = arith.constant 0 : index
    %9 = vector.load %arg7[%c0_7, %c0_8] : memref<232x32xf32, #tpu.memory_space<vmem>>, vector<225x32xf32>
    tpu.vector_store %arg7[%c0_7, %c0_8], %8 {strides = array<i32>} : memref<232x32xf32, #tpu.memory_space<vmem>>, vector<225x32xf32>,
    %c0_9 = arith.constant 0 : index
    %c0_10 = arith.constant 0 : index
    %10 = vector.load %arg7[%c0_9, %c0_10] : memref<232x32xf32, #tpu.memory_space<vmem>>, vector<195x32xf32>
    %c1 = arith.constant 1 : index
    %c0_11 = arith.constant 0 : index
    %11 = vector.load %arg7[%c1, %c0_11] : memref<232x32xf32, #tpu.memory_space<vmem>>, vector<195x32xf32>
    %c2 = arith.constant 2 : index
    %c0_12 = arith.constant 0 : index
    %12 = vector.load %arg7[%c2, %c0_12] : memref<232x32xf32, #tpu.memory_space<vmem>>, vector<195x32xf32>
    %c15 = arith.constant 15 : index
    %c0_13 = arith.constant 0 : index
    %13 = vector.load %arg7[%c15, %c0_13] : memref<232x32xf32, #tpu.memory_space<vmem>>, vector<195x32xf32>
    %c16 = arith.constant 16 : index
    %c0_14 = arith.constant 0 : index
    %14 = vector.load %arg7[%c16, %c0_14] : memref<232x32xf32, #tpu.memory_space<vmem>>, vector<195x32xf32>
    %c17 = arith.constant 17 : index
    %c0_15 = arith.constant 0 : index
    %15 = vector.load %arg7[%c17, %c0_15] : memref<232x32xf32, #tpu.memory_space<vmem>>, vector<195x32xf32>
    %c30 = arith.constant 30 : index
    %c0_16 = arith.constant 0 : index
    %16 = vector.load %arg7[%c30, %c0_16] : memref<232x32xf32, #tpu.memory_space<vmem>>, vector<195x32xf32>
    %c31 = arith.constant 31 : index
    %c0_17 = arith.constant 0 : index
    %17 = vector.load %arg7[%c31, %c0_17] : memref<232x32xf32, #tpu.memory_space<vmem>>, vector<195x32xf32>
    %c32 = arith.constant 32 : index
    %c0_18 = arith.constant 0 : index
    %18 = vector.load %arg7[%c32, %c0_18] : memref<232x32xf32, #tpu.memory_space<vmem>>, vector<195x32xf32>
    %19 = tpu.concatenate %10, %11, %12, %13, %14, %15, %16, %17, %18 in 1 : vector<195x32xf32>, vector<195x32xf32>, vector<195x32xf32>, vector<195x32xf32>, vector<195x32xf32>, vector<195x32xf32>, vector<195x32xf32>, vector<195x32xf32>, vector<195x32xf32> -> vector<195x288xf32>
    %c0_19 = arith.constant 0 : index
    %c0_20 = arith.constant 0 : index
    %c0_21 = arith.constant 0 : index
    %20 = vector.load %arg4[%c0_19, %c0_20, %c0_21] : memref<3x288x32xf32, #tpu.memory_space<vmem>>, vector<1x288x32xf32>
    %21 = vector.shape_cast %20 : vector<1x288x32xf32> to vector<288x32xf32>
    %cst_22 = arith.constant dense<0.000000e+00> : vector<195x32xf32>
    %22 = tpu.matmul %19, %21, %cst_22 {dimension_numbers = #tpu.dot_dimension_numbers<[1], [0], [0], [1], [0, 0, 1, 1], [], []>, precision = #tpu.contract_precision<fp32>} : vector<195x288xf32>, vector<288x32xf32>, vector<195x32xf32> -> vector<195x32xf32>
    %c0_23 = arith.constant 0 : index
    %c0_24 = arith.constant 0 : index
    %c0_25 = arith.constant 0 : index
    %23 = vector.load %arg5[%c0_23, %c0_24, %c0_25] : memref<3x1x32xf32, #tpu.memory_space<vmem>>, vector<1x1x32xf32>
    %24 = vector.shape_cast %23 : vector<1x1x32xf32> to vector<1x32xf32>
    %25 = vector.broadcast %24 : vector<1x32xf32> to vector<195x32xf32>
    %26 = arith.addf %22, %25 : vector<195x32xf32>
    %cst_26 = arith.constant 0.000000e+00 : f32
    %27 = vector.broadcast %cst_26 : f32 to vector<195x32xf32>
    %28 = arith.maximumf %26, %27 : vector<195x32xf32>
    %c0_27 = arith.constant 0 : index
    %c0_28 = arith.constant 0 : index
    %29 = vector.load %arg8[%c0_27, %c0_28] : memref<232x32xf32, #tpu.memory_space<vmem>>, vector<195x32xf32>
    tpu.vector_store %arg8[%c0_27, %c0_28], %28 {strides = array<i32>} : memref<232x32xf32, #tpu.memory_space<vmem>>, vector<195x32xf32>,
    %c0_29 = arith.constant 0 : index
    %c0_30 = arith.constant 0 : index
    %30 = vector.load %arg8[%c0_29, %c0_30] : memref<232x32xf32, #tpu.memory_space<vmem>>, vector<165x32xf32>
    %c1_31 = arith.constant 1 : index
    %c0_32 = arith.constant 0 : index
    %31 = vector.load %arg8[%c1_31, %c0_32] : memref<232x32xf32, #tpu.memory_space<vmem>>, vector<165x32xf32>
    %c2_33 = arith.constant 2 : index
    %c0_34 = arith.constant 0 : index
    %32 = vector.load %arg8[%c2_33, %c0_34] : memref<232x32xf32, #tpu.memory_space<vmem>>, vector<165x32xf32>
    %c15_35 = arith.constant 15 : index
    %c0_36 = arith.constant 0 : index
    %33 = vector.load %arg8[%c15_35, %c0_36] : memref<232x32xf32, #tpu.memory_space<vmem>>, vector<165x32xf32>
    %c16_37 = arith.constant 16 : index
    %c0_38 = arith.constant 0 : index
    %34 = vector.load %arg8[%c16_37, %c0_38] : memref<232x32xf32, #tpu.memory_space<vmem>>, vector<165x32xf32>
    %c17_39 = arith.constant 17 : index
    %c0_40 = arith.constant 0 : index
    %35 = vector.load %arg8[%c17_39, %c0_40] : memref<232x32xf32, #tpu.memory_space<vmem>>, vector<165x32xf32>
    %c30_41 = arith.constant 30 : index
    %c0_42 = arith.constant 0 : index
    %36 = vector.load %arg8[%c30_41, %c0_42] : memref<232x32xf32, #tpu.memory_space<vmem>>, vector<165x32xf32>
    %c31_43 = arith.constant 31 : index
    %c0_44 = arith.constant 0 : index
    %37 = vector.load %arg8[%c31_43, %c0_44] : memref<232x32xf32, #tpu.memory_space<vmem>>, vector<165x32xf32>
    %c32_45 = arith.constant 32 : index
    %c0_46 = arith.constant 0 : index
    %38 = vector.load %arg8[%c32_45, %c0_46] : memref<232x32xf32, #tpu.memory_space<vmem>>, vector<165x32xf32>
    %39 = tpu.concatenate %30, %31, %32, %33, %34, %35, %36, %37, %38 in 1 : vector<165x32xf32>, vector<165x32xf32>, vector<165x32xf32>, vector<165x32xf32>, vector<165x32xf32>, vector<165x32xf32>, vector<165x32xf32>, vector<165x32xf32>, vector<165x32xf32> -> vector<165x288xf32>
    %c1_47 = arith.constant 1 : index
    %c0_48 = arith.constant 0 : index
    %c0_49 = arith.constant 0 : index
    %40 = vector.load %arg4[%c1_47, %c0_48, %c0_49] : memref<3x288x32xf32, #tpu.memory_space<vmem>>, vector<1x288x32xf32>
    %41 = vector.shape_cast %40 : vector<1x288x32xf32> to vector<288x32xf32>
    %cst_50 = arith.constant dense<0.000000e+00> : vector<165x32xf32>
    %42 = tpu.matmul %39, %41, %cst_50 {dimension_numbers = #tpu.dot_dimension_numbers<[1], [0], [0], [1], [0, 0, 1, 1], [], []>, precision = #tpu.contract_precision<fp32>} : vector<165x288xf32>, vector<288x32xf32>, vector<165x32xf32> -> vector<165x32xf32>
    %c1_51 = arith.constant 1 : index
    %c0_52 = arith.constant 0 : index
    %c0_53 = arith.constant 0 : index
    %43 = vector.load %arg5[%c1_51, %c0_52, %c0_53] : memref<3x1x32xf32, #tpu.memory_space<vmem>>, vector<1x1x32xf32>
    %44 = vector.shape_cast %43 : vector<1x1x32xf32> to vector<1x32xf32>
    %45 = vector.broadcast %44 : vector<1x32xf32> to vector<165x32xf32>
    %46 = arith.addf %42, %45 : vector<165x32xf32>
    %cst_54 = arith.constant 0.000000e+00 : f32
    %47 = vector.broadcast %cst_54 : f32 to vector<165x32xf32>
    %48 = arith.maximumf %46, %47 : vector<165x32xf32>
    %c0_55 = arith.constant 0 : index
    %c0_56 = arith.constant 0 : index
    %49 = vector.load %arg7[%c0_55, %c0_56] : memref<232x32xf32, #tpu.memory_space<vmem>>, vector<165x32xf32>
    tpu.vector_store %arg7[%c0_55, %c0_56], %48 {strides = array<i32>} : memref<232x32xf32, #tpu.memory_space<vmem>>, vector<165x32xf32>,
    %c0_57 = arith.constant 0 : index
    %c0_58 = arith.constant 0 : index
    %50 = vector.load %arg7[%c0_57, %c0_58] : memref<232x32xf32, #tpu.memory_space<vmem>>, vector<135x32xf32>
    %c1_59 = arith.constant 1 : index
    %c0_60 = arith.constant 0 : index
    %51 = vector.load %arg7[%c1_59, %c0_60] : memref<232x32xf32, #tpu.memory_space<vmem>>, vector<135x32xf32>
    %c2_61 = arith.constant 2 : index
    %c0_62 = arith.constant 0 : index
    %52 = vector.load %arg7[%c2_61, %c0_62] : memref<232x32xf32, #tpu.memory_space<vmem>>, vector<135x32xf32>
    %c15_63 = arith.constant 15 : index
    %c0_64 = arith.constant 0 : index
    %53 = vector.load %arg7[%c15_63, %c0_64] : memref<232x32xf32, #tpu.memory_space<vmem>>, vector<135x32xf32>
    %c16_65 = arith.constant 16 : index
    %c0_66 = arith.constant 0 : index
    %54 = vector.load %arg7[%c16_65, %c0_66] : memref<232x32xf32, #tpu.memory_space<vmem>>, vector<135x32xf32>
    %c17_67 = arith.constant 17 : index
    %c0_68 = arith.constant 0 : index
    %55 = vector.load %arg7[%c17_67, %c0_68] : memref<232x32xf32, #tpu.memory_space<vmem>>, vector<135x32xf32>
    %c30_69 = arith.constant 30 : index
    %c0_70 = arith.constant 0 : index
    %56 = vector.load %arg7[%c30_69, %c0_70] : memref<232x32xf32, #tpu.memory_space<vmem>>, vector<135x32xf32>
    %c31_71 = arith.constant 31 : index
    %c0_72 = arith.constant 0 : index
    %57 = vector.load %arg7[%c31_71, %c0_72] : memref<232x32xf32, #tpu.memory_space<vmem>>, vector<135x32xf32>
    %c32_73 = arith.constant 32 : index
    %c0_74 = arith.constant 0 : index
    %58 = vector.load %arg7[%c32_73, %c0_74] : memref<232x32xf32, #tpu.memory_space<vmem>>, vector<135x32xf32>
    %59 = tpu.concatenate %50, %51, %52, %53, %54, %55, %56, %57, %58 in 1 : vector<135x32xf32>, vector<135x32xf32>, vector<135x32xf32>, vector<135x32xf32>, vector<135x32xf32>, vector<135x32xf32>, vector<135x32xf32>, vector<135x32xf32>, vector<135x32xf32> -> vector<135x288xf32>
    %c2_75 = arith.constant 2 : index
    %c0_76 = arith.constant 0 : index
    %c0_77 = arith.constant 0 : index
    %60 = vector.load %arg4[%c2_75, %c0_76, %c0_77] : memref<3x288x32xf32, #tpu.memory_space<vmem>>, vector<1x288x32xf32>
    %61 = vector.shape_cast %60 : vector<1x288x32xf32> to vector<288x32xf32>
    %cst_78 = arith.constant dense<0.000000e+00> : vector<135x32xf32>
    %62 = tpu.matmul %59, %61, %cst_78 {dimension_numbers = #tpu.dot_dimension_numbers<[1], [0], [0], [1], [0, 0, 1, 1], [], []>, precision = #tpu.contract_precision<fp32>} : vector<135x288xf32>, vector<288x32xf32>, vector<135x32xf32> -> vector<135x32xf32>
    %c2_79 = arith.constant 2 : index
    %c0_80 = arith.constant 0 : index
    %c0_81 = arith.constant 0 : index
    %63 = vector.load %arg5[%c2_79, %c0_80, %c0_81] : memref<3x1x32xf32, #tpu.memory_space<vmem>>, vector<1x1x32xf32>
    %64 = vector.shape_cast %63 : vector<1x1x32xf32> to vector<1x32xf32>
    %65 = vector.broadcast %64 : vector<1x32xf32> to vector<135x32xf32>
    %66 = arith.addf %62, %65 : vector<135x32xf32>
    %c0_82 = arith.constant 0 : index
    %c0_83 = arith.constant 0 : index
    %c0_84 = arith.constant 0 : index
    %67 = vector.load %arg6[%c0_82, %c0_83, %c0_84] : memref<1x135x32xf32, #tpu.memory_space<vmem>>, vector<1x135x32xf32>
    %68 = vector.shape_cast %67 : vector<1x135x32xf32> to vector<135x32xf32>
    %69 = vector.shape_cast %66 : vector<135x32xf32> to vector<1x135x32xf32>
    tpu.vector_store %arg6[%c0_82, %c0_83, %c0_84], %69 {strides = array<i32>} : memref<1x135x32xf32, #tpu.memory_space<vmem>>, vector<1x135x32xf32>,
    return
  }
  func.func @transform_0(%arg0: i32) -> (i32, i32, i32) {
    %c0_i32 = arith.constant 0 : i32
    %c0_i32_0 = arith.constant 0 : i32
    %c0_i32_1 = arith.constant 0 : i32
    return %arg0, %c0_i32, %c0_i32_0 : i32, i32, i32
  }
  func.func @transform_1(%arg0: i32) -> (i32, i32) {
    %c0_i32 = arith.constant 0 : i32
    %c0_i32_0 = arith.constant 0 : i32
    %c0_i32_1 = arith.constant 0 : i32
    return %c0_i32, %c0_i32_0 : i32, i32
  }
  func.func @transform_2(%arg0: i32) -> (i32, i32) {
    %c0_i32 = arith.constant 0 : i32
    %c0_i32_0 = arith.constant 0 : i32
    %c0_i32_1 = arith.constant 0 : i32
    return %c0_i32, %c0_i32_0 : i32, i32
  }
  func.func @transform_3(%arg0: i32) -> (i32, i32, i32) {
    %c0_i32 = arith.constant 0 : i32
    %c0_i32_0 = arith.constant 0 : i32
    %c0_i32_1 = arith.constant 0 : i32
    %c0_i32_2 = arith.constant 0 : i32
    return %c0_i32, %c0_i32_0, %c0_i32_1 : i32, i32, i32
  }
  func.func @transform_4(%arg0: i32) -> (i32, i32, i32) {
    %c0_i32 = arith.constant 0 : i32
    %c0_i32_0 = arith.constant 0 : i32
    %c0_i32_1 = arith.constant 0 : i32
    %c0_i32_2 = arith.constant 0 : i32
    return %c0_i32, %c0_i32_0, %c0_i32_1 : i32, i32, i32
  }
  func.func @transform_5(%arg0: i32) -> (i32, i32, i32) {
    %c0_i32 = arith.constant 0 : i32
    %c0_i32_0 = arith.constant 0 : i32
    %c0_i32_1 = arith.constant 0 : i32
    return %arg0, %c0_i32, %c0_i32_0 : i32, i32, i32
  }
}

</mosaic_0001>

<llo_original>
// kernel: tpu_custom_call.1
$region0: #{tpu_custom_call.1}
  #allocation0 [shape = 'u32[]', space=smem, size = 0x4, offset = 0x4, fixed_abs, tag = 'smem constant byte address 0x4 - core index']
  #allocation1 [shape = 'u32[72,128]{1,0:T(1,128)}', space=vmem, size = 0x9000, scoped, tag = 'internal scratch']
  #allocation2 [shape = 'f32[232,32]{1,0:T(8,128)}', space=vmem, size = 0x1d000, scoped, tag = 'scratch operand']
  #allocation3 [shape = 'f32[232,32]{1,0:T(8,128)}', space=vmem, size = 0x1d000, scoped, tag = 'scratch operand']
  %s0 = inlined_call_operand.vmem [shape: f32[2,225,36], index: 0, kind: input, shape index: {}]
  %s1 = inlined_call_operand.vmem [shape: f32[36,32], index: 1, kind: input, shape index: {}]
  %s2 = inlined_call_operand.vmem [shape: f32[1,32], index: 2, kind: input, shape index: {}]
  %s3 = inlined_call_operand.vmem [shape: f32[3,288,32], index: 3, kind: input, shape index: {}]
  %s4 = inlined_call_operand.vmem [shape: f32[3,1,32], index: 4, kind: input, shape index: {}]
  %s5 = inlined_call_operand.vmem [shape: f32[2,135,32], index: 5, kind: output, shape index: {}]
  %s6 = sld [smem:[#allocation0]]
  $region53: #{tpu_custom_call.1} parent=0
    _
  %s8 = ssub.s32 1, %s6
  %s9 = scalar_select 0, %s8, %s6
  loop: start=0, step=1, limit=4
  $region2: #{tpu_custom_call.1} parent=0 // loop_pre_header
    _
  $region3: #{tpu_custom_call.1} parent=0 // loop_header
    %s11 = sphi 0, %s15
    %p12 = scmp.ge.s32.totalorder %s11, 4
    %s21 = sphi 0, %s23
    %s24 = sphi 0, %s21
    %s25 = sphi 0, %s24
    %s41 = sphi 0, %s25
    %s45 = sphi 0, %s45
    %s47 = sphi 0, %s45
    %s48 = sphi 0, %s47
    %s62 = sphi 0, %s48
    %s66 = sphi 0, %s66
    %s68 = sphi 0, %s66
    %s69 = sphi 0, %s68
    %s83 = sphi 0, %s69
    %s87 = sphi 0, %s87
    %s89 = sphi 0, %s87
    %s90 = sphi 0, %s89
    %s104 = sphi 0, %s90
    %s108 = sphi 0, %s108
    %s110 = sphi 0, %s108
    %s111 = sphi 0, %s110
    %s125 = sphi 0, %s111
    %s131 = sphi 0, %s133
    %s134 = sphi 0, %s131
    %s135 = sphi 0, %s134
    %s151 = sphi 0, %s135
  $region4: #{tpu_custom_call.1} parent=0 // loop_header_branch
    %14 = sbr.rel (%p12) target = $region8
  $region5: #{tpu_custom_call.1} parent=0 // loop_body
    %s16 = ssub.s32 %s11, 1
    %s17 = ssub.s32 %s11, 2
    %s18 = sadd.s32 %s11, 1
    %s19 = ssub.s32 %s11, %s18
    %p20 = scmp.eq.s32.totalorder %s19, 0
    %s22 = sadd.s32 %s21, 1
    %s23 = scalar_select %p20, %s21, %s22
    %p26 = pneg %p20
    %p27 = scmp.eq.s32.totalorder %s11, 1
    %p28 = por %p26, %p27
    %p29 = scmp.ne.s32.totalorder %s21, %s24
    %p30 = scmp.eq.s32.totalorder %s11, 0
    %p31 = por %p29, %p30
    %p32 = scmp.ne.s32.totalorder %s21, %s24
    %p33 = scmp.eq.s32.totalorder %s16, 1
    %p34 = por %p32, %p33
    %p35 = scmp.ne.s32.totalorder %s24, %s25
    %p36 = scmp.eq.s32.totalorder %s16, 0
    %p37 = por %p35, %p36
    %p38 = scmp.ne.s32.totalorder %s24, %s25
    %p39 = scmp.eq.s32.totalorder %s17, 1
    %p40 = por %p38, %p39
    %p42 = scmp.ne.s32.totalorder %s25, %s41
    %p43 = scmp.eq.s32.totalorder %s17, 0
    %p44 = por %p42, %p43
    %s46 = sadd.s32 %s45, 1
    %p49 = scmp.eq.s32.totalorder %s11, 1
    %p50 = scmp.ne.s32.totalorder %s45, %s47
    %p51 = scmp.eq.s32.totalorder %s11, 0
    %p52 = por %p50, %p51
    %p53 = scmp.ne.s32.totalorder %s45, %s47
    %p54 = scmp.eq.s32.totalorder %s16, 1
    %p55 = por %p53, %p54
    %p56 = scmp.ne.s32.totalorder %s47, %s48
    %p57 = scmp.eq.s32.totalorder %s16, 0
    %p58 = por %p56, %p57
    %p59 = scmp.ne.s32.totalorder %s47, %s48
    %p60 = scmp.eq.s32.totalorder %s17, 1
    %p61 = por %p59, %p60
    %p63 = scmp.ne.s32.totalorder %s48, %s62
    %p64 = scmp.eq.s32.totalorder %s17, 0
    %p65 = por %p63, %p64
    %s67 = sadd.s32 %s66, 1
    %p70 = scmp.eq.s32.totalorder %s11, 1
    %p71 = scmp.ne.s32.totalorder %s66, %s68
    %p72 = scmp.eq.s32.totalorder %s11, 0
    %p73 = por %p71, %p72
    %p74 = scmp.ne.s32.totalorder %s66, %s68
    %p75 = scmp.eq.s32.totalorder %s16, 1
    %p76 = por %p74, %p75
    %p77 = scmp.ne.s32.totalorder %s68, %s69
    %p78 = scmp.eq.s32.totalorder %s16, 0
    %p79 = por %p77, %p78
    %p80 = scmp.ne.s32.totalorder %s68, %s69
    %p81 = scmp.eq.s32.totalorder %s17, 1
    %p82 = por %p80, %p81
    %p84 = scmp.ne.s32.totalorder %s69, %s83
    %p85 = scmp.eq.s32.totalorder %s17, 0
    %p86 = por %p84, %p85
    %s88 = sadd.s32 %s87, 1
    %p91 = scmp.eq.s32.totalorder %s11, 1
    %p92 = scmp.ne.s32.totalorder %s87, %s89
    %p93 = scmp.eq.s32.totalorder %s11, 0
    %p94 = por %p92, %p93
    %p95 = scmp.ne.s32.totalorder %s87, %s89
    %p96 = scmp.eq.s32.totalorder %s16, 1
    %p97 = por %p95, %p96
    %p98 = scmp.ne.s32.totalorder %s89, %s90
    %p99 = scmp.eq.s32.totalorder %s16, 0
    %p100 = por %p98, %p99
    %p101 = scmp.ne.s32.totalorder %s89, %s90
    %p102 = scmp.eq.s32.totalorder %s17, 1
    %p103 = por %p101, %p102
    %p105 = scmp.ne.s32.totalorder %s90, %s104
    %p106 = scmp.eq.s32.totalorder %s17, 0
    %p107 = por %p105, %p106
    %s109 = sadd.s32 %s108, 1
    %p112 = scmp.eq.s32.totalorder %s11, 1
    %p113 = scmp.ne.s32.totalorder %s108, %s110
    %p114 = scmp.eq.s32.totalorder %s11, 0
    %p115 = por %p113, %p114
    %p116 = scmp.ne.s32.totalorder %s108, %s110
    %p117 = scmp.eq.s32.totalorder %s16, 1
    %p118 = por %p116, %p117
    %p119 = scmp.ne.s32.totalorder %s110, %s111
    %p120 = scmp.eq.s32.totalorder %s16, 0
    %p121 = por %p119, %p120
    %p122 = scmp.ne.s32.totalorder %s110, %s111
    %p123 = scmp.eq.s32.totalorder %s17, 1
    %p124 = por %p122, %p123
    %p126 = scmp.ne.s32.totalorder %s111, %s125
    %p127 = scmp.eq.s32.totalorder %s17, 0
    %p128 = por %p126, %p127
    %s129 = ssub.s32 %s11, %s18
    %p130 = scmp.eq.s32.totalorder %s129, 0
    %s132 = sadd.s32 %s131, 1
    %s133 = scalar_select %p130, %s131, %s132
    %p136 = pneg %p130
    %p137 = scmp.eq.s32.totalorder %s11, 1
    %p138 = por %p136, %p137
    %p139 = scmp.ne.s32.totalorder %s131, %s134
    %p140 = scmp.eq.s32.totalorder %s11, 0
    %p141 = por %p139, %p140
    %p142 = scmp.ne.s32.totalorder %s131, %s134
    %p143 = scmp.eq.s32.totalorder %s16, 1
    %p144 = por %p142, %p143
    %p145 = scmp.ne.s32.totalorder %s134, %s135
    %p146 = scmp.eq.s32.totalorder %s16, 0
    %p147 = por %p145, %p146
    %p148 = scmp.ne.s32.totalorder %s134, %s135
    %p149 = scmp.eq.s32.totalorder %s17, 1
    %p150 = por %p148, %p149
    %p152 = scmp.ne.s32.totalorder %s135, %s151
    %p153 = scmp.eq.s32.totalorder %s17, 0
    %p154 = por %p152, %p153
    %p155 = scmp.le.s32.totalorder 1, %s11
    %p156 = scmp.lt.s32.totalorder %s11, 3
    %p157 = pnand %p155, %p156
    %p158 = pneg %p157
    // Predicated region
    $region9: #{tpu_custom_call.1} parent=5 // pred_check
      _
    $region10: #{tpu_custom_call.1} parent=5 // pred_check_branch
      %160 = sbr.rel (%p157) target = $region12
    $region11: #{tpu_custom_call.1} parent=5 // pred_region
      %s161 = ssub.s32 %s11, 1
      // Predicated region
      $region13: #{tpu_custom_call.1} parent=11 // pred_check
        %p162 = pneg %p58
      $region14: #{tpu_custom_call.1} parent=11 // pred_check_branch
        %164 = sbr.rel (%p162) target = $region16
      $region15: #{tpu_custom_call.1} parent=11 // pred_region
        _
      $region16: #{tpu_custom_call.1} parent=11 // pred_fallthru
        _
      // Predicated region
      $region17: #{tpu_custom_call.1} parent=11 // pred_check
        %p165 = pneg %p79
      $region18: #{tpu_custom_call.1} parent=11 // pred_check_branch
        %167 = sbr.rel (%p165) target = $region20
      $region19: #{tpu_custom_call.1} parent=11 // pred_region
        _
      $region20: #{tpu_custom_call.1} parent=11 // pred_fallthru
        _
      // Predicated region
      $region21: #{tpu_custom_call.1} parent=11 // pred_check
        %p168 = pneg %p100
      $region22: #{tpu_custom_call.1} parent=11 // pred_check_branch
        %170 = sbr.rel (%p168) target = $region24
      $region23: #{tpu_custom_call.1} parent=11 // pred_region
        _
      $region24: #{tpu_custom_call.1} parent=11 // pred_fallthru
        _
      // Predicated region
      $region25: #{tpu_custom_call.1} parent=11 // pred_check
        %p171 = pneg %p121
      $region26: #{tpu_custom_call.1} parent=11 // pred_check_branch
        %173 = sbr.rel (%p171) target = $region28
      $region27: #{tpu_custom_call.1} parent=11 // pred_region
        _
      $region28: #{tpu_custom_call.1} parent=11 // pred_fallthru
        _
    $region12: #{tpu_custom_call.1} parent=5 // pred_fallthru
      _
    %p174 = scmp.lt.s32.totalorder %s11, 2
    // Predicated region
    $region29: #{tpu_custom_call.1} parent=5 // pred_check
      %p175 = pneg %p174
    $region30: #{tpu_custom_call.1} parent=5 // pred_check_branch
      %177 = sbr.rel (%p175) target = $region32
    $region31: #{tpu_custom_call.1} parent=5 // pred_region
      // Predicated region
      $region33: #{tpu_custom_call.1} parent=31 // pred_check
        %p178 = pneg %p31
      $region34: #{tpu_custom_call.1} parent=31 // pred_check_branch
        %180 = sbr.rel (%p178) target = $region36
      $region35: #{tpu_custom_call.1} parent=31 // pred_region
        %p181 = scmp.lt.s32.totalorder %s11, 1
        %s182 = scalar_select %p181, %s11, 1
        %s183 = smul.addr %s182, 29
        %s184 = smul.addr %s183, 8
        %s185 = scalar_lea.vmem %s0, %s184
      $region36: #{tpu_custom_call.1} parent=31 // pred_fallthru
        _
    $region32: #{tpu_custom_call.1} parent=5 // pred_fallthru
      _
    %p186 = scmp.le.s32.totalorder 1, %s11
    %p187 = scmp.lt.s32.totalorder %s11, 3
    %p188 = pnand %p186, %p187
    %p189 = pneg %p188
    // Predicated region
    $region37: #{tpu_custom_call.1} parent=5 // pred_check
      _
    $region38: #{tpu_custom_call.1} parent=5 // pred_check_branch
      %191 = sbr.rel (%p188) target = $region40
    $region39: #{tpu_custom_call.1} parent=5 // pred_region
      %s192 = ssub.s32 %s11, 1
      %p193 = scmp.lt.s32.totalorder %s16, 1
      %s194 = scalar_select %p193, %s16, 1
      %s195 = smul.addr %s194, 29
      %s196 = smul.addr %s195, 8
      %s197 = scalar_lea.vmem %s0, %s196
      %p198 = pneg %p37
      %p199 = pneg %p34
      %p200 = pneg %p58
      %p201 = pneg %p55
      %p202 = pneg %p79
      %p203 = pneg %p76
      %p204 = pneg %p100
      %p205 = pneg %p97
      %p206 = pneg %p121
      %p207 = pneg %p118
      %p208 = pneg %p147
      %p209 = pneg %p144
      %p210 = scmp.lt.s32.totalorder %s16, 1
      %s211 = scalar_select %p210, %s16, 1
      %s212 = smul.addr %s211, 17
      %s213 = smul.addr %s212, 8
      %s214 = scalar_lea.vmem %s5, %s213
      %p215 = scmp.lt.s32.totalorder %s16, 1
      %s216 = scalar_select %p215, %s16, 1
      %s217 = smul.addr %s216, 29
      %s218 = smul.addr %s217, 8
      %s219 = scalar_lea.vmem %s0, %s218
      %p220 = scmp.lt.s32.totalorder %s16, 1
      %s221 = scalar_select %p220, %s16, 1
      %s222 = smul.addr %s221, 17
      %s223 = smul.addr %s222, 8
      %s224 = scalar_lea.vmem %s5, %s223
      %v225 = vld [vmem:[%s219] sm:$0xff]
      %v226 = vld [vmem:[%s219 + $0x8] sm:$0xff]
      %v227 = vld [vmem:[%s219 + $0x10] sm:$0xff]
      %v228 = vld [vmem:[%s219 + $0x18] sm:$0xff]
      %v229 = vld [vmem:[%s219 + $0x20] sm:$0xff]
      %v230 = vld [vmem:[%s219 + $0x28] sm:$0xff]
      %v231 = vld [vmem:[%s219 + $0x30] sm:$0xff]
      %v232 = vld [vmem:[%s219 + $0x38] sm:$0xff]
      %v233 = vld [vmem:[%s219 + $0x40] sm:$0xff]
      %v234 = vld [vmem:[%s219 + $0x48] sm:$0xff]
      %v235 = vld [vmem:[%s219 + $0x50] sm:$0xff]
      %v236 = vld [vmem:[%s219 + $0x58] sm:$0xff]
      %v237 = vld [vmem:[%s219 + $0x60] sm:$0xff]
      %v238 = vld [vmem:[%s219 + $0x68] sm:$0xff]
      %v239 = vld [vmem:[%s219 + $0x70] sm:$0xff]
      %v240 = vld [vmem:[%s219 + $0x78] sm:$0xff]
      %v241 = vld [vmem:[%s219 + $0x80] sm:$0xff]
      %v242 = vld [vmem:[%s219 + $0x88] sm:$0xff]
      %v243 = vld [vmem:[%s219 + $0x90] sm:$0xff]
      %v244 = vld [vmem:[%s219 + $0x98] sm:$0xff]
      %v245 = vld [vmem:[%s219 + $0xa0] sm:$0xff]
      %v246 = vld [vmem:[%s219 + $0xa8] sm:$0xff]
      %v247 = vld [vmem:[%s219 + $0xb0] sm:$0xff]
      %v248 = vld [vmem:[%s219 + $0xb8] sm:$0xff]
      %v249 = vld [vmem:[%s219 + $0xc0] sm:$0xff]
      %v250 = vld [vmem:[%s219 + $0xc8] sm:$0xff]
      %v251 = vld [vmem:[%s219 + $0xd0] sm:$0xff]
      %v252 = vld [vmem:[%s219 + $0xd8] sm:$0xff]
      %v253 = vld [vmem:[%s219 + $0xe0] sm:$0x1]
      %v254 = vld [vmem:[%s1] sm:$0xff]
      %v255 = vld [vmem:[%s1 + $0x8] sm:$0xff]
      %v256 = vld [vmem:[%s1 + $0x10] sm:$0xff]
      %v257 = vld [vmem:[%s1 + $0x18] sm:$0xff]
      %v258 = vld [vmem:[%s1 + $0x20] sm:$0xf]
      %v259 = vld [vmem:[%s2] sm:$0x1]
      %v261 = vperm.slane %v259, 0
      %vm263 = vcmask 293888
      %v265 = vsel %vm263, %v225, 0
      %v268 = vsel %vm263, %v226, 0
      %v271 = vsel %vm263, %v227, 0
      %v274 = vsel %vm263, %v228, 0
      %v277 = vsel %vm263, %v229, 0
      %v280 = vsel %vm263, %v230, 0
      %v283 = vsel %vm263, %v231, 0
      %v286 = vsel %vm263, %v232, 0
      %v289 = vsel %vm263, %v233, 0
      %v292 = vsel %vm263, %v234, 0
      %v295 = vsel %vm263, %v235, 0
      %v298 = vsel %vm263, %v236, 0
      %v301 = vsel %vm263, %v237, 0
      %v304 = vsel %vm263, %v238, 0
      %v307 = vsel %vm263, %v239, 0
      %v310 = vsel %vm263, %v240, 0
      %v313 = vsel %vm263, %v241, 0
      %v316 = vsel %vm263, %v242, 0
      %v319 = vsel %vm263, %v243, 0
      %v322 = vsel %vm263, %v244, 0
      %v325 = vsel %vm263, %v245, 0
      %v328 = vsel %vm263, %v246, 0
      %v331 = vsel %vm263, %v247, 0
      %v334 = vsel %vm263, %v248, 0
      %v337 = vsel %vm263, %v249, 0
      %v340 = vsel %vm263, %v250, 0
      %v343 = vsel %vm263, %v251, 0
      %v346 = vsel %vm263, %v252, 0
      %v349 = vsel %vm263, %v253, 0
      %vm351 = vcmask 1043456
      %v353 = vsel %vm351, %v258, 0
      %355 = vmatpush.msra.mxu0 0.0
      %356 = vmatpush.msra.mxu0 0.0
      %357 = vmatpush.msra.mxu0 0.0
      %358 = vmatpush.msra.mxu0 0.0
      %359 = vmatpush.msra.mxu0 0.0
      %360 = vmatpush.msra.mxu0 0.0
      %361 = vmatpush.msra.mxu0 0.0
      %362 = vmatpush.msra.mxu0 0.0
      %363 = vmatpush.msra.mxu0 0.0
      %364 = vmatpush.msra.mxu0 0.0
      %365 = vmatpush.msra.mxu0 0.0
      %v366 = vand.u32 %v353, 4294901760
      %367 = vmatpush.msra.mxu0 %v366
      %v368 = vand.u32 %v257, 4294901760
      %369 = vmatpush.msra.mxu0 %v368
      %v370 = vand.u32 %v256, 4294901760
      %371 = vmatpush.msra.mxu0 %v370
      %v372 = vand.u32 %v255, 4294901760
      %373 = vmatpush.msra.mxu0 %v372
      %v374 = vand.u32 %v254, 4294901760
      %375 = vmatpush.msra.mxu0 %v374
      %v376 = vand.u32 %v265, 4294901760
      %v377 = vsub.f32 %v265, %v376
      %v378 = vand.u32 %v377, 4294901760
      %v379 = vsub.f32 %v377, %v378
      %v380 = vand.u32 %v379, 4294901760
      %381 = vmatmul.f32.gmra.mxu0 %v380
      %v382 = vpop.f32.mrf.mxu0
      %v383 = vadd.f32 %v261, %v382
      %v384 = vand.u32 %v268, 4294901760
      %v385 = vsub.f32 %v268, %v384
      %v386 = vand.u32 %v385, 4294901760
      %v387 = vsub.f32 %v385, %v386
      %v388 = vand.u32 %v387, 4294901760
      %389 = vmatmul.f32.gmra.mxu0 %v388
      %v390 = vpop.f32.mrf.mxu0
      %v391 = vadd.f32 %v261, %v390
      %v392 = vand.u32 %v271, 4294901760
      %v393 = vsub.f32 %v271, %v392
      %v394 = vand.u32 %v393, 4294901760
      %v395 = vsub.f32 %v393, %v394
      %v396 = vand.u32 %v395, 4294901760
      %397 = vmatmul.f32.gmra.mxu0 %v396
      %v398 = vpop.f32.mrf.mxu0
      %v399 = vadd.f32 %v261, %v398
      %v400 = vand.u32 %v274, 4294901760
      %v401 = vsub.f32 %v274, %v400
      %v402 = vand.u32 %v401, 4294901760
      %v403 = vsub.f32 %v401, %v402
      %v404 = vand.u32 %v403, 4294901760
      %405 = vmatmul.f32.gmra.mxu0 %v404
      %v406 = vpop.f32.mrf.mxu0
      %v407 = vadd.f32 %v261, %v406
      %v408 = vand.u32 %v277, 4294901760
      %v409 = vsub.f32 %v277, %v408
      %v410 = vand.u32 %v409, 4294901760
      %v411 = vsub.f32 %v409, %v410
      %v412 = vand.u32 %v411, 4294901760
      %413 = vmatmul.f32.gmra.mxu0 %v412
      %v414 = vpop.f32.mrf.mxu0
      %v415 = vadd.f32 %v261, %v414
      %v416 = vand.u32 %v280, 4294901760
      %v417 = vsub.f32 %v280, %v416
      %v418 = vand.u32 %v417, 4294901760
      %v419 = vsub.f32 %v417, %v418
      %v420 = vand.u32 %v419, 4294901760
      %421 = vmatmul.f32.gmra.mxu0 %v420
      %v422 = vpop.f32.mrf.mxu0
      %v423 = vadd.f32 %v261, %v422
      %v424 = vand.u32 %v283, 4294901760
      %v425 = vsub.f32 %v283, %v424
      %v426 = vand.u32 %v425, 4294901760
      %v427 = vsub.f32 %v425, %v426
      %v428 = vand.u32 %v427, 4294901760
      %429 = vmatmul.f32.gmra.mxu0 %v428
      %v430 = vpop.f32.mrf.mxu0
      %v431 = vadd.f32 %v261, %v430
      %v432 = vand.u32 %v286, 4294901760
      %v433 = vsub.f32 %v286, %v432
      %v434 = vand.u32 %v433, 4294901760
      %v435 = vsub.f32 %v433, %v434
      %v436 = vand.u32 %v435, 4294901760
      %437 = vmatmul.f32.gmra.mxu0 %v436
      %v438 = vpop.f32.mrf.mxu0
      %v439 = vadd.f32 %v261, %v438
      %v440 = vand.u32 %v289, 4294901760
      %v441 = vsub.f32 %v289, %v440
      %v442 = vand.u32 %v441, 4294901760
      %v443 = vsub.f32 %v441, %v442
      %v444 = vand.u32 %v443, 4294901760
      %445 = vmatmul.f32.gmra.mxu0 %v444
      %v446 = vpop.f32.mrf.mxu0
      %v447 = vadd.f32 %v261, %v446
      %v448 = vand.u32 %v292, 4294901760
      %v449 = vsub.f32 %v292, %v448
      %v450 = vand.u32 %v449, 4294901760
      %v451 = vsub.f32 %v449, %v450
      %v452 = vand.u32 %v451, 4294901760
      %453 = vmatmul.f32.gmra.mxu0 %v452
      %v454 = vpop.f32.mrf.mxu0
      %v455 = vadd.f32 %v261, %v454
      %v456 = vand.u32 %v295, 4294901760
      %v457 = vsub.f32 %v295, %v456
      %v458 = vand.u32 %v457, 4294901760
      %v459 = vsub.f32 %v457, %v458
      %v460 = vand.u32 %v459, 4294901760
      %461 = vmatmul.f32.gmra.mxu0 %v460
      %v462 = vpop.f32.mrf.mxu0
      %v463 = vadd.f32 %v261, %v462
      %v464 = vand.u32 %v298, 4294901760
      %v465 = vsub.f32 %v298, %v464
      %v466 = vand.u32 %v465, 4294901760
      %v467 = vsub.f32 %v465, %v466
      %v468 = vand.u32 %v467, 4294901760
      %469 = vmatmul.f32.gmra.mxu0 %v468
      %v470 = vpop.f32.mrf.mxu0
      %v471 = vadd.f32 %v261, %v470
      %v472 = vand.u32 %v301, 4294901760
      %v473 = vsub.f32 %v301, %v472
      %v474 = vand.u32 %v473, 4294901760
      %v475 = vsub.f32 %v473, %v474
      %v476 = vand.u32 %v475, 4294901760
      %477 = vmatmul.f32.gmra.mxu0 %v476
      %v478 = vpop.f32.mrf.mxu0
      %v479 = vadd.f32 %v261, %v478
      %v480 = vand.u32 %v304, 4294901760
      %v481 = vsub.f32 %v304, %v480
      %v482 = vand.u32 %v481, 4294901760
      %v483 = vsub.f32 %v481, %v482
      %v484 = vand.u32 %v483, 4294901760
      %485 = vmatmul.f32.gmra.mxu0 %v484
      %v486 = vpop.f32.mrf.mxu0
      %v487 = vadd.f32 %v261, %v486
      %v488 = vand.u32 %v307, 4294901760
      %v489 = vsub.f32 %v307, %v488
      %v490 = vand.u32 %v489, 4294901760
      %v491 = vsub.f32 %v489, %v490
      %v492 = vand.u32 %v491, 4294901760
      %493 = vmatmul.f32.gmra.mxu0 %v492
      %v494 = vpop.f32.mrf.mxu0
      %v495 = vadd.f32 %v261, %v494
      %v496 = vand.u32 %v310, 4294901760
      %v497 = vsub.f32 %v310, %v496
      %v498 = vand.u32 %v497, 4294901760
      %v499 = vsub.f32 %v497, %v498
      %v500 = vand.u32 %v499, 4294901760
      %501 = vmatmul.f32.gmra.mxu0 %v500
      %v502 = vpop.f32.mrf.mxu0
      %v503 = vadd.f32 %v261, %v502
      %v504 = vand.u32 %v313, 4294901760
      %v505 = vsub.f32 %v313, %v504
      %v506 = vand.u32 %v505, 4294901760
      %v507 = vsub.f32 %v505, %v506
      %v508 = vand.u32 %v507, 4294901760
      %509 = vmatmul.f32.gmra.mxu0 %v508
      %v510 = vpop.f32.mrf.mxu0
      %v511 = vadd.f32 %v261, %v510
      %v512 = vand.u32 %v316, 4294901760
      %v513 = vsub.f32 %v316, %v512
      %v514 = vand.u32 %v513, 4294901760
      %v515 = vsub.f32 %v513, %v514
      %v516 = vand.u32 %v515, 4294901760
      %517 = vmatmul.f32.gmra.mxu0 %v516
      %v518 = vpop.f32.mrf.mxu0
      %v519 = vadd.f32 %v261, %v518
      %v520 = vand.u32 %v319, 4294901760
      %v521 = vsub.f32 %v319, %v520
      %v522 = vand.u32 %v521, 4294901760
      %v523 = vsub.f32 %v521, %v522
      %v524 = vand.u32 %v523, 4294901760
      %525 = vmatmul.f32.gmra.mxu0 %v524
      %v526 = vpop.f32.mrf.mxu0
      %v527 = vadd.f32 %v261, %v526
      %v528 = vand.u32 %v322, 4294901760
      %v529 = vsub.f32 %v322, %v528
      %v530 = vand.u32 %v529, 4294901760
      %v531 = vsub.f32 %v529, %v530
      %v532 = vand.u32 %v531, 4294901760
      %533 = vmatmul.f32.gmra.mxu0 %v532
      %v534 = vpop.f32.mrf.mxu0
      %v535 = vadd.f32 %v261, %v534
      %v536 = vand.u32 %v325, 4294901760
      %v537 = vsub.f32 %v325, %v536
      %v538 = vand.u32 %v537, 4294901760
      %v539 = vsub.f32 %v537, %v538
      %v540 = vand.u32 %v539, 4294901760
      %541 = vmatmul.f32.gmra.mxu0 %v540
      %v542 = vpop.f32.mrf.mxu0
      %v543 = vadd.f32 %v261, %v542
      %v544 = vand.u32 %v328, 4294901760
      %v545 = vsub.f32 %v328, %v544
      %v546 = vand.u32 %v545, 4294901760
      %v547 = vsub.f32 %v545, %v546
      %v548 = vand.u32 %v547, 4294901760
      %549 = vmatmul.f32.gmra.mxu0 %v548
      %v550 = vpop.f32.mrf.mxu0
      %v551 = vadd.f32 %v261, %v550
      %v552 = vand.u32 %v331, 4294901760
      %v553 = vsub.f32 %v331, %v552
      %v554 = vand.u32 %v553, 4294901760
      %v555 = vsub.f32 %v553, %v554
      %v556 = vand.u32 %v555, 4294901760
      %557 = vmatmul.f32.gmra.mxu0 %v556
      %v558 = vpop.f32.mrf.mxu0
      %v559 = vadd.f32 %v261, %v558
      %v560 = vand.u32 %v334, 4294901760
      %v561 = vsub.f32 %v334, %v560
      %v562 = vand.u32 %v561, 4294901760
      %v563 = vsub.f32 %v561, %v562
      %v564 = vand.u32 %v563, 4294901760
      %565 = vmatmul.f32.gmra.mxu0 %v564
      %v566 = vpop.f32.mrf.mxu0
      %v567 = vadd.f32 %v261, %v566
      %v568 = vand.u32 %v337, 4294901760
      %v569 = vsub.f32 %v337, %v568
      %v570 = vand.u32 %v569, 4294901760
      %v571 = vsub.f32 %v569, %v570
      %v572 = vand.u32 %v571, 4294901760
      %573 = vmatmul.f32.gmra.mxu0 %v572
      %v574 = vpop.f32.mrf.mxu0
      %v575 = vadd.f32 %v261, %v574
      %v576 = vand.u32 %v340, 4294901760
      %v577 = vsub.f32 %v340, %v576
      %v578 = vand.u32 %v577, 4294901760
      %v579 = vsub.f32 %v577, %v578
      %v580 = vand.u32 %v579, 4294901760
      %581 = vmatmul.f32.gmra.mxu0 %v580
      %v582 = vpop.f32.mrf.mxu0
      %v583 = vadd.f32 %v261, %v582
      %v584 = vand.u32 %v343, 4294901760
      %v585 = vsub.f32 %v343, %v584
      %v586 = vand.u32 %v585, 4294901760
      %v587 = vsub.f32 %v585, %v586
      %v588 = vand.u32 %v587, 4294901760
      %589 = vmatmul.f32.gmra.mxu0 %v588
      %v590 = vpop.f32.mrf.mxu0
      %v591 = vadd.f32 %v261, %v590
      %v592 = vand.u32 %v346, 4294901760
      %v593 = vsub.f32 %v346, %v592
      %v594 = vand.u32 %v593, 4294901760
      %v595 = vsub.f32 %v593, %v594
      %v596 = vand.u32 %v595, 4294901760
      %597 = vmatmul.f32.gmra.mxu0 %v596
      %v598 = vpop.f32.mrf.mxu0
      %v599 = vadd.f32 %v261, %v598
      %v600 = vand.u32 %v349, 4294901760
      %v601 = vsub.f32 %v349, %v600
      %v602 = vand.u32 %v601, 4294901760
      %v603 = vsub.f32 %v601, %v602
      %v604 = vand.u32 %v603, 4294901760
      %605 = vmatmul.f32.gmra.mxu0 %v604
      %v606 = vpop.f32.mrf.mxu0
      %v607 = vadd.f32 %v261, %v606
      %608 = vdwg.mxu0
      %609 = vmatpush.msra.mxu0 0.0
      %610 = vmatpush.msra.mxu0 0.0
      %611 = vmatpush.msra.mxu0 0.0
      %612 = vmatpush.msra.mxu0 0.0
      %613 = vmatpush.msra.mxu0 0.0
      %614 = vmatpush.msra.mxu0 0.0
      %615 = vmatpush.msra.mxu0 0.0
      %616 = vmatpush.msra.mxu0 0.0
      %617 = vmatpush.msra.mxu0 0.0
      %618 = vmatpush.msra.mxu0 0.0
      %619 = vmatpush.msra.mxu0 0.0
      %v620 = vand.u32 %v353, 4294901760
      %v621 = vsub.f32 %v353, %v620
      %v622 = vand.u32 %v621, 4294901760
      %v623 = vsub.f32 %v621, %v622
      %v624 = vand.u32 %v623, 4294901760
      %625 = vmatpush.msra.mxu0 %v624
      %v626 = vand.u32 %v257, 4294901760
      %v627 = vsub.f32 %v257, %v626
      %v628 = vand.u32 %v627, 4294901760
      %v629 = vsub.f32 %v627, %v628
      %v630 = vand.u32 %v629, 4294901760
      %631 = vmatpush.msra.mxu0 %v630
      %v632 = vand.u32 %v256, 4294901760
      %v633 = vsub.f32 %v256, %v632
      %v634 = vand.u32 %v633, 4294901760
      %v635 = vsub.f32 %v633, %v634
      %v636 = vand.u32 %v635, 4294901760
      %637 = vmatpush.msra.mxu0 %v636
      %v638 = vand.u32 %v255, 4294901760
      %v639 = vsub.f32 %v255, %v638
      %v640 = vand.u32 %v639, 4294901760
      %v641 = vsub.f32 %v639, %v640
      %v642 = vand.u32 %v641, 4294901760
      %643 = vmatpush.msra.mxu0 %v642
      %v644 = vand.u32 %v254, 4294901760
      %v645 = vsub.f32 %v254, %v644
      %v646 = vand.u32 %v645, 4294901760
      %v647 = vsub.f32 %v645, %v646
      %v648 = vand.u32 %v647, 4294901760
      %649 = vmatpush.msra.mxu0 %v648
      %v650 = vand.u32 %v265, 4294901760
      %651 = vmatmul.f32.gmra.mxu0 %v650
      %v652 = vpop.f32.mrf.mxu0
      %v653 = vadd.f32 %v383, %v652
      %v654 = vand.u32 %v268, 4294901760
      %655 = vmatmul.f32.gmra.mxu0 %v654
      %v656 = vpop.f32.mrf.mxu0
      %v657 = vadd.f32 %v391, %v656
      %v658 = vand.u32 %v271, 4294901760
      %659 = vmatmul.f32.gmra.mxu0 %v658
      %v660 = vpop.f32.mrf.mxu0
      %v661 = vadd.f32 %v399, %v660
      %v662 = vand.u32 %v274, 4294901760
      %663 = vmatmul.f32.gmra.mxu0 %v662
      %v664 = vpop.f32.mrf.mxu0
      %v665 = vadd.f32 %v407, %v664
      %v666 = vand.u32 %v277, 4294901760
      %667 = vmatmul.f32.gmra.mxu0 %v666
      %v668 = vpop.f32.mrf.mxu0
      %v669 = vadd.f32 %v415, %v668
      %v670 = vand.u32 %v280, 4294901760
      %671 = vmatmul.f32.gmra.mxu0 %v670
      %v672 = vpop.f32.mrf.mxu0
      %v673 = vadd.f32 %v423, %v672
      %v674 = vand.u32 %v283, 4294901760
      %675 = vmatmul.f32.gmra.mxu0 %v674
      %v676 = vpop.f32.mrf.mxu0
      %v677 = vadd.f32 %v431, %v676
      %v678 = vand.u32 %v286, 4294901760
      %679 = vmatmul.f32.gmra.mxu0 %v678
      %v680 = vpop.f32.mrf.mxu0
      %v681 = vadd.f32 %v439, %v680
      %v682 = vand.u32 %v289, 4294901760
      %683 = vmatmul.f32.gmra.mxu0 %v682
      %v684 = vpop.f32.mrf.mxu0
      %v685 = vadd.f32 %v447, %v684
      %v686 = vand.u32 %v292, 4294901760
      %687 = vmatmul.f32.gmra.mxu0 %v686
      %v688 = vpop.f32.mrf.mxu0
      %v689 = vadd.f32 %v455, %v688
      %v690 = vand.u32 %v295, 4294901760
      %691 = vmatmul.f32.gmra.mxu0 %v690
      %v692 = vpop.f32.mrf.mxu0
      %v693 = vadd.f32 %v463, %v692
      %v694 = vand.u32 %v298, 4294901760
      %695 = vmatmul.f32.gmra.mxu0 %v694
      %v696 = vpop.f32.mrf.mxu0
      %v697 = vadd.f32 %v471, %v696
      %v698 = vand.u32 %v301, 4294901760
      %699 = vmatmul.f32.gmra.mxu0 %v698
      %v700 = vpop.f32.mrf.mxu0
      %v701 = vadd.f32 %v479, %v700
      %v702 = vand.u32 %v304, 4294901760
      %703 = vmatmul.f32.gmra.mxu0 %v702
      %v704 = vpop.f32.mrf.mxu0
      %v705 = vadd.f32 %v487, %v704
      %v706 = vand.u32 %v307, 4294901760
      %707 = vmatmul.f32.gmra.mxu0 %v706
      %v708 = vpop.f32.mrf.mxu0
      %v709 = vadd.f32 %v495, %v708
      %v710 = vand.u32 %v310, 4294901760
      %711 = vmatmul.f32.gmra.mxu0 %v710
      %v712 = vpop.f32.mrf.mxu0
      %v713 = vadd.f32 %v503, %v712
      %v714 = vand.u32 %v313, 4294901760
      %715 = vmatmul.f32.gmra.mxu0 %v714
      %v716 = vpop.f32.mrf.mxu0
      %v717 = vadd.f32 %v511, %v716
      %v718 = vand.u32 %v316, 4294901760
      %719 = vmatmul.f32.gmra.mxu0 %v718
      %v720 = vpop.f32.mrf.mxu0
      %v721 = vadd.f32 %v519, %v720
      %v722 = vand.u32 %v319, 4294901760
      %723 = vmatmul.f32.gmra.mxu0 %v722
      %v724 = vpop.f32.mrf.mxu0
      %v725 = vadd.f32 %v527, %v724
      %v726 = vand.u32 %v322, 4294901760
      %727 = vmatmul.f32.gmra.mxu0 %v726
      %v728 = vpop.f32.mrf.mxu0
      %v729 = vadd.f32 %v535, %v728
      %v730 = vand.u32 %v325, 4294901760
      %731 = vmatmul.f32.gmra.mxu0 %v730
      %v732 = vpop.f32.mrf.mxu0
      %v733 = vadd.f32 %v543, %v732
      %v734 = vand.u32 %v328, 4294901760
      %735 = vmatmul.f32.gmra.mxu0 %v734
      %v736 = vpop.f32.mrf.mxu0
      %v737 = vadd.f32 %v551, %v736
      %v738 = vand.u32 %v331, 4294901760
      %739 = vmatmul.f32.gmra.mxu0 %v738
      %v740 = vpop.f32.mrf.mxu0
      %v741 = vadd.f32 %v559, %v740
      %v742 = vand.u32 %v334, 4294901760
      %743 = vmatmul.f32.gmra.mxu0 %v742
      %v744 = vpop.f32.mrf.mxu0
      %v745 = vadd.f32 %v567, %v744
      %v746 = vand.u32 %v337, 4294901760
      %747 = vmatmul.f32.gmra.mxu0 %v746
      %v748 = vpop.f32.mrf.mxu0
      %v749 = vadd.f32 %v575, %v748
      %v750 = vand.u32 %v340, 4294901760
      %751 = vmatmul.f32.gmra.mxu0 %v750
      %v752 = vpop.f32.mrf.mxu0
      %v753 = vadd.f32 %v583, %v752
      %v754 = vand.u32 %v343, 4294901760
      %755 = vmatmul.f32.gmra.mxu0 %v754
      %v756 = vpop.f32.mrf.mxu0
      %v757 = vadd.f32 %v591, %v756
      %v758 = vand.u32 %v346, 4294901760
      %759 = vmatmul.f32.gmra.mxu0 %v758
      %v760 = vpop.f32.mrf.mxu0
      %v761 = vadd.f32 %v599, %v760
      %v762 = vand.u32 %v349, 4294901760
      %763 = vmatmul.f32.gmra.mxu0 %v762
      %v764 = vpop.f32.mrf.mxu0
      %v765 = vadd.f32 %v607, %v764
      %766 = vdwg.mxu0
      %767 = vmatpush.msra.mxu0 0.0
      %768 = vmatpush.msra.mxu0 0.0
      %769 = vmatpush.msra.mxu0 0.0
      %770 = vmatpush.msra.mxu0 0.0
      %771 = vmatpush.msra.mxu0 0.0
      %772 = vmatpush.msra.mxu0 0.0
      %773 = vmatpush.msra.mxu0 0.0
      %774 = vmatpush.msra.mxu0 0.0
      %775 = vmatpush.msra.mxu0 0.0
      %776 = vmatpush.msra.mxu0 0.0
      %777 = vmatpush.msra.mxu0 0.0
      %v778 = vand.u32 %v353, 4294901760
      %v779 = vsub.f32 %v353, %v778
      %780 = vmatpush.msra.mxu0 %v779
      %v781 = vand.u32 %v257, 4294901760
      %v782 = vsub.f32 %v257, %v781
      %783 = vmatpush.msra.mxu0 %v782
      %v784 = vand.u32 %v256, 4294901760
      %v785 = vsub.f32 %v256, %v784
      %786 = vmatpush.msra.mxu0 %v785
      %v787 = vand.u32 %v255, 4294901760
      %v788 = vsub.f32 %v255, %v787
      %789 = vmatpush.msra.mxu0 %v788
      %v790 = vand.u32 %v254, 4294901760
      %v791 = vsub.f32 %v254, %v790
      %792 = vmatpush.msra.mxu0 %v791
      %v793 = vand.u32 %v265, 4294901760
      %v794 = vsub.f32 %v265, %v793
      %795 = vmatmul.f32.gmra.mxu0 %v794
      %v796 = vpop.f32.mrf.mxu0
      %v797 = vadd.f32 %v653, %v796
      %v798 = vand.u32 %v268, 4294901760
      %v799 = vsub.f32 %v268, %v798
      %800 = vmatmul.f32.gmra.mxu0 %v799
      %v801 = vpop.f32.mrf.mxu0
      %v802 = vadd.f32 %v657, %v801
      %v803 = vand.u32 %v271, 4294901760
      %v804 = vsub.f32 %v271, %v803
      %805 = vmatmul.f32.gmra.mxu0 %v804
      %v806 = vpop.f32.mrf.mxu0
      %v807 = vadd.f32 %v661, %v806
      %v808 = vand.u32 %v274, 4294901760
      %v809 = vsub.f32 %v274, %v808
      %810 = vmatmul.f32.gmra.mxu0 %v809
      %v811 = vpop.f32.mrf.mxu0
      %v812 = vadd.f32 %v665, %v811
      %v813 = vand.u32 %v277, 4294901760
      %v814 = vsub.f32 %v277, %v813
      %815 = vmatmul.f32.gmra.mxu0 %v814
      %v816 = vpop.f32.mrf.mxu0
      %v817 = vadd.f32 %v669, %v816
      %v818 = vand.u32 %v280, 4294901760
      %v819 = vsub.f32 %v280, %v818
      %820 = vmatmul.f32.gmra.mxu0 %v819
      %v821 = vpop.f32.mrf.mxu0
      %v822 = vadd.f32 %v673, %v821
      %v823 = vand.u32 %v283, 4294901760
      %v824 = vsub.f32 %v283, %v823
      %825 = vmatmul.f32.gmra.mxu0 %v824
      %v826 = vpop.f32.mrf.mxu0
      %v827 = vadd.f32 %v677, %v826
      %v828 = vand.u32 %v286, 4294901760
      %v829 = vsub.f32 %v286, %v828
      %830 = vmatmul.f32.gmra.mxu0 %v829
      %v831 = vpop.f32.mrf.mxu0
      %v832 = vadd.f32 %v681, %v831
      %v833 = vand.u32 %v289, 4294901760
      %v834 = vsub.f32 %v289, %v833
      %835 = vmatmul.f32.gmra.mxu0 %v834
      %v836 = vpop.f32.mrf.mxu0
      %v837 = vadd.f32 %v685, %v836
      %v838 = vand.u32 %v292, 4294901760
      %v839 = vsub.f32 %v292, %v838
      %840 = vmatmul.f32.gmra.mxu0 %v839
      %v841 = vpop.f32.mrf.mxu0
      %v842 = vadd.f32 %v689, %v841
      %v843 = vand.u32 %v295, 4294901760
      %v844 = vsub.f32 %v295, %v843
      %845 = vmatmul.f32.gmra.mxu0 %v844
      %v846 = vpop.f32.mrf.mxu0
      %v847 = vadd.f32 %v693, %v846
      %v848 = vand.u32 %v298, 4294901760
      %v849 = vsub.f32 %v298, %v848
      %850 = vmatmul.f32.gmra.mxu0 %v849
      %v851 = vpop.f32.mrf.mxu0
      %v852 = vadd.f32 %v697, %v851
      %v853 = vand.u32 %v301, 4294901760
      %v854 = vsub.f32 %v301, %v853
      %855 = vmatmul.f32.gmra.mxu0 %v854
      %v856 = vpop.f32.mrf.mxu0
      %v857 = vadd.f32 %v701, %v856
      %v858 = vand.u32 %v304, 4294901760
      %v859 = vsub.f32 %v304, %v858
      %860 = vmatmul.f32.gmra.mxu0 %v859
      %v861 = vpop.f32.mrf.mxu0
      %v862 = vadd.f32 %v705, %v861
      %v863 = vand.u32 %v307, 4294901760
      %v864 = vsub.f32 %v307, %v863
      %865 = vmatmul.f32.gmra.mxu0 %v864
      %v866 = vpop.f32.mrf.mxu0
      %v867 = vadd.f32 %v709, %v866
      %v868 = vand.u32 %v310, 4294901760
      %v869 = vsub.f32 %v310, %v868
      %870 = vmatmul.f32.gmra.mxu0 %v869
      %v871 = vpop.f32.mrf.mxu0
      %v872 = vadd.f32 %v713, %v871
      %v873 = vand.u32 %v313, 4294901760
      %v874 = vsub.f32 %v313, %v873
      %875 = vmatmul.f32.gmra.mxu0 %v874
      %v876 = vpop.f32.mrf.mxu0
      %v877 = vadd.f32 %v717, %v876
      %v878 = vand.u32 %v316, 4294901760
      %v879 = vsub.f32 %v316, %v878
      %880 = vmatmul.f32.gmra.mxu0 %v879
      %v881 = vpop.f32.mrf.mxu0
      %v882 = vadd.f32 %v721, %v881
      %v883 = vand.u32 %v319, 4294901760
      %v884 = vsub.f32 %v319, %v883
      %885 = vmatmul.f32.gmra.mxu0 %v884
      %v886 = vpop.f32.mrf.mxu0
      %v887 = vadd.f32 %v725, %v886
      %v888 = vand.u32 %v322, 4294901760
      %v889 = vsub.f32 %v322, %v888
      %890 = vmatmul.f32.gmra.mxu0 %v889
      %v891 = vpop.f32.mrf.mxu0
      %v892 = vadd.f32 %v729, %v891
      %v893 = vand.u32 %v325, 4294901760
      %v894 = vsub.f32 %v325, %v893
      %895 = vmatmul.f32.gmra.mxu0 %v894
      %v896 = vpop.f32.mrf.mxu0
      %v897 = vadd.f32 %v733, %v896
      %v898 = vand.u32 %v328, 4294901760
      %v899 = vsub.f32 %v328, %v898
      %900 = vmatmul.f32.gmra.mxu0 %v899
      %v901 = vpop.f32.mrf.mxu0
      %v902 = vadd.f32 %v737, %v901
      %v903 = vand.u32 %v331, 4294901760
      %v904 = vsub.f32 %v331, %v903
      %905 = vmatmul.f32.gmra.mxu0 %v904
      %v906 = vpop.f32.mrf.mxu0
      %v907 = vadd.f32 %v741, %v906
      %v908 = vand.u32 %v334, 4294901760
      %v909 = vsub.f32 %v334, %v908
      %910 = vmatmul.f32.gmra.mxu0 %v909
      %v911 = vpop.f32.mrf.mxu0
      %v912 = vadd.f32 %v745, %v911
      %v913 = vand.u32 %v337, 4294901760
      %v914 = vsub.f32 %v337, %v913
      %915 = vmatmul.f32.gmra.mxu0 %v914
      %v916 = vpop.f32.mrf.mxu0
      %v917 = vadd.f32 %v749, %v916
      %v918 = vand.u32 %v340, 4294901760
      %v919 = vsub.f32 %v340, %v918
      %920 = vmatmul.f32.gmra.mxu0 %v919
      %v921 = vpop.f32.mrf.mxu0
      %v922 = vadd.f32 %v753, %v921
      %v923 = vand.u32 %v343, 4294901760
      %v924 = vsub.f32 %v343, %v923
      %925 = vmatmul.f32.gmra.mxu0 %v924
      %v926 = vpop.f32.mrf.mxu0
      %v927 = vadd.f32 %v757, %v926
      %v928 = vand.u32 %v346, 4294901760
      %v929 = vsub.f32 %v346, %v928
      %930 = vmatmul.f32.gmra.mxu0 %v929
      %v931 = vpop.f32.mrf.mxu0
      %v932 = vadd.f32 %v761, %v931
      %v933 = vand.u32 %v349, 4294901760
      %v934 = vsub.f32 %v349, %v933
      %935 = vmatmul.f32.gmra.mxu0 %v934
      %v936 = vpop.f32.mrf.mxu0
      %v937 = vadd.f32 %v765, %v936
      %938 = vdwg.mxu0
      %939 = vmatpush.msra.mxu0 0.0
      %940 = vmatpush.msra.mxu0 0.0
      %941 = vmatpush.msra.mxu0 0.0
      %942 = vmatpush.msra.mxu0 0.0
      %943 = vmatpush.msra.mxu0 0.0
      %944 = vmatpush.msra.mxu0 0.0
      %945 = vmatpush.msra.mxu0 0.0
      %946 = vmatpush.msra.mxu0 0.0
      %947 = vmatpush.msra.mxu0 0.0
      %948 = vmatpush.msra.mxu0 0.0
      %949 = vmatpush.msra.mxu0 0.0
      %v950 = vand.u32 %v353, 4294901760
      %951 = vmatpush.msra.mxu0 %v950
      %v952 = vand.u32 %v257, 4294901760
      %953 = vmatpush.msra.mxu0 %v952
      %v954 = vand.u32 %v256, 4294901760
      %955 = vmatpush.msra.mxu0 %v954
      %v956 = vand.u32 %v255, 4294901760
      %957 = vmatpush.msra.mxu0 %v956
      %v958 = vand.u32 %v254, 4294901760
      %959 = vmatpush.msra.mxu0 %v958
      %v960 = vand.u32 %v265, 4294901760
      %v961 = vsub.f32 %v265, %v960
      %v962 = vand.u32 %v961, 4294901760
      %963 = vmatmul.f32.gmra.mxu0 %v962
      %v964 = vpop.f32.mrf.mxu0
      %v965 = vadd.f32 %v797, %v964
      %v966 = vand.u32 %v268, 4294901760
      %v967 = vsub.f32 %v268, %v966
      %v968 = vand.u32 %v967, 4294901760
      %969 = vmatmul.f32.gmra.mxu0 %v968
      %v970 = vpop.f32.mrf.mxu0
      %v971 = vadd.f32 %v802, %v970
      %v972 = vand.u32 %v271, 4294901760
      %v973 = vsub.f32 %v271, %v972
      %v974 = vand.u32 %v973, 4294901760
      %975 = vmatmul.f32.gmra.mxu0 %v974
      %v976 = vpop.f32.mrf.mxu0
      %v977 = vadd.f32 %v807, %v976
      %v978 = vand.u32 %v274, 4294901760
      %v979 = vsub.f32 %v274, %v978
      %v980 = vand.u32 %v979, 4294901760
      %981 = vmatmul.f32.gmra.mxu0 %v980
      %v982 = vpop.f32.mrf.mxu0
      %v983 = vadd.f32 %v812, %v982
      %v984 = vand.u32 %v277, 4294901760
      %v985 = vsub.f32 %v277, %v984
      %v986 = vand.u32 %v985, 4294901760
      %987 = vmatmul.f32.gmra.mxu0 %v986
      %v988 = vpop.f32.mrf.mxu0
      %v989 = vadd.f32 %v817, %v988
      %v990 = vand.u32 %v280, 4294901760
      %v991 = vsub.f32 %v280, %v990
      %v992 = vand.u32 %v991, 4294901760
      %993 = vmatmul.f32.gmra.mxu0 %v992
      %v994 = vpop.f32.mrf.mxu0
      %v995 = vadd.f32 %v822, %v994
      %v996 = vand.u32 %v283, 4294901760
      %v997 = vsub.f32 %v283, %v996
      %v998 = vand.u32 %v997, 4294901760
      %999 = vmatmul.f32.gmra.mxu0 %v998
      %v1000 = vpop.f32.mrf.mxu0
      %v1001 = vadd.f32 %v827, %v1000
      %v1002 = vand.u32 %v286, 4294901760
      %v1003 = vsub.f32 %v286, %v1002
      %v1004 = vand.u32 %v1003, 4294901760
      %1005 = vmatmul.f32.gmra.mxu0 %v1004
      %v1006 = vpop.f32.mrf.mxu0
      %v1007 = vadd.f32 %v832, %v1006
      %v1008 = vand.u32 %v289, 4294901760
      %v1009 = vsub.f32 %v289, %v1008
      %v1010 = vand.u32 %v1009, 4294901760
      %1011 = vmatmul.f32.gmra.mxu0 %v1010
      %v1012 = vpop.f32.mrf.mxu0
      %v1013 = vadd.f32 %v837, %v1012
      %v1014 = vand.u32 %v292, 4294901760
      %v1015 = vsub.f32 %v292, %v1014
      %v1016 = vand.u32 %v1015, 4294901760
      %1017 = vmatmul.f32.gmra.mxu0 %v1016
      %v1018 = vpop.f32.mrf.mxu0
      %v1019 = vadd.f32 %v842, %v1018
      %v1020 = vand.u32 %v295, 4294901760
      %v1021 = vsub.f32 %v295, %v1020
      %v1022 = vand.u32 %v1021, 4294901760
      %1023 = vmatmul.f32.gmra.mxu0 %v1022
      %v1024 = vpop.f32.mrf.mxu0
      %v1025 = vadd.f32 %v847, %v1024
      %v1026 = vand.u32 %v298, 4294901760
      %v1027 = vsub.f32 %v298, %v1026
      %v1028 = vand.u32 %v1027, 4294901760
      %1029 = vmatmul.f32.gmra.mxu0 %v1028
      %v1030 = vpop.f32.mrf.mxu0
      %v1031 = vadd.f32 %v852, %v1030
      %v1032 = vand.u32 %v301, 4294901760
      %v1033 = vsub.f32 %v301, %v1032
      %v1034 = vand.u32 %v1033, 4294901760
      %1035 = vmatmul.f32.gmra.mxu0 %v1034
      %v1036 = vpop.f32.mrf.mxu0
      %v1037 = vadd.f32 %v857, %v1036
      %v1038 = vand.u32 %v304, 4294901760
      %v1039 = vsub.f32 %v304, %v1038
      %v1040 = vand.u32 %v1039, 4294901760
      %1041 = vmatmul.f32.gmra.mxu0 %v1040
      %v1042 = vpop.f32.mrf.mxu0
      %v1043 = vadd.f32 %v862, %v1042
      %v1044 = vand.u32 %v307, 4294901760
      %v1045 = vsub.f32 %v307, %v1044
      %v1046 = vand.u32 %v1045, 4294901760
      %1047 = vmatmul.f32.gmra.mxu0 %v1046
      %v1048 = vpop.f32.mrf.mxu0
      %v1049 = vadd.f32 %v867, %v1048
      %v1050 = vand.u32 %v310, 4294901760
      %v1051 = vsub.f32 %v310, %v1050
      %v1052 = vand.u32 %v1051, 4294901760
      %1053 = vmatmul.f32.gmra.mxu0 %v1052
      %v1054 = vpop.f32.mrf.mxu0
      %v1055 = vadd.f32 %v872, %v1054
      %v1056 = vand.u32 %v313, 4294901760
      %v1057 = vsub.f32 %v313, %v1056
      %v1058 = vand.u32 %v1057, 4294901760
      %1059 = vmatmul.f32.gmra.mxu0 %v1058
      %v1060 = vpop.f32.mrf.mxu0
      %v1061 = vadd.f32 %v877, %v1060
      %v1062 = vand.u32 %v316, 4294901760
      %v1063 = vsub.f32 %v316, %v1062
      %v1064 = vand.u32 %v1063, 4294901760
      %1065 = vmatmul.f32.gmra.mxu0 %v1064
      %v1066 = vpop.f32.mrf.mxu0
      %v1067 = vadd.f32 %v882, %v1066
      %v1068 = vand.u32 %v319, 4294901760
      %v1069 = vsub.f32 %v319, %v1068
      %v1070 = vand.u32 %v1069, 4294901760
      %1071 = vmatmul.f32.gmra.mxu0 %v1070
      %v1072 = vpop.f32.mrf.mxu0
      %v1073 = vadd.f32 %v887, %v1072
      %v1074 = vand.u32 %v322, 4294901760
      %v1075 = vsub.f32 %v322, %v1074
      %v1076 = vand.u32 %v1075, 4294901760
      %1077 = vmatmul.f32.gmra.mxu0 %v1076
      %v1078 = vpop.f32.mrf.mxu0
      %v1079 = vadd.f32 %v892, %v1078
      %v1080 = vand.u32 %v325, 4294901760
      %v1081 = vsub.f32 %v325, %v1080
      %v1082 = vand.u32 %v1081, 4294901760
      %1083 = vmatmul.f32.gmra.mxu0 %v1082
      %v1084 = vpop.f32.mrf.mxu0
      %v1085 = vadd.f32 %v897, %v1084
      %v1086 = vand.u32 %v328, 4294901760
      %v1087 = vsub.f32 %v328, %v1086
      %v1088 = vand.u32 %v1087, 4294901760
      %1089 = vmatmul.f32.gmra.mxu0 %v1088
      %v1090 = vpop.f32.mrf.mxu0
      %v1091 = vadd.f32 %v902, %v1090
      %v1092 = vand.u32 %v331, 4294901760
      %v1093 = vsub.f32 %v331, %v1092
      %v1094 = vand.u32 %v1093, 4294901760
      %1095 = vmatmul.f32.gmra.mxu0 %v1094
      %v1096 = vpop.f32.mrf.mxu0
      %v1097 = vadd.f32 %v907, %v1096
      %v1098 = vand.u32 %v334, 4294901760
      %v1099 = vsub.f32 %v334, %v1098
      %v1100 = vand.u32 %v1099, 4294901760
      %1101 = vmatmul.f32.gmra.mxu0 %v1100
      %v1102 = vpop.f32.mrf.mxu0
      %v1103 = vadd.f32 %v912, %v1102
      %v1104 = vand.u32 %v337, 4294901760
      %v1105 = vsub.f32 %v337, %v1104
      %v1106 = vand.u32 %v1105, 4294901760
      %1107 = vmatmul.f32.gmra.mxu0 %v1106
      %v1108 = vpop.f32.mrf.mxu0
      %v1109 = vadd.f32 %v917, %v1108
      %v1110 = vand.u32 %v340, 4294901760
      %v1111 = vsub.f32 %v340, %v1110
      %v1112 = vand.u32 %v1111, 4294901760
      %1113 = vmatmul.f32.gmra.mxu0 %v1112
      %v1114 = vpop.f32.mrf.mxu0
      %v1115 = vadd.f32 %v922, %v1114
      %v1116 = vand.u32 %v343, 4294901760
      %v1117 = vsub.f32 %v343, %v1116
      %v1118 = vand.u32 %v1117, 4294901760
      %1119 = vmatmul.f32.gmra.mxu0 %v1118
      %v1120 = vpop.f32.mrf.mxu0
      %v1121 = vadd.f32 %v927, %v1120
      %v1122 = vand.u32 %v346, 4294901760
      %v1123 = vsub.f32 %v346, %v1122
      %v1124 = vand.u32 %v1123, 4294901760
      %1125 = vmatmul.f32.gmra.mxu0 %v1124
      %v1126 = vpop.f32.mrf.mxu0
      %v1127 = vadd.f32 %v932, %v1126
      %v1128 = vand.u32 %v349, 4294901760
      %v1129 = vsub.f32 %v349, %v1128
      %v1130 = vand.u32 %v1129, 4294901760
      %1131 = vmatmul.f32.gmra.mxu0 %v1130
      %v1132 = vpop.f32.mrf.mxu0
      %v1133 = vadd.f32 %v937, %v1132
      %1134 = vdwg.mxu0
      %1135 = vmatpush.msra.mxu0 0.0
      %1136 = vmatpush.msra.mxu0 0.0
      %1137 = vmatpush.msra.mxu0 0.0
      %1138 = vmatpush.msra.mxu0 0.0
      %1139 = vmatpush.msra.mxu0 0.0
      %1140 = vmatpush.msra.mxu0 0.0
      %1141 = vmatpush.msra.mxu0 0.0
      %1142 = vmatpush.msra.mxu0 0.0
      %1143 = vmatpush.msra.mxu0 0.0
      %1144 = vmatpush.msra.mxu0 0.0
      %1145 = vmatpush.msra.mxu0 0.0
      %v1146 = vand.u32 %v353, 4294901760
      %v1147 = vsub.f32 %v353, %v1146
      %v1148 = vand.u32 %v1147, 4294901760
      %1149 = vmatpush.msra.mxu0 %v1148
      %v1150 = vand.u32 %v257, 4294901760
      %v1151 = vsub.f32 %v257, %v1150
      %v1152 = vand.u32 %v1151, 4294901760
      %1153 = vmatpush.msra.mxu0 %v1152
      %v1154 = vand.u32 %v256, 4294901760
      %v1155 = vsub.f32 %v256, %v1154
      %v1156 = vand.u32 %v1155, 4294901760
      %1157 = vmatpush.msra.mxu0 %v1156
      %v1158 = vand.u32 %v255, 4294901760
      %v1159 = vsub.f32 %v255, %v1158
      %v1160 = vand.u32 %v1159, 4294901760
      %1161 = vmatpush.msra.mxu0 %v1160
      %v1162 = vand.u32 %v254, 4294901760
      %v1163 = vsub.f32 %v254, %v1162
      %v1164 = vand.u32 %v1163, 4294901760
      %1165 = vmatpush.msra.mxu0 %v1164
      %v1166 = vand.u32 %v265, 4294901760
      %1167 = vmatmul.f32.gmra.mxu0 %v1166
      %v1168 = vpop.f32.mrf.mxu0
      %v1169 = vadd.f32 %v965, %v1168
      %v1170 = vand.u32 %v268, 4294901760
      %1171 = vmatmul.f32.gmra.mxu0 %v1170
      %v1172 = vpop.f32.mrf.mxu0
      %v1173 = vadd.f32 %v971, %v1172
      %v1174 = vand.u32 %v271, 4294901760
      %1175 = vmatmul.f32.gmra.mxu0 %v1174
      %v1176 = vpop.f32.mrf.mxu0
      %v1177 = vadd.f32 %v977, %v1176
      %v1178 = vand.u32 %v274, 4294901760
      %1179 = vmatmul.f32.gmra.mxu0 %v1178
      %v1180 = vpop.f32.mrf.mxu0
      %v1181 = vadd.f32 %v983, %v1180
      %v1182 = vand.u32 %v277, 4294901760
      %1183 = vmatmul.f32.gmra.mxu0 %v1182
      %v1184 = vpop.f32.mrf.mxu0
      %v1185 = vadd.f32 %v989, %v1184
      %v1186 = vand.u32 %v280, 4294901760
      %1187 = vmatmul.f32.gmra.mxu0 %v1186
      %v1188 = vpop.f32.mrf.mxu0
      %v1189 = vadd.f32 %v995, %v1188
      %v1190 = vand.u32 %v283, 4294901760
      %1191 = vmatmul.f32.gmra.mxu0 %v1190
      %v1192 = vpop.f32.mrf.mxu0
      %v1193 = vadd.f32 %v1001, %v1192
      %v1194 = vand.u32 %v286, 4294901760
      %1195 = vmatmul.f32.gmra.mxu0 %v1194
      %v1196 = vpop.f32.mrf.mxu0
      %v1197 = vadd.f32 %v1007, %v1196
      %v1198 = vand.u32 %v289, 4294901760
      %1199 = vmatmul.f32.gmra.mxu0 %v1198
      %v1200 = vpop.f32.mrf.mxu0
      %v1201 = vadd.f32 %v1013, %v1200
      %v1202 = vand.u32 %v292, 4294901760
      %1203 = vmatmul.f32.gmra.mxu0 %v1202
      %v1204 = vpop.f32.mrf.mxu0
      %v1205 = vadd.f32 %v1019, %v1204
      %v1206 = vand.u32 %v295, 4294901760
      %1207 = vmatmul.f32.gmra.mxu0 %v1206
      %v1208 = vpop.f32.mrf.mxu0
      %v1209 = vadd.f32 %v1025, %v1208
      %v1210 = vand.u32 %v298, 4294901760
      %1211 = vmatmul.f32.gmra.mxu0 %v1210
      %v1212 = vpop.f32.mrf.mxu0
      %v1213 = vadd.f32 %v1031, %v1212
      %v1214 = vand.u32 %v301, 4294901760
      %1215 = vmatmul.f32.gmra.mxu0 %v1214
      %v1216 = vpop.f32.mrf.mxu0
      %v1217 = vadd.f32 %v1037, %v1216
      %v1218 = vand.u32 %v304, 4294901760
      %1219 = vmatmul.f32.gmra.mxu0 %v1218
      %v1220 = vpop.f32.mrf.mxu0
      %v1221 = vadd.f32 %v1043, %v1220
      %v1222 = vand.u32 %v307, 4294901760
      %1223 = vmatmul.f32.gmra.mxu0 %v1222
      %v1224 = vpop.f32.mrf.mxu0
      %v1225 = vadd.f32 %v1049, %v1224
      %v1226 = vand.u32 %v310, 4294901760
      %1227 = vmatmul.f32.gmra.mxu0 %v1226
      %v1228 = vpop.f32.mrf.mxu0
      %v1229 = vadd.f32 %v1055, %v1228
      %v1230 = vand.u32 %v313, 4294901760
      %1231 = vmatmul.f32.gmra.mxu0 %v1230
      %v1232 = vpop.f32.mrf.mxu0
      %v1233 = vadd.f32 %v1061, %v1232
      %v1234 = vand.u32 %v316, 4294901760
      %1235 = vmatmul.f32.gmra.mxu0 %v1234
      %v1236 = vpop.f32.mrf.mxu0
      %v1237 = vadd.f32 %v1067, %v1236
      %v1238 = vand.u32 %v319, 4294901760
      %1239 = vmatmul.f32.gmra.mxu0 %v1238
      %v1240 = vpop.f32.mrf.mxu0
      %v1241 = vadd.f32 %v1073, %v1240
      %v1242 = vand.u32 %v322, 4294901760
      %1243 = vmatmul.f32.gmra.mxu0 %v1242
      %v1244 = vpop.f32.mrf.mxu0
      %v1245 = vadd.f32 %v1079, %v1244
      %v1246 = vand.u32 %v325, 4294901760
      %1247 = vmatmul.f32.gmra.mxu0 %v1246
      %v1248 = vpop.f32.mrf.mxu0
      %v1249 = vadd.f32 %v1085, %v1248
      %v1250 = vand.u32 %v328, 4294901760
      %1251 = vmatmul.f32.gmra.mxu0 %v1250
      %v1252 = vpop.f32.mrf.mxu0
      %v1253 = vadd.f32 %v1091, %v1252
      %v1254 = vand.u32 %v331, 4294901760
      %1255 = vmatmul.f32.gmra.mxu0 %v1254
      %v1256 = vpop.f32.mrf.mxu0
      %v1257 = vadd.f32 %v1097, %v1256
      %v1258 = vand.u32 %v334, 4294901760
      %1259 = vmatmul.f32.gmra.mxu0 %v1258
      %v1260 = vpop.f32.mrf.mxu0
      %v1261 = vadd.f32 %v1103, %v1260
      %v1262 = vand.u32 %v337, 4294901760
      %1263 = vmatmul.f32.gmra.mxu0 %v1262
      %v1264 = vpop.f32.mrf.mxu0
      %v1265 = vadd.f32 %v1109, %v1264
      %v1266 = vand.u32 %v340, 4294901760
      %1267 = vmatmul.f32.gmra.mxu0 %v1266
      %v1268 = vpop.f32.mrf.mxu0
      %v1269 = vadd.f32 %v1115, %v1268
      %v1270 = vand.u32 %v343, 4294901760
      %1271 = vmatmul.f32.gmra.mxu0 %v1270
      %v1272 = vpop.f32.mrf.mxu0
      %v1273 = vadd.f32 %v1121, %v1272
      %v1274 = vand.u32 %v346, 4294901760
      %1275 = vmatmul.f32.gmra.mxu0 %v1274
      %v1276 = vpop.f32.mrf.mxu0
      %v1277 = vadd.f32 %v1127, %v1276
      %v1278 = vand.u32 %v349, 4294901760
      %1279 = vmatmul.f32.gmra.mxu0 %v1278
      %v1280 = vpop.f32.mrf.mxu0
      %v1281 = vadd.f32 %v1133, %v1280
      %1282 = vdwg.mxu0
      %1283 = vmatpush.msra.mxu0 0.0
      %1284 = vmatpush.msra.mxu0 0.0
      %1285 = vmatpush.msra.mxu0 0.0
      %1286 = vmatpush.msra.mxu0 0.0
      %1287 = vmatpush.msra.mxu0 0.0
      %1288 = vmatpush.msra.mxu0 0.0
      %1289 = vmatpush.msra.mxu0 0.0
      %1290 = vmatpush.msra.mxu0 0.0
      %1291 = vmatpush.msra.mxu0 0.0
      %1292 = vmatpush.msra.mxu0 0.0
      %1293 = vmatpush.msra.mxu0 0.0
      %v1294 = vand.u32 %v353, 4294901760
      %1295 = vmatpush.msra.mxu0 %v1294
      %v1296 = vand.u32 %v257, 4294901760
      %1297 = vmatpush.msra.mxu0 %v1296
      %v1298 = vand.u32 %v256, 4294901760
      %1299 = vmatpush.msra.mxu0 %v1298
      %v1300 = vand.u32 %v255, 4294901760
      %1301 = vmatpush.msra.mxu0 %v1300
      %v1302 = vand.u32 %v254, 4294901760
      %1303 = vmatpush.msra.mxu0 %v1302
      %v1304 = vand.u32 %v265, 4294901760
      %1305 = vmatmul.f32.gmra.mxu0 %v1304
      %v1306 = vpop.f32.mrf.mxu0
      %v1307 = vadd.f32 %v1169, %v1306
      %v1308 = vand.u32 %v268, 4294901760
      %1309 = vmatmul.f32.gmra.mxu0 %v1308
      %v1310 = vpop.f32.mrf.mxu0
      %v1311 = vadd.f32 %v1173, %v1310
      %v1312 = vand.u32 %v271, 4294901760
      %1313 = vmatmul.f32.gmra.mxu0 %v1312
      %v1314 = vpop.f32.mrf.mxu0
      %v1315 = vadd.f32 %v1177, %v1314
      %v1316 = vand.u32 %v274, 4294901760
      %1317 = vmatmul.f32.gmra.mxu0 %v1316
      %v1318 = vpop.f32.mrf.mxu0
      %v1319 = vadd.f32 %v1181, %v1318
      %v1320 = vand.u32 %v277, 4294901760
      %1321 = vmatmul.f32.gmra.mxu0 %v1320
      %v1322 = vpop.f32.mrf.mxu0
      %v1323 = vadd.f32 %v1185, %v1322
      %v1324 = vand.u32 %v280, 4294901760
      %1325 = vmatmul.f32.gmra.mxu0 %v1324
      %v1326 = vpop.f32.mrf.mxu0
      %v1327 = vadd.f32 %v1189, %v1326
      %v1328 = vand.u32 %v283, 4294901760
      %1329 = vmatmul.f32.gmra.mxu0 %v1328
      %v1330 = vpop.f32.mrf.mxu0
      %v1331 = vadd.f32 %v1193, %v1330
      %v1332 = vand.u32 %v286, 4294901760
      %1333 = vmatmul.f32.gmra.mxu0 %v1332
      %v1334 = vpop.f32.mrf.mxu0
      %v1335 = vadd.f32 %v1197, %v1334
      %v1336 = vand.u32 %v289, 4294901760
      %1337 = vmatmul.f32.gmra.mxu0 %v1336
      %v1338 = vpop.f32.mrf.mxu0
      %v1339 = vadd.f32 %v1201, %v1338
      %v1340 = vand.u32 %v292, 4294901760
      %1341 = vmatmul.f32.gmra.mxu0 %v1340
      %v1342 = vpop.f32.mrf.mxu0
      %v1343 = vadd.f32 %v1205, %v1342
      %v1344 = vand.u32 %v295, 4294901760
      %1345 = vmatmul.f32.gmra.mxu0 %v1344
      %v1346 = vpop.f32.mrf.mxu0
      %v1347 = vadd.f32 %v1209, %v1346
      %v1348 = vand.u32 %v298, 4294901760
      %1349 = vmatmul.f32.gmra.mxu0 %v1348
      %v1350 = vpop.f32.mrf.mxu0
      %v1351 = vadd.f32 %v1213, %v1350
      %v1352 = vand.u32 %v301, 4294901760
      %1353 = vmatmul.f32.gmra.mxu0 %v1352
      %v1354 = vpop.f32.mrf.mxu0
      %v1355 = vadd.f32 %v1217, %v1354
      %v1356 = vand.u32 %v304, 4294901760
      %1357 = vmatmul.f32.gmra.mxu0 %v1356
      %v1358 = vpop.f32.mrf.mxu0
      %v1359 = vadd.f32 %v1221, %v1358
      %v1360 = vand.u32 %v307, 4294901760
      %1361 = vmatmul.f32.gmra.mxu0 %v1360
      %v1362 = vpop.f32.mrf.mxu0
      %v1363 = vadd.f32 %v1225, %v1362
      %v1364 = vand.u32 %v310, 4294901760
      %1365 = vmatmul.f32.gmra.mxu0 %v1364
      %v1366 = vpop.f32.mrf.mxu0
      %v1367 = vadd.f32 %v1229, %v1366
      %v1368 = vand.u32 %v313, 4294901760
      %1369 = vmatmul.f32.gmra.mxu0 %v1368
      %v1370 = vpop.f32.mrf.mxu0
      %v1371 = vadd.f32 %v1233, %v1370
      %v1372 = vand.u32 %v316, 4294901760
      %1373 = vmatmul.f32.gmra.mxu0 %v1372
      %v1374 = vpop.f32.mrf.mxu0
      %v1375 = vadd.f32 %v1237, %v1374
      %v1376 = vand.u32 %v319, 4294901760
      %1377 = vmatmul.f32.gmra.mxu0 %v1376
      %v1378 = vpop.f32.mrf.mxu0
      %v1379 = vadd.f32 %v1241, %v1378
      %v1380 = vand.u32 %v322, 4294901760
      %1381 = vmatmul.f32.gmra.mxu0 %v1380
      %v1382 = vpop.f32.mrf.mxu0
      %v1383 = vadd.f32 %v1245, %v1382
      %v1384 = vand.u32 %v325, 4294901760
      %1385 = vmatmul.f32.gmra.mxu0 %v1384
      %v1386 = vpop.f32.mrf.mxu0
      %v1387 = vadd.f32 %v1249, %v1386
      %v1388 = vand.u32 %v328, 4294901760
      %1389 = vmatmul.f32.gmra.mxu0 %v1388
      %v1390 = vpop.f32.mrf.mxu0
      %v1391 = vadd.f32 %v1253, %v1390
      %v1392 = vand.u32 %v331, 4294901760
      %1393 = vmatmul.f32.gmra.mxu0 %v1392
      %v1394 = vpop.f32.mrf.mxu0
      %v1395 = vadd.f32 %v1257, %v1394
      %v1396 = vand.u32 %v334, 4294901760
      %1397 = vmatmul.f32.gmra.mxu0 %v1396
      %v1398 = vpop.f32.mrf.mxu0
      %v1399 = vadd.f32 %v1261, %v1398
      %v1400 = vand.u32 %v337, 4294901760
      %1401 = vmatmul.f32.gmra.mxu0 %v1400
      %v1402 = vpop.f32.mrf.mxu0
      %v1403 = vadd.f32 %v1265, %v1402
      %v1404 = vand.u32 %v340, 4294901760
      %1405 = vmatmul.f32.gmra.mxu0 %v1404
      %v1406 = vpop.f32.mrf.mxu0
      %v1407 = vadd.f32 %v1269, %v1406
      %v1408 = vand.u32 %v343, 4294901760
      %1409 = vmatmul.f32.gmra.mxu0 %v1408
      %v1410 = vpop.f32.mrf.mxu0
      %v1411 = vadd.f32 %v1273, %v1410
      %v1412 = vand.u32 %v346, 4294901760
      %1413 = vmatmul.f32.gmra.mxu0 %v1412
      %v1414 = vpop.f32.mrf.mxu0
      %v1415 = vadd.f32 %v1277, %v1414
      %v1416 = vand.u32 %v349, 4294901760
      %1417 = vmatmul.f32.gmra.mxu0 %v1416
      %v1418 = vpop.f32.mrf.mxu0
      %v1419 = vadd.f32 %v1281, %v1418
      %1420 = vdwg.mxu0
      %v1421 = vmax.f32 %v1307, 0.0
      %v1422 = vmax.f32 %v1311, 0.0
      %v1423 = vmax.f32 %v1315, 0.0
      %v1424 = vmax.f32 %v1319, 0.0
      %v1425 = vmax.f32 %v1323, 0.0
      %v1426 = vmax.f32 %v1327, 0.0
      %v1427 = vmax.f32 %v1331, 0.0
      %v1428 = vmax.f32 %v1335, 0.0
      %v1429 = vmax.f32 %v1339, 0.0
      %v1430 = vmax.f32 %v1343, 0.0
      %v1431 = vmax.f32 %v1347, 0.0
      %v1432 = vmax.f32 %v1351, 0.0
      %v1433 = vmax.f32 %v1355, 0.0
      %v1434 = vmax.f32 %v1359, 0.0
      %v1435 = vmax.f32 %v1363, 0.0
      %v1436 = vmax.f32 %v1367, 0.0
      %v1437 = vmax.f32 %v1371, 0.0
      %v1438 = vmax.f32 %v1375, 0.0
      %v1439 = vmax.f32 %v1379, 0.0
      %v1440 = vmax.f32 %v1383, 0.0
      %v1441 = vmax.f32 %v1387, 0.0
      %v1442 = vmax.f32 %v1391, 0.0
      %v1443 = vmax.f32 %v1395, 0.0
      %v1444 = vmax.f32 %v1399, 0.0
      %v1445 = vmax.f32 %v1403, 0.0
      %v1446 = vmax.f32 %v1407, 0.0
      %v1447 = vmax.f32 %v1411, 0.0
      %v1448 = vmax.f32 %v1415, 0.0
      %v1449 = vmax.f32 %v1419, 0.0
      %vm1450 = vcmask 261120
      %1451 = vst.msk [vmem:[#allocation2] sm:$0xff] %vm1450, %v1421
      %1452 = vst.msk [vmem:[#allocation2 + $0x8] sm:$0xff] %vm1450, %v1422
      %1453 = vst.msk [vmem:[#allocation2 + $0x10] sm:$0xff] %vm1450, %v1423
      %1454 = vst.msk [vmem:[#allocation2 + $0x18] sm:$0xff] %vm1450, %v1424
      %1455 = vst.msk [vmem:[#allocation2 + $0x20] sm:$0xff] %vm1450, %v1425
      %1456 = vst.msk [vmem:[#allocation2 + $0x28] sm:$0xff] %vm1450, %v1426
      %1457 = vst.msk [vmem:[#allocation2 + $0x30] sm:$0xff] %vm1450, %v1427
      %1458 = vst.msk [vmem:[#allocation2 + $0x38] sm:$0xff] %vm1450, %v1428
      %1459 = vst.msk [vmem:[#allocation2 + $0x40] sm:$0xff] %vm1450, %v1429
      %1460 = vst.msk [vmem:[#allocation2 + $0x48] sm:$0xff] %vm1450, %v1430
      %1461 = vst.msk [vmem:[#allocation2 + $0x50] sm:$0xff] %vm1450, %v1431
      %1462 = vst.msk [vmem:[#allocation2 + $0x58] sm:$0xff] %vm1450, %v1432
      %1463 = vst.msk [vmem:[#allocation2 + $0x60] sm:$0xff] %vm1450, %v1433
      %1464 = vst.msk [vmem:[#allocation2 + $0x68] sm:$0xff] %vm1450, %v1434
      %1465 = vst.msk [vmem:[#allocation2 + $0x70] sm:$0xff] %vm1450, %v1435
      %1466 = vst.msk [vmem:[#allocation2 + $0x78] sm:$0xff] %vm1450, %v1436
      %1467 = vst.msk [vmem:[#allocation2 + $0x80] sm:$0xff] %vm1450, %v1437
      %1468 = vst.msk [vmem:[#allocation2 + $0x88] sm:$0xff] %vm1450, %v1438
      %1469 = vst.msk [vmem:[#allocation2 + $0x90] sm:$0xff] %vm1450, %v1439
      %1470 = vst.msk [vmem:[#allocation2 + $0x98] sm:$0xff] %vm1450, %v1440
      %1471 = vst.msk [vmem:[#allocation2 + $0xa0] sm:$0xff] %vm1450, %v1441
      %1472 = vst.msk [vmem:[#allocation2 + $0xa8] sm:$0xff] %vm1450, %v1442
      %1473 = vst.msk [vmem:[#allocation2 + $0xb0] sm:$0xff] %vm1450, %v1443
      %1474 = vst.msk [vmem:[#allocation2 + $0xb8] sm:$0xff] %vm1450, %v1444
      %1475 = vst.msk [vmem:[#allocation2 + $0xc0] sm:$0xff] %vm1450, %v1445
      %1476 = vst.msk [vmem:[#allocation2 + $0xc8] sm:$0xff] %vm1450, %v1446
      %1477 = vst.msk [vmem:[#allocation2 + $0xd0] sm:$0xff] %vm1450, %v1447
      %1478 = vst.msk [vmem:[#allocation2 + $0xd8] sm:$0xff] %vm1450, %v1448
      %vm1479 = vcmask 253952
      %1480 = vst.msk [vmem:[#allocation2 + $0xe0] sm:$0x1] %vm1479, %v1449
      %v1481 = vld [vmem:[#allocation2] sm:$0xff]
      %v1482 = vld [vmem:[#allocation2 + $0x8] sm:$0xff]
      %v1483 = vld [vmem:[#allocation2 + $0x10] sm:$0xff]
      %v1484 = vld [vmem:[#allocation2 + $0x18] sm:$0xff]
      %v1485 = vld [vmem:[#allocation2 + $0x20] sm:$0xff]
      %v1486 = vld [vmem:[#allocation2 + $0x28] sm:$0xff]
      %v1487 = vld [vmem:[#allocation2 + $0x30] sm:$0xff]
      %v1488 = vld [vmem:[#allocation2 + $0x38] sm:$0xff]
      %v1489 = vld [vmem:[#allocation2 + $0x40] sm:$0xff]
      %v1490 = vld [vmem:[#allocation2 + $0x48] sm:$0xff]
      %v1491 = vld [vmem:[#allocation2 + $0x50] sm:$0xff]
      %v1492 = vld [vmem:[#allocation2 + $0x58] sm:$0xff]
      %v1493 = vld [vmem:[#allocation2 + $0x60] sm:$0xff]
      %v1494 = vld [vmem:[#allocation2 + $0x68] sm:$0xff]
      %v1495 = vld [vmem:[#allocation2 + $0x70] sm:$0xff]
      %v1496 = vld [vmem:[#allocation2 + $0x78] sm:$0xff]
      %v1497 = vld [vmem:[#allocation2 + $0x80] sm:$0xff]
      %v1498 = vld [vmem:[#allocation2 + $0x88] sm:$0xff]
      %v1499 = vld [vmem:[#allocation2 + $0x90] sm:$0xff]
      %v1500 = vld [vmem:[#allocation2 + $0x98] sm:$0xff]
      %v1501 = vld [vmem:[#allocation2 + $0xa0] sm:$0xff]
      %v1502 = vld [vmem:[#allocation2 + $0xa8] sm:$0xff]
      %v1503 = vld [vmem:[#allocation2 + $0xb0] sm:$0xff]
      %v1504 = vld [vmem:[#allocation2 + $0xb8] sm:$0xff]
      %v1505 = vld [vmem:[#allocation2 + $0xc0] sm:$0x7]
      %v1506 = vld [vmem:[#allocation2 + $0x1] sm:$0xff]
      %v1507 = vld [vmem:[#allocation2 + $0x9] sm:$0xff]
      %v1508 = vld [vmem:[#allocation2 + $0x11] sm:$0xff]
      %v1509 = vld [vmem:[#allocation2 + $0x19] sm:$0xff]
      %v1510 = vld [vmem:[#allocation2 + $0x21] sm:$0xff]
      %v1511 = vld [vmem:[#allocation2 + $0x29] sm:$0xff]
      %v1512 = vld [vmem:[#allocation2 + $0x31] sm:$0xff]
      %v1513 = vld [vmem:[#allocation2 + $0x39] sm:$0xff]
      %v1514 = vld [vmem:[#allocation2 + $0x41] sm:$0xff]
      %v1515 = vld [vmem:[#allocation2 + $0x49] sm:$0xff]
      %v1516 = vld [vmem:[#allocation2 + $0x51] sm:$0xff]
      %v1517 = vld [vmem:[#allocation2 + $0x59] sm:$0xff]
      %v1518 = vld [vmem:[#allocation2 + $0x61] sm:$0xff]
      %v1519 = vld [vmem:[#allocation2 + $0x69] sm:$0xff]
      %v1520 = vld [vmem:[#allocation2 + $0x71] sm:$0xff]
      %v1521 = vld [vmem:[#allocation2 + $0x79] sm:$0xff]
      %v1522 = vld [vmem:[#allocation2 + $0x81] sm:$0xff]
      %v1523 = vld [vmem:[#allocation2 + $0x89] sm:$0xff]
      %v1524 = vld [vmem:[#allocation2 + $0x91] sm:$0xff]
      %v1525 = vld [vmem:[#allocation2 + $0x99] sm:$0xff]
      %v1526 = vld [vmem:[#allocation2 + $0xa1] sm:$0xff]
      %v1527 = vld [vmem:[#allocation2 + $0xa9] sm:$0xff]
      %v1528 = vld [vmem:[#allocation2 + $0xb1] sm:$0xff]
      %v1529 = vld [vmem:[#allocation2 + $0xb9] sm:$0xff]
      %v1530 = vld [vmem:[#allocation2 + $0xc1] sm:$0x7]
      %v1531 = vld [vmem:[#allocation2 + $0x2] sm:$0xff]
      %v1532 = vld [vmem:[#allocation2 + $0xa] sm:$0xff]
      %v1533 = vld [vmem:[#allocation2 + $0x12] sm:$0xff]
      %v1534 = vld [vmem:[#allocation2 + $0x1a] sm:$0xff]
      %v1535 = vld [vmem:[#allocation2 + $0x22] sm:$0xff]
      %v1536 = vld [vmem:[#allocation2 + $0x2a] sm:$0xff]
      %v1537 = vld [vmem:[#allocation2 + $0x32] sm:$0xff]
      %v1538 = vld [vmem:[#allocation2 + $0x3a] sm:$0xff]
      %v1539 = vld [vmem:[#allocation2 + $0x42] sm:$0xff]
      %v1540 = vld [vmem:[#allocation2 + $0x4a] sm:$0xff]
      %v1541 = vld [vmem:[#allocation2 + $0x52] sm:$0xff]
      %v1542 = vld [vmem:[#allocation2 + $0x5a] sm:$0xff]
      %v1543 = vld [vmem:[#allocation2 + $0x62] sm:$0xff]
      %v1544 = vld [vmem:[#allocation2 + $0x6a] sm:$0xff]
      %v1545 = vld [vmem:[#allocation2 + $0x72] sm:$0xff]
      %v1546 = vld [vmem:[#allocation2 + $0x7a] sm:$0xff]
      %v1547 = vld [vmem:[#allocation2 + $0x82] sm:$0xff]
      %v1548 = vld [vmem:[#allocation2 + $0x8a] sm:$0xff]
      %v1549 = vld [vmem:[#allocation2 + $0x92] sm:$0xff]
      %v1550 = vld [vmem:[#allocation2 + $0x9a] sm:$0xff]
      %v1551 = vld [vmem:[#allocation2 + $0xa2] sm:$0xff]
      %v1552 = vld [vmem:[#allocation2 + $0xaa] sm:$0xff]
      %v1553 = vld [vmem:[#allocation2 + $0xb2] sm:$0xff]
      %v1554 = vld [vmem:[#allocation2 + $0xba] sm:$0xff]
      %v1555 = vld [vmem:[#allocation2 + $0xc2] sm:$0x7]
      %v1556 = vld [vmem:[#allocation2 + $0xf] sm:$0xff]
      %v1557 = vld [vmem:[#allocation2 + $0x17] sm:$0xff]
      %v1558 = vld [vmem:[#allocation2 + $0x1f] sm:$0xff]
      %v1559 = vld [vmem:[#allocation2 + $0x27] sm:$0xff]
      %v1560 = vld [vmem:[#allocation2 + $0x2f] sm:$0xff]
      %v1561 = vld [vmem:[#allocation2 + $0x37] sm:$0xff]
      %v1562 = vld [vmem:[#allocation2 + $0x3f] sm:$0xff]
      %v1563 = vld [vmem:[#allocation2 + $0x47] sm:$0xff]
      %v1564 = vld [vmem:[#allocation2 + $0x4f] sm:$0xff]
      %v1565 = vld [vmem:[#allocation2 + $0x57] sm:$0xff]
      %v1566 = vld [vmem:[#allocation2 + $0x5f] sm:$0xff]
      %v1567 = vld [vmem:[#allocation2 + $0x67] sm:$0xff]
      %v1568 = vld [vmem:[#allocation2 + $0x6f] sm:$0xff]
      %v1569 = vld [vmem:[#allocation2 + $0x77] sm:$0xff]
      %v1570 = vld [vmem:[#allocation2 + $0x7f] sm:$0xff]
      %v1571 = vld [vmem:[#allocation2 + $0x87] sm:$0xff]
      %v1572 = vld [vmem:[#allocation2 + $0x8f] sm:$0xff]
      %v1573 = vld [vmem:[#allocation2 + $0x97] sm:$0xff]
      %v1574 = vld [vmem:[#allocation2 + $0x9f] sm:$0xff]
      %v1575 = vld [vmem:[#allocation2 + $0xa7] sm:$0xff]
      %v1576 = vld [vmem:[#allocation2 + $0xaf] sm:$0xff]
      %v1577 = vld [vmem:[#allocation2 + $0xb7] sm:$0xff]
      %v1578 = vld [vmem:[#allocation2 + $0xbf] sm:$0xff]
      %v1579 = vld [vmem:[#allocation2 + $0xc7] sm:$0xff]
      %v1580 = vld [vmem:[#allocation2 + $0xcf] sm:$0x7]
      %v1581 = vld [vmem:[#allocation2 + $0xc0] sm:$0xff]
      %v1582 = vld [vmem:[#allocation2 + $0xc8] sm:$0xff]
      %v1583 = vld [vmem:[#allocation2 + $0xd0] sm:$0x7]
      %v1584 = vld [vmem:[#allocation2 + $0xc1] sm:$0xff]
      %v1585 = vld [vmem:[#allocation2 + $0xc9] sm:$0xff]
      %v1586 = vld [vmem:[#allocation2 + $0xd1] sm:$0x7]
      %v1587 = vld [vmem:[#allocation2 + $0x1e] sm:$0xff]
      %v1588 = vld [vmem:[#allocation2 + $0x26] sm:$0xff]
      %v1589 = vld [vmem:[#allocation2 + $0x2e] sm:$0xff]
      %v1590 = vld [vmem:[#allocation2 + $0x36] sm:$0xff]
      %v1591 = vld [vmem:[#allocation2 + $0x3e] sm:$0xff]
      %v1592 = vld [vmem:[#allocation2 + $0x46] sm:$0xff]
      %v1593 = vld [vmem:[#allocation2 + $0x4e] sm:$0xff]
      %v1594 = vld [vmem:[#allocation2 + $0x56] sm:$0xff]
      %v1595 = vld [vmem:[#allocation2 + $0x5e] sm:$0xff]
      %v1596 = vld [vmem:[#allocation2 + $0x66] sm:$0xff]
      %v1597 = vld [vmem:[#allocation2 + $0x6e] sm:$0xff]
      %v1598 = vld [vmem:[#allocation2 + $0x76] sm:$0xff]
      %v1599 = vld [vmem:[#allocation2 + $0x7e] sm:$0xff]
      %v1600 = vld [vmem:[#allocation2 + $0x86] sm:$0xff]
      %v1601 = vld [vmem:[#allocation2 + $0x8e] sm:$0xff]
      %v1602 = vld [vmem:[#allocation2 + $0x96] sm:$0xff]
      %v1603 = vld [vmem:[#allocation2 + $0x9e] sm:$0xff]
      %v1604 = vld [vmem:[#allocation2 + $0xa6] sm:$0xff]
      %v1605 = vld [vmem:[#allocation2 + $0xae] sm:$0xff]
      %v1606 = vld [vmem:[#allocation2 + $0xb6] sm:$0xff]
      %v1607 = vld [vmem:[#allocation2 + $0xbe] sm:$0xff]
      %v1608 = vld [vmem:[#allocation2 + $0xc6] sm:$0xff]
      %v1609 = vld [vmem:[#allocation2 + $0xce] sm:$0xff]
      %v1610 = vld [vmem:[#allocation2 + $0xd6] sm:$0xff]
      %v1611 = vld [vmem:[#allocation2 + $0xde] sm:$0x7]
      %v1612 = vld [vmem:[#allocation2 + $0xcf] sm:$0xff]
      %v1613 = vld [vmem:[#allocation2 + $0xd7] sm:$0xff]
      %v1614 = vld [vmem:[#allocation2 + $0xdf] sm:$0x7]
      %v1615 = vld [vmem:[#allocation2 + $0xd0] sm:$0xff]
      %v1616 = vld [vmem:[#allocation2 + $0xd8] sm:$0xff]
      %v1617 = vld [vmem:[#allocation2 + $0xe0] sm:$0x7]
      %1643 = vrot.lane.b32.xlu0 %v1506, 32
      %v1644 = vpop.permute.xlu0 %1643
      %1645 = vrot.lane.b32.xlu0 %v1507, 32
      %v1646 = vpop.permute.xlu0 %1645
      %1647 = vrot.lane.b32.xlu0 %v1508, 32
      %v1648 = vpop.permute.xlu0 %1647
      %1649 = vrot.lane.b32.xlu0 %v1509, 32
      %v1650 = vpop.permute.xlu0 %1649
      %1651 = vrot.lane.b32.xlu0 %v1510, 32
      %v1652 = vpop.permute.xlu0 %1651
      %1653 = vrot.lane.b32.xlu0 %v1511, 32
      %v1654 = vpop.permute.xlu0 %1653
      %1655 = vrot.lane.b32.xlu0 %v1512, 32
      %v1656 = vpop.permute.xlu0 %1655
      %1657 = vrot.lane.b32.xlu0 %v1513, 32
      %v1658 = vpop.permute.xlu0 %1657
      %1659 = vrot.lane.b32.xlu0 %v1514, 32
      %v1660 = vpop.permute.xlu0 %1659
      %1661 = vrot.lane.b32.xlu0 %v1515, 32
      %v1662 = vpop.permute.xlu0 %1661
      %1663 = vrot.lane.b32.xlu0 %v1516, 32
      %v1664 = vpop.permute.xlu0 %1663
      %1665 = vrot.lane.b32.xlu0 %v1517, 32
      %v1666 = vpop.permute.xlu0 %1665
      %1667 = vrot.lane.b32.xlu0 %v1518, 32
      %v1668 = vpop.permute.xlu0 %1667
      %1669 = vrot.lane.b32.xlu0 %v1519, 32
      %v1670 = vpop.permute.xlu0 %1669
      %1671 = vrot.lane.b32.xlu0 %v1520, 32
      %v1672 = vpop.permute.xlu0 %1671
      %1673 = vrot.lane.b32.xlu0 %v1521, 32
      %v1674 = vpop.permute.xlu0 %1673
      %1675 = vrot.lane.b32.xlu0 %v1522, 32
      %v1676 = vpop.permute.xlu0 %1675
      %1677 = vrot.lane.b32.xlu0 %v1523, 32
      %v1678 = vpop.permute.xlu0 %1677
      %1679 = vrot.lane.b32.xlu0 %v1524, 32
      %v1680 = vpop.permute.xlu0 %1679
      %1681 = vrot.lane.b32.xlu0 %v1525, 32
      %v1682 = vpop.permute.xlu0 %1681
      %1683 = vrot.lane.b32.xlu0 %v1526, 32
      %v1684 = vpop.permute.xlu0 %1683
      %1685 = vrot.lane.b32.xlu0 %v1527, 32
      %v1686 = vpop.permute.xlu0 %1685
      %1687 = vrot.lane.b32.xlu0 %v1528, 32
      %v1688 = vpop.permute.xlu0 %1687
      %1689 = vrot.lane.b32.xlu0 %v1529, 32
      %v1690 = vpop.permute.xlu0 %1689
      %1691 = vrot.lane.b32.xlu0 %v1530, 32
      %v1692 = vpop.permute.xlu0 %1691
      %1743 = vrot.lane.b32.xlu0 %v1531, 64
      %v1744 = vpop.permute.xlu0 %1743
      %1745 = vrot.lane.b32.xlu0 %v1532, 64
      %v1746 = vpop.permute.xlu0 %1745
      %1747 = vrot.lane.b32.xlu0 %v1533, 64
      %v1748 = vpop.permute.xlu0 %1747
      %1749 = vrot.lane.b32.xlu0 %v1534, 64
      %v1750 = vpop.permute.xlu0 %1749
      %1751 = vrot.lane.b32.xlu0 %v1535, 64
      %v1752 = vpop.permute.xlu0 %1751
      %1753 = vrot.lane.b32.xlu0 %v1536, 64
      %v1754 = vpop.permute.xlu0 %1753
      %1755 = vrot.lane.b32.xlu0 %v1537, 64
      %v1756 = vpop.permute.xlu0 %1755
      %1757 = vrot.lane.b32.xlu0 %v1538, 64
      %v1758 = vpop.permute.xlu0 %1757
      %1759 = vrot.lane.b32.xlu0 %v1539, 64
      %v1760 = vpop.permute.xlu0 %1759
      %1761 = vrot.lane.b32.xlu0 %v1540, 64
      %v1762 = vpop.permute.xlu0 %1761
      %1763 = vrot.lane.b32.xlu0 %v1541, 64
      %v1764 = vpop.permute.xlu0 %1763
      %1765 = vrot.lane.b32.xlu0 %v1542, 64
      %v1766 = vpop.permute.xlu0 %1765
      %1767 = vrot.lane.b32.xlu0 %v1543, 64
      %v1768 = vpop.permute.xlu0 %1767
      %1769 = vrot.lane.b32.xlu0 %v1544, 64
      %v1770 = vpop.permute.xlu0 %1769
      %1771 = vrot.lane.b32.xlu0 %v1545, 64
      %v1772 = vpop.permute.xlu0 %1771
      %1773 = vrot.lane.b32.xlu0 %v1546, 64
      %v1774 = vpop.permute.xlu0 %1773
      %1775 = vrot.lane.b32.xlu0 %v1547, 64
      %v1776 = vpop.permute.xlu0 %1775
      %1777 = vrot.lane.b32.xlu0 %v1548, 64
      %v1778 = vpop.permute.xlu0 %1777
      %1779 = vrot.lane.b32.xlu0 %v1549, 64
      %v1780 = vpop.permute.xlu0 %1779
      %1781 = vrot.lane.b32.xlu0 %v1550, 64
      %v1782 = vpop.permute.xlu0 %1781
      %1783 = vrot.lane.b32.xlu0 %v1551, 64
      %v1784 = vpop.permute.xlu0 %1783
      %1785 = vrot.lane.b32.xlu0 %v1552, 64
      %v1786 = vpop.permute.xlu0 %1785
      %1787 = vrot.lane.b32.xlu0 %v1553, 64
      %v1788 = vpop.permute.xlu0 %1787
      %1789 = vrot.lane.b32.xlu0 %v1554, 64
      %v1790 = vpop.permute.xlu0 %1789
      %1791 = vrot.lane.b32.xlu0 %v1555, 64
      %v1792 = vpop.permute.xlu0 %1791
      %1843 = vrot.lane.b32.xlu0 %v1556, 96
      %v1844 = vpop.permute.xlu0 %1843
      %1845 = vrot.lane.b32.xlu0 %v1557, 96
      %v1846 = vpop.permute.xlu0 %1845
      %1847 = vrot.lane.b32.xlu0 %v1558, 96
      %v1848 = vpop.permute.xlu0 %1847
      %1849 = vrot.lane.b32.xlu0 %v1559, 96
      %v1850 = vpop.permute.xlu0 %1849
      %1851 = vrot.lane.b32.xlu0 %v1560, 96
      %v1852 = vpop.permute.xlu0 %1851
      %1853 = vrot.lane.b32.xlu0 %v1561, 96
      %v1854 = vpop.permute.xlu0 %1853
      %1855 = vrot.lane.b32.xlu0 %v1562, 96
      %v1856 = vpop.permute.xlu0 %1855
      %1857 = vrot.lane.b32.xlu0 %v1563, 96
      %v1858 = vpop.permute.xlu0 %1857
      %1859 = vrot.lane.b32.xlu0 %v1564, 96
      %v1860 = vpop.permute.xlu0 %1859
      %1861 = vrot.lane.b32.xlu0 %v1565, 96
      %v1862 = vpop.permute.xlu0 %1861
      %1863 = vrot.lane.b32.xlu0 %v1566, 96
      %v1864 = vpop.permute.xlu0 %1863
      %1865 = vrot.lane.b32.xlu0 %v1567, 96
      %v1866 = vpop.permute.xlu0 %1865
      %1867 = vrot.lane.b32.xlu0 %v1568, 96
      %v1868 = vpop.permute.xlu0 %1867
      %1869 = vrot.lane.b32.xlu0 %v1569, 96
      %v1870 = vpop.permute.xlu0 %1869
      %1871 = vrot.lane.b32.xlu0 %v1570, 96
      %v1872 = vpop.permute.xlu0 %1871
      %1873 = vrot.lane.b32.xlu0 %v1571, 96
      %v1874 = vpop.permute.xlu0 %1873
      %1875 = vrot.lane.b32.xlu0 %v1572, 96
      %v1876 = vpop.permute.xlu0 %1875
      %1877 = vrot.lane.b32.xlu0 %v1573, 96
      %v1878 = vpop.permute.xlu0 %1877
      %1879 = vrot.lane.b32.xlu0 %v1574, 96
      %v1880 = vpop.permute.xlu0 %1879
      %1881 = vrot.lane.b32.xlu0 %v1575, 96
      %v1882 = vpop.permute.xlu0 %1881
      %1883 = vrot.lane.b32.xlu0 %v1576, 96
      %v1884 = vpop.permute.xlu0 %1883
      %1885 = vrot.lane.b32.xlu0 %v1577, 96
      %v1886 = vpop.permute.xlu0 %1885
      %1887 = vrot.lane.b32.xlu0 %v1578, 96
      %v1888 = vpop.permute.xlu0 %1887
      %1889 = vrot.lane.b32.xlu0 %v1579, 96
      %v1890 = vpop.permute.xlu0 %1889
      %1891 = vrot.lane.b32.xlu0 %v1580, 96
      %v1892 = vpop.permute.xlu0 %1891
      %1921 = vrot.lane.b32.xlu0 %v1584, 32
      %v1922 = vpop.permute.xlu0 %1921
      %1923 = vrot.lane.b32.xlu0 %v1585, 32
      %v1924 = vpop.permute.xlu0 %1923
      %1925 = vrot.lane.b32.xlu0 %v1586, 32
      %v1926 = vpop.permute.xlu0 %1925
      %1955 = vrot.lane.b32.xlu0 %v1587, 64
      %v1956 = vpop.permute.xlu0 %1955
      %1957 = vrot.lane.b32.xlu0 %v1588, 64
      %v1958 = vpop.permute.xlu0 %1957
      %1959 = vrot.lane.b32.xlu0 %v1589, 64
      %v1960 = vpop.permute.xlu0 %1959
      %1961 = vrot.lane.b32.xlu0 %v1590, 64
      %v1962 = vpop.permute.xlu0 %1961
      %1963 = vrot.lane.b32.xlu0 %v1591, 64
      %v1964 = vpop.permute.xlu0 %1963
      %1965 = vrot.lane.b32.xlu0 %v1592, 64
      %v1966 = vpop.permute.xlu0 %1965
      %1967 = vrot.lane.b32.xlu0 %v1593, 64
      %v1968 = vpop.permute.xlu0 %1967
      %1969 = vrot.lane.b32.xlu0 %v1594, 64
      %v1970 = vpop.permute.xlu0 %1969
      %1971 = vrot.lane.b32.xlu0 %v1595, 64
      %v1972 = vpop.permute.xlu0 %1971
      %1973 = vrot.lane.b32.xlu0 %v1596, 64
      %v1974 = vpop.permute.xlu0 %1973
      %1975 = vrot.lane.b32.xlu0 %v1597, 64
      %v1976 = vpop.permute.xlu0 %1975
      %1977 = vrot.lane.b32.xlu0 %v1598, 64
      %v1978 = vpop.permute.xlu0 %1977
      %1979 = vrot.lane.b32.xlu0 %v1599, 64
      %v1980 = vpop.permute.xlu0 %1979
      %1981 = vrot.lane.b32.xlu0 %v1600, 64
      %v1982 = vpop.permute.xlu0 %1981
      %1983 = vrot.lane.b32.xlu0 %v1601, 64
      %v1984 = vpop.permute.xlu0 %1983
      %1985 = vrot.lane.b32.xlu0 %v1602, 64
      %v1986 = vpop.permute.xlu0 %1985
      %1987 = vrot.lane.b32.xlu0 %v1603, 64
      %v1988 = vpop.permute.xlu0 %1987
      %1989 = vrot.lane.b32.xlu0 %v1604, 64
      %v1990 = vpop.permute.xlu0 %1989
      %1991 = vrot.lane.b32.xlu0 %v1605, 64
      %v1992 = vpop.permute.xlu0 %1991
      %1993 = vrot.lane.b32.xlu0 %v1606, 64
      %v1994 = vpop.permute.xlu0 %1993
      %1995 = vrot.lane.b32.xlu0 %v1607, 64
      %v1996 = vpop.permute.xlu0 %1995
      %1997 = vrot.lane.b32.xlu0 %v1608, 64
      %v1998 = vpop.permute.xlu0 %1997
      %1999 = vrot.lane.b32.xlu0 %v1609, 64
      %v2000 = vpop.permute.xlu0 %1999
      %2001 = vrot.lane.b32.xlu0 %v1610, 64
      %v2002 = vpop.permute.xlu0 %2001
      %2003 = vrot.lane.b32.xlu0 %v1611, 64
      %v2004 = vpop.permute.xlu0 %2003
      %2033 = vrot.lane.b32.xlu0 %v1612, 96
      %v2034 = vpop.permute.xlu0 %2033
      %2035 = vrot.lane.b32.xlu0 %v1613, 96
      %v2036 = vpop.permute.xlu0 %2035
      %2037 = vrot.lane.b32.xlu0 %v1614, 96
      %v2038 = vpop.permute.xlu0 %2037
      %v2042 = vsel %vm1450, %v1481, %v1644
      %v2043 = vsel %vm1450, %v1482, %v1646
      %v2044 = vsel %vm1450, %v1483, %v1648
      %v2045 = vsel %vm1450, %v1484, %v1650
      %v2046 = vsel %vm1450, %v1485, %v1652
      %v2047 = vsel %vm1450, %v1486, %v1654
      %v2048 = vsel %vm1450, %v1487, %v1656
      %v2049 = vsel %vm1450, %v1488, %v1658
      %v2050 = vsel %vm1450, %v1489, %v1660
      %v2051 = vsel %vm1450, %v1490, %v1662
      %v2052 = vsel %vm1450, %v1491, %v1664
      %v2053 = vsel %vm1450, %v1492, %v1666
      %v2054 = vsel %vm1450, %v1493, %v1668
      %v2055 = vsel %vm1450, %v1494, %v1670
      %v2056 = vsel %vm1450, %v1495, %v1672
      %v2057 = vsel %vm1450, %v1496, %v1674
      %v2058 = vsel %vm1450, %v1497, %v1676
      %v2059 = vsel %vm1450, %v1498, %v1678
      %v2060 = vsel %vm1450, %v1499, %v1680
      %v2061 = vsel %vm1450, %v1500, %v1682
      %v2062 = vsel %vm1450, %v1501, %v1684
      %v2063 = vsel %vm1450, %v1502, %v1686
      %v2064 = vsel %vm1450, %v1503, %v1688
      %v2065 = vsel %vm1450, %v1504, %v1690
      %v2066 = vsel %vm1450, %v1505, %v1692
      %vm2067 = vcmask 523264
      %v2068 = vsel %vm2067, %v2042, %v1744
      %v2069 = vsel %vm2067, %v2043, %v1746
      %v2070 = vsel %vm2067, %v2044, %v1748
      %v2071 = vsel %vm2067, %v2045, %v1750
      %v2072 = vsel %vm2067, %v2046, %v1752
      %v2073 = vsel %vm2067, %v2047, %v1754
      %v2074 = vsel %vm2067, %v2048, %v1756
      %v2075 = vsel %vm2067, %v2049, %v1758
      %v2076 = vsel %vm2067, %v2050, %v1760
      %v2077 = vsel %vm2067, %v2051, %v1762
      %v2078 = vsel %vm2067, %v2052, %v1764
      %v2079 = vsel %vm2067, %v2053, %v1766
      %v2080 = vsel %vm2067, %v2054, %v1768
      %v2081 = vsel %vm2067, %v2055, %v1770
      %v2082 = vsel %vm2067, %v2056, %v1772
      %v2083 = vsel %vm2067, %v2057, %v1774
      %v2084 = vsel %vm2067, %v2058, %v1776
      %v2085 = vsel %vm2067, %v2059, %v1778
      %v2086 = vsel %vm2067, %v2060, %v1780
      %v2087 = vsel %vm2067, %v2061, %v1782
      %v2088 = vsel %vm2067, %v2062, %v1784
      %v2089 = vsel %vm2067, %v2063, %v1786
      %v2090 = vsel %vm2067, %v2064, %v1788
      %v2091 = vsel %vm2067, %v2065, %v1790
      %v2092 = vsel %vm2067, %v2066, %v1792
      %vm2093 = vcmask 785408
      %v2094 = vsel %vm2093, %v2068, %v1844
      %v2095 = vsel %vm2093, %v2069, %v1846
      %v2096 = vsel %vm2093, %v2070, %v1848
      %v2097 = vsel %vm2093, %v2071, %v1850
      %v2098 = vsel %vm2093, %v2072, %v1852
      %v2099 = vsel %vm2093, %v2073, %v1854
      %v2100 = vsel %vm2093, %v2074, %v1856
      %v2101 = vsel %vm2093, %v2075, %v1858
      %v2102 = vsel %vm2093, %v2076, %v1860
      %v2103 = vsel %vm2093, %v2077, %v1862
      %v2104 = vsel %vm2093, %v2078, %v1864
      %v2105 = vsel %vm2093, %v2079, %v1866
      %v2106 = vsel %vm2093, %v2080, %v1868
      %v2107 = vsel %vm2093, %v2081, %v1870
      %v2108 = vsel %vm2093, %v2082, %v1872
      %v2109 = vsel %vm2093, %v2083, %v1874
      %v2110 = vsel %vm2093, %v2084, %v1876
      %v2111 = vsel %vm2093, %v2085, %v1878
      %v2112 = vsel %vm2093, %v2086, %v1880
      %v2113 = vsel %vm2093, %v2087, %v1882
      %v2114 = vsel %vm2093, %v2088, %v1884
      %v2115 = vsel %vm2093, %v2089, %v1886
      %v2116 = vsel %vm2093, %v2090, %v1888
      %v2117 = vsel %vm2093, %v2091, %v1890
      %v2118 = vsel %vm2093, %v2092, %v1892
      %v2119 = vsel %vm1450, %v1581, %v1922
      %v2120 = vsel %vm1450, %v1582, %v1924
      %v2121 = vsel %vm1450, %v1583, %v1926
      %v2122 = vsel %vm2067, %v2044, %v1956
      %v2123 = vsel %vm2067, %v2045, %v1958
      %v2124 = vsel %vm2067, %v2046, %v1960
      %v2125 = vsel %vm2067, %v2047, %v1962
      %v2126 = vsel %vm2067, %v2048, %v1964
      %v2127 = vsel %vm2067, %v2049, %v1966
      %v2128 = vsel %vm2067, %v2050, %v1968
      %v2129 = vsel %vm2067, %v2051, %v1970
      %v2130 = vsel %vm2067, %v2052, %v1972
      %v2131 = vsel %vm2067, %v2053, %v1974
      %v2132 = vsel %vm2067, %v2054, %v1976
      %v2133 = vsel %vm2067, %v2055, %v1978
      %v2134 = vsel %vm2067, %v2056, %v1980
      %v2135 = vsel %vm2067, %v2057, %v1982
      %v2136 = vsel %vm2067, %v2058, %v1984
      %v2137 = vsel %vm2067, %v2059, %v1986
      %v2138 = vsel %vm2067, %v2060, %v1988
      %v2139 = vsel %vm2067, %v2061, %v1990
      %v2140 = vsel %vm2067, %v2062, %v1992
      %v2141 = vsel %vm2067, %v2063, %v1994
      %v2142 = vsel %vm2067, %v2064, %v1996
      %v2143 = vsel %vm2067, %v2065, %v1998
      %v2144 = vsel %vm2067, %v2119, %v2000
      %v2145 = vsel %vm2067, %v2120, %v2002
      %v2146 = vsel %vm2067, %v2121, %v2004
      %v2147 = vsel %vm2093, %v2122, %v1848
      %v2148 = vsel %vm2093, %v2123, %v1850
      %v2149 = vsel %vm2093, %v2124, %v1852
      %v2150 = vsel %vm2093, %v2125, %v1854
      %v2151 = vsel %vm2093, %v2126, %v1856
      %v2152 = vsel %vm2093, %v2127, %v1858
      %v2153 = vsel %vm2093, %v2128, %v1860
      %v2154 = vsel %vm2093, %v2129, %v1862
      %v2155 = vsel %vm2093, %v2130, %v1864
      %v2156 = vsel %vm2093, %v2131, %v1866
      %v2157 = vsel %vm2093, %v2132, %v1868
      %v2158 = vsel %vm2093, %v2133, %v1870
      %v2159 = vsel %vm2093, %v2134, %v1872
      %v2160 = vsel %vm2093, %v2135, %v1874
      %v2161 = vsel %vm2093, %v2136, %v1876
      %v2162 = vsel %vm2093, %v2137, %v1878
      %v2163 = vsel %vm2093, %v2138, %v1880
      %v2164 = vsel %vm2093, %v2139, %v1882
      %v2165 = vsel %vm2093, %v2140, %v1884
      %v2166 = vsel %vm2093, %v2141, %v1886
      %v2167 = vsel %vm2093, %v2142, %v1888
      %v2168 = vsel %vm2093, %v2143, %v1890
      %v2169 = vsel %vm2093, %v2144, %v2034
      %v2170 = vsel %vm2093, %v2145, %v2036
      %v2171 = vsel %vm2093, %v2146, %v2038
      %v2172 = vld [vmem:[%s3] sm:$0xff]
      %v2173 = vld [vmem:[%s3 + $0x8] sm:$0xff]
      %v2174 = vld [vmem:[%s3 + $0x10] sm:$0xff]
      %v2175 = vld [vmem:[%s3 + $0x18] sm:$0xff]
      %v2176 = vld [vmem:[%s3 + $0x20] sm:$0xff]
      %v2177 = vld [vmem:[%s3 + $0x28] sm:$0xff]
      %v2178 = vld [vmem:[%s3 + $0x30] sm:$0xff]
      %v2179 = vld [vmem:[%s3 + $0x38] sm:$0xff]
      %v2180 = vld [vmem:[%s3 + $0x40] sm:$0xff]
      %v2181 = vld [vmem:[%s3 + $0x48] sm:$0xff]
      %v2182 = vld [vmem:[%s3 + $0x50] sm:$0xff]
      %v2183 = vld [vmem:[%s3 + $0x58] sm:$0xff]
      %v2184 = vld [vmem:[%s3 + $0x60] sm:$0xff]
      %v2185 = vld [vmem:[%s3 + $0x68] sm:$0xff]
      %v2186 = vld [vmem:[%s3 + $0x70] sm:$0xff]
      %v2187 = vld [vmem:[%s3 + $0x78] sm:$0xff]
      %v2188 = vld [vmem:[%s3 + $0x80] sm:$0xff]
      %v2189 = vld [vmem:[%s3 + $0x88] sm:$0xff]
      %v2190 = vld [vmem:[%s3 + $0x90] sm:$0xff]
      %v2191 = vld [vmem:[%s3 + $0x98] sm:$0xff]
      %v2192 = vld [vmem:[%s3 + $0xa0] sm:$0xff]
      %v2193 = vld [vmem:[%s3 + $0xa8] sm:$0xff]
      %v2194 = vld [vmem:[%s3 + $0xb0] sm:$0xff]
      %v2195 = vld [vmem:[%s3 + $0xb8] sm:$0xff]
      %v2196 = vld [vmem:[%s3 + $0xc0] sm:$0xff]
      %v2197 = vld [vmem:[%s3 + $0xc8] sm:$0xff]
      %v2198 = vld [vmem:[%s3 + $0xd0] sm:$0xff]
      %v2199 = vld [vmem:[%s3 + $0xd8] sm:$0xff]
      %v2200 = vld [vmem:[%s3 + $0xe0] sm:$0xff]
      %v2201 = vld [vmem:[%s3 + $0xe8] sm:$0xff]
      %v2202 = vld [vmem:[%s3 + $0xf0] sm:$0xff]
      %v2203 = vld [vmem:[%s3 + $0xf8] sm:$0xff]
      %v2204 = vld [vmem:[%s3 + $0x100] sm:$0xff]
      %v2205 = vld [vmem:[%s3 + $0x108] sm:$0xff]
      %v2206 = vld [vmem:[%s3 + $0x110] sm:$0xff]
      %v2207 = vld [vmem:[%s3 + $0x118] sm:$0xff]
      %v2208 = vld [vmem:[%s4] sm:$0x1]
      %v2210 = vperm.slane %v2208, 0
      %v2213 = vsel %vm1450, %v1485, 0
      %v2216 = vsel %vm1450, %v1486, 0
      %v2219 = vsel %vm1450, %v1487, 0
      %v2222 = vsel %vm1450, %v1488, 0
      %v2225 = vsel %vm1450, %v1489, 0
      %v2228 = vsel %vm1450, %v1490, 0
      %v2231 = vsel %vm1450, %v1491, 0
      %v2234 = vsel %vm1450, %v1492, 0
      %v2237 = vsel %vm1450, %v1493, 0
      %v2240 = vsel %vm1450, %v1494, 0
      %v2243 = vsel %vm1450, %v1495, 0
      %v2246 = vsel %vm1450, %v1496, 0
      %v2249 = vsel %vm1450, %v1497, 0
      %v2252 = vsel %vm1450, %v1498, 0
      %v2255 = vsel %vm1450, %v1499, 0
      %v2258 = vsel %vm1450, %v1500, 0
      %v2261 = vsel %vm1450, %v1501, 0
      %v2264 = vsel %vm1450, %v1502, 0
      %v2267 = vsel %vm1450, %v1503, 0
      %v2270 = vsel %vm1450, %v1504, 0
      %v2273 = vsel %vm1450, %v1581, 0
      %v2276 = vsel %vm1450, %v1582, 0
      %v2279 = vsel %vm1450, %v1615, 0
      %v2282 = vsel %vm1450, %v1616, 0
      %v2285 = vsel %vm1450, %v1617, 0
      %v2287 = vand.u32 %v2187, 4294901760
      %2288 = vmatpush.msra.mxu0 %v2287
      %v2289 = vand.u32 %v2186, 4294901760
      %2290 = vmatpush.msra.mxu0 %v2289
      %v2291 = vand.u32 %v2185, 4294901760
      %2292 = vmatpush.msra.mxu0 %v2291
      %v2293 = vand.u32 %v2184, 4294901760
      %2294 = vmatpush.msra.mxu0 %v2293
      %v2295 = vand.u32 %v2183, 4294901760
      %2296 = vmatpush.msra.mxu0 %v2295
      %v2297 = vand.u32 %v2182, 4294901760
      %2298 = vmatpush.msra.mxu0 %v2297
      %v2299 = vand.u32 %v2181, 4294901760
      %2300 = vmatpush.msra.mxu0 %v2299
      %v2301 = vand.u32 %v2180, 4294901760
      %2302 = vmatpush.msra.mxu0 %v2301
      %v2303 = vand.u32 %v2179, 4294901760
      %2304 = vmatpush.msra.mxu0 %v2303
      %v2305 = vand.u32 %v2178, 4294901760
      %2306 = vmatpush.msra.mxu0 %v2305
      %v2307 = vand.u32 %v2177, 4294901760
      %2308 = vmatpush.msra.mxu0 %v2307
      %v2309 = vand.u32 %v2176, 4294901760
      %2310 = vmatpush.msra.mxu0 %v2309
      %v2311 = vand.u32 %v2175, 4294901760
      %2312 = vmatpush.msra.mxu0 %v2311
      %v2313 = vand.u32 %v2174, 4294901760
      %2314 = vmatpush.msra.mxu0 %v2313
      %v2315 = vand.u32 %v2173, 4294901760
      %2316 = vmatpush.msra.mxu0 %v2315
      %v2317 = vand.u32 %v2172, 4294901760
      %2318 = vmatpush.msra.mxu0 %v2317
      %v2319 = vand.u32 %v2094, 4294901760
      %v2320 = vsub.f32 %v2094, %v2319
      %v2321 = vand.u32 %v2320, 4294901760
      %v2322 = vsub.f32 %v2320, %v2321
      %v2323 = vand.u32 %v2322, 4294901760
      %2324 = vmatmul.f32.gmra.mxu0 %v2323
      %v2325 = vpop.f32.mrf.mxu0
      %v2326 = vadd.f32 %v2210, %v2325
      %v2327 = vand.u32 %v2095, 4294901760
      %v2328 = vsub.f32 %v2095, %v2327
      %v2329 = vand.u32 %v2328, 4294901760
      %v2330 = vsub.f32 %v2328, %v2329
      %v2331 = vand.u32 %v2330, 4294901760
      %2332 = vmatmul.f32.gmra.mxu0 %v2331
      %v2333 = vpop.f32.mrf.mxu0
      %v2334 = vadd.f32 %v2210, %v2333
      %v2335 = vand.u32 %v2096, 4294901760
      %v2336 = vsub.f32 %v2096, %v2335
      %v2337 = vand.u32 %v2336, 4294901760
      %v2338 = vsub.f32 %v2336, %v2337
      %v2339 = vand.u32 %v2338, 4294901760
      %2340 = vmatmul.f32.gmra.mxu0 %v2339
      %v2341 = vpop.f32.mrf.mxu0
      %v2342 = vadd.f32 %v2210, %v2341
      %v2343 = vand.u32 %v2097, 4294901760
      %v2344 = vsub.f32 %v2097, %v2343
      %v2345 = vand.u32 %v2344, 4294901760
      %v2346 = vsub.f32 %v2344, %v2345
      %v2347 = vand.u32 %v2346, 4294901760
      %2348 = vmatmul.f32.gmra.mxu0 %v2347
      %v2349 = vpop.f32.mrf.mxu0
      %v2350 = vadd.f32 %v2210, %v2349
      %v2351 = vand.u32 %v2098, 4294901760
      %v2352 = vsub.f32 %v2098, %v2351
      %v2353 = vand.u32 %v2352, 4294901760
      %v2354 = vsub.f32 %v2352, %v2353
      %v2355 = vand.u32 %v2354, 4294901760
      %2356 = vmatmul.f32.gmra.mxu0 %v2355
      %v2357 = vpop.f32.mrf.mxu0
      %v2358 = vadd.f32 %v2210, %v2357
      %v2359 = vand.u32 %v2099, 4294901760
      %v2360 = vsub.f32 %v2099, %v2359
      %v2361 = vand.u32 %v2360, 4294901760
      %v2362 = vsub.f32 %v2360, %v2361
      %v2363 = vand.u32 %v2362, 4294901760
      %2364 = vmatmul.f32.gmra.mxu0 %v2363
      %v2365 = vpop.f32.mrf.mxu0
      %v2366 = vadd.f32 %v2210, %v2365
      %v2367 = vand.u32 %v2100, 4294901760
      %v2368 = vsub.f32 %v2100, %v2367
      %v2369 = vand.u32 %v2368, 4294901760
      %v2370 = vsub.f32 %v2368, %v2369
      %v2371 = vand.u32 %v2370, 4294901760
      %2372 = vmatmul.f32.gmra.mxu0 %v2371
      %v2373 = vpop.f32.mrf.mxu0
      %v2374 = vadd.f32 %v2210, %v2373
      %v2375 = vand.u32 %v2101, 4294901760
      %v2376 = vsub.f32 %v2101, %v2375
      %v2377 = vand.u32 %v2376, 4294901760
      %v2378 = vsub.f32 %v2376, %v2377
      %v2379 = vand.u32 %v2378, 4294901760
      %2380 = vmatmul.f32.gmra.mxu0 %v2379
      %v2381 = vpop.f32.mrf.mxu0
      %v2382 = vadd.f32 %v2210, %v2381
      %v2383 = vand.u32 %v2102, 4294901760
      %v2384 = vsub.f32 %v2102, %v2383
      %v2385 = vand.u32 %v2384, 4294901760
      %v2386 = vsub.f32 %v2384, %v2385
      %v2387 = vand.u32 %v2386, 4294901760
      %2388 = vmatmul.f32.gmra.mxu0 %v2387
      %v2389 = vpop.f32.mrf.mxu0
      %v2390 = vadd.f32 %v2210, %v2389
      %v2391 = vand.u32 %v2103, 4294901760
      %v2392 = vsub.f32 %v2103, %v2391
      %v2393 = vand.u32 %v2392, 4294901760
      %v2394 = vsub.f32 %v2392, %v2393
      %v2395 = vand.u32 %v2394, 4294901760
      %2396 = vmatmul.f32.gmra.mxu0 %v2395
      %v2397 = vpop.f32.mrf.mxu0
      %v2398 = vadd.f32 %v2210, %v2397
      %v2399 = vand.u32 %v2104, 4294901760
      %v2400 = vsub.f32 %v2104, %v2399
      %v2401 = vand.u32 %v2400, 4294901760
      %v2402 = vsub.f32 %v2400, %v2401
      %v2403 = vand.u32 %v2402, 4294901760
      %2404 = vmatmul.f32.gmra.mxu0 %v2403
      %v2405 = vpop.f32.mrf.mxu0
      %v2406 = vadd.f32 %v2210, %v2405
      %v2407 = vand.u32 %v2105, 4294901760
      %v2408 = vsub.f32 %v2105, %v2407
      %v2409 = vand.u32 %v2408, 4294901760
      %v2410 = vsub.f32 %v2408, %v2409
      %v2411 = vand.u32 %v2410, 4294901760
      %2412 = vmatmul.f32.gmra.mxu0 %v2411
      %v2413 = vpop.f32.mrf.mxu0
      %v2414 = vadd.f32 %v2210, %v2413
      %v2415 = vand.u32 %v2106, 4294901760
      %v2416 = vsub.f32 %v2106, %v2415
      %v2417 = vand.u32 %v2416, 4294901760
      %v2418 = vsub.f32 %v2416, %v2417
      %v2419 = vand.u32 %v2418, 4294901760
      %2420 = vmatmul.f32.gmra.mxu0 %v2419
      %v2421 = vpop.f32.mrf.mxu0
      %v2422 = vadd.f32 %v2210, %v2421
      %v2423 = vand.u32 %v2107, 4294901760
      %v2424 = vsub.f32 %v2107, %v2423
      %v2425 = vand.u32 %v2424, 4294901760
      %v2426 = vsub.f32 %v2424, %v2425
      %v2427 = vand.u32 %v2426, 4294901760
      %2428 = vmatmul.f32.gmra.mxu0 %v2427
      %v2429 = vpop.f32.mrf.mxu0
      %v2430 = vadd.f32 %v2210, %v2429
      %v2431 = vand.u32 %v2108, 4294901760
      %v2432 = vsub.f32 %v2108, %v2431
      %v2433 = vand.u32 %v2432, 4294901760
      %v2434 = vsub.f32 %v2432, %v2433
      %v2435 = vand.u32 %v2434, 4294901760
      %2436 = vmatmul.f32.gmra.mxu0 %v2435
      %v2437 = vpop.f32.mrf.mxu0
      %v2438 = vadd.f32 %v2210, %v2437
      %v2439 = vand.u32 %v2109, 4294901760
      %v2440 = vsub.f32 %v2109, %v2439
      %v2441 = vand.u32 %v2440, 4294901760
      %v2442 = vsub.f32 %v2440, %v2441
      %v2443 = vand.u32 %v2442, 4294901760
      %2444 = vmatmul.f32.gmra.mxu0 %v2443
      %v2445 = vpop.f32.mrf.mxu0
      %v2446 = vadd.f32 %v2210, %v2445
      %v2447 = vand.u32 %v2110, 4294901760
      %v2448 = vsub.f32 %v2110, %v2447
      %v2449 = vand.u32 %v2448, 4294901760
      %v2450 = vsub.f32 %v2448, %v2449
      %v2451 = vand.u32 %v2450, 4294901760
      %2452 = vmatmul.f32.gmra.mxu0 %v2451
      %v2453 = vpop.f32.mrf.mxu0
      %v2454 = vadd.f32 %v2210, %v2453
      %v2455 = vand.u32 %v2111, 4294901760
      %v2456 = vsub.f32 %v2111, %v2455
      %v2457 = vand.u32 %v2456, 4294901760
      %v2458 = vsub.f32 %v2456, %v2457
      %v2459 = vand.u32 %v2458, 4294901760
      %2460 = vmatmul.f32.gmra.mxu0 %v2459
      %v2461 = vpop.f32.mrf.mxu0
      %v2462 = vadd.f32 %v2210, %v2461
      %v2463 = vand.u32 %v2112, 4294901760
      %v2464 = vsub.f32 %v2112, %v2463
      %v2465 = vand.u32 %v2464, 4294901760
      %v2466 = vsub.f32 %v2464, %v2465
      %v2467 = vand.u32 %v2466, 4294901760
      %2468 = vmatmul.f32.gmra.mxu0 %v2467
      %v2469 = vpop.f32.mrf.mxu0
      %v2470 = vadd.f32 %v2210, %v2469
      %v2471 = vand.u32 %v2113, 4294901760
      %v2472 = vsub.f32 %v2113, %v2471
      %v2473 = vand.u32 %v2472, 4294901760
      %v2474 = vsub.f32 %v2472, %v2473
      %v2475 = vand.u32 %v2474, 4294901760
      %2476 = vmatmul.f32.gmra.mxu0 %v2475
      %v2477 = vpop.f32.mrf.mxu0
      %v2478 = vadd.f32 %v2210, %v2477
      %v2479 = vand.u32 %v2114, 4294901760
      %v2480 = vsub.f32 %v2114, %v2479
      %v2481 = vand.u32 %v2480, 4294901760
      %v2482 = vsub.f32 %v2480, %v2481
      %v2483 = vand.u32 %v2482, 4294901760
      %2484 = vmatmul.f32.gmra.mxu0 %v2483
      %v2485 = vpop.f32.mrf.mxu0
      %v2486 = vadd.f32 %v2210, %v2485
      %v2487 = vand.u32 %v2115, 4294901760
      %v2488 = vsub.f32 %v2115, %v2487
      %v2489 = vand.u32 %v2488, 4294901760
      %v2490 = vsub.f32 %v2488, %v2489
      %v2491 = vand.u32 %v2490, 4294901760
      %2492 = vmatmul.f32.gmra.mxu0 %v2491
      %v2493 = vpop.f32.mrf.mxu0
      %v2494 = vadd.f32 %v2210, %v2493
      %v2495 = vand.u32 %v2116, 4294901760
      %v2496 = vsub.f32 %v2116, %v2495
      %v2497 = vand.u32 %v2496, 4294901760
      %v2498 = vsub.f32 %v2496, %v2497
      %v2499 = vand.u32 %v2498, 4294901760
      %2500 = vmatmul.f32.gmra.mxu0 %v2499
      %v2501 = vpop.f32.mrf.mxu0
      %v2502 = vadd.f32 %v2210, %v2501
      %v2503 = vand.u32 %v2117, 4294901760
      %v2504 = vsub.f32 %v2117, %v2503
      %v2505 = vand.u32 %v2504, 4294901760
      %v2506 = vsub.f32 %v2504, %v2505
      %v2507 = vand.u32 %v2506, 4294901760
      %2508 = vmatmul.f32.gmra.mxu0 %v2507
      %v2509 = vpop.f32.mrf.mxu0
      %v2510 = vadd.f32 %v2210, %v2509
      %v2511 = vand.u32 %v2118, 4294901760
      %v2512 = vsub.f32 %v2118, %v2511
      %v2513 = vand.u32 %v2512, 4294901760
      %v2514 = vsub.f32 %v2512, %v2513
      %v2515 = vand.u32 %v2514, 4294901760
      %2516 = vmatmul.f32.gmra.mxu0 %v2515
      %v2517 = vpop.f32.mrf.mxu0
      %v2518 = vadd.f32 %v2210, %v2517
      %2519 = vdwg.mxu0
      %v2520 = vand.u32 %v2187, 4294901760
      %v2521 = vsub.f32 %v2187, %v2520
      %v2522 = vand.u32 %v2521, 4294901760
      %v2523 = vsub.f32 %v2521, %v2522
      %v2524 = vand.u32 %v2523, 4294901760
      %2525 = vmatpush.msra.mxu0 %v2524
      %v2526 = vand.u32 %v2186, 4294901760
      %v2527 = vsub.f32 %v2186, %v2526
      %v2528 = vand.u32 %v2527, 4294901760
      %v2529 = vsub.f32 %v2527, %v2528
      %v2530 = vand.u32 %v2529, 4294901760
      %2531 = vmatpush.msra.mxu0 %v2530
      %v2532 = vand.u32 %v2185, 4294901760
      %v2533 = vsub.f32 %v2185, %v2532
      %v2534 = vand.u32 %v2533, 4294901760
      %v2535 = vsub.f32 %v2533, %v2534
      %v2536 = vand.u32 %v2535, 4294901760
      %2537 = vmatpush.msra.mxu0 %v2536
      %v2538 = vand.u32 %v2184, 4294901760
      %v2539 = vsub.f32 %v2184, %v2538
      %v2540 = vand.u32 %v2539, 4294901760
      %v2541 = vsub.f32 %v2539, %v2540
      %v2542 = vand.u32 %v2541, 4294901760
      %2543 = vmatpush.msra.mxu0 %v2542
      %v2544 = vand.u32 %v2183, 4294901760
      %v2545 = vsub.f32 %v2183, %v2544
      %v2546 = vand.u32 %v2545, 4294901760
      %v2547 = vsub.f32 %v2545, %v2546
      %v2548 = vand.u32 %v2547, 4294901760
      %2549 = vmatpush.msra.mxu0 %v2548
      %v2550 = vand.u32 %v2182, 4294901760
      %v2551 = vsub.f32 %v2182, %v2550
      %v2552 = vand.u32 %v2551, 4294901760
      %v2553 = vsub.f32 %v2551, %v2552
      %v2554 = vand.u32 %v2553, 4294901760
      %2555 = vmatpush.msra.mxu0 %v2554
      %v2556 = vand.u32 %v2181, 4294901760
      %v2557 = vsub.f32 %v2181, %v2556
      %v2558 = vand.u32 %v2557, 4294901760
      %v2559 = vsub.f32 %v2557, %v2558
      %v2560 = vand.u32 %v2559, 4294901760
      %2561 = vmatpush.msra.mxu0 %v2560
      %v2562 = vand.u32 %v2180, 4294901760
      %v2563 = vsub.f32 %v2180, %v2562
      %v2564 = vand.u32 %v2563, 4294901760
      %v2565 = vsub.f32 %v2563, %v2564
      %v2566 = vand.u32 %v2565, 4294901760
      %2567 = vmatpush.msra.mxu0 %v2566
      %v2568 = vand.u32 %v2179, 4294901760
      %v2569 = vsub.f32 %v2179, %v2568
      %v2570 = vand.u32 %v2569, 4294901760
      %v2571 = vsub.f32 %v2569, %v2570
      %v2572 = vand.u32 %v2571, 4294901760
      %2573 = vmatpush.msra.mxu0 %v2572
      %v2574 = vand.u32 %v2178, 4294901760
      %v2575 = vsub.f32 %v2178, %v2574
      %v2576 = vand.u32 %v2575, 4294901760
      %v2577 = vsub.f32 %v2575, %v2576
      %v2578 = vand.u32 %v2577, 4294901760
      %2579 = vmatpush.msra.mxu0 %v2578
      %v2580 = vand.u32 %v2177, 4294901760
      %v2581 = vsub.f32 %v2177, %v2580
      %v2582 = vand.u32 %v2581, 4294901760
      %v2583 = vsub.f32 %v2581, %v2582
      %v2584 = vand.u32 %v2583, 4294901760
      %2585 = vmatpush.msra.mxu0 %v2584
      %v2586 = vand.u32 %v2176, 4294901760
      %v2587 = vsub.f32 %v2176, %v2586
      %v2588 = vand.u32 %v2587, 4294901760
      %v2589 = vsub.f32 %v2587, %v2588
      %v2590 = vand.u32 %v2589, 4294901760
      %2591 = vmatpush.msra.mxu0 %v2590
      %v2592 = vand.u32 %v2175, 4294901760
      %v2593 = vsub.f32 %v2175, %v2592
      %v2594 = vand.u32 %v2593, 4294901760
      %v2595 = vsub.f32 %v2593, %v2594
      %v2596 = vand.u32 %v2595, 4294901760
      %2597 = vmatpush.msra.mxu0 %v2596
      %v2598 = vand.u32 %v2174, 4294901760
      %v2599 = vsub.f32 %v2174, %v2598
      %v2600 = vand.u32 %v2599, 4294901760
      %v2601 = vsub.f32 %v2599, %v2600
      %v2602 = vand.u32 %v2601, 4294901760
      %2603 = vmatpush.msra.mxu0 %v2602
      %v2604 = vand.u32 %v2173, 4294901760
      %v2605 = vsub.f32 %v2173, %v2604
      %v2606 = vand.u32 %v2605, 4294901760
      %v2607 = vsub.f32 %v2605, %v2606
      %v2608 = vand.u32 %v2607, 4294901760
      %2609 = vmatpush.msra.mxu0 %v2608
      %v2610 = vand.u32 %v2172, 4294901760
      %v2611 = vsub.f32 %v2172, %v2610
      %v2612 = vand.u32 %v2611, 4294901760
      %v2613 = vsub.f32 %v2611, %v2612
      %v2614 = vand.u32 %v2613, 4294901760
      %2615 = vmatpush.msra.mxu0 %v2614
      %v2616 = vand.u32 %v2094, 4294901760
      %2617 = vmatmul.f32.gmra.mxu0 %v2616
      %v2618 = vpop.f32.mrf.mxu0
      %v2619 = vadd.f32 %v2326, %v2618
      %v2620 = vand.u32 %v2095, 4294901760
      %2621 = vmatmul.f32.gmra.mxu0 %v2620
      %v2622 = vpop.f32.mrf.mxu0
      %v2623 = vadd.f32 %v2334, %v2622
      %v2624 = vand.u32 %v2096, 4294901760
      %2625 = vmatmul.f32.gmra.mxu0 %v2624
      %v2626 = vpop.f32.mrf.mxu0
      %v2627 = vadd.f32 %v2342, %v2626
      %v2628 = vand.u32 %v2097, 4294901760
      %2629 = vmatmul.f32.gmra.mxu0 %v2628
      %v2630 = vpop.f32.mrf.mxu0
      %v2631 = vadd.f32 %v2350, %v2630
      %v2632 = vand.u32 %v2098, 4294901760
      %2633 = vmatmul.f32.gmra.mxu0 %v2632
      %v2634 = vpop.f32.mrf.mxu0
      %v2635 = vadd.f32 %v2358, %v2634
      %v2636 = vand.u32 %v2099, 4294901760
      %2637 = vmatmul.f32.gmra.mxu0 %v2636
      %v2638 = vpop.f32.mrf.mxu0
      %v2639 = vadd.f32 %v2366, %v2638
      %v2640 = vand.u32 %v2100, 4294901760
      %2641 = vmatmul.f32.gmra.mxu0 %v2640
      %v2642 = vpop.f32.mrf.mxu0
      %v2643 = vadd.f32 %v2374, %v2642
      %v2644 = vand.u32 %v2101, 4294901760
      %2645 = vmatmul.f32.gmra.mxu0 %v2644
      %v2646 = vpop.f32.mrf.mxu0
      %v2647 = vadd.f32 %v2382, %v2646
      %v2648 = vand.u32 %v2102, 4294901760
      %2649 = vmatmul.f32.gmra.mxu0 %v2648
      %v2650 = vpop.f32.mrf.mxu0
      %v2651 = vadd.f32 %v2390, %v2650
      %v2652 = vand.u32 %v2103, 4294901760
      %2653 = vmatmul.f32.gmra.mxu0 %v2652
      %v2654 = vpop.f32.mrf.mxu0
      %v2655 = vadd.f32 %v2398, %v2654
      %v2656 = vand.u32 %v2104, 4294901760
      %2657 = vmatmul.f32.gmra.mxu0 %v2656
      %v2658 = vpop.f32.mrf.mxu0
      %v2659 = vadd.f32 %v2406, %v2658
      %v2660 = vand.u32 %v2105, 4294901760
      %2661 = vmatmul.f32.gmra.mxu0 %v2660
      %v2662 = vpop.f32.mrf.mxu0
      %v2663 = vadd.f32 %v2414, %v2662
      %v2664 = vand.u32 %v2106, 4294901760
      %2665 = vmatmul.f32.gmra.mxu0 %v2664
      %v2666 = vpop.f32.mrf.mxu0
      %v2667 = vadd.f32 %v2422, %v2666
      %v2668 = vand.u32 %v2107, 4294901760
      %2669 = vmatmul.f32.gmra.mxu0 %v2668
      %v2670 = vpop.f32.mrf.mxu0
      %v2671 = vadd.f32 %v2430, %v2670
      %v2672 = vand.u32 %v2108, 4294901760
      %2673 = vmatmul.f32.gmra.mxu0 %v2672
      %v2674 = vpop.f32.mrf.mxu0
      %v2675 = vadd.f32 %v2438, %v2674
      %v2676 = vand.u32 %v2109, 4294901760
      %2677 = vmatmul.f32.gmra.mxu0 %v2676
      %v2678 = vpop.f32.mrf.mxu0
      %v2679 = vadd.f32 %v2446, %v2678
      %v2680 = vand.u32 %v2110, 4294901760
      %2681 = vmatmul.f32.gmra.mxu0 %v2680
      %v2682 = vpop.f32.mrf.mxu0
      %v2683 = vadd.f32 %v2454, %v2682
      %v2684 = vand.u32 %v2111, 4294901760
      %2685 = vmatmul.f32.gmra.mxu0 %v2684
      %v2686 = vpop.f32.mrf.mxu0
      %v2687 = vadd.f32 %v2462, %v2686
      %v2688 = vand.u32 %v2112, 4294901760
      %2689 = vmatmul.f32.gmra.mxu0 %v2688
      %v2690 = vpop.f32.mrf.mxu0
      %v2691 = vadd.f32 %v2470, %v2690
      %v2692 = vand.u32 %v2113, 4294901760
      %2693 = vmatmul.f32.gmra.mxu0 %v2692
      %v2694 = vpop.f32.mrf.mxu0
      %v2695 = vadd.f32 %v2478, %v2694
      %v2696 = vand.u32 %v2114, 4294901760
      %2697 = vmatmul.f32.gmra.mxu0 %v2696
      %v2698 = vpop.f32.mrf.mxu0
      %v2699 = vadd.f32 %v2486, %v2698
      %v2700 = vand.u32 %v2115, 4294901760
      %2701 = vmatmul.f32.gmra.mxu0 %v2700
      %v2702 = vpop.f32.mrf.mxu0
      %v2703 = vadd.f32 %v2494, %v2702
      %v2704 = vand.u32 %v2116, 4294901760
      %2705 = vmatmul.f32.gmra.mxu0 %v2704
      %v2706 = vpop.f32.mrf.mxu0
      %v2707 = vadd.f32 %v2502, %v2706
      %v2708 = vand.u32 %v2117, 4294901760
      %2709 = vmatmul.f32.gmra.mxu0 %v2708
      %v2710 = vpop.f32.mrf.mxu0
      %v2711 = vadd.f32 %v2510, %v2710
      %v2712 = vand.u32 %v2118, 4294901760
      %2713 = vmatmul.f32.gmra.mxu0 %v2712
      %v2714 = vpop.f32.mrf.mxu0
      %v2715 = vadd.f32 %v2518, %v2714
      %2716 = vdwg.mxu0
      %v2717 = vand.u32 %v2187, 4294901760
      %v2718 = vsub.f32 %v2187, %v2717
      %2719 = vmatpush.msra.mxu0 %v2718
      %v2720 = vand.u32 %v2186, 4294901760
      %v2721 = vsub.f32 %v2186, %v2720
      %2722 = vmatpush.msra.mxu0 %v2721
      %v2723 = vand.u32 %v2185, 4294901760
      %v2724 = vsub.f32 %v2185, %v2723
      %2725 = vmatpush.msra.mxu0 %v2724
      %v2726 = vand.u32 %v2184, 4294901760
      %v2727 = vsub.f32 %v2184, %v2726
      %2728 = vmatpush.msra.mxu0 %v2727
      %v2729 = vand.u32 %v2183, 4294901760
      %v2730 = vsub.f32 %v2183, %v2729
      %2731 = vmatpush.msra.mxu0 %v2730
      %v2732 = vand.u32 %v2182, 4294901760
      %v2733 = vsub.f32 %v2182, %v2732
      %2734 = vmatpush.msra.mxu0 %v2733
      %v2735 = vand.u32 %v2181, 4294901760
      %v2736 = vsub.f32 %v2181, %v2735
      %2737 = vmatpush.msra.mxu0 %v2736
      %v2738 = vand.u32 %v2180, 4294901760
      %v2739 = vsub.f32 %v2180, %v2738
      %2740 = vmatpush.msra.mxu0 %v2739
      %v2741 = vand.u32 %v2179, 4294901760
      %v2742 = vsub.f32 %v2179, %v2741
      %2743 = vmatpush.msra.mxu0 %v2742
      %v2744 = vand.u32 %v2178, 4294901760
      %v2745 = vsub.f32 %v2178, %v2744
      %2746 = vmatpush.msra.mxu0 %v2745
      %v2747 = vand.u32 %v2177, 4294901760
      %v2748 = vsub.f32 %v2177, %v2747
      %2749 = vmatpush.msra.mxu0 %v2748
      %v2750 = vand.u32 %v2176, 4294901760
      %v2751 = vsub.f32 %v2176, %v2750
      %2752 = vmatpush.msra.mxu0 %v2751
      %v2753 = vand.u32 %v2175, 4294901760
      %v2754 = vsub.f32 %v2175, %v2753
      %2755 = vmatpush.msra.mxu0 %v2754
      %v2756 = vand.u32 %v2174, 4294901760
      %v2757 = vsub.f32 %v2174, %v2756
      %2758 = vmatpush.msra.mxu0 %v2757
      %v2759 = vand.u32 %v2173, 4294901760
      %v2760 = vsub.f32 %v2173, %v2759
      %2761 = vmatpush.msra.mxu0 %v2760
      %v2762 = vand.u32 %v2172, 4294901760
      %v2763 = vsub.f32 %v2172, %v2762
      %2764 = vmatpush.msra.mxu0 %v2763
      %v2765 = vand.u32 %v2094, 4294901760
      %v2766 = vsub.f32 %v2094, %v2765
      %2767 = vmatmul.f32.gmra.mxu0 %v2766
      %v2768 = vpop.f32.mrf.mxu0
      %v2769 = vadd.f32 %v2619, %v2768
      %v2770 = vand.u32 %v2095, 4294901760
      %v2771 = vsub.f32 %v2095, %v2770
      %2772 = vmatmul.f32.gmra.mxu0 %v2771
      %v2773 = vpop.f32.mrf.mxu0
      %v2774 = vadd.f32 %v2623, %v2773
      %v2775 = vand.u32 %v2096, 4294901760
      %v2776 = vsub.f32 %v2096, %v2775
      %2777 = vmatmul.f32.gmra.mxu0 %v2776
      %v2778 = vpop.f32.mrf.mxu0
      %v2779 = vadd.f32 %v2627, %v2778
      %v2780 = vand.u32 %v2097, 4294901760
      %v2781 = vsub.f32 %v2097, %v2780
      %2782 = vmatmul.f32.gmra.mxu0 %v2781
      %v2783 = vpop.f32.mrf.mxu0
      %v2784 = vadd.f32 %v2631, %v2783
      %v2785 = vand.u32 %v2098, 4294901760
      %v2786 = vsub.f32 %v2098, %v2785
      %2787 = vmatmul.f32.gmra.mxu0 %v2786
      %v2788 = vpop.f32.mrf.mxu0
      %v2789 = vadd.f32 %v2635, %v2788
      %v2790 = vand.u32 %v2099, 4294901760
      %v2791 = vsub.f32 %v2099, %v2790
      %2792 = vmatmul.f32.gmra.mxu0 %v2791
      %v2793 = vpop.f32.mrf.mxu0
      %v2794 = vadd.f32 %v2639, %v2793
      %v2795 = vand.u32 %v2100, 4294901760
      %v2796 = vsub.f32 %v2100, %v2795
      %2797 = vmatmul.f32.gmra.mxu0 %v2796
      %v2798 = vpop.f32.mrf.mxu0
      %v2799 = vadd.f32 %v2643, %v2798
      %v2800 = vand.u32 %v2101, 4294901760
      %v2801 = vsub.f32 %v2101, %v2800
      %2802 = vmatmul.f32.gmra.mxu0 %v2801
      %v2803 = vpop.f32.mrf.mxu0
      %v2804 = vadd.f32 %v2647, %v2803
      %v2805 = vand.u32 %v2102, 4294901760
      %v2806 = vsub.f32 %v2102, %v2805
      %2807 = vmatmul.f32.gmra.mxu0 %v2806
      %v2808 = vpop.f32.mrf.mxu0
      %v2809 = vadd.f32 %v2651, %v2808
      %v2810 = vand.u32 %v2103, 4294901760
      %v2811 = vsub.f32 %v2103, %v2810
      %2812 = vmatmul.f32.gmra.mxu0 %v2811
      %v2813 = vpop.f32.mrf.mxu0
      %v2814 = vadd.f32 %v2655, %v2813
      %v2815 = vand.u32 %v2104, 4294901760
      %v2816 = vsub.f32 %v2104, %v2815
      %2817 = vmatmul.f32.gmra.mxu0 %v2816
      %v2818 = vpop.f32.mrf.mxu0
      %v2819 = vadd.f32 %v2659, %v2818
      %v2820 = vand.u32 %v2105, 4294901760
      %v2821 = vsub.f32 %v2105, %v2820
      %2822 = vmatmul.f32.gmra.mxu0 %v2821
      %v2823 = vpop.f32.mrf.mxu0
      %v2824 = vadd.f32 %v2663, %v2823
      %v2825 = vand.u32 %v2106, 4294901760
      %v2826 = vsub.f32 %v2106, %v2825
      %2827 = vmatmul.f32.gmra.mxu0 %v2826
      %v2828 = vpop.f32.mrf.mxu0
      %v2829 = vadd.f32 %v2667, %v2828
      %v2830 = vand.u32 %v2107, 4294901760
      %v2831 = vsub.f32 %v2107, %v2830
      %2832 = vmatmul.f32.gmra.mxu0 %v2831
      %v2833 = vpop.f32.mrf.mxu0
      %v2834 = vadd.f32 %v2671, %v2833
      %v2835 = vand.u32 %v2108, 4294901760
      %v2836 = vsub.f32 %v2108, %v2835
      %2837 = vmatmul.f32.gmra.mxu0 %v2836
      %v2838 = vpop.f32.mrf.mxu0
      %v2839 = vadd.f32 %v2675, %v2838
      %v2840 = vand.u32 %v2109, 4294901760
      %v2841 = vsub.f32 %v2109, %v2840
      %2842 = vmatmul.f32.gmra.mxu0 %v2841
      %v2843 = vpop.f32.mrf.mxu0
      %v2844 = vadd.f32 %v2679, %v2843
      %v2845 = vand.u32 %v2110, 4294901760
      %v2846 = vsub.f32 %v2110, %v2845
      %2847 = vmatmul.f32.gmra.mxu0 %v2846
      %v2848 = vpop.f32.mrf.mxu0
      %v2849 = vadd.f32 %v2683, %v2848
      %v2850 = vand.u32 %v2111, 4294901760
      %v2851 = vsub.f32 %v2111, %v2850
      %2852 = vmatmul.f32.gmra.mxu0 %v2851
      %v2853 = vpop.f32.mrf.mxu0
      %v2854 = vadd.f32 %v2687, %v2853
      %v2855 = vand.u32 %v2112, 4294901760
      %v2856 = vsub.f32 %v2112, %v2855
      %2857 = vmatmul.f32.gmra.mxu0 %v2856
      %v2858 = vpop.f32.mrf.mxu0
      %v2859 = vadd.f32 %v2691, %v2858
      %v2860 = vand.u32 %v2113, 4294901760
      %v2861 = vsub.f32 %v2113, %v2860
      %2862 = vmatmul.f32.gmra.mxu0 %v2861
      %v2863 = vpop.f32.mrf.mxu0
      %v2864 = vadd.f32 %v2695, %v2863
      %v2865 = vand.u32 %v2114, 4294901760
      %v2866 = vsub.f32 %v2114, %v2865
      %2867 = vmatmul.f32.gmra.mxu0 %v2866
      %v2868 = vpop.f32.mrf.mxu0
      %v2869 = vadd.f32 %v2699, %v2868
      %v2870 = vand.u32 %v2115, 4294901760
      %v2871 = vsub.f32 %v2115, %v2870
      %2872 = vmatmul.f32.gmra.mxu0 %v2871
      %v2873 = vpop.f32.mrf.mxu0
      %v2874 = vadd.f32 %v2703, %v2873
      %v2875 = vand.u32 %v2116, 4294901760
      %v2876 = vsub.f32 %v2116, %v2875
      %2877 = vmatmul.f32.gmra.mxu0 %v2876
      %v2878 = vpop.f32.mrf.mxu0
      %v2879 = vadd.f32 %v2707, %v2878
      %v2880 = vand.u32 %v2117, 4294901760
      %v2881 = vsub.f32 %v2117, %v2880
      %2882 = vmatmul.f32.gmra.mxu0 %v2881
      %v2883 = vpop.f32.mrf.mxu0
      %v2884 = vadd.f32 %v2711, %v2883
      %v2885 = vand.u32 %v2118, 4294901760
      %v2886 = vsub.f32 %v2118, %v2885
      %2887 = vmatmul.f32.gmra.mxu0 %v2886
      %v2888 = vpop.f32.mrf.mxu0
      %v2889 = vadd.f32 %v2715, %v2888
      %2890 = vdwg.mxu0
      %v2891 = vand.u32 %v2187, 4294901760
      %2892 = vmatpush.msra.mxu0 %v2891
      %v2893 = vand.u32 %v2186, 4294901760
      %2894 = vmatpush.msra.mxu0 %v2893
      %v2895 = vand.u32 %v2185, 4294901760
      %2896 = vmatpush.msra.mxu0 %v2895
      %v2897 = vand.u32 %v2184, 4294901760
      %2898 = vmatpush.msra.mxu0 %v2897
      %v2899 = vand.u32 %v2183, 4294901760
      %2900 = vmatpush.msra.mxu0 %v2899
      %v2901 = vand.u32 %v2182, 4294901760
      %2902 = vmatpush.msra.mxu0 %v2901
      %v2903 = vand.u32 %v2181, 4294901760
      %2904 = vmatpush.msra.mxu0 %v2903
      %v2905 = vand.u32 %v2180, 4294901760
      %2906 = vmatpush.msra.mxu0 %v2905
      %v2907 = vand.u32 %v2179, 4294901760
      %2908 = vmatpush.msra.mxu0 %v2907
      %v2909 = vand.u32 %v2178, 4294901760
      %2910 = vmatpush.msra.mxu0 %v2909
      %v2911 = vand.u32 %v2177, 4294901760
      %2912 = vmatpush.msra.mxu0 %v2911
      %v2913 = vand.u32 %v2176, 4294901760
      %2914 = vmatpush.msra.mxu0 %v2913
      %v2915 = vand.u32 %v2175, 4294901760
      %2916 = vmatpush.msra.mxu0 %v2915
      %v2917 = vand.u32 %v2174, 4294901760
      %2918 = vmatpush.msra.mxu0 %v2917
      %v2919 = vand.u32 %v2173, 4294901760
      %2920 = vmatpush.msra.mxu0 %v2919
      %v2921 = vand.u32 %v2172, 4294901760
      %2922 = vmatpush.msra.mxu0 %v2921
      %v2923 = vand.u32 %v2094, 4294901760
      %v2924 = vsub.f32 %v2094, %v2923
      %v2925 = vand.u32 %v2924, 4294901760
      %2926 = vmatmul.f32.gmra.mxu0 %v2925
      %v2927 = vpop.f32.mrf.mxu0
      %v2928 = vadd.f32 %v2769, %v2927
      %v2929 = vand.u32 %v2095, 4294901760
      %v2930 = vsub.f32 %v2095, %v2929
      %v2931 = vand.u32 %v2930, 4294901760
      %2932 = vmatmul.f32.gmra.mxu0 %v2931
      %v2933 = vpop.f32.mrf.mxu0
      %v2934 = vadd.f32 %v2774, %v2933
      %v2935 = vand.u32 %v2096, 4294901760
      %v2936 = vsub.f32 %v2096, %v2935
      %v2937 = vand.u32 %v2936, 4294901760
      %2938 = vmatmul.f32.gmra.mxu0 %v2937
      %v2939 = vpop.f32.mrf.mxu0
      %v2940 = vadd.f32 %v2779, %v2939
      %v2941 = vand.u32 %v2097, 4294901760
      %v2942 = vsub.f32 %v2097, %v2941
      %v2943 = vand.u32 %v2942, 4294901760
      %2944 = vmatmul.f32.gmra.mxu0 %v2943
      %v2945 = vpop.f32.mrf.mxu0
      %v2946 = vadd.f32 %v2784, %v2945
      %v2947 = vand.u32 %v2098, 4294901760
      %v2948 = vsub.f32 %v2098, %v2947
      %v2949 = vand.u32 %v2948, 4294901760
      %2950 = vmatmul.f32.gmra.mxu0 %v2949
      %v2951 = vpop.f32.mrf.mxu0
      %v2952 = vadd.f32 %v2789, %v2951
      %v2953 = vand.u32 %v2099, 4294901760
      %v2954 = vsub.f32 %v2099, %v2953
      %v2955 = vand.u32 %v2954, 4294901760
      %2956 = vmatmul.f32.gmra.mxu0 %v2955
      %v2957 = vpop.f32.mrf.mxu0
      %v2958 = vadd.f32 %v2794, %v2957
      %v2959 = vand.u32 %v2100, 4294901760
      %v2960 = vsub.f32 %v2100, %v2959
      %v2961 = vand.u32 %v2960, 4294901760
      %2962 = vmatmul.f32.gmra.mxu0 %v2961
      %v2963 = vpop.f32.mrf.mxu0
      %v2964 = vadd.f32 %v2799, %v2963
      %v2965 = vand.u32 %v2101, 4294901760
      %v2966 = vsub.f32 %v2101, %v2965
      %v2967 = vand.u32 %v2966, 4294901760
      %2968 = vmatmul.f32.gmra.mxu0 %v2967
      %v2969 = vpop.f32.mrf.mxu0
      %v2970 = vadd.f32 %v2804, %v2969
      %v2971 = vand.u32 %v2102, 4294901760
      %v2972 = vsub.f32 %v2102, %v2971
      %v2973 = vand.u32 %v2972, 4294901760
      %2974 = vmatmul.f32.gmra.mxu0 %v2973
      %v2975 = vpop.f32.mrf.mxu0
      %v2976 = vadd.f32 %v2809, %v2975
      %v2977 = vand.u32 %v2103, 4294901760
      %v2978 = vsub.f32 %v2103, %v2977
      %v2979 = vand.u32 %v2978, 4294901760
      %2980 = vmatmul.f32.gmra.mxu0 %v2979
      %v2981 = vpop.f32.mrf.mxu0
      %v2982 = vadd.f32 %v2814, %v2981
      %v2983 = vand.u32 %v2104, 4294901760
      %v2984 = vsub.f32 %v2104, %v2983
      %v2985 = vand.u32 %v2984, 4294901760
      %2986 = vmatmul.f32.gmra.mxu0 %v2985
      %v2987 = vpop.f32.mrf.mxu0
      %v2988 = vadd.f32 %v2819, %v2987
      %v2989 = vand.u32 %v2105, 4294901760
      %v2990 = vsub.f32 %v2105, %v2989
      %v2991 = vand.u32 %v2990, 4294901760
      %2992 = vmatmul.f32.gmra.mxu0 %v2991
      %v2993 = vpop.f32.mrf.mxu0
      %v2994 = vadd.f32 %v2824, %v2993
      %v2995 = vand.u32 %v2106, 4294901760
      %v2996 = vsub.f32 %v2106, %v2995
      %v2997 = vand.u32 %v2996, 4294901760
      %2998 = vmatmul.f32.gmra.mxu0 %v2997
      %v2999 = vpop.f32.mrf.mxu0
      %v3000 = vadd.f32 %v2829, %v2999
      %v3001 = vand.u32 %v2107, 4294901760
      %v3002 = vsub.f32 %v2107, %v3001
      %v3003 = vand.u32 %v3002, 4294901760
      %3004 = vmatmul.f32.gmra.mxu0 %v3003
      %v3005 = vpop.f32.mrf.mxu0
      %v3006 = vadd.f32 %v2834, %v3005
      %v3007 = vand.u32 %v2108, 4294901760
      %v3008 = vsub.f32 %v2108, %v3007
      %v3009 = vand.u32 %v3008, 4294901760
      %3010 = vmatmul.f32.gmra.mxu0 %v3009
      %v3011 = vpop.f32.mrf.mxu0
      %v3012 = vadd.f32 %v2839, %v3011
      %v3013 = vand.u32 %v2109, 4294901760
      %v3014 = vsub.f32 %v2109, %v3013
      %v3015 = vand.u32 %v3014, 4294901760
      %3016 = vmatmul.f32.gmra.mxu0 %v3015
      %v3017 = vpop.f32.mrf.mxu0
      %v3018 = vadd.f32 %v2844, %v3017
      %v3019 = vand.u32 %v2110, 4294901760
      %v3020 = vsub.f32 %v2110, %v3019
      %v3021 = vand.u32 %v3020, 4294901760
      %3022 = vmatmul.f32.gmra.mxu0 %v3021
      %v3023 = vpop.f32.mrf.mxu0
      %v3024 = vadd.f32 %v2849, %v3023
      %v3025 = vand.u32 %v2111, 4294901760
      %v3026 = vsub.f32 %v2111, %v3025
      %v3027 = vand.u32 %v3026, 4294901760
      %3028 = vmatmul.f32.gmra.mxu0 %v3027
      %v3029 = vpop.f32.mrf.mxu0
      %v3030 = vadd.f32 %v2854, %v3029
      %v3031 = vand.u32 %v2112, 4294901760
      %v3032 = vsub.f32 %v2112, %v3031
      %v3033 = vand.u32 %v3032, 4294901760
      %3034 = vmatmul.f32.gmra.mxu0 %v3033
      %v3035 = vpop.f32.mrf.mxu0
      %v3036 = vadd.f32 %v2859, %v3035
      %v3037 = vand.u32 %v2113, 4294901760
      %v3038 = vsub.f32 %v2113, %v3037
      %v3039 = vand.u32 %v3038, 4294901760
      %3040 = vmatmul.f32.gmra.mxu0 %v3039
      %v3041 = vpop.f32.mrf.mxu0
      %v3042 = vadd.f32 %v2864, %v3041
      %v3043 = vand.u32 %v2114, 4294901760
      %v3044 = vsub.f32 %v2114, %v3043
      %v3045 = vand.u32 %v3044, 4294901760
      %3046 = vmatmul.f32.gmra.mxu0 %v3045
      %v3047 = vpop.f32.mrf.mxu0
      %v3048 = vadd.f32 %v2869, %v3047
      %v3049 = vand.u32 %v2115, 4294901760
      %v3050 = vsub.f32 %v2115, %v3049
      %v3051 = vand.u32 %v3050, 4294901760
      %3052 = vmatmul.f32.gmra.mxu0 %v3051
      %v3053 = vpop.f32.mrf.mxu0
      %v3054 = vadd.f32 %v2874, %v3053
      %v3055 = vand.u32 %v2116, 4294901760
      %v3056 = vsub.f32 %v2116, %v3055
      %v3057 = vand.u32 %v3056, 4294901760
      %3058 = vmatmul.f32.gmra.mxu0 %v3057
      %v3059 = vpop.f32.mrf.mxu0
      %v3060 = vadd.f32 %v2879, %v3059
      %v3061 = vand.u32 %v2117, 4294901760
      %v3062 = vsub.f32 %v2117, %v3061
      %v3063 = vand.u32 %v3062, 4294901760
      %3064 = vmatmul.f32.gmra.mxu0 %v3063
      %v3065 = vpop.f32.mrf.mxu0
      %v3066 = vadd.f32 %v2884, %v3065
      %v3067 = vand.u32 %v2118, 4294901760
      %v3068 = vsub.f32 %v2118, %v3067
      %v3069 = vand.u32 %v3068, 4294901760
      %3070 = vmatmul.f32.gmra.mxu0 %v3069
      %v3071 = vpop.f32.mrf.mxu0
      %v3072 = vadd.f32 %v2889, %v3071
      %3073 = vdwg.mxu0
      %v3074 = vand.u32 %v2187, 4294901760
      %v3075 = vsub.f32 %v2187, %v3074
      %v3076 = vand.u32 %v3075, 4294901760
      %3077 = vmatpush.msra.mxu0 %v3076
      %v3078 = vand.u32 %v2186, 4294901760
      %v3079 = vsub.f32 %v2186, %v3078
      %v3080 = vand.u32 %v3079, 4294901760
      %3081 = vmatpush.msra.mxu0 %v3080
      %v3082 = vand.u32 %v2185, 4294901760
      %v3083 = vsub.f32 %v2185, %v3082
      %v3084 = vand.u32 %v3083, 4294901760
      %3085 = vmatpush.msra.mxu0 %v3084
      %v3086 = vand.u32 %v2184, 4294901760
      %v3087 = vsub.f32 %v2184, %v3086
      %v3088 = vand.u32 %v3087, 4294901760
      %3089 = vmatpush.msra.mxu0 %v3088
      %v3090 = vand.u32 %v2183, 4294901760
      %v3091 = vsub.f32 %v2183, %v3090
      %v3092 = vand.u32 %v3091, 4294901760
      %3093 = vmatpush.msra.mxu0 %v3092
      %v3094 = vand.u32 %v2182, 4294901760
      %v3095 = vsub.f32 %v2182, %v3094
      %v3096 = vand.u32 %v3095, 4294901760
      %3097 = vmatpush.msra.mxu0 %v3096
      %v3098 = vand.u32 %v2181, 4294901760
      %v3099 = vsub.f32 %v2181, %v3098
      %v3100 = vand.u32 %v3099, 4294901760
      %3101 = vmatpush.msra.mxu0 %v3100
      %v3102 = vand.u32 %v2180, 4294901760
      %v3103 = vsub.f32 %v2180, %v3102
      %v3104 = vand.u32 %v3103, 4294901760
      %3105 = vmatpush.msra.mxu0 %v3104
      %v3106 = vand.u32 %v2179, 4294901760
      %v3107 = vsub.f32 %v2179, %v3106
      %v3108 = vand.u32 %v3107, 4294901760
      %3109 = vmatpush.msra.mxu0 %v3108
      %v3110 = vand.u32 %v2178, 4294901760
      %v3111 = vsub.f32 %v2178, %v3110
      %v3112 = vand.u32 %v3111, 4294901760
      %3113 = vmatpush.msra.mxu0 %v3112
      %v3114 = vand.u32 %v2177, 4294901760
      %v3115 = vsub.f32 %v2177, %v3114
      %v3116 = vand.u32 %v3115, 4294901760
      %3117 = vmatpush.msra.mxu0 %v3116
      %v3118 = vand.u32 %v2176, 4294901760
      %v3119 = vsub.f32 %v2176, %v3118
      %v3120 = vand.u32 %v3119, 4294901760
      %3121 = vmatpush.msra.mxu0 %v3120
      %v3122 = vand.u32 %v2175, 4294901760
      %v3123 = vsub.f32 %v2175, %v3122
      %v3124 = vand.u32 %v3123, 4294901760
      %3125 = vmatpush.msra.mxu0 %v3124
      %v3126 = vand.u32 %v2174, 4294901760
      %v3127 = vsub.f32 %v2174, %v3126
      %v3128 = vand.u32 %v3127, 4294901760
      %3129 = vmatpush.msra.mxu0 %v3128
      %v3130 = vand.u32 %v2173, 4294901760
      %v3131 = vsub.f32 %v2173, %v3130
      %v3132 = vand.u32 %v3131, 4294901760
      %3133 = vmatpush.msra.mxu0 %v3132
      %v3134 = vand.u32 %v2172, 4294901760
      %v3135 = vsub.f32 %v2172, %v3134
      %v3136 = vand.u32 %v3135, 4294901760
      %3137 = vmatpush.msra.mxu0 %v3136
      %v3138 = vand.u32 %v2094, 4294901760
      %3139 = vmatmul.f32.gmra.mxu0 %v3138
      %v3140 = vpop.f32.mrf.mxu0
      %v3141 = vadd.f32 %v2928, %v3140
      %v3142 = vand.u32 %v2095, 4294901760
      %3143 = vmatmul.f32.gmra.mxu0 %v3142
      %v3144 = vpop.f32.mrf.mxu0
      %v3145 = vadd.f32 %v2934, %v3144
      %v3146 = vand.u32 %v2096, 4294901760
      %3147 = vmatmul.f32.gmra.mxu0 %v3146
      %v3148 = vpop.f32.mrf.mxu0
      %v3149 = vadd.f32 %v2940, %v3148
      %v3150 = vand.u32 %v2097, 4294901760
      %3151 = vmatmul.f32.gmra.mxu0 %v3150
      %v3152 = vpop.f32.mrf.mxu0
      %v3153 = vadd.f32 %v2946, %v3152
      %v3154 = vand.u32 %v2098, 4294901760
      %3155 = vmatmul.f32.gmra.mxu0 %v3154
      %v3156 = vpop.f32.mrf.mxu0
      %v3157 = vadd.f32 %v2952, %v3156
      %v3158 = vand.u32 %v2099, 4294901760
      %3159 = vmatmul.f32.gmra.mxu0 %v3158
      %v3160 = vpop.f32.mrf.mxu0
      %v3161 = vadd.f32 %v2958, %v3160
      %v3162 = vand.u32 %v2100, 4294901760
      %3163 = vmatmul.f32.gmra.mxu0 %v3162
      %v3164 = vpop.f32.mrf.mxu0
      %v3165 = vadd.f32 %v2964, %v3164
      %v3166 = vand.u32 %v2101, 4294901760
      %3167 = vmatmul.f32.gmra.mxu0 %v3166
      %v3168 = vpop.f32.mrf.mxu0
      %v3169 = vadd.f32 %v2970, %v3168
      %v3170 = vand.u32 %v2102, 4294901760
      %3171 = vmatmul.f32.gmra.mxu0 %v3170
      %v3172 = vpop.f32.mrf.mxu0
      %v3173 = vadd.f32 %v2976, %v3172
      %v3174 = vand.u32 %v2103, 4294901760
      %3175 = vmatmul.f32.gmra.mxu0 %v3174
      %v3176 = vpop.f32.mrf.mxu0
      %v3177 = vadd.f32 %v2982, %v3176
      %v3178 = vand.u32 %v2104, 4294901760
      %3179 = vmatmul.f32.gmra.mxu0 %v3178
      %v3180 = vpop.f32.mrf.mxu0
      %v3181 = vadd.f32 %v2988, %v3180
      %v3182 = vand.u32 %v2105, 4294901760
      %3183 = vmatmul.f32.gmra.mxu0 %v3182
      %v3184 = vpop.f32.mrf.mxu0
      %v3185 = vadd.f32 %v2994, %v3184
      %v3186 = vand.u32 %v2106, 4294901760
      %3187 = vmatmul.f32.gmra.mxu0 %v3186
      %v3188 = vpop.f32.mrf.mxu0
      %v3189 = vadd.f32 %v3000, %v3188
      %v3190 = vand.u32 %v2107, 4294901760
      %3191 = vmatmul.f32.gmra.mxu0 %v3190
      %v3192 = vpop.f32.mrf.mxu0
      %v3193 = vadd.f32 %v3006, %v3192
      %v3194 = vand.u32 %v2108, 4294901760
      %3195 = vmatmul.f32.gmra.mxu0 %v3194
      %v3196 = vpop.f32.mrf.mxu0
      %v3197 = vadd.f32 %v3012, %v3196
      %v3198 = vand.u32 %v2109, 4294901760
      %3199 = vmatmul.f32.gmra.mxu0 %v3198
      %v3200 = vpop.f32.mrf.mxu0
      %v3201 = vadd.f32 %v3018, %v3200
      %v3202 = vand.u32 %v2110, 4294901760
      %3203 = vmatmul.f32.gmra.mxu0 %v3202
      %v3204 = vpop.f32.mrf.mxu0
      %v3205 = vadd.f32 %v3024, %v3204
      %v3206 = vand.u32 %v2111, 4294901760
      %3207 = vmatmul.f32.gmra.mxu0 %v3206
      %v3208 = vpop.f32.mrf.mxu0
      %v3209 = vadd.f32 %v3030, %v3208
      %v3210 = vand.u32 %v2112, 4294901760
      %3211 = vmatmul.f32.gmra.mxu0 %v3210
      %v3212 = vpop.f32.mrf.mxu0
      %v3213 = vadd.f32 %v3036, %v3212
      %v3214 = vand.u32 %v2113, 4294901760
      %3215 = vmatmul.f32.gmra.mxu0 %v3214
      %v3216 = vpop.f32.mrf.mxu0
      %v3217 = vadd.f32 %v3042, %v3216
      %v3218 = vand.u32 %v2114, 4294901760
      %3219 = vmatmul.f32.gmra.mxu0 %v3218
      %v3220 = vpop.f32.mrf.mxu0
      %v3221 = vadd.f32 %v3048, %v3220
      %v3222 = vand.u32 %v2115, 4294901760
      %3223 = vmatmul.f32.gmra.mxu0 %v3222
      %v3224 = vpop.f32.mrf.mxu0
      %v3225 = vadd.f32 %v3054, %v3224
      %v3226 = vand.u32 %v2116, 4294901760
      %3227 = vmatmul.f32.gmra.mxu0 %v3226
      %v3228 = vpop.f32.mrf.mxu0
      %v3229 = vadd.f32 %v3060, %v3228
      %v3230 = vand.u32 %v2117, 4294901760
      %3231 = vmatmul.f32.gmra.mxu0 %v3230
      %v3232 = vpop.f32.mrf.mxu0
      %v3233 = vadd.f32 %v3066, %v3232
      %v3234 = vand.u32 %v2118, 4294901760
      %3235 = vmatmul.f32.gmra.mxu0 %v3234
      %v3236 = vpop.f32.mrf.mxu0
      %v3237 = vadd.f32 %v3072, %v3236
      %3238 = vdwg.mxu0
      %v3239 = vand.u32 %v2187, 4294901760
      %3240 = vmatpush.msra.mxu0 %v3239
      %v3241 = vand.u32 %v2186, 4294901760
      %3242 = vmatpush.msra.mxu0 %v3241
      %v3243 = vand.u32 %v2185, 4294901760
      %3244 = vmatpush.msra.mxu0 %v3243
      %v3245 = vand.u32 %v2184, 4294901760
      %3246 = vmatpush.msra.mxu0 %v3245
      %v3247 = vand.u32 %v2183, 4294901760
      %3248 = vmatpush.msra.mxu0 %v3247
      %v3249 = vand.u32 %v2182, 4294901760
      %3250 = vmatpush.msra.mxu0 %v3249
      %v3251 = vand.u32 %v2181, 4294901760
      %3252 = vmatpush.msra.mxu0 %v3251
      %v3253 = vand.u32 %v2180, 4294901760
      %3254 = vmatpush.msra.mxu0 %v3253
      %v3255 = vand.u32 %v2179, 4294901760
      %3256 = vmatpush.msra.mxu0 %v3255
      %v3257 = vand.u32 %v2178, 4294901760
      %3258 = vmatpush.msra.mxu0 %v3257
      %v3259 = vand.u32 %v2177, 4294901760
      %3260 = vmatpush.msra.mxu0 %v3259
      %v3261 = vand.u32 %v2176, 4294901760
      %3262 = vmatpush.msra.mxu0 %v3261
      %v3263 = vand.u32 %v2175, 4294901760
      %3264 = vmatpush.msra.mxu0 %v3263
      %v3265 = vand.u32 %v2174, 4294901760
      %3266 = vmatpush.msra.mxu0 %v3265
      %v3267 = vand.u32 %v2173, 4294901760
      %3268 = vmatpush.msra.mxu0 %v3267
      %v3269 = vand.u32 %v2172, 4294901760
      %3270 = vmatpush.msra.mxu0 %v3269
      %v3271 = vand.u32 %v2094, 4294901760
      %3272 = vmatmul.f32.gmra.mxu0 %v3271
      %v3273 = vpop.f32.mrf.mxu0
      %v3274 = vadd.f32 %v3141, %v3273
      %v3275 = vand.u32 %v2095, 4294901760
      %3276 = vmatmul.f32.gmra.mxu0 %v3275
      %v3277 = vpop.f32.mrf.mxu0
      %v3278 = vadd.f32 %v3145, %v3277
      %v3279 = vand.u32 %v2096, 4294901760
      %3280 = vmatmul.f32.gmra.mxu0 %v3279
      %v3281 = vpop.f32.mrf.mxu0
      %v3282 = vadd.f32 %v3149, %v3281
      %v3283 = vand.u32 %v2097, 4294901760
      %3284 = vmatmul.f32.gmra.mxu0 %v3283
      %v3285 = vpop.f32.mrf.mxu0
      %v3286 = vadd.f32 %v3153, %v3285
      %v3287 = vand.u32 %v2098, 4294901760
      %3288 = vmatmul.f32.gmra.mxu0 %v3287
      %v3289 = vpop.f32.mrf.mxu0
      %v3290 = vadd.f32 %v3157, %v3289
      %v3291 = vand.u32 %v2099, 4294901760
      %3292 = vmatmul.f32.gmra.mxu0 %v3291
      %v3293 = vpop.f32.mrf.mxu0
      %v3294 = vadd.f32 %v3161, %v3293
      %v3295 = vand.u32 %v2100, 4294901760
      %3296 = vmatmul.f32.gmra.mxu0 %v3295
      %v3297 = vpop.f32.mrf.mxu0
      %v3298 = vadd.f32 %v3165, %v3297
      %v3299 = vand.u32 %v2101, 4294901760
      %3300 = vmatmul.f32.gmra.mxu0 %v3299
      %v3301 = vpop.f32.mrf.mxu0
      %v3302 = vadd.f32 %v3169, %v3301
      %v3303 = vand.u32 %v2102, 4294901760
      %3304 = vmatmul.f32.gmra.mxu0 %v3303
      %v3305 = vpop.f32.mrf.mxu0
      %v3306 = vadd.f32 %v3173, %v3305
      %v3307 = vand.u32 %v2103, 4294901760
      %3308 = vmatmul.f32.gmra.mxu0 %v3307
      %v3309 = vpop.f32.mrf.mxu0
      %v3310 = vadd.f32 %v3177, %v3309
      %v3311 = vand.u32 %v2104, 4294901760
      %3312 = vmatmul.f32.gmra.mxu0 %v3311
      %v3313 = vpop.f32.mrf.mxu0
      %v3314 = vadd.f32 %v3181, %v3313
      %v3315 = vand.u32 %v2105, 4294901760
      %3316 = vmatmul.f32.gmra.mxu0 %v3315
      %v3317 = vpop.f32.mrf.mxu0
      %v3318 = vadd.f32 %v3185, %v3317
      %v3319 = vand.u32 %v2106, 4294901760
      %3320 = vmatmul.f32.gmra.mxu0 %v3319
      %v3321 = vpop.f32.mrf.mxu0
      %v3322 = vadd.f32 %v3189, %v3321
      %v3323 = vand.u32 %v2107, 4294901760
      %3324 = vmatmul.f32.gmra.mxu0 %v3323
      %v3325 = vpop.f32.mrf.mxu0
      %v3326 = vadd.f32 %v3193, %v3325
      %v3327 = vand.u32 %v2108, 4294901760
      %3328 = vmatmul.f32.gmra.mxu0 %v3327
      %v3329 = vpop.f32.mrf.mxu0
      %v3330 = vadd.f32 %v3197, %v3329
      %v3331 = vand.u32 %v2109, 4294901760
      %3332 = vmatmul.f32.gmra.mxu0 %v3331
      %v3333 = vpop.f32.mrf.mxu0
      %v3334 = vadd.f32 %v3201, %v3333
      %v3335 = vand.u32 %v2110, 4294901760
      %3336 = vmatmul.f32.gmra.mxu0 %v3335
      %v3337 = vpop.f32.mrf.mxu0
      %v3338 = vadd.f32 %v3205, %v3337
      %v3339 = vand.u32 %v2111, 4294901760
      %3340 = vmatmul.f32.gmra.mxu0 %v3339
      %v3341 = vpop.f32.mrf.mxu0
      %v3342 = vadd.f32 %v3209, %v3341
      %v3343 = vand.u32 %v2112, 4294901760
      %3344 = vmatmul.f32.gmra.mxu0 %v3343
      %v3345 = vpop.f32.mrf.mxu0
      %v3346 = vadd.f32 %v3213, %v3345
      %v3347 = vand.u32 %v2113, 4294901760
      %3348 = vmatmul.f32.gmra.mxu0 %v3347
      %v3349 = vpop.f32.mrf.mxu0
      %v3350 = vadd.f32 %v3217, %v3349
      %v3351 = vand.u32 %v2114, 4294901760
      %3352 = vmatmul.f32.gmra.mxu0 %v3351
      %v3353 = vpop.f32.mrf.mxu0
      %v3354 = vadd.f32 %v3221, %v3353
      %v3355 = vand.u32 %v2115, 4294901760
      %3356 = vmatmul.f32.gmra.mxu0 %v3355
      %v3357 = vpop.f32.mrf.mxu0
      %v3358 = vadd.f32 %v3225, %v3357
      %v3359 = vand.u32 %v2116, 4294901760
      %3360 = vmatmul.f32.gmra.mxu0 %v3359
      %v3361 = vpop.f32.mrf.mxu0
      %v3362 = vadd.f32 %v3229, %v3361
      %v3363 = vand.u32 %v2117, 4294901760
      %3364 = vmatmul.f32.gmra.mxu0 %v3363
      %v3365 = vpop.f32.mrf.mxu0
      %v3366 = vadd.f32 %v3233, %v3365
      %v3367 = vand.u32 %v2118, 4294901760
      %3368 = vmatmul.f32.gmra.mxu0 %v3367
      %v3369 = vpop.f32.mrf.mxu0
      %v3370 = vadd.f32 %v3237, %v3369
      %3371 = vdwg.mxu0
      %v3372 = vand.u32 %v2203, 4294901760
      %3373 = vmatpush.msra.mxu0 %v3372
      %v3374 = vand.u32 %v2202, 4294901760
      %3375 = vmatpush.msra.mxu0 %v3374
      %v3376 = vand.u32 %v2201, 4294901760
      %3377 = vmatpush.msra.mxu0 %v3376
      %v3378 = vand.u32 %v2200, 4294901760
      %3379 = vmatpush.msra.mxu0 %v3378
      %v3380 = vand.u32 %v2199, 4294901760
      %3381 = vmatpush.msra.mxu0 %v3380
      %v3382 = vand.u32 %v2198, 4294901760
      %3383 = vmatpush.msra.mxu0 %v3382
      %v3384 = vand.u32 %v2197, 4294901760
      %3385 = vmatpush.msra.mxu0 %v3384
      %v3386 = vand.u32 %v2196, 4294901760
      %3387 = vmatpush.msra.mxu0 %v3386
      %v3388 = vand.u32 %v2195, 4294901760
      %3389 = vmatpush.msra.mxu0 %v3388
      %v3390 = vand.u32 %v2194, 4294901760
      %3391 = vmatpush.msra.mxu0 %v3390
      %v3392 = vand.u32 %v2193, 4294901760
      %3393 = vmatpush.msra.mxu0 %v3392
      %v3394 = vand.u32 %v2192, 4294901760
      %3395 = vmatpush.msra.mxu0 %v3394
      %v3396 = vand.u32 %v2191, 4294901760
      %3397 = vmatpush.msra.mxu0 %v3396
      %v3398 = vand.u32 %v2190, 4294901760
      %3399 = vmatpush.msra.mxu0 %v3398
      %v3400 = vand.u32 %v2189, 4294901760
      %3401 = vmatpush.msra.mxu0 %v3400
      %v3402 = vand.u32 %v2188, 4294901760
      %3403 = vmatpush.msra.mxu0 %v3402
      %v3404 = vand.u32 %v2147, 4294901760
      %v3405 = vsub.f32 %v2147, %v3404
      %v3406 = vand.u32 %v3405, 4294901760
      %v3407 = vsub.f32 %v3405, %v3406
      %v3408 = vand.u32 %v3407, 4294901760
      %3409 = vmatmul.f32.gmra.mxu0 %v3408
      %v3410 = vpop.f32.mrf.mxu0
      %v3411 = vadd.f32 %v3274, %v3410
      %v3412 = vand.u32 %v2148, 4294901760
      %v3413 = vsub.f32 %v2148, %v3412
      %v3414 = vand.u32 %v3413, 4294901760
      %v3415 = vsub.f32 %v3413, %v3414
      %v3416 = vand.u32 %v3415, 4294901760
      %3417 = vmatmul.f32.gmra.mxu0 %v3416
      %v3418 = vpop.f32.mrf.mxu0
      %v3419 = vadd.f32 %v3278, %v3418
      %v3420 = vand.u32 %v2149, 4294901760
      %v3421 = vsub.f32 %v2149, %v3420
      %v3422 = vand.u32 %v3421, 4294901760
      %v3423 = vsub.f32 %v3421, %v3422
      %v3424 = vand.u32 %v3423, 4294901760
      %3425 = vmatmul.f32.gmra.mxu0 %v3424
      %v3426 = vpop.f32.mrf.mxu0
      %v3427 = vadd.f32 %v3282, %v3426
      %v3428 = vand.u32 %v2150, 4294901760
      %v3429 = vsub.f32 %v2150, %v3428
      %v3430 = vand.u32 %v3429, 4294901760
      %v3431 = vsub.f32 %v3429, %v3430
      %v3432 = vand.u32 %v3431, 4294901760
      %3433 = vmatmul.f32.gmra.mxu0 %v3432
      %v3434 = vpop.f32.mrf.mxu0
      %v3435 = vadd.f32 %v3286, %v3434
      %v3436 = vand.u32 %v2151, 4294901760
      %v3437 = vsub.f32 %v2151, %v3436
      %v3438 = vand.u32 %v3437, 4294901760
      %v3439 = vsub.f32 %v3437, %v3438
      %v3440 = vand.u32 %v3439, 4294901760
      %3441 = vmatmul.f32.gmra.mxu0 %v3440
      %v3442 = vpop.f32.mrf.mxu0
      %v3443 = vadd.f32 %v3290, %v3442
      %v3444 = vand.u32 %v2152, 4294901760
      %v3445 = vsub.f32 %v2152, %v3444
      %v3446 = vand.u32 %v3445, 4294901760
      %v3447 = vsub.f32 %v3445, %v3446
      %v3448 = vand.u32 %v3447, 4294901760
      %3449 = vmatmul.f32.gmra.mxu0 %v3448
      %v3450 = vpop.f32.mrf.mxu0
      %v3451 = vadd.f32 %v3294, %v3450
      %v3452 = vand.u32 %v2153, 4294901760
      %v3453 = vsub.f32 %v2153, %v3452
      %v3454 = vand.u32 %v3453, 4294901760
      %v3455 = vsub.f32 %v3453, %v3454
      %v3456 = vand.u32 %v3455, 4294901760
      %3457 = vmatmul.f32.gmra.mxu0 %v3456
      %v3458 = vpop.f32.mrf.mxu0
      %v3459 = vadd.f32 %v3298, %v3458
      %v3460 = vand.u32 %v2154, 4294901760
      %v3461 = vsub.f32 %v2154, %v3460
      %v3462 = vand.u32 %v3461, 4294901760
      %v3463 = vsub.f32 %v3461, %v3462
      %v3464 = vand.u32 %v3463, 4294901760
      %3465 = vmatmul.f32.gmra.mxu0 %v3464
      %v3466 = vpop.f32.mrf.mxu0
      %v3467 = vadd.f32 %v3302, %v3466
      %v3468 = vand.u32 %v2155, 4294901760
      %v3469 = vsub.f32 %v2155, %v3468
      %v3470 = vand.u32 %v3469, 4294901760
      %v3471 = vsub.f32 %v3469, %v3470
      %v3472 = vand.u32 %v3471, 4294901760
      %3473 = vmatmul.f32.gmra.mxu0 %v3472
      %v3474 = vpop.f32.mrf.mxu0
      %v3475 = vadd.f32 %v3306, %v3474
      %v3476 = vand.u32 %v2156, 4294901760
      %v3477 = vsub.f32 %v2156, %v3476
      %v3478 = vand.u32 %v3477, 4294901760
      %v3479 = vsub.f32 %v3477, %v3478
      %v3480 = vand.u32 %v3479, 4294901760
      %3481 = vmatmul.f32.gmra.mxu0 %v3480
      %v3482 = vpop.f32.mrf.mxu0
      %v3483 = vadd.f32 %v3310, %v3482
      %v3484 = vand.u32 %v2157, 4294901760
      %v3485 = vsub.f32 %v2157, %v3484
      %v3486 = vand.u32 %v3485, 4294901760
      %v3487 = vsub.f32 %v3485, %v3486
      %v3488 = vand.u32 %v3487, 4294901760
      %3489 = vmatmul.f32.gmra.mxu0 %v3488
      %v3490 = vpop.f32.mrf.mxu0
      %v3491 = vadd.f32 %v3314, %v3490
      %v3492 = vand.u32 %v2158, 4294901760
      %v3493 = vsub.f32 %v2158, %v3492
      %v3494 = vand.u32 %v3493, 4294901760
      %v3495 = vsub.f32 %v3493, %v3494
      %v3496 = vand.u32 %v3495, 4294901760
      %3497 = vmatmul.f32.gmra.mxu0 %v3496
      %v3498 = vpop.f32.mrf.mxu0
      %v3499 = vadd.f32 %v3318, %v3498
      %v3500 = vand.u32 %v2159, 4294901760
      %v3501 = vsub.f32 %v2159, %v3500
      %v3502 = vand.u32 %v3501, 4294901760
      %v3503 = vsub.f32 %v3501, %v3502
      %v3504 = vand.u32 %v3503, 4294901760
      %3505 = vmatmul.f32.gmra.mxu0 %v3504
      %v3506 = vpop.f32.mrf.mxu0
      %v3507 = vadd.f32 %v3322, %v3506
      %v3508 = vand.u32 %v2160, 4294901760
      %v3509 = vsub.f32 %v2160, %v3508
      %v3510 = vand.u32 %v3509, 4294901760
      %v3511 = vsub.f32 %v3509, %v3510
      %v3512 = vand.u32 %v3511, 4294901760
      %3513 = vmatmul.f32.gmra.mxu0 %v3512
      %v3514 = vpop.f32.mrf.mxu0
      %v3515 = vadd.f32 %v3326, %v3514
      %v3516 = vand.u32 %v2161, 4294901760
      %v3517 = vsub.f32 %v2161, %v3516
      %v3518 = vand.u32 %v3517, 4294901760
      %v3519 = vsub.f32 %v3517, %v3518
      %v3520 = vand.u32 %v3519, 4294901760
      %3521 = vmatmul.f32.gmra.mxu0 %v3520
      %v3522 = vpop.f32.mrf.mxu0
      %v3523 = vadd.f32 %v3330, %v3522
      %v3524 = vand.u32 %v2162, 4294901760
      %v3525 = vsub.f32 %v2162, %v3524
      %v3526 = vand.u32 %v3525, 4294901760
      %v3527 = vsub.f32 %v3525, %v3526
      %v3528 = vand.u32 %v3527, 4294901760
      %3529 = vmatmul.f32.gmra.mxu0 %v3528
      %v3530 = vpop.f32.mrf.mxu0
      %v3531 = vadd.f32 %v3334, %v3530
      %v3532 = vand.u32 %v2163, 4294901760
      %v3533 = vsub.f32 %v2163, %v3532
      %v3534 = vand.u32 %v3533, 4294901760
      %v3535 = vsub.f32 %v3533, %v3534
      %v3536 = vand.u32 %v3535, 4294901760
      %3537 = vmatmul.f32.gmra.mxu0 %v3536
      %v3538 = vpop.f32.mrf.mxu0
      %v3539 = vadd.f32 %v3338, %v3538
      %v3540 = vand.u32 %v2164, 4294901760
      %v3541 = vsub.f32 %v2164, %v3540
      %v3542 = vand.u32 %v3541, 4294901760
      %v3543 = vsub.f32 %v3541, %v3542
      %v3544 = vand.u32 %v3543, 4294901760
      %3545 = vmatmul.f32.gmra.mxu0 %v3544
      %v3546 = vpop.f32.mrf.mxu0
      %v3547 = vadd.f32 %v3342, %v3546
      %v3548 = vand.u32 %v2165, 4294901760
      %v3549 = vsub.f32 %v2165, %v3548
      %v3550 = vand.u32 %v3549, 4294901760
      %v3551 = vsub.f32 %v3549, %v3550
      %v3552 = vand.u32 %v3551, 4294901760
      %3553 = vmatmul.f32.gmra.mxu0 %v3552
      %v3554 = vpop.f32.mrf.mxu0
      %v3555 = vadd.f32 %v3346, %v3554
      %v3556 = vand.u32 %v2166, 4294901760
      %v3557 = vsub.f32 %v2166, %v3556
      %v3558 = vand.u32 %v3557, 4294901760
      %v3559 = vsub.f32 %v3557, %v3558
      %v3560 = vand.u32 %v3559, 4294901760
      %3561 = vmatmul.f32.gmra.mxu0 %v3560
      %v3562 = vpop.f32.mrf.mxu0
      %v3563 = vadd.f32 %v3350, %v3562
      %v3564 = vand.u32 %v2167, 4294901760
      %v3565 = vsub.f32 %v2167, %v3564
      %v3566 = vand.u32 %v3565, 4294901760
      %v3567 = vsub.f32 %v3565, %v3566
      %v3568 = vand.u32 %v3567, 4294901760
      %3569 = vmatmul.f32.gmra.mxu0 %v3568
      %v3570 = vpop.f32.mrf.mxu0
      %v3571 = vadd.f32 %v3354, %v3570
      %v3572 = vand.u32 %v2168, 4294901760
      %v3573 = vsub.f32 %v2168, %v3572
      %v3574 = vand.u32 %v3573, 4294901760
      %v3575 = vsub.f32 %v3573, %v3574
      %v3576 = vand.u32 %v3575, 4294901760
      %3577 = vmatmul.f32.gmra.mxu0 %v3576
      %v3578 = vpop.f32.mrf.mxu0
      %v3579 = vadd.f32 %v3358, %v3578
      %v3580 = vand.u32 %v2169, 4294901760
      %v3581 = vsub.f32 %v2169, %v3580
      %v3582 = vand.u32 %v3581, 4294901760
      %v3583 = vsub.f32 %v3581, %v3582
      %v3584 = vand.u32 %v3583, 4294901760
      %3585 = vmatmul.f32.gmra.mxu0 %v3584
      %v3586 = vpop.f32.mrf.mxu0
      %v3587 = vadd.f32 %v3362, %v3586
      %v3588 = vand.u32 %v2170, 4294901760
      %v3589 = vsub.f32 %v2170, %v3588
      %v3590 = vand.u32 %v3589, 4294901760
      %v3591 = vsub.f32 %v3589, %v3590
      %v3592 = vand.u32 %v3591, 4294901760
      %3593 = vmatmul.f32.gmra.mxu0 %v3592
      %v3594 = vpop.f32.mrf.mxu0
      %v3595 = vadd.f32 %v3366, %v3594
      %v3596 = vand.u32 %v2171, 4294901760
      %v3597 = vsub.f32 %v2171, %v3596
      %v3598 = vand.u32 %v3597, 4294901760
      %v3599 = vsub.f32 %v3597, %v3598
      %v3600 = vand.u32 %v3599, 4294901760
      %3601 = vmatmul.f32.gmra.mxu0 %v3600
      %v3602 = vpop.f32.mrf.mxu0
      %v3603 = vadd.f32 %v3370, %v3602
      %3604 = vdwg.mxu0
      %v3605 = vand.u32 %v2203, 4294901760
      %v3606 = vsub.f32 %v2203, %v3605
      %v3607 = vand.u32 %v3606, 4294901760
      %v3608 = vsub.f32 %v3606, %v3607
      %v3609 = vand.u32 %v3608, 4294901760
      %3610 = vmatpush.msra.mxu0 %v3609
      %v3611 = vand.u32 %v2202, 4294901760
      %v3612 = vsub.f32 %v2202, %v3611
      %v3613 = vand.u32 %v3612, 4294901760
      %v3614 = vsub.f32 %v3612, %v3613
      %v3615 = vand.u32 %v3614, 4294901760
      %3616 = vmatpush.msra.mxu0 %v3615
      %v3617 = vand.u32 %v2201, 4294901760
      %v3618 = vsub.f32 %v2201, %v3617
      %v3619 = vand.u32 %v3618, 4294901760
      %v3620 = vsub.f32 %v3618, %v3619
      %v3621 = vand.u32 %v3620, 4294901760
      %3622 = vmatpush.msra.mxu0 %v3621
      %v3623 = vand.u32 %v2200, 4294901760
      %v3624 = vsub.f32 %v2200, %v3623
      %v3625 = vand.u32 %v3624, 4294901760
      %v3626 = vsub.f32 %v3624, %v3625
      %v3627 = vand.u32 %v3626, 4294901760
      %3628 = vmatpush.msra.mxu0 %v3627
      %v3629 = vand.u32 %v2199, 4294901760
      %v3630 = vsub.f32 %v2199, %v3629
      %v3631 = vand.u32 %v3630, 4294901760
      %v3632 = vsub.f32 %v3630, %v3631
      %v3633 = vand.u32 %v3632, 4294901760
      %3634 = vmatpush.msra.mxu0 %v3633
      %v3635 = vand.u32 %v2198, 4294901760
      %v3636 = vsub.f32 %v2198, %v3635
      %v3637 = vand.u32 %v3636, 4294901760
      %v3638 = vsub.f32 %v3636, %v3637
      %v3639 = vand.u32 %v3638, 4294901760
      %3640 = vmatpush.msra.mxu0 %v3639
      %v3641 = vand.u32 %v2197, 4294901760
      %v3642 = vsub.f32 %v2197, %v3641
      %v3643 = vand.u32 %v3642, 4294901760
      %v3644 = vsub.f32 %v3642, %v3643
      %v3645 = vand.u32 %v3644, 4294901760
      %3646 = vmatpush.msra.mxu0 %v3645
      %v3647 = vand.u32 %v2196, 4294901760
      %v3648 = vsub.f32 %v2196, %v3647
      %v3649 = vand.u32 %v3648, 4294901760
      %v3650 = vsub.f32 %v3648, %v3649
      %v3651 = vand.u32 %v3650, 4294901760
      %3652 = vmatpush.msra.mxu0 %v3651
      %v3653 = vand.u32 %v2195, 4294901760
      %v3654 = vsub.f32 %v2195, %v3653
      %v3655 = vand.u32 %v3654, 4294901760
      %v3656 = vsub.f32 %v3654, %v3655
      %v3657 = vand.u32 %v3656, 4294901760
      %3658 = vmatpush.msra.mxu0 %v3657
      %v3659 = vand.u32 %v2194, 4294901760
      %v3660 = vsub.f32 %v2194, %v3659
      %v3661 = vand.u32 %v3660, 4294901760
      %v3662 = vsub.f32 %v3660, %v3661
      %v3663 = vand.u32 %v3662, 4294901760
      %3664 = vmatpush.msra.mxu0 %v3663
      %v3665 = vand.u32 %v2193, 4294901760
      %v3666 = vsub.f32 %v2193, %v3665
      %v3667 = vand.u32 %v3666, 4294901760
      %v3668 = vsub.f32 %v3666, %v3667
      %v3669 = vand.u32 %v3668, 4294901760
      %3670 = vmatpush.msra.mxu0 %v3669
      %v3671 = vand.u32 %v2192, 4294901760
      %v3672 = vsub.f32 %v2192, %v3671
      %v3673 = vand.u32 %v3672, 4294901760
      %v3674 = vsub.f32 %v3672, %v3673
      %v3675 = vand.u32 %v3674, 4294901760
      %3676 = vmatpush.msra.mxu0 %v3675
      %v3677 = vand.u32 %v2191, 4294901760
      %v3678 = vsub.f32 %v2191, %v3677
      %v3679 = vand.u32 %v3678, 4294901760
      %v3680 = vsub.f32 %v3678, %v3679
      %v3681 = vand.u32 %v3680, 4294901760
      %3682 = vmatpush.msra.mxu0 %v3681
      %v3683 = vand.u32 %v2190, 4294901760
      %v3684 = vsub.f32 %v2190, %v3683
      %v3685 = vand.u32 %v3684, 4294901760
      %v3686 = vsub.f32 %v3684, %v3685
      %v3687 = vand.u32 %v3686, 4294901760
      %3688 = vmatpush.msra.mxu0 %v3687
      %v3689 = vand.u32 %v2189, 4294901760
      %v3690 = vsub.f32 %v2189, %v3689
      %v3691 = vand.u32 %v3690, 4294901760
      %v3692 = vsub.f32 %v3690, %v3691
      %v3693 = vand.u32 %v3692, 4294901760
      %3694 = vmatpush.msra.mxu0 %v3693
      %v3695 = vand.u32 %v2188, 4294901760
      %v3696 = vsub.f32 %v2188, %v3695
      %v3697 = vand.u32 %v3696, 4294901760
      %v3698 = vsub.f32 %v3696, %v3697
      %v3699 = vand.u32 %v3698, 4294901760
      %3700 = vmatpush.msra.mxu0 %v3699
      %v3701 = vand.u32 %v2147, 4294901760
      %3702 = vmatmul.f32.gmra.mxu0 %v3701
      %v3703 = vpop.f32.mrf.mxu0
      %v3704 = vadd.f32 %v3411, %v3703
      %v3705 = vand.u32 %v2148, 4294901760
      %3706 = vmatmul.f32.gmra.mxu0 %v3705
      %v3707 = vpop.f32.mrf.mxu0
      %v3708 = vadd.f32 %v3419, %v3707
      %v3709 = vand.u32 %v2149, 4294901760
      %3710 = vmatmul.f32.gmra.mxu0 %v3709
      %v3711 = vpop.f32.mrf.mxu0
      %v3712 = vadd.f32 %v3427, %v3711
      %v3713 = vand.u32 %v2150, 4294901760
      %3714 = vmatmul.f32.gmra.mxu0 %v3713
      %v3715 = vpop.f32.mrf.mxu0
      %v3716 = vadd.f32 %v3435, %v3715
      %v3717 = vand.u32 %v2151, 4294901760
      %3718 = vmatmul.f32.gmra.mxu0 %v3717
      %v3719 = vpop.f32.mrf.mxu0
      %v3720 = vadd.f32 %v3443, %v3719
      %v3721 = vand.u32 %v2152, 4294901760
      %3722 = vmatmul.f32.gmra.mxu0 %v3721
      %v3723 = vpop.f32.mrf.mxu0
      %v3724 = vadd.f32 %v3451, %v3723
      %v3725 = vand.u32 %v2153, 4294901760
      %3726 = vmatmul.f32.gmra.mxu0 %v3725
      %v3727 = vpop.f32.mrf.mxu0
      %v3728 = vadd.f32 %v3459, %v3727
      %v3729 = vand.u32 %v2154, 4294901760
      %3730 = vmatmul.f32.gmra.mxu0 %v3729
      %v3731 = vpop.f32.mrf.mxu0
      %v3732 = vadd.f32 %v3467, %v3731
      %v3733 = vand.u32 %v2155, 4294901760
      %3734 = vmatmul.f32.gmra.mxu0 %v3733
      %v3735 = vpop.f32.mrf.mxu0
      %v3736 = vadd.f32 %v3475, %v3735
      %v3737 = vand.u32 %v2156, 4294901760
      %3738 = vmatmul.f32.gmra.mxu0 %v3737
      %v3739 = vpop.f32.mrf.mxu0
      %v3740 = vadd.f32 %v3483, %v3739
      %v3741 = vand.u32 %v2157, 4294901760
      %3742 = vmatmul.f32.gmra.mxu0 %v3741
      %v3743 = vpop.f32.mrf.mxu0
      %v3744 = vadd.f32 %v3491, %v3743
      %v3745 = vand.u32 %v2158, 4294901760
      %3746 = vmatmul.f32.gmra.mxu0 %v3745
      %v3747 = vpop.f32.mrf.mxu0
      %v3748 = vadd.f32 %v3499, %v3747
      %v3749 = vand.u32 %v2159, 4294901760
      %3750 = vmatmul.f32.gmra.mxu0 %v3749
      %v3751 = vpop.f32.mrf.mxu0
      %v3752 = vadd.f32 %v3507, %v3751
      %v3753 = vand.u32 %v2160, 4294901760
      %3754 = vmatmul.f32.gmra.mxu0 %v3753
      %v3755 = vpop.f32.mrf.mxu0
      %v3756 = vadd.f32 %v3515, %v3755
      %v3757 = vand.u32 %v2161, 4294901760
      %3758 = vmatmul.f32.gmra.mxu0 %v3757
      %v3759 = vpop.f32.mrf.mxu0
      %v3760 = vadd.f32 %v3523, %v3759
      %v3761 = vand.u32 %v2162, 4294901760
      %3762 = vmatmul.f32.gmra.mxu0 %v3761
      %v3763 = vpop.f32.mrf.mxu0
      %v3764 = vadd.f32 %v3531, %v3763
      %v3765 = vand.u32 %v2163, 4294901760
      %3766 = vmatmul.f32.gmra.mxu0 %v3765
      %v3767 = vpop.f32.mrf.mxu0
      %v3768 = vadd.f32 %v3539, %v3767
      %v3769 = vand.u32 %v2164, 4294901760
      %3770 = vmatmul.f32.gmra.mxu0 %v3769
      %v3771 = vpop.f32.mrf.mxu0
      %v3772 = vadd.f32 %v3547, %v3771
      %v3773 = vand.u32 %v2165, 4294901760
      %3774 = vmatmul.f32.gmra.mxu0 %v3773
      %v3775 = vpop.f32.mrf.mxu0
      %v3776 = vadd.f32 %v3555, %v3775
      %v3777 = vand.u32 %v2166, 4294901760
      %3778 = vmatmul.f32.gmra.mxu0 %v3777
      %v3779 = vpop.f32.mrf.mxu0
      %v3780 = vadd.f32 %v3563, %v3779
      %v3781 = vand.u32 %v2167, 4294901760
      %3782 = vmatmul.f32.gmra.mxu0 %v3781
      %v3783 = vpop.f32.mrf.mxu0
      %v3784 = vadd.f32 %v3571, %v3783
      %v3785 = vand.u32 %v2168, 4294901760
      %3786 = vmatmul.f32.gmra.mxu0 %v3785
      %v3787 = vpop.f32.mrf.mxu0
      %v3788 = vadd.f32 %v3579, %v3787
      %v3789 = vand.u32 %v2169, 4294901760
      %3790 = vmatmul.f32.gmra.mxu0 %v3789
      %v3791 = vpop.f32.mrf.mxu0
      %v3792 = vadd.f32 %v3587, %v3791
      %v3793 = vand.u32 %v2170, 4294901760
      %3794 = vmatmul.f32.gmra.mxu0 %v3793
      %v3795 = vpop.f32.mrf.mxu0
      %v3796 = vadd.f32 %v3595, %v3795
      %v3797 = vand.u32 %v2171, 4294901760
      %3798 = vmatmul.f32.gmra.mxu0 %v3797
      %v3799 = vpop.f32.mrf.mxu0
      %v3800 = vadd.f32 %v3603, %v3799
      %3801 = vdwg.mxu0
      %v3802 = vand.u32 %v2203, 4294901760
      %v3803 = vsub.f32 %v2203, %v3802
      %3804 = vmatpush.msra.mxu0 %v3803
      %v3805 = vand.u32 %v2202, 4294901760
      %v3806 = vsub.f32 %v2202, %v3805
      %3807 = vmatpush.msra.mxu0 %v3806
      %v3808 = vand.u32 %v2201, 4294901760
      %v3809 = vsub.f32 %v2201, %v3808
      %3810 = vmatpush.msra.mxu0 %v3809
      %v3811 = vand.u32 %v2200, 4294901760
      %v3812 = vsub.f32 %v2200, %v3811
      %3813 = vmatpush.msra.mxu0 %v3812
      %v3814 = vand.u32 %v2199, 4294901760
      %v3815 = vsub.f32 %v2199, %v3814
      %3816 = vmatpush.msra.mxu0 %v3815
      %v3817 = vand.u32 %v2198, 4294901760
      %v3818 = vsub.f32 %v2198, %v3817
      %3819 = vmatpush.msra.mxu0 %v3818
      %v3820 = vand.u32 %v2197, 4294901760
      %v3821 = vsub.f32 %v2197, %v3820
      %3822 = vmatpush.msra.mxu0 %v3821
      %v3823 = vand.u32 %v2196, 4294901760
      %v3824 = vsub.f32 %v2196, %v3823
      %3825 = vmatpush.msra.mxu0 %v3824
      %v3826 = vand.u32 %v2195, 4294901760
      %v3827 = vsub.f32 %v2195, %v3826
      %3828 = vmatpush.msra.mxu0 %v3827
      %v3829 = vand.u32 %v2194, 4294901760
      %v3830 = vsub.f32 %v2194, %v3829
      %3831 = vmatpush.msra.mxu0 %v3830
      %v3832 = vand.u32 %v2193, 4294901760
      %v3833 = vsub.f32 %v2193, %v3832
      %3834 = vmatpush.msra.mxu0 %v3833
      %v3835 = vand.u32 %v2192, 4294901760
      %v3836 = vsub.f32 %v2192, %v3835
      %3837 = vmatpush.msra.mxu0 %v3836
      %v3838 = vand.u32 %v2191, 4294901760
      %v3839 = vsub.f32 %v2191, %v3838
      %3840 = vmatpush.msra.mxu0 %v3839
      %v3841 = vand.u32 %v2190, 4294901760
      %v3842 = vsub.f32 %v2190, %v3841
      %3843 = vmatpush.msra.mxu0 %v3842
      %v3844 = vand.u32 %v2189, 4294901760
      %v3845 = vsub.f32 %v2189, %v3844
      %3846 = vmatpush.msra.mxu0 %v3845
      %v3847 = vand.u32 %v2188, 4294901760
      %v3848 = vsub.f32 %v2188, %v3847
      %3849 = vmatpush.msra.mxu0 %v3848
      %v3850 = vand.u32 %v2147, 4294901760
      %v3851 = vsub.f32 %v2147, %v3850
      %3852 = vmatmul.f32.gmra.mxu0 %v3851
      %v3853 = vpop.f32.mrf.mxu0
      %v3854 = vadd.f32 %v3704, %v3853
      %v3855 = vand.u32 %v2148, 4294901760
      %v3856 = vsub.f32 %v2148, %v3855
      %3857 = vmatmul.f32.gmra.mxu0 %v3856
      %v3858 = vpop.f32.mrf.mxu0
      %v3859 = vadd.f32 %v3708, %v3858
      %v3860 = vand.u32 %v2149, 4294901760
      %v3861 = vsub.f32 %v2149, %v3860
      %3862 = vmatmul.f32.gmra.mxu0 %v3861
      %v3863 = vpop.f32.mrf.mxu0
      %v3864 = vadd.f32 %v3712, %v3863
      %v3865 = vand.u32 %v2150, 4294901760
      %v3866 = vsub.f32 %v2150, %v3865
      %3867 = vmatmul.f32.gmra.mxu0 %v3866
      %v3868 = vpop.f32.mrf.mxu0
      %v3869 = vadd.f32 %v3716, %v3868
      %v3870 = vand.u32 %v2151, 4294901760
      %v3871 = vsub.f32 %v2151, %v3870
      %3872 = vmatmul.f32.gmra.mxu0 %v3871
      %v3873 = vpop.f32.mrf.mxu0
      %v3874 = vadd.f32 %v3720, %v3873
      %v3875 = vand.u32 %v2152, 4294901760
      %v3876 = vsub.f32 %v2152, %v3875
      %3877 = vmatmul.f32.gmra.mxu0 %v3876
      %v3878 = vpop.f32.mrf.mxu0
      %v3879 = vadd.f32 %v3724, %v3878
      %v3880 = vand.u32 %v2153, 4294901760
      %v3881 = vsub.f32 %v2153, %v3880
      %3882 = vmatmul.f32.gmra.mxu0 %v3881
      %v3883 = vpop.f32.mrf.mxu0
      %v3884 = vadd.f32 %v3728, %v3883
      %v3885 = vand.u32 %v2154, 4294901760
      %v3886 = vsub.f32 %v2154, %v3885
      %3887 = vmatmul.f32.gmra.mxu0 %v3886
      %v3888 = vpop.f32.mrf.mxu0
      %v3889 = vadd.f32 %v3732, %v3888
      %v3890 = vand.u32 %v2155, 4294901760
      %v3891 = vsub.f32 %v2155, %v3890
      %3892 = vmatmul.f32.gmra.mxu0 %v3891
      %v3893 = vpop.f32.mrf.mxu0
      %v3894 = vadd.f32 %v3736, %v3893
      %v3895 = vand.u32 %v2156, 4294901760
      %v3896 = vsub.f32 %v2156, %v3895
      %3897 = vmatmul.f32.gmra.mxu0 %v3896
      %v3898 = vpop.f32.mrf.mxu0
      %v3899 = vadd.f32 %v3740, %v3898
      %v3900 = vand.u32 %v2157, 4294901760
      %v3901 = vsub.f32 %v2157, %v3900
      %3902 = vmatmul.f32.gmra.mxu0 %v3901
      %v3903 = vpop.f32.mrf.mxu0
      %v3904 = vadd.f32 %v3744, %v3903
      %v3905 = vand.u32 %v2158, 4294901760
      %v3906 = vsub.f32 %v2158, %v3905
      %3907 = vmatmul.f32.gmra.mxu0 %v3906
      %v3908 = vpop.f32.mrf.mxu0
      %v3909 = vadd.f32 %v3748, %v3908
      %v3910 = vand.u32 %v2159, 4294901760
      %v3911 = vsub.f32 %v2159, %v3910
      %3912 = vmatmul.f32.gmra.mxu0 %v3911
      %v3913 = vpop.f32.mrf.mxu0
      %v3914 = vadd.f32 %v3752, %v3913
      %v3915 = vand.u32 %v2160, 4294901760
      %v3916 = vsub.f32 %v2160, %v3915
      %3917 = vmatmul.f32.gmra.mxu0 %v3916
      %v3918 = vpop.f32.mrf.mxu0
      %v3919 = vadd.f32 %v3756, %v3918
      %v3920 = vand.u32 %v2161, 4294901760
      %v3921 = vsub.f32 %v2161, %v3920
      %3922 = vmatmul.f32.gmra.mxu0 %v3921
      %v3923 = vpop.f32.mrf.mxu0
      %v3924 = vadd.f32 %v3760, %v3923
      %v3925 = vand.u32 %v2162, 4294901760
      %v3926 = vsub.f32 %v2162, %v3925
      %3927 = vmatmul.f32.gmra.mxu0 %v3926
      %v3928 = vpop.f32.mrf.mxu0
      %v3929 = vadd.f32 %v3764, %v3928
      %v3930 = vand.u32 %v2163, 4294901760
      %v3931 = vsub.f32 %v2163, %v3930
      %3932 = vmatmul.f32.gmra.mxu0 %v3931
      %v3933 = vpop.f32.mrf.mxu0
      %v3934 = vadd.f32 %v3768, %v3933
      %v3935 = vand.u32 %v2164, 4294901760
      %v3936 = vsub.f32 %v2164, %v3935
      %3937 = vmatmul.f32.gmra.mxu0 %v3936
      %v3938 = vpop.f32.mrf.mxu0
      %v3939 = vadd.f32 %v3772, %v3938
      %v3940 = vand.u32 %v2165, 4294901760
      %v3941 = vsub.f32 %v2165, %v3940
      %3942 = vmatmul.f32.gmra.mxu0 %v3941
      %v3943 = vpop.f32.mrf.mxu0
      %v3944 = vadd.f32 %v3776, %v3943
      %v3945 = vand.u32 %v2166, 4294901760
      %v3946 = vsub.f32 %v2166, %v3945
      %3947 = vmatmul.f32.gmra.mxu0 %v3946
      %v3948 = vpop.f32.mrf.mxu0
      %v3949 = vadd.f32 %v3780, %v3948
      %v3950 = vand.u32 %v2167, 4294901760
      %v3951 = vsub.f32 %v2167, %v3950
      %3952 = vmatmul.f32.gmra.mxu0 %v3951
      %v3953 = vpop.f32.mrf.mxu0
      %v3954 = vadd.f32 %v3784, %v3953
      %v3955 = vand.u32 %v2168, 4294901760
      %v3956 = vsub.f32 %v2168, %v3955
      %3957 = vmatmul.f32.gmra.mxu0 %v3956
      %v3958 = vpop.f32.mrf.mxu0
      %v3959 = vadd.f32 %v3788, %v3958
      %v3960 = vand.u32 %v2169, 4294901760
      %v3961 = vsub.f32 %v2169, %v3960
      %3962 = vmatmul.f32.gmra.mxu0 %v3961
      %v3963 = vpop.f32.mrf.mxu0
      %v3964 = vadd.f32 %v3792, %v3963
      %v3965 = vand.u32 %v2170, 4294901760
      %v3966 = vsub.f32 %v2170, %v3965
      %3967 = vmatmul.f32.gmra.mxu0 %v3966
      %v3968 = vpop.f32.mrf.mxu0
      %v3969 = vadd.f32 %v3796, %v3968
      %v3970 = vand.u32 %v2171, 4294901760
      %v3971 = vsub.f32 %v2171, %v3970
      %3972 = vmatmul.f32.gmra.mxu0 %v3971
      %v3973 = vpop.f32.mrf.mxu0
      %v3974 = vadd.f32 %v3800, %v3973
      %3975 = vdwg.mxu0
      %v3976 = vand.u32 %v2203, 4294901760
      %3977 = vmatpush.msra.mxu0 %v3976
      %v3978 = vand.u32 %v2202, 4294901760
      %3979 = vmatpush.msra.mxu0 %v3978
      %v3980 = vand.u32 %v2201, 4294901760
      %3981 = vmatpush.msra.mxu0 %v3980
      %v3982 = vand.u32 %v2200, 4294901760
      %3983 = vmatpush.msra.mxu0 %v3982
      %v3984 = vand.u32 %v2199, 4294901760
      %3985 = vmatpush.msra.mxu0 %v3984
      %v3986 = vand.u32 %v2198, 4294901760
      %3987 = vmatpush.msra.mxu0 %v3986
      %v3988 = vand.u32 %v2197, 4294901760
      %3989 = vmatpush.msra.mxu0 %v3988
      %v3990 = vand.u32 %v2196, 4294901760
      %3991 = vmatpush.msra.mxu0 %v3990
      %v3992 = vand.u32 %v2195, 4294901760
      %3993 = vmatpush.msra.mxu0 %v3992
      %v3994 = vand.u32 %v2194, 4294901760
      %3995 = vmatpush.msra.mxu0 %v3994
      %v3996 = vand.u32 %v2193, 4294901760
      %3997 = vmatpush.msra.mxu0 %v3996
      %v3998 = vand.u32 %v2192, 4294901760
      %3999 = vmatpush.msra.mxu0 %v3998
      %v4000 = vand.u32 %v2191, 4294901760
      %4001 = vmatpush.msra.mxu0 %v4000
      %v4002 = vand.u32 %v2190, 4294901760
      %4003 = vmatpush.msra.mxu0 %v4002
      %v4004 = vand.u32 %v2189, 4294901760
      %4005 = vmatpush.msra.mxu0 %v4004
      %v4006 = vand.u32 %v2188, 4294901760
      %4007 = vmatpush.msra.mxu0 %v4006
      %v4008 = vand.u32 %v2147, 4294901760
      %v4009 = vsub.f32 %v2147, %v4008
      %v4010 = vand.u32 %v4009, 4294901760
      %4011 = vmatmul.f32.gmra.mxu0 %v4010
      %v4012 = vpop.f32.mrf.mxu0
      %v4013 = vadd.f32 %v3854, %v4012
      %v4014 = vand.u32 %v2148, 4294901760
      %v4015 = vsub.f32 %v2148, %v4014
      %v4016 = vand.u32 %v4015, 4294901760
      %4017 = vmatmul.f32.gmra.mxu0 %v4016
      %v4018 = vpop.f32.mrf.mxu0
      %v4019 = vadd.f32 %v3859, %v4018
      %v4020 = vand.u32 %v2149, 4294901760
      %v4021 = vsub.f32 %v2149, %v4020
      %v4022 = vand.u32 %v4021, 4294901760
      %4023 = vmatmul.f32.gmra.mxu0 %v4022
      %v4024 = vpop.f32.mrf.mxu0
      %v4025 = vadd.f32 %v3864, %v4024
      %v4026 = vand.u32 %v2150, 4294901760
      %v4027 = vsub.f32 %v2150, %v4026
      %v4028 = vand.u32 %v4027, 4294901760
      %4029 = vmatmul.f32.gmra.mxu0 %v4028
      %v4030 = vpop.f32.mrf.mxu0
      %v4031 = vadd.f32 %v3869, %v4030
      %v4032 = vand.u32 %v2151, 4294901760
      %v4033 = vsub.f32 %v2151, %v4032
      %v4034 = vand.u32 %v4033, 4294901760
      %4035 = vmatmul.f32.gmra.mxu0 %v4034
      %v4036 = vpop.f32.mrf.mxu0
      %v4037 = vadd.f32 %v3874, %v4036
      %v4038 = vand.u32 %v2152, 4294901760
      %v4039 = vsub.f32 %v2152, %v4038
      %v4040 = vand.u32 %v4039, 4294901760
      %4041 = vmatmul.f32.gmra.mxu0 %v4040
      %v4042 = vpop.f32.mrf.mxu0
      %v4043 = vadd.f32 %v3879, %v4042
      %v4044 = vand.u32 %v2153, 4294901760
      %v4045 = vsub.f32 %v2153, %v4044
      %v4046 = vand.u32 %v4045, 4294901760
      %4047 = vmatmul.f32.gmra.mxu0 %v4046
      %v4048 = vpop.f32.mrf.mxu0
      %v4049 = vadd.f32 %v3884, %v4048
      %v4050 = vand.u32 %v2154, 4294901760
      %v4051 = vsub.f32 %v2154, %v4050
      %v4052 = vand.u32 %v4051, 4294901760
      %4053 = vmatmul.f32.gmra.mxu0 %v4052
      %v4054 = vpop.f32.mrf.mxu0
      %v4055 = vadd.f32 %v3889, %v4054
      %v4056 = vand.u32 %v2155, 4294901760
      %v4057 = vsub.f32 %v2155, %v4056
      %v4058 = vand.u32 %v4057, 4294901760
      %4059 = vmatmul.f32.gmra.mxu0 %v4058
      %v4060 = vpop.f32.mrf.mxu0
      %v4061 = vadd.f32 %v3894, %v4060
      %v4062 = vand.u32 %v2156, 4294901760
      %v4063 = vsub.f32 %v2156, %v4062
      %v4064 = vand.u32 %v4063, 4294901760
      %4065 = vmatmul.f32.gmra.mxu0 %v4064
      %v4066 = vpop.f32.mrf.mxu0
      %v4067 = vadd.f32 %v3899, %v4066
      %v4068 = vand.u32 %v2157, 4294901760
      %v4069 = vsub.f32 %v2157, %v4068
      %v4070 = vand.u32 %v4069, 4294901760
      %4071 = vmatmul.f32.gmra.mxu0 %v4070
      %v4072 = vpop.f32.mrf.mxu0
      %v4073 = vadd.f32 %v3904, %v4072
      %v4074 = vand.u32 %v2158, 4294901760
      %v4075 = vsub.f32 %v2158, %v4074
      %v4076 = vand.u32 %v4075, 4294901760
      %4077 = vmatmul.f32.gmra.mxu0 %v4076
      %v4078 = vpop.f32.mrf.mxu0
      %v4079 = vadd.f32 %v3909, %v4078
      %v4080 = vand.u32 %v2159, 4294901760
      %v4081 = vsub.f32 %v2159, %v4080
      %v4082 = vand.u32 %v4081, 4294901760
      %4083 = vmatmul.f32.gmra.mxu0 %v4082
      %v4084 = vpop.f32.mrf.mxu0
      %v4085 = vadd.f32 %v3914, %v4084
      %v4086 = vand.u32 %v2160, 4294901760
      %v4087 = vsub.f32 %v2160, %v4086
      %v4088 = vand.u32 %v4087, 4294901760
      %4089 = vmatmul.f32.gmra.mxu0 %v4088
      %v4090 = vpop.f32.mrf.mxu0
      %v4091 = vadd.f32 %v3919, %v4090
      %v4092 = vand.u32 %v2161, 4294901760
      %v4093 = vsub.f32 %v2161, %v4092
      %v4094 = vand.u32 %v4093, 4294901760
      %4095 = vmatmul.f32.gmra.mxu0 %v4094
      %v4096 = vpop.f32.mrf.mxu0
      %v4097 = vadd.f32 %v3924, %v4096
      %v4098 = vand.u32 %v2162, 4294901760
      %v4099 = vsub.f32 %v2162, %v4098
      %v4100 = vand.u32 %v4099, 4294901760
      %4101 = vmatmul.f32.gmra.mxu0 %v4100
      %v4102 = vpop.f32.mrf.mxu0
      %v4103 = vadd.f32 %v3929, %v4102
      %v4104 = vand.u32 %v2163, 4294901760
      %v4105 = vsub.f32 %v2163, %v4104
      %v4106 = vand.u32 %v4105, 4294901760
      %4107 = vmatmul.f32.gmra.mxu0 %v4106
      %v4108 = vpop.f32.mrf.mxu0
      %v4109 = vadd.f32 %v3934, %v4108
      %v4110 = vand.u32 %v2164, 4294901760
      %v4111 = vsub.f32 %v2164, %v4110
      %v4112 = vand.u32 %v4111, 4294901760
      %4113 = vmatmul.f32.gmra.mxu0 %v4112
      %v4114 = vpop.f32.mrf.mxu0
      %v4115 = vadd.f32 %v3939, %v4114
      %v4116 = vand.u32 %v2165, 4294901760
      %v4117 = vsub.f32 %v2165, %v4116
      %v4118 = vand.u32 %v4117, 4294901760
      %4119 = vmatmul.f32.gmra.mxu0 %v4118
      %v4120 = vpop.f32.mrf.mxu0
      %v4121 = vadd.f32 %v3944, %v4120
      %v4122 = vand.u32 %v2166, 4294901760
      %v4123 = vsub.f32 %v2166, %v4122
      %v4124 = vand.u32 %v4123, 4294901760
      %4125 = vmatmul.f32.gmra.mxu0 %v4124
      %v4126 = vpop.f32.mrf.mxu0
      %v4127 = vadd.f32 %v3949, %v4126
      %v4128 = vand.u32 %v2167, 4294901760
      %v4129 = vsub.f32 %v2167, %v4128
      %v4130 = vand.u32 %v4129, 4294901760
      %4131 = vmatmul.f32.gmra.mxu0 %v4130
      %v4132 = vpop.f32.mrf.mxu0
      %v4133 = vadd.f32 %v3954, %v4132
      %v4134 = vand.u32 %v2168, 4294901760
      %v4135 = vsub.f32 %v2168, %v4134
      %v4136 = vand.u32 %v4135, 4294901760
      %4137 = vmatmul.f32.gmra.mxu0 %v4136
      %v4138 = vpop.f32.mrf.mxu0
      %v4139 = vadd.f32 %v3959, %v4138
      %v4140 = vand.u32 %v2169, 4294901760
      %v4141 = vsub.f32 %v2169, %v4140
      %v4142 = vand.u32 %v4141, 4294901760
      %4143 = vmatmul.f32.gmra.mxu0 %v4142
      %v4144 = vpop.f32.mrf.mxu0
      %v4145 = vadd.f32 %v3964, %v4144
      %v4146 = vand.u32 %v2170, 4294901760
      %v4147 = vsub.f32 %v2170, %v4146
      %v4148 = vand.u32 %v4147, 4294901760
      %4149 = vmatmul.f32.gmra.mxu0 %v4148
      %v4150 = vpop.f32.mrf.mxu0
      %v4151 = vadd.f32 %v3969, %v4150
      %v4152 = vand.u32 %v2171, 4294901760
      %v4153 = vsub.f32 %v2171, %v4152
      %v4154 = vand.u32 %v4153, 4294901760
      %4155 = vmatmul.f32.gmra.mxu0 %v4154
      %v4156 = vpop.f32.mrf.mxu0
      %v4157 = vadd.f32 %v3974, %v4156
      %4158 = vdwg.mxu0
      %v4159 = vand.u32 %v2203, 4294901760
      %v4160 = vsub.f32 %v2203, %v4159
      %v4161 = vand.u32 %v4160, 4294901760
      %4162 = vmatpush.msra.mxu0 %v4161
      %v4163 = vand.u32 %v2202, 4294901760
      %v4164 = vsub.f32 %v2202, %v4163
      %v4165 = vand.u32 %v4164, 4294901760
      %4166 = vmatpush.msra.mxu0 %v4165
      %v4167 = vand.u32 %v2201, 4294901760
      %v4168 = vsub.f32 %v2201, %v4167
      %v4169 = vand.u32 %v4168, 4294901760
      %4170 = vmatpush.msra.mxu0 %v4169
      %v4171 = vand.u32 %v2200, 4294901760
      %v4172 = vsub.f32 %v2200, %v4171
      %v4173 = vand.u32 %v4172, 4294901760
      %4174 = vmatpush.msra.mxu0 %v4173
      %v4175 = vand.u32 %v2199, 4294901760
      %v4176 = vsub.f32 %v2199, %v4175
      %v4177 = vand.u32 %v4176, 4294901760
      %4178 = vmatpush.msra.mxu0 %v4177
      %v4179 = vand.u32 %v2198, 4294901760
      %v4180 = vsub.f32 %v2198, %v4179
      %v4181 = vand.u32 %v4180, 4294901760
      %4182 = vmatpush.msra.mxu0 %v4181
      %v4183 = vand.u32 %v2197, 4294901760
      %v4184 = vsub.f32 %v2197, %v4183
      %v4185 = vand.u32 %v4184, 4294901760
      %4186 = vmatpush.msra.mxu0 %v4185
      %v4187 = vand.u32 %v2196, 4294901760
      %v4188 = vsub.f32 %v2196, %v4187
      %v4189 = vand.u32 %v4188, 4294901760
      %4190 = vmatpush.msra.mxu0 %v4189
      %v4191 = vand.u32 %v2195, 4294901760
      %v4192 = vsub.f32 %v2195, %v4191
      %v4193 = vand.u32 %v4192, 4294901760
      %4194 = vmatpush.msra.mxu0 %v4193
      %v4195 = vand.u32 %v2194, 4294901760
      %v4196 = vsub.f32 %v2194, %v4195
      %v4197 = vand.u32 %v4196, 4294901760
      %4198 = vmatpush.msra.mxu0 %v4197
      %v4199 = vand.u32 %v2193, 4294901760
      %v4200 = vsub.f32 %v2193, %v4199
      %v4201 = vand.u32 %v4200, 4294901760
      %4202 = vmatpush.msra.mxu0 %v4201
      %v4203 = vand.u32 %v2192, 4294901760
      %v4204 = vsub.f32 %v2192, %v4203
      %v4205 = vand.u32 %v4204, 4294901760
      %4206 = vmatpush.msra.mxu0 %v4205
      %v4207 = vand.u32 %v2191, 4294901760
      %v4208 = vsub.f32 %v2191, %v4207
      %v4209 = vand.u32 %v4208, 4294901760
      %4210 = vmatpush.msra.mxu0 %v4209
      %v4211 = vand.u32 %v2190, 4294901760
      %v4212 = vsub.f32 %v2190, %v4211
      %v4213 = vand.u32 %v4212, 4294901760
      %4214 = vmatpush.msra.mxu0 %v4213
      %v4215 = vand.u32 %v2189, 4294901760
      %v4216 = vsub.f32 %v2189, %v4215
      %v4217 = vand.u32 %v4216, 4294901760
      %4218 = vmatpush.msra.mxu0 %v4217
      %v4219 = vand.u32 %v2188, 4294901760
      %v4220 = vsub.f32 %v2188, %v4219
      %v4221 = vand.u32 %v4220, 4294901760
      %4222 = vmatpush.msra.mxu0 %v4221
      %v4223 = vand.u32 %v2147, 4294901760
      %4224 = vmatmul.f32.gmra.mxu0 %v4223
      %v4225 = vpop.f32.mrf.mxu0
      %v4226 = vadd.f32 %v4013, %v4225
      %v4227 = vand.u32 %v2148, 4294901760
      %4228 = vmatmul.f32.gmra.mxu0 %v4227
      %v4229 = vpop.f32.mrf.mxu0
      %v4230 = vadd.f32 %v4019, %v4229
      %v4231 = vand.u32 %v2149, 4294901760
      %4232 = vmatmul.f32.gmra.mxu0 %v4231
      %v4233 = vpop.f32.mrf.mxu0
      %v4234 = vadd.f32 %v4025, %v4233
      %v4235 = vand.u32 %v2150, 4294901760
      %4236 = vmatmul.f32.gmra.mxu0 %v4235
      %v4237 = vpop.f32.mrf.mxu0
      %v4238 = vadd.f32 %v4031, %v4237
      %v4239 = vand.u32 %v2151, 4294901760
      %4240 = vmatmul.f32.gmra.mxu0 %v4239
      %v4241 = vpop.f32.mrf.mxu0
      %v4242 = vadd.f32 %v4037, %v4241
      %v4243 = vand.u32 %v2152, 4294901760
      %4244 = vmatmul.f32.gmra.mxu0 %v4243
      %v4245 = vpop.f32.mrf.mxu0
      %v4246 = vadd.f32 %v4043, %v4245
      %v4247 = vand.u32 %v2153, 4294901760
      %4248 = vmatmul.f32.gmra.mxu0 %v4247
      %v4249 = vpop.f32.mrf.mxu0
      %v4250 = vadd.f32 %v4049, %v4249
      %v4251 = vand.u32 %v2154, 4294901760
      %4252 = vmatmul.f32.gmra.mxu0 %v4251
      %v4253 = vpop.f32.mrf.mxu0
      %v4254 = vadd.f32 %v4055, %v4253
      %v4255 = vand.u32 %v2155, 4294901760
      %4256 = vmatmul.f32.gmra.mxu0 %v4255
      %v4257 = vpop.f32.mrf.mxu0
      %v4258 = vadd.f32 %v4061, %v4257
      %v4259 = vand.u32 %v2156, 4294901760
      %4260 = vmatmul.f32.gmra.mxu0 %v4259
      %v4261 = vpop.f32.mrf.mxu0
      %v4262 = vadd.f32 %v4067, %v4261
      %v4263 = vand.u32 %v2157, 4294901760
      %4264 = vmatmul.f32.gmra.mxu0 %v4263
      %v4265 = vpop.f32.mrf.mxu0
      %v4266 = vadd.f32 %v4073, %v4265
      %v4267 = vand.u32 %v2158, 4294901760
      %4268 = vmatmul.f32.gmra.mxu0 %v4267
      %v4269 = vpop.f32.mrf.mxu0
      %v4270 = vadd.f32 %v4079, %v4269
      %v4271 = vand.u32 %v2159, 4294901760
      %4272 = vmatmul.f32.gmra.mxu0 %v4271
      %v4273 = vpop.f32.mrf.mxu0
      %v4274 = vadd.f32 %v4085, %v4273
      %v4275 = vand.u32 %v2160, 4294901760
      %4276 = vmatmul.f32.gmra.mxu0 %v4275
      %v4277 = vpop.f32.mrf.mxu0
      %v4278 = vadd.f32 %v4091, %v4277
      %v4279 = vand.u32 %v2161, 4294901760
      %4280 = vmatmul.f32.gmra.mxu0 %v4279
      %v4281 = vpop.f32.mrf.mxu0
      %v4282 = vadd.f32 %v4097, %v4281
      %v4283 = vand.u32 %v2162, 4294901760
      %4284 = vmatmul.f32.gmra.mxu0 %v4283
      %v4285 = vpop.f32.mrf.mxu0
      %v4286 = vadd.f32 %v4103, %v4285
      %v4287 = vand.u32 %v2163, 4294901760
      %4288 = vmatmul.f32.gmra.mxu0 %v4287
      %v4289 = vpop.f32.mrf.mxu0
      %v4290 = vadd.f32 %v4109, %v4289
      %v4291 = vand.u32 %v2164, 4294901760
      %4292 = vmatmul.f32.gmra.mxu0 %v4291
      %v4293 = vpop.f32.mrf.mxu0
      %v4294 = vadd.f32 %v4115, %v4293
      %v4295 = vand.u32 %v2165, 4294901760
      %4296 = vmatmul.f32.gmra.mxu0 %v4295
      %v4297 = vpop.f32.mrf.mxu0
      %v4298 = vadd.f32 %v4121, %v4297
      %v4299 = vand.u32 %v2166, 4294901760
      %4300 = vmatmul.f32.gmra.mxu0 %v4299
      %v4301 = vpop.f32.mrf.mxu0
      %v4302 = vadd.f32 %v4127, %v4301
      %v4303 = vand.u32 %v2167, 4294901760
      %4304 = vmatmul.f32.gmra.mxu0 %v4303
      %v4305 = vpop.f32.mrf.mxu0
      %v4306 = vadd.f32 %v4133, %v4305
      %v4307 = vand.u32 %v2168, 4294901760
      %4308 = vmatmul.f32.gmra.mxu0 %v4307
      %v4309 = vpop.f32.mrf.mxu0
      %v4310 = vadd.f32 %v4139, %v4309
      %v4311 = vand.u32 %v2169, 4294901760
      %4312 = vmatmul.f32.gmra.mxu0 %v4311
      %v4313 = vpop.f32.mrf.mxu0
      %v4314 = vadd.f32 %v4145, %v4313
      %v4315 = vand.u32 %v2170, 4294901760
      %4316 = vmatmul.f32.gmra.mxu0 %v4315
      %v4317 = vpop.f32.mrf.mxu0
      %v4318 = vadd.f32 %v4151, %v4317
      %v4319 = vand.u32 %v2171, 4294901760
      %4320 = vmatmul.f32.gmra.mxu0 %v4319
      %v4321 = vpop.f32.mrf.mxu0
      %v4322 = vadd.f32 %v4157, %v4321
      %4323 = vdwg.mxu0
      %v4324 = vand.u32 %v2203, 4294901760
      %4325 = vmatpush.msra.mxu0 %v4324
      %v4326 = vand.u32 %v2202, 4294901760
      %4327 = vmatpush.msra.mxu0 %v4326
      %v4328 = vand.u32 %v2201, 4294901760
      %4329 = vmatpush.msra.mxu0 %v4328
      %v4330 = vand.u32 %v2200, 4294901760
      %4331 = vmatpush.msra.mxu0 %v4330
      %v4332 = vand.u32 %v2199, 4294901760
      %4333 = vmatpush.msra.mxu0 %v4332
      %v4334 = vand.u32 %v2198, 4294901760
      %4335 = vmatpush.msra.mxu0 %v4334
      %v4336 = vand.u32 %v2197, 4294901760
      %4337 = vmatpush.msra.mxu0 %v4336
      %v4338 = vand.u32 %v2196, 4294901760
      %4339 = vmatpush.msra.mxu0 %v4338
      %v4340 = vand.u32 %v2195, 4294901760
      %4341 = vmatpush.msra.mxu0 %v4340
      %v4342 = vand.u32 %v2194, 4294901760
      %4343 = vmatpush.msra.mxu0 %v4342
      %v4344 = vand.u32 %v2193, 4294901760
      %4345 = vmatpush.msra.mxu0 %v4344
      %v4346 = vand.u32 %v2192, 4294901760
      %4347 = vmatpush.msra.mxu0 %v4346
      %v4348 = vand.u32 %v2191, 4294901760
      %4349 = vmatpush.msra.mxu0 %v4348
      %v4350 = vand.u32 %v2190, 4294901760
      %4351 = vmatpush.msra.mxu0 %v4350
      %v4352 = vand.u32 %v2189, 4294901760
      %4353 = vmatpush.msra.mxu0 %v4352
      %v4354 = vand.u32 %v2188, 4294901760
      %4355 = vmatpush.msra.mxu0 %v4354
      %v4356 = vand.u32 %v2147, 4294901760
      %4357 = vmatmul.f32.gmra.mxu0 %v4356
      %v4358 = vpop.f32.mrf.mxu0
      %v4359 = vadd.f32 %v4226, %v4358
      %v4360 = vand.u32 %v2148, 4294901760
      %4361 = vmatmul.f32.gmra.mxu0 %v4360
      %v4362 = vpop.f32.mrf.mxu0
      %v4363 = vadd.f32 %v4230, %v4362
      %v4364 = vand.u32 %v2149, 4294901760
      %4365 = vmatmul.f32.gmra.mxu0 %v4364
      %v4366 = vpop.f32.mrf.mxu0
      %v4367 = vadd.f32 %v4234, %v4366
      %v4368 = vand.u32 %v2150, 4294901760
      %4369 = vmatmul.f32.gmra.mxu0 %v4368
      %v4370 = vpop.f32.mrf.mxu0
      %v4371 = vadd.f32 %v4238, %v4370
      %v4372 = vand.u32 %v2151, 4294901760
      %4373 = vmatmul.f32.gmra.mxu0 %v4372
      %v4374 = vpop.f32.mrf.mxu0
      %v4375 = vadd.f32 %v4242, %v4374
      %v4376 = vand.u32 %v2152, 4294901760
      %4377 = vmatmul.f32.gmra.mxu0 %v4376
      %v4378 = vpop.f32.mrf.mxu0
      %v4379 = vadd.f32 %v4246, %v4378
      %v4380 = vand.u32 %v2153, 4294901760
      %4381 = vmatmul.f32.gmra.mxu0 %v4380
      %v4382 = vpop.f32.mrf.mxu0
      %v4383 = vadd.f32 %v4250, %v4382
      %v4384 = vand.u32 %v2154, 4294901760
      %4385 = vmatmul.f32.gmra.mxu0 %v4384
      %v4386 = vpop.f32.mrf.mxu0
      %v4387 = vadd.f32 %v4254, %v4386
      %v4388 = vand.u32 %v2155, 4294901760
      %4389 = vmatmul.f32.gmra.mxu0 %v4388
      %v4390 = vpop.f32.mrf.mxu0
      %v4391 = vadd.f32 %v4258, %v4390
      %v4392 = vand.u32 %v2156, 4294901760
      %4393 = vmatmul.f32.gmra.mxu0 %v4392
      %v4394 = vpop.f32.mrf.mxu0
      %v4395 = vadd.f32 %v4262, %v4394
      %v4396 = vand.u32 %v2157, 4294901760
      %4397 = vmatmul.f32.gmra.mxu0 %v4396
      %v4398 = vpop.f32.mrf.mxu0
      %v4399 = vadd.f32 %v4266, %v4398
      %v4400 = vand.u32 %v2158, 4294901760
      %4401 = vmatmul.f32.gmra.mxu0 %v4400
      %v4402 = vpop.f32.mrf.mxu0
      %v4403 = vadd.f32 %v4270, %v4402
      %v4404 = vand.u32 %v2159, 4294901760
      %4405 = vmatmul.f32.gmra.mxu0 %v4404
      %v4406 = vpop.f32.mrf.mxu0
      %v4407 = vadd.f32 %v4274, %v4406
      %v4408 = vand.u32 %v2160, 4294901760
      %4409 = vmatmul.f32.gmra.mxu0 %v4408
      %v4410 = vpop.f32.mrf.mxu0
      %v4411 = vadd.f32 %v4278, %v4410
      %v4412 = vand.u32 %v2161, 4294901760
      %4413 = vmatmul.f32.gmra.mxu0 %v4412
      %v4414 = vpop.f32.mrf.mxu0
      %v4415 = vadd.f32 %v4282, %v4414
      %v4416 = vand.u32 %v2162, 4294901760
      %4417 = vmatmul.f32.gmra.mxu0 %v4416
      %v4418 = vpop.f32.mrf.mxu0
      %v4419 = vadd.f32 %v4286, %v4418
      %v4420 = vand.u32 %v2163, 4294901760
      %4421 = vmatmul.f32.gmra.mxu0 %v4420
      %v4422 = vpop.f32.mrf.mxu0
      %v4423 = vadd.f32 %v4290, %v4422
      %v4424 = vand.u32 %v2164, 4294901760
      %4425 = vmatmul.f32.gmra.mxu0 %v4424
      %v4426 = vpop.f32.mrf.mxu0
      %v4427 = vadd.f32 %v4294, %v4426
      %v4428 = vand.u32 %v2165, 4294901760
      %4429 = vmatmul.f32.gmra.mxu0 %v4428
      %v4430 = vpop.f32.mrf.mxu0
      %v4431 = vadd.f32 %v4298, %v4430
      %v4432 = vand.u32 %v2166, 4294901760
      %4433 = vmatmul.f32.gmra.mxu0 %v4432
      %v4434 = vpop.f32.mrf.mxu0
      %v4435 = vadd.f32 %v4302, %v4434
      %v4436 = vand.u32 %v2167, 4294901760
      %4437 = vmatmul.f32.gmra.mxu0 %v4436
      %v4438 = vpop.f32.mrf.mxu0
      %v4439 = vadd.f32 %v4306, %v4438
      %v4440 = vand.u32 %v2168, 4294901760
      %4441 = vmatmul.f32.gmra.mxu0 %v4440
      %v4442 = vpop.f32.mrf.mxu0
      %v4443 = vadd.f32 %v4310, %v4442
      %v4444 = vand.u32 %v2169, 4294901760
      %4445 = vmatmul.f32.gmra.mxu0 %v4444
      %v4446 = vpop.f32.mrf.mxu0
      %v4447 = vadd.f32 %v4314, %v4446
      %v4448 = vand.u32 %v2170, 4294901760
      %4449 = vmatmul.f32.gmra.mxu0 %v4448
      %v4450 = vpop.f32.mrf.mxu0
      %v4451 = vadd.f32 %v4318, %v4450
      %v4452 = vand.u32 %v2171, 4294901760
      %4453 = vmatmul.f32.gmra.mxu0 %v4452
      %v4454 = vpop.f32.mrf.mxu0
      %v4455 = vadd.f32 %v4322, %v4454
      %4456 = vdwg.mxu0
      %4457 = vmatpush.msra.mxu0 0.0
      %4458 = vmatpush.msra.mxu0 0.0
      %4459 = vmatpush.msra.mxu0 0.0
      %4460 = vmatpush.msra.mxu0 0.0
      %4461 = vmatpush.msra.mxu0 0.0
      %4462 = vmatpush.msra.mxu0 0.0
      %4463 = vmatpush.msra.mxu0 0.0
      %4464 = vmatpush.msra.mxu0 0.0
      %4465 = vmatpush.msra.mxu0 0.0
      %4466 = vmatpush.msra.mxu0 0.0
      %4467 = vmatpush.msra.mxu0 0.0
      %4468 = vmatpush.msra.mxu0 0.0
      %v4469 = vand.u32 %v2207, 4294901760
      %4470 = vmatpush.msra.mxu0 %v4469
      %v4471 = vand.u32 %v2206, 4294901760
      %4472 = vmatpush.msra.mxu0 %v4471
      %v4473 = vand.u32 %v2205, 4294901760
      %4474 = vmatpush.msra.mxu0 %v4473
      %v4475 = vand.u32 %v2204, 4294901760
      %4476 = vmatpush.msra.mxu0 %v4475
      %v4477 = vand.u32 %v2213, 4294901760
      %v4478 = vsub.f32 %v2213, %v4477
      %v4479 = vand.u32 %v4478, 4294901760
      %v4480 = vsub.f32 %v4478, %v4479
      %v4481 = vand.u32 %v4480, 4294901760
      %4482 = vmatmul.f32.gmra.mxu0 %v4481
      %v4483 = vpop.f32.mrf.mxu0
      %v4484 = vadd.f32 %v4359, %v4483
      %v4485 = vand.u32 %v2216, 4294901760
      %v4486 = vsub.f32 %v2216, %v4485
      %v4487 = vand.u32 %v4486, 4294901760
      %v4488 = vsub.f32 %v4486, %v4487
      %v4489 = vand.u32 %v4488, 4294901760
      %4490 = vmatmul.f32.gmra.mxu0 %v4489
      %v4491 = vpop.f32.mrf.mxu0
      %v4492 = vadd.f32 %v4363, %v4491
      %v4493 = vand.u32 %v2219, 4294901760
      %v4494 = vsub.f32 %v2219, %v4493
      %v4495 = vand.u32 %v4494, 4294901760
      %v4496 = vsub.f32 %v4494, %v4495
      %v4497 = vand.u32 %v4496, 4294901760
      %4498 = vmatmul.f32.gmra.mxu0 %v4497
      %v4499 = vpop.f32.mrf.mxu0
      %v4500 = vadd.f32 %v4367, %v4499
      %v4501 = vand.u32 %v2222, 4294901760
      %v4502 = vsub.f32 %v2222, %v4501
      %v4503 = vand.u32 %v4502, 4294901760
      %v4504 = vsub.f32 %v4502, %v4503
      %v4505 = vand.u32 %v4504, 4294901760
      %4506 = vmatmul.f32.gmra.mxu0 %v4505
      %v4507 = vpop.f32.mrf.mxu0
      %v4508 = vadd.f32 %v4371, %v4507
      %v4509 = vand.u32 %v2225, 4294901760
      %v4510 = vsub.f32 %v2225, %v4509
      %v4511 = vand.u32 %v4510, 4294901760
      %v4512 = vsub.f32 %v4510, %v4511
      %v4513 = vand.u32 %v4512, 4294901760
      %4514 = vmatmul.f32.gmra.mxu0 %v4513
      %v4515 = vpop.f32.mrf.mxu0
      %v4516 = vadd.f32 %v4375, %v4515
      %v4517 = vand.u32 %v2228, 4294901760
      %v4518 = vsub.f32 %v2228, %v4517
      %v4519 = vand.u32 %v4518, 4294901760
      %v4520 = vsub.f32 %v4518, %v4519
      %v4521 = vand.u32 %v4520, 4294901760
      %4522 = vmatmul.f32.gmra.mxu0 %v4521
      %v4523 = vpop.f32.mrf.mxu0
      %v4524 = vadd.f32 %v4379, %v4523
      %v4525 = vand.u32 %v2231, 4294901760
      %v4526 = vsub.f32 %v2231, %v4525
      %v4527 = vand.u32 %v4526, 4294901760
      %v4528 = vsub.f32 %v4526, %v4527
      %v4529 = vand.u32 %v4528, 4294901760
      %4530 = vmatmul.f32.gmra.mxu0 %v4529
      %v4531 = vpop.f32.mrf.mxu0
      %v4532 = vadd.f32 %v4383, %v4531
      %v4533 = vand.u32 %v2234, 4294901760
      %v4534 = vsub.f32 %v2234, %v4533
      %v4535 = vand.u32 %v4534, 4294901760
      %v4536 = vsub.f32 %v4534, %v4535
      %v4537 = vand.u32 %v4536, 4294901760
      %4538 = vmatmul.f32.gmra.mxu0 %v4537
      %v4539 = vpop.f32.mrf.mxu0
      %v4540 = vadd.f32 %v4387, %v4539
      %v4541 = vand.u32 %v2237, 4294901760
      %v4542 = vsub.f32 %v2237, %v4541
      %v4543 = vand.u32 %v4542, 4294901760
      %v4544 = vsub.f32 %v4542, %v4543
      %v4545 = vand.u32 %v4544, 4294901760
      %4546 = vmatmul.f32.gmra.mxu0 %v4545
      %v4547 = vpop.f32.mrf.mxu0
      %v4548 = vadd.f32 %v4391, %v4547
      %v4549 = vand.u32 %v2240, 4294901760
      %v4550 = vsub.f32 %v2240, %v4549
      %v4551 = vand.u32 %v4550, 4294901760
      %v4552 = vsub.f32 %v4550, %v4551
      %v4553 = vand.u32 %v4552, 4294901760
      %4554 = vmatmul.f32.gmra.mxu0 %v4553
      %v4555 = vpop.f32.mrf.mxu0
      %v4556 = vadd.f32 %v4395, %v4555
      %v4557 = vand.u32 %v2243, 4294901760
      %v4558 = vsub.f32 %v2243, %v4557
      %v4559 = vand.u32 %v4558, 4294901760
      %v4560 = vsub.f32 %v4558, %v4559
      %v4561 = vand.u32 %v4560, 4294901760
      %4562 = vmatmul.f32.gmra.mxu0 %v4561
      %v4563 = vpop.f32.mrf.mxu0
      %v4564 = vadd.f32 %v4399, %v4563
      %v4565 = vand.u32 %v2246, 4294901760
      %v4566 = vsub.f32 %v2246, %v4565
      %v4567 = vand.u32 %v4566, 4294901760
      %v4568 = vsub.f32 %v4566, %v4567
      %v4569 = vand.u32 %v4568, 4294901760
      %4570 = vmatmul.f32.gmra.mxu0 %v4569
      %v4571 = vpop.f32.mrf.mxu0
      %v4572 = vadd.f32 %v4403, %v4571
      %v4573 = vand.u32 %v2249, 4294901760
      %v4574 = vsub.f32 %v2249, %v4573
      %v4575 = vand.u32 %v4574, 4294901760
      %v4576 = vsub.f32 %v4574, %v4575
      %v4577 = vand.u32 %v4576, 4294901760
      %4578 = vmatmul.f32.gmra.mxu0 %v4577
      %v4579 = vpop.f32.mrf.mxu0
      %v4580 = vadd.f32 %v4407, %v4579
      %v4581 = vand.u32 %v2252, 4294901760
      %v4582 = vsub.f32 %v2252, %v4581
      %v4583 = vand.u32 %v4582, 4294901760
      %v4584 = vsub.f32 %v4582, %v4583
      %v4585 = vand.u32 %v4584, 4294901760
      %4586 = vmatmul.f32.gmra.mxu0 %v4585
      %v4587 = vpop.f32.mrf.mxu0
      %v4588 = vadd.f32 %v4411, %v4587
      %v4589 = vand.u32 %v2255, 4294901760
      %v4590 = vsub.f32 %v2255, %v4589
      %v4591 = vand.u32 %v4590, 4294901760
      %v4592 = vsub.f32 %v4590, %v4591
      %v4593 = vand.u32 %v4592, 4294901760
      %4594 = vmatmul.f32.gmra.mxu0 %v4593
      %v4595 = vpop.f32.mrf.mxu0
      %v4596 = vadd.f32 %v4415, %v4595
      %v4597 = vand.u32 %v2258, 4294901760
      %v4598 = vsub.f32 %v2258, %v4597
      %v4599 = vand.u32 %v4598, 4294901760
      %v4600 = vsub.f32 %v4598, %v4599
      %v4601 = vand.u32 %v4600, 4294901760
      %4602 = vmatmul.f32.gmra.mxu0 %v4601
      %v4603 = vpop.f32.mrf.mxu0
      %v4604 = vadd.f32 %v4419, %v4603
      %v4605 = vand.u32 %v2261, 4294901760
      %v4606 = vsub.f32 %v2261, %v4605
      %v4607 = vand.u32 %v4606, 4294901760
      %v4608 = vsub.f32 %v4606, %v4607
      %v4609 = vand.u32 %v4608, 4294901760
      %4610 = vmatmul.f32.gmra.mxu0 %v4609
      %v4611 = vpop.f32.mrf.mxu0
      %v4612 = vadd.f32 %v4423, %v4611
      %v4613 = vand.u32 %v2264, 4294901760
      %v4614 = vsub.f32 %v2264, %v4613
      %v4615 = vand.u32 %v4614, 4294901760
      %v4616 = vsub.f32 %v4614, %v4615
      %v4617 = vand.u32 %v4616, 4294901760
      %4618 = vmatmul.f32.gmra.mxu0 %v4617
      %v4619 = vpop.f32.mrf.mxu0
      %v4620 = vadd.f32 %v4427, %v4619
      %v4621 = vand.u32 %v2267, 4294901760
      %v4622 = vsub.f32 %v2267, %v4621
      %v4623 = vand.u32 %v4622, 4294901760
      %v4624 = vsub.f32 %v4622, %v4623
      %v4625 = vand.u32 %v4624, 4294901760
      %4626 = vmatmul.f32.gmra.mxu0 %v4625
      %v4627 = vpop.f32.mrf.mxu0
      %v4628 = vadd.f32 %v4431, %v4627
      %v4629 = vand.u32 %v2270, 4294901760
      %v4630 = vsub.f32 %v2270, %v4629
      %v4631 = vand.u32 %v4630, 4294901760
      %v4632 = vsub.f32 %v4630, %v4631
      %v4633 = vand.u32 %v4632, 4294901760
      %4634 = vmatmul.f32.gmra.mxu0 %v4633
      %v4635 = vpop.f32.mrf.mxu0
      %v4636 = vadd.f32 %v4435, %v4635
      %v4637 = vand.u32 %v2273, 4294901760
      %v4638 = vsub.f32 %v2273, %v4637
      %v4639 = vand.u32 %v4638, 4294901760
      %v4640 = vsub.f32 %v4638, %v4639
      %v4641 = vand.u32 %v4640, 4294901760
      %4642 = vmatmul.f32.gmra.mxu0 %v4641
      %v4643 = vpop.f32.mrf.mxu0
      %v4644 = vadd.f32 %v4439, %v4643
      %v4645 = vand.u32 %v2276, 4294901760
      %v4646 = vsub.f32 %v2276, %v4645
      %v4647 = vand.u32 %v4646, 4294901760
      %v4648 = vsub.f32 %v4646, %v4647
      %v4649 = vand.u32 %v4648, 4294901760
      %4650 = vmatmul.f32.gmra.mxu0 %v4649
      %v4651 = vpop.f32.mrf.mxu0
      %v4652 = vadd.f32 %v4443, %v4651
      %v4653 = vand.u32 %v2279, 4294901760
      %v4654 = vsub.f32 %v2279, %v4653
      %v4655 = vand.u32 %v4654, 4294901760
      %v4656 = vsub.f32 %v4654, %v4655
      %v4657 = vand.u32 %v4656, 4294901760
      %4658 = vmatmul.f32.gmra.mxu0 %v4657
      %v4659 = vpop.f32.mrf.mxu0
      %v4660 = vadd.f32 %v4447, %v4659
      %v4661 = vand.u32 %v2282, 4294901760
      %v4662 = vsub.f32 %v2282, %v4661
      %v4663 = vand.u32 %v4662, 4294901760
      %v4664 = vsub.f32 %v4662, %v4663
      %v4665 = vand.u32 %v4664, 4294901760
      %4666 = vmatmul.f32.gmra.mxu0 %v4665
      %v4667 = vpop.f32.mrf.mxu0
      %v4668 = vadd.f32 %v4451, %v4667
      %v4669 = vand.u32 %v2285, 4294901760
      %v4670 = vsub.f32 %v2285, %v4669
      %v4671 = vand.u32 %v4670, 4294901760
      %v4672 = vsub.f32 %v4670, %v4671
      %v4673 = vand.u32 %v4672, 4294901760
      %4674 = vmatmul.f32.gmra.mxu0 %v4673
      %v4675 = vpop.f32.mrf.mxu0
      %v4676 = vadd.f32 %v4455, %v4675
      %4677 = vdwg.mxu0
      %4678 = vmatpush.msra.mxu0 0.0
      %4679 = vmatpush.msra.mxu0 0.0
      %4680 = vmatpush.msra.mxu0 0.0
      %4681 = vmatpush.msra.mxu0 0.0
      %4682 = vmatpush.msra.mxu0 0.0
      %4683 = vmatpush.msra.mxu0 0.0
      %4684 = vmatpush.msra.mxu0 0.0
      %4685 = vmatpush.msra.mxu0 0.0
      %4686 = vmatpush.msra.mxu0 0.0
      %4687 = vmatpush.msra.mxu0 0.0
      %4688 = vmatpush.msra.mxu0 0.0
      %4689 = vmatpush.msra.mxu0 0.0
      %v4690 = vand.u32 %v2207, 4294901760
      %v4691 = vsub.f32 %v2207, %v4690
      %v4692 = vand.u32 %v4691, 4294901760
      %v4693 = vsub.f32 %v4691, %v4692
      %v4694 = vand.u32 %v4693, 4294901760
      %4695 = vmatpush.msra.mxu0 %v4694
      %v4696 = vand.u32 %v2206, 4294901760
      %v4697 = vsub.f32 %v2206, %v4696
      %v4698 = vand.u32 %v4697, 4294901760
      %v4699 = vsub.f32 %v4697, %v4698
      %v4700 = vand.u32 %v4699, 4294901760
      %4701 = vmatpush.msra.mxu0 %v4700
      %v4702 = vand.u32 %v2205, 4294901760
      %v4703 = vsub.f32 %v2205, %v4702
      %v4704 = vand.u32 %v4703, 4294901760
      %v4705 = vsub.f32 %v4703, %v4704
      %v4706 = vand.u32 %v4705, 4294901760
      %4707 = vmatpush.msra.mxu0 %v4706
      %v4708 = vand.u32 %v2204, 4294901760
      %v4709 = vsub.f32 %v2204, %v4708
      %v4710 = vand.u32 %v4709, 4294901760
      %v4711 = vsub.f32 %v4709, %v4710
      %v4712 = vand.u32 %v4711, 4294901760
      %4713 = vmatpush.msra.mxu0 %v4712
      %v4714 = vand.u32 %v2213, 4294901760
      %4715 = vmatmul.f32.gmra.mxu0 %v4714
      %v4716 = vpop.f32.mrf.mxu0
      %v4717 = vadd.f32 %v4484, %v4716
      %v4718 = vand.u32 %v2216, 4294901760
      %4719 = vmatmul.f32.gmra.mxu0 %v4718
      %v4720 = vpop.f32.mrf.mxu0
      %v4721 = vadd.f32 %v4492, %v4720
      %v4722 = vand.u32 %v2219, 4294901760
      %4723 = vmatmul.f32.gmra.mxu0 %v4722
      %v4724 = vpop.f32.mrf.mxu0
      %v4725 = vadd.f32 %v4500, %v4724
      %v4726 = vand.u32 %v2222, 4294901760
      %4727 = vmatmul.f32.gmra.mxu0 %v4726
      %v4728 = vpop.f32.mrf.mxu0
      %v4729 = vadd.f32 %v4508, %v4728
      %v4730 = vand.u32 %v2225, 4294901760
      %4731 = vmatmul.f32.gmra.mxu0 %v4730
      %v4732 = vpop.f32.mrf.mxu0
      %v4733 = vadd.f32 %v4516, %v4732
      %v4734 = vand.u32 %v2228, 4294901760
      %4735 = vmatmul.f32.gmra.mxu0 %v4734
      %v4736 = vpop.f32.mrf.mxu0
      %v4737 = vadd.f32 %v4524, %v4736
      %v4738 = vand.u32 %v2231, 4294901760
      %4739 = vmatmul.f32.gmra.mxu0 %v4738
      %v4740 = vpop.f32.mrf.mxu0
      %v4741 = vadd.f32 %v4532, %v4740
      %v4742 = vand.u32 %v2234, 4294901760
      %4743 = vmatmul.f32.gmra.mxu0 %v4742
      %v4744 = vpop.f32.mrf.mxu0
      %v4745 = vadd.f32 %v4540, %v4744
      %v4746 = vand.u32 %v2237, 4294901760
      %4747 = vmatmul.f32.gmra.mxu0 %v4746
      %v4748 = vpop.f32.mrf.mxu0
      %v4749 = vadd.f32 %v4548, %v4748
      %v4750 = vand.u32 %v2240, 4294901760
      %4751 = vmatmul.f32.gmra.mxu0 %v4750
      %v4752 = vpop.f32.mrf.mxu0
      %v4753 = vadd.f32 %v4556, %v4752
      %v4754 = vand.u32 %v2243, 4294901760
      %4755 = vmatmul.f32.gmra.mxu0 %v4754
      %v4756 = vpop.f32.mrf.mxu0
      %v4757 = vadd.f32 %v4564, %v4756
      %v4758 = vand.u32 %v2246, 4294901760
      %4759 = vmatmul.f32.gmra.mxu0 %v4758
      %v4760 = vpop.f32.mrf.mxu0
      %v4761 = vadd.f32 %v4572, %v4760
      %v4762 = vand.u32 %v2249, 4294901760
      %4763 = vmatmul.f32.gmra.mxu0 %v4762
      %v4764 = vpop.f32.mrf.mxu0
      %v4765 = vadd.f32 %v4580, %v4764
      %v4766 = vand.u32 %v2252, 4294901760
      %4767 = vmatmul.f32.gmra.mxu0 %v4766
      %v4768 = vpop.f32.mrf.mxu0
      %v4769 = vadd.f32 %v4588, %v4768
      %v4770 = vand.u32 %v2255, 4294901760
      %4771 = vmatmul.f32.gmra.mxu0 %v4770
      %v4772 = vpop.f32.mrf.mxu0
      %v4773 = vadd.f32 %v4596, %v4772
      %v4774 = vand.u32 %v2258, 4294901760
      %4775 = vmatmul.f32.gmra.mxu0 %v4774
      %v4776 = vpop.f32.mrf.mxu0
      %v4777 = vadd.f32 %v4604, %v4776
      %v4778 = vand.u32 %v2261, 4294901760
      %4779 = vmatmul.f32.gmra.mxu0 %v4778
      %v4780 = vpop.f32.mrf.mxu0
      %v4781 = vadd.f32 %v4612, %v4780
      %v4782 = vand.u32 %v2264, 4294901760
      %4783 = vmatmul.f32.gmra.mxu0 %v4782
      %v4784 = vpop.f32.mrf.mxu0
      %v4785 = vadd.f32 %v4620, %v4784
      %v4786 = vand.u32 %v2267, 4294901760
      %4787 = vmatmul.f32.gmra.mxu0 %v4786
      %v4788 = vpop.f32.mrf.mxu0
      %v4789 = vadd.f32 %v4628, %v4788
      %v4790 = vand.u32 %v2270, 4294901760
      %4791 = vmatmul.f32.gmra.mxu0 %v4790
      %v4792 = vpop.f32.mrf.mxu0
      %v4793 = vadd.f32 %v4636, %v4792
      %v4794 = vand.u32 %v2273, 4294901760
      %4795 = vmatmul.f32.gmra.mxu0 %v4794
      %v4796 = vpop.f32.mrf.mxu0
      %v4797 = vadd.f32 %v4644, %v4796
      %v4798 = vand.u32 %v2276, 4294901760
      %4799 = vmatmul.f32.gmra.mxu0 %v4798
      %v4800 = vpop.f32.mrf.mxu0
      %v4801 = vadd.f32 %v4652, %v4800
      %v4802 = vand.u32 %v2279, 4294901760
      %4803 = vmatmul.f32.gmra.mxu0 %v4802
      %v4804 = vpop.f32.mrf.mxu0
      %v4805 = vadd.f32 %v4660, %v4804
      %v4806 = vand.u32 %v2282, 4294901760
      %4807 = vmatmul.f32.gmra.mxu0 %v4806
      %v4808 = vpop.f32.mrf.mxu0
      %v4809 = vadd.f32 %v4668, %v4808
      %v4810 = vand.u32 %v2285, 4294901760
      %4811 = vmatmul.f32.gmra.mxu0 %v4810
      %v4812 = vpop.f32.mrf.mxu0
      %v4813 = vadd.f32 %v4676, %v4812
      %4814 = vdwg.mxu0
      %4815 = vmatpush.msra.mxu0 0.0
      %4816 = vmatpush.msra.mxu0 0.0
      %4817 = vmatpush.msra.mxu0 0.0
      %4818 = vmatpush.msra.mxu0 0.0
      %4819 = vmatpush.msra.mxu0 0.0
      %4820 = vmatpush.msra.mxu0 0.0
      %4821 = vmatpush.msra.mxu0 0.0
      %4822 = vmatpush.msra.mxu0 0.0
      %4823 = vmatpush.msra.mxu0 0.0
      %4824 = vmatpush.msra.mxu0 0.0
      %4825 = vmatpush.msra.mxu0 0.0
      %4826 = vmatpush.msra.mxu0 0.0
      %v4827 = vand.u32 %v2207, 4294901760
      %v4828 = vsub.f32 %v2207, %v4827
      %4829 = vmatpush.msra.mxu0 %v4828
      %v4830 = vand.u32 %v2206, 4294901760
      %v4831 = vsub.f32 %v2206, %v4830
      %4832 = vmatpush.msra.mxu0 %v4831
      %v4833 = vand.u32 %v2205, 4294901760
      %v4834 = vsub.f32 %v2205, %v4833
      %4835 = vmatpush.msra.mxu0 %v4834
      %v4836 = vand.u32 %v2204, 4294901760
      %v4837 = vsub.f32 %v2204, %v4836
      %4838 = vmatpush.msra.mxu0 %v4837
      %v4839 = vand.u32 %v2213, 4294901760
      %v4840 = vsub.f32 %v2213, %v4839
      %4841 = vmatmul.f32.gmra.mxu0 %v4840
      %v4842 = vpop.f32.mrf.mxu0
      %v4843 = vadd.f32 %v4717, %v4842
      %v4844 = vand.u32 %v2216, 4294901760
      %v4845 = vsub.f32 %v2216, %v4844
      %4846 = vmatmul.f32.gmra.mxu0 %v4845
      %v4847 = vpop.f32.mrf.mxu0
      %v4848 = vadd.f32 %v4721, %v4847
      %v4849 = vand.u32 %v2219, 4294901760
      %v4850 = vsub.f32 %v2219, %v4849
      %4851 = vmatmul.f32.gmra.mxu0 %v4850
      %v4852 = vpop.f32.mrf.mxu0
      %v4853 = vadd.f32 %v4725, %v4852
      %v4854 = vand.u32 %v2222, 4294901760
      %v4855 = vsub.f32 %v2222, %v4854
      %4856 = vmatmul.f32.gmra.mxu0 %v4855
      %v4857 = vpop.f32.mrf.mxu0
      %v4858 = vadd.f32 %v4729, %v4857
      %v4859 = vand.u32 %v2225, 4294901760
      %v4860 = vsub.f32 %v2225, %v4859
      %4861 = vmatmul.f32.gmra.mxu0 %v4860
      %v4862 = vpop.f32.mrf.mxu0
      %v4863 = vadd.f32 %v4733, %v4862
      %v4864 = vand.u32 %v2228, 4294901760
      %v4865 = vsub.f32 %v2228, %v4864
      %4866 = vmatmul.f32.gmra.mxu0 %v4865
      %v4867 = vpop.f32.mrf.mxu0
      %v4868 = vadd.f32 %v4737, %v4867
      %v4869 = vand.u32 %v2231, 4294901760
      %v4870 = vsub.f32 %v2231, %v4869
      %4871 = vmatmul.f32.gmra.mxu0 %v4870
      %v4872 = vpop.f32.mrf.mxu0
      %v4873 = vadd.f32 %v4741, %v4872
      %v4874 = vand.u32 %v2234, 4294901760
      %v4875 = vsub.f32 %v2234, %v4874
      %4876 = vmatmul.f32.gmra.mxu0 %v4875
      %v4877 = vpop.f32.mrf.mxu0
      %v4878 = vadd.f32 %v4745, %v4877
      %v4879 = vand.u32 %v2237, 4294901760
      %v4880 = vsub.f32 %v2237, %v4879
      %4881 = vmatmul.f32.gmra.mxu0 %v4880
      %v4882 = vpop.f32.mrf.mxu0
      %v4883 = vadd.f32 %v4749, %v4882
      %v4884 = vand.u32 %v2240, 4294901760
      %v4885 = vsub.f32 %v2240, %v4884
      %4886 = vmatmul.f32.gmra.mxu0 %v4885
      %v4887 = vpop.f32.mrf.mxu0
      %v4888 = vadd.f32 %v4753, %v4887
      %v4889 = vand.u32 %v2243, 4294901760
      %v4890 = vsub.f32 %v2243, %v4889
      %4891 = vmatmul.f32.gmra.mxu0 %v4890
      %v4892 = vpop.f32.mrf.mxu0
      %v4893 = vadd.f32 %v4757, %v4892
      %v4894 = vand.u32 %v2246, 4294901760
      %v4895 = vsub.f32 %v2246, %v4894
      %4896 = vmatmul.f32.gmra.mxu0 %v4895
      %v4897 = vpop.f32.mrf.mxu0
      %v4898 = vadd.f32 %v4761, %v4897
      %v4899 = vand.u32 %v2249, 4294901760
      %v4900 = vsub.f32 %v2249, %v4899
      %4901 = vmatmul.f32.gmra.mxu0 %v4900
      %v4902 = vpop.f32.mrf.mxu0
      %v4903 = vadd.f32 %v4765, %v4902
      %v4904 = vand.u32 %v2252, 4294901760
      %v4905 = vsub.f32 %v2252, %v4904
      %4906 = vmatmul.f32.gmra.mxu0 %v4905
      %v4907 = vpop.f32.mrf.mxu0
      %v4908 = vadd.f32 %v4769, %v4907
      %v4909 = vand.u32 %v2255, 4294901760
      %v4910 = vsub.f32 %v2255, %v4909
      %4911 = vmatmul.f32.gmra.mxu0 %v4910
      %v4912 = vpop.f32.mrf.mxu0
      %v4913 = vadd.f32 %v4773, %v4912
      %v4914 = vand.u32 %v2258, 4294901760
      %v4915 = vsub.f32 %v2258, %v4914
      %4916 = vmatmul.f32.gmra.mxu0 %v4915
      %v4917 = vpop.f32.mrf.mxu0
      %v4918 = vadd.f32 %v4777, %v4917
      %v4919 = vand.u32 %v2261, 4294901760
      %v4920 = vsub.f32 %v2261, %v4919
      %4921 = vmatmul.f32.gmra.mxu0 %v4920
      %v4922 = vpop.f32.mrf.mxu0
      %v4923 = vadd.f32 %v4781, %v4922
      %v4924 = vand.u32 %v2264, 4294901760
      %v4925 = vsub.f32 %v2264, %v4924
      %4926 = vmatmul.f32.gmra.mxu0 %v4925
      %v4927 = vpop.f32.mrf.mxu0
      %v4928 = vadd.f32 %v4785, %v4927
      %v4929 = vand.u32 %v2267, 4294901760
      %v4930 = vsub.f32 %v2267, %v4929
      %4931 = vmatmul.f32.gmra.mxu0 %v4930
      %v4932 = vpop.f32.mrf.mxu0
      %v4933 = vadd.f32 %v4789, %v4932
      %v4934 = vand.u32 %v2270, 4294901760
      %v4935 = vsub.f32 %v2270, %v4934
      %4936 = vmatmul.f32.gmra.mxu0 %v4935
      %v4937 = vpop.f32.mrf.mxu0
      %v4938 = vadd.f32 %v4793, %v4937
      %v4939 = vand.u32 %v2273, 4294901760
      %v4940 = vsub.f32 %v2273, %v4939
      %4941 = vmatmul.f32.gmra.mxu0 %v4940
      %v4942 = vpop.f32.mrf.mxu0
      %v4943 = vadd.f32 %v4797, %v4942
      %v4944 = vand.u32 %v2276, 4294901760
      %v4945 = vsub.f32 %v2276, %v4944
      %4946 = vmatmul.f32.gmra.mxu0 %v4945
      %v4947 = vpop.f32.mrf.mxu0
      %v4948 = vadd.f32 %v4801, %v4947
      %v4949 = vand.u32 %v2279, 4294901760
      %v4950 = vsub.f32 %v2279, %v4949
      %4951 = vmatmul.f32.gmra.mxu0 %v4950
      %v4952 = vpop.f32.mrf.mxu0
      %v4953 = vadd.f32 %v4805, %v4952
      %v4954 = vand.u32 %v2282, 4294901760
      %v4955 = vsub.f32 %v2282, %v4954
      %4956 = vmatmul.f32.gmra.mxu0 %v4955
      %v4957 = vpop.f32.mrf.mxu0
      %v4958 = vadd.f32 %v4809, %v4957
      %v4959 = vand.u32 %v2285, 4294901760
      %v4960 = vsub.f32 %v2285, %v4959
      %4961 = vmatmul.f32.gmra.mxu0 %v4960
      %v4962 = vpop.f32.mrf.mxu0
      %v4963 = vadd.f32 %v4813, %v4962
      %4964 = vdwg.mxu0
      %4965 = vmatpush.msra.mxu0 0.0
      %4966 = vmatpush.msra.mxu0 0.0
      %4967 = vmatpush.msra.mxu0 0.0
      %4968 = vmatpush.msra.mxu0 0.0
      %4969 = vmatpush.msra.mxu0 0.0
      %4970 = vmatpush.msra.mxu0 0.0
      %4971 = vmatpush.msra.mxu0 0.0
      %4972 = vmatpush.msra.mxu0 0.0
      %4973 = vmatpush.msra.mxu0 0.0
      %4974 = vmatpush.msra.mxu0 0.0
      %4975 = vmatpush.msra.mxu0 0.0
      %4976 = vmatpush.msra.mxu0 0.0
      %v4977 = vand.u32 %v2207, 4294901760
      %4978 = vmatpush.msra.mxu0 %v4977
      %v4979 = vand.u32 %v2206, 4294901760
      %4980 = vmatpush.msra.mxu0 %v4979
      %v4981 = vand.u32 %v2205, 4294901760
      %4982 = vmatpush.msra.mxu0 %v4981
      %v4983 = vand.u32 %v2204, 4294901760
      %4984 = vmatpush.msra.mxu0 %v4983
      %v4985 = vand.u32 %v2213, 4294901760
      %v4986 = vsub.f32 %v2213, %v4985
      %v4987 = vand.u32 %v4986, 4294901760
      %4988 = vmatmul.f32.gmra.mxu0 %v4987
      %v4989 = vpop.f32.mrf.mxu0
      %v4990 = vadd.f32 %v4843, %v4989
      %v4991 = vand.u32 %v2216, 4294901760
      %v4992 = vsub.f32 %v2216, %v4991
      %v4993 = vand.u32 %v4992, 4294901760
      %4994 = vmatmul.f32.gmra.mxu0 %v4993
      %v4995 = vpop.f32.mrf.mxu0
      %v4996 = vadd.f32 %v4848, %v4995
      %v4997 = vand.u32 %v2219, 4294901760
      %v4998 = vsub.f32 %v2219, %v4997
      %v4999 = vand.u32 %v4998, 4294901760
      %5000 = vmatmul.f32.gmra.mxu0 %v4999
      %v5001 = vpop.f32.mrf.mxu0
      %v5002 = vadd.f32 %v4853, %v5001
      %v5003 = vand.u32 %v2222, 4294901760
      %v5004 = vsub.f32 %v2222, %v5003
      %v5005 = vand.u32 %v5004, 4294901760
      %5006 = vmatmul.f32.gmra.mxu0 %v5005
      %v5007 = vpop.f32.mrf.mxu0
      %v5008 = vadd.f32 %v4858, %v5007
      %v5009 = vand.u32 %v2225, 4294901760
      %v5010 = vsub.f32 %v2225, %v5009
      %v5011 = vand.u32 %v5010, 4294901760
      %5012 = vmatmul.f32.gmra.mxu0 %v5011
      %v5013 = vpop.f32.mrf.mxu0
      %v5014 = vadd.f32 %v4863, %v5013
      %v5015 = vand.u32 %v2228, 4294901760
      %v5016 = vsub.f32 %v2228, %v5015
      %v5017 = vand.u32 %v5016, 4294901760
      %5018 = vmatmul.f32.gmra.mxu0 %v5017
      %v5019 = vpop.f32.mrf.mxu0
      %v5020 = vadd.f32 %v4868, %v5019
      %v5021 = vand.u32 %v2231, 4294901760
      %v5022 = vsub.f32 %v2231, %v5021
      %v5023 = vand.u32 %v5022, 4294901760
      %5024 = vmatmul.f32.gmra.mxu0 %v5023
      %v5025 = vpop.f32.mrf.mxu0
      %v5026 = vadd.f32 %v4873, %v5025
      %v5027 = vand.u32 %v2234, 4294901760
      %v5028 = vsub.f32 %v2234, %v5027
      %v5029 = vand.u32 %v5028, 4294901760
      %5030 = vmatmul.f32.gmra.mxu0 %v5029
      %v5031 = vpop.f32.mrf.mxu0
      %v5032 = vadd.f32 %v4878, %v5031
      %v5033 = vand.u32 %v2237, 4294901760
      %v5034 = vsub.f32 %v2237, %v5033
      %v5035 = vand.u32 %v5034, 4294901760
      %5036 = vmatmul.f32.gmra.mxu0 %v5035
      %v5037 = vpop.f32.mrf.mxu0
      %v5038 = vadd.f32 %v4883, %v5037
      %v5039 = vand.u32 %v2240, 4294901760
      %v5040 = vsub.f32 %v2240, %v5039
      %v5041 = vand.u32 %v5040, 4294901760
      %5042 = vmatmul.f32.gmra.mxu0 %v5041
      %v5043 = vpop.f32.mrf.mxu0
      %v5044 = vadd.f32 %v4888, %v5043
      %v5045 = vand.u32 %v2243, 4294901760
      %v5046 = vsub.f32 %v2243, %v5045
      %v5047 = vand.u32 %v5046, 4294901760
      %5048 = vmatmul.f32.gmra.mxu0 %v5047
      %v5049 = vpop.f32.mrf.mxu0
      %v5050 = vadd.f32 %v4893, %v5049
      %v5051 = vand.u32 %v2246, 4294901760
      %v5052 = vsub.f32 %v2246, %v5051
      %v5053 = vand.u32 %v5052, 4294901760
      %5054 = vmatmul.f32.gmra.mxu0 %v5053
      %v5055 = vpop.f32.mrf.mxu0
      %v5056 = vadd.f32 %v4898, %v5055
      %v5057 = vand.u32 %v2249, 4294901760
      %v5058 = vsub.f32 %v2249, %v5057
      %v5059 = vand.u32 %v5058, 4294901760
      %5060 = vmatmul.f32.gmra.mxu0 %v5059
      %v5061 = vpop.f32.mrf.mxu0
      %v5062 = vadd.f32 %v4903, %v5061
      %v5063 = vand.u32 %v2252, 4294901760
      %v5064 = vsub.f32 %v2252, %v5063
      %v5065 = vand.u32 %v5064, 4294901760
      %5066 = vmatmul.f32.gmra.mxu0 %v5065
      %v5067 = vpop.f32.mrf.mxu0
      %v5068 = vadd.f32 %v4908, %v5067
      %v5069 = vand.u32 %v2255, 4294901760
      %v5070 = vsub.f32 %v2255, %v5069
      %v5071 = vand.u32 %v5070, 4294901760
      %5072 = vmatmul.f32.gmra.mxu0 %v5071
      %v5073 = vpop.f32.mrf.mxu0
      %v5074 = vadd.f32 %v4913, %v5073
      %v5075 = vand.u32 %v2258, 4294901760
      %v5076 = vsub.f32 %v2258, %v5075
      %v5077 = vand.u32 %v5076, 4294901760
      %5078 = vmatmul.f32.gmra.mxu0 %v5077
      %v5079 = vpop.f32.mrf.mxu0
      %v5080 = vadd.f32 %v4918, %v5079
      %v5081 = vand.u32 %v2261, 4294901760
      %v5082 = vsub.f32 %v2261, %v5081
      %v5083 = vand.u32 %v5082, 4294901760
      %5084 = vmatmul.f32.gmra.mxu0 %v5083
      %v5085 = vpop.f32.mrf.mxu0
      %v5086 = vadd.f32 %v4923, %v5085
      %v5087 = vand.u32 %v2264, 4294901760
      %v5088 = vsub.f32 %v2264, %v5087
      %v5089 = vand.u32 %v5088, 4294901760
      %5090 = vmatmul.f32.gmra.mxu0 %v5089
      %v5091 = vpop.f32.mrf.mxu0
      %v5092 = vadd.f32 %v4928, %v5091
      %v5093 = vand.u32 %v2267, 4294901760
      %v5094 = vsub.f32 %v2267, %v5093
      %v5095 = vand.u32 %v5094, 4294901760
      %5096 = vmatmul.f32.gmra.mxu0 %v5095
      %v5097 = vpop.f32.mrf.mxu0
      %v5098 = vadd.f32 %v4933, %v5097
      %v5099 = vand.u32 %v2270, 4294901760
      %v5100 = vsub.f32 %v2270, %v5099
      %v5101 = vand.u32 %v5100, 4294901760
      %5102 = vmatmul.f32.gmra.mxu0 %v5101
      %v5103 = vpop.f32.mrf.mxu0
      %v5104 = vadd.f32 %v4938, %v5103
      %v5105 = vand.u32 %v2273, 4294901760
      %v5106 = vsub.f32 %v2273, %v5105
      %v5107 = vand.u32 %v5106, 4294901760
      %5108 = vmatmul.f32.gmra.mxu0 %v5107
      %v5109 = vpop.f32.mrf.mxu0
      %v5110 = vadd.f32 %v4943, %v5109
      %v5111 = vand.u32 %v2276, 4294901760
      %v5112 = vsub.f32 %v2276, %v5111
      %v5113 = vand.u32 %v5112, 4294901760
      %5114 = vmatmul.f32.gmra.mxu0 %v5113
      %v5115 = vpop.f32.mrf.mxu0
      %v5116 = vadd.f32 %v4948, %v5115
      %v5117 = vand.u32 %v2279, 4294901760
      %v5118 = vsub.f32 %v2279, %v5117
      %v5119 = vand.u32 %v5118, 4294901760
      %5120 = vmatmul.f32.gmra.mxu0 %v5119
      %v5121 = vpop.f32.mrf.mxu0
      %v5122 = vadd.f32 %v4953, %v5121
      %v5123 = vand.u32 %v2282, 4294901760
      %v5124 = vsub.f32 %v2282, %v5123
      %v5125 = vand.u32 %v5124, 4294901760
      %5126 = vmatmul.f32.gmra.mxu0 %v5125
      %v5127 = vpop.f32.mrf.mxu0
      %v5128 = vadd.f32 %v4958, %v5127
      %v5129 = vand.u32 %v2285, 4294901760
      %v5130 = vsub.f32 %v2285, %v5129
      %v5131 = vand.u32 %v5130, 4294901760
      %5132 = vmatmul.f32.gmra.mxu0 %v5131
      %v5133 = vpop.f32.mrf.mxu0
      %v5134 = vadd.f32 %v4963, %v5133
      %5135 = vdwg.mxu0
      %5136 = vmatpush.msra.mxu0 0.0
      %5137 = vmatpush.msra.mxu0 0.0
      %5138 = vmatpush.msra.mxu0 0.0
      %5139 = vmatpush.msra.mxu0 0.0
      %5140 = vmatpush.msra.mxu0 0.0
      %5141 = vmatpush.msra.mxu0 0.0
      %5142 = vmatpush.msra.mxu0 0.0
      %5143 = vmatpush.msra.mxu0 0.0
      %5144 = vmatpush.msra.mxu0 0.0
      %5145 = vmatpush.msra.mxu0 0.0
      %5146 = vmatpush.msra.mxu0 0.0
      %5147 = vmatpush.msra.mxu0 0.0
      %v5148 = vand.u32 %v2207, 4294901760
      %v5149 = vsub.f32 %v2207, %v5148
      %v5150 = vand.u32 %v5149, 4294901760
      %5151 = vmatpush.msra.mxu0 %v5150
      %v5152 = vand.u32 %v2206, 4294901760
      %v5153 = vsub.f32 %v2206, %v5152
      %v5154 = vand.u32 %v5153, 4294901760
      %5155 = vmatpush.msra.mxu0 %v5154
      %v5156 = vand.u32 %v2205, 4294901760
      %v5157 = vsub.f32 %v2205, %v5156
      %v5158 = vand.u32 %v5157, 4294901760
      %5159 = vmatpush.msra.mxu0 %v5158
      %v5160 = vand.u32 %v2204, 4294901760
      %v5161 = vsub.f32 %v2204, %v5160
      %v5162 = vand.u32 %v5161, 4294901760
      %5163 = vmatpush.msra.mxu0 %v5162
      %v5164 = vand.u32 %v2213, 4294901760
      %5165 = vmatmul.f32.gmra.mxu0 %v5164
      %v5166 = vpop.f32.mrf.mxu0
      %v5167 = vadd.f32 %v4990, %v5166
      %v5168 = vand.u32 %v2216, 4294901760
      %5169 = vmatmul.f32.gmra.mxu0 %v5168
      %v5170 = vpop.f32.mrf.mxu0
      %v5171 = vadd.f32 %v4996, %v5170
      %v5172 = vand.u32 %v2219, 4294901760
      %5173 = vmatmul.f32.gmra.mxu0 %v5172
      %v5174 = vpop.f32.mrf.mxu0
      %v5175 = vadd.f32 %v5002, %v5174
      %v5176 = vand.u32 %v2222, 4294901760
      %5177 = vmatmul.f32.gmra.mxu0 %v5176
      %v5178 = vpop.f32.mrf.mxu0
      %v5179 = vadd.f32 %v5008, %v5178
      %v5180 = vand.u32 %v2225, 4294901760
      %5181 = vmatmul.f32.gmra.mxu0 %v5180
      %v5182 = vpop.f32.mrf.mxu0
      %v5183 = vadd.f32 %v5014, %v5182
      %v5184 = vand.u32 %v2228, 4294901760
      %5185 = vmatmul.f32.gmra.mxu0 %v5184
      %v5186 = vpop.f32.mrf.mxu0
      %v5187 = vadd.f32 %v5020, %v5186
      %v5188 = vand.u32 %v2231, 4294901760
      %5189 = vmatmul.f32.gmra.mxu0 %v5188
      %v5190 = vpop.f32.mrf.mxu0
      %v5191 = vadd.f32 %v5026, %v5190
      %v5192 = vand.u32 %v2234, 4294901760
      %5193 = vmatmul.f32.gmra.mxu0 %v5192
      %v5194 = vpop.f32.mrf.mxu0
      %v5195 = vadd.f32 %v5032, %v5194
      %v5196 = vand.u32 %v2237, 4294901760
      %5197 = vmatmul.f32.gmra.mxu0 %v5196
      %v5198 = vpop.f32.mrf.mxu0
      %v5199 = vadd.f32 %v5038, %v5198
      %v5200 = vand.u32 %v2240, 4294901760
      %5201 = vmatmul.f32.gmra.mxu0 %v5200
      %v5202 = vpop.f32.mrf.mxu0
      %v5203 = vadd.f32 %v5044, %v5202
      %v5204 = vand.u32 %v2243, 4294901760
      %5205 = vmatmul.f32.gmra.mxu0 %v5204
      %v5206 = vpop.f32.mrf.mxu0
      %v5207 = vadd.f32 %v5050, %v5206
      %v5208 = vand.u32 %v2246, 4294901760
      %5209 = vmatmul.f32.gmra.mxu0 %v5208
      %v5210 = vpop.f32.mrf.mxu0
      %v5211 = vadd.f32 %v5056, %v5210
      %v5212 = vand.u32 %v2249, 4294901760
      %5213 = vmatmul.f32.gmra.mxu0 %v5212
      %v5214 = vpop.f32.mrf.mxu0
      %v5215 = vadd.f32 %v5062, %v5214
      %v5216 = vand.u32 %v2252, 4294901760
      %5217 = vmatmul.f32.gmra.mxu0 %v5216
      %v5218 = vpop.f32.mrf.mxu0
      %v5219 = vadd.f32 %v5068, %v5218
      %v5220 = vand.u32 %v2255, 4294901760
      %5221 = vmatmul.f32.gmra.mxu0 %v5220
      %v5222 = vpop.f32.mrf.mxu0
      %v5223 = vadd.f32 %v5074, %v5222
      %v5224 = vand.u32 %v2258, 4294901760
      %5225 = vmatmul.f32.gmra.mxu0 %v5224
      %v5226 = vpop.f32.mrf.mxu0
      %v5227 = vadd.f32 %v5080, %v5226
      %v5228 = vand.u32 %v2261, 4294901760
      %5229 = vmatmul.f32.gmra.mxu0 %v5228
      %v5230 = vpop.f32.mrf.mxu0
      %v5231 = vadd.f32 %v5086, %v5230
      %v5232 = vand.u32 %v2264, 4294901760
      %5233 = vmatmul.f32.gmra.mxu0 %v5232
      %v5234 = vpop.f32.mrf.mxu0
      %v5235 = vadd.f32 %v5092, %v5234
      %v5236 = vand.u32 %v2267, 4294901760
      %5237 = vmatmul.f32.gmra.mxu0 %v5236
      %v5238 = vpop.f32.mrf.mxu0
      %v5239 = vadd.f32 %v5098, %v5238
      %v5240 = vand.u32 %v2270, 4294901760
      %5241 = vmatmul.f32.gmra.mxu0 %v5240
      %v5242 = vpop.f32.mrf.mxu0
      %v5243 = vadd.f32 %v5104, %v5242
      %v5244 = vand.u32 %v2273, 4294901760
      %5245 = vmatmul.f32.gmra.mxu0 %v5244
      %v5246 = vpop.f32.mrf.mxu0
      %v5247 = vadd.f32 %v5110, %v5246
      %v5248 = vand.u32 %v2276, 4294901760
      %5249 = vmatmul.f32.gmra.mxu0 %v5248
      %v5250 = vpop.f32.mrf.mxu0
      %v5251 = vadd.f32 %v5116, %v5250
      %v5252 = vand.u32 %v2279, 4294901760
      %5253 = vmatmul.f32.gmra.mxu0 %v5252
      %v5254 = vpop.f32.mrf.mxu0
      %v5255 = vadd.f32 %v5122, %v5254
      %v5256 = vand.u32 %v2282, 4294901760
      %5257 = vmatmul.f32.gmra.mxu0 %v5256
      %v5258 = vpop.f32.mrf.mxu0
      %v5259 = vadd.f32 %v5128, %v5258
      %v5260 = vand.u32 %v2285, 4294901760
      %5261 = vmatmul.f32.gmra.mxu0 %v5260
      %v5262 = vpop.f32.mrf.mxu0
      %v5263 = vadd.f32 %v5134, %v5262
      %5264 = vdwg.mxu0
      %5265 = vmatpush.msra.mxu0 0.0
      %5266 = vmatpush.msra.mxu0 0.0
      %5267 = vmatpush.msra.mxu0 0.0
      %5268 = vmatpush.msra.mxu0 0.0
      %5269 = vmatpush.msra.mxu0 0.0
      %5270 = vmatpush.msra.mxu0 0.0
      %5271 = vmatpush.msra.mxu0 0.0
      %5272 = vmatpush.msra.mxu0 0.0
      %5273 = vmatpush.msra.mxu0 0.0
      %5274 = vmatpush.msra.mxu0 0.0
      %5275 = vmatpush.msra.mxu0 0.0
      %5276 = vmatpush.msra.mxu0 0.0
      %v5277 = vand.u32 %v2207, 4294901760
      %5278 = vmatpush.msra.mxu0 %v5277
      %v5279 = vand.u32 %v2206, 4294901760
      %5280 = vmatpush.msra.mxu0 %v5279
      %v5281 = vand.u32 %v2205, 4294901760
      %5282 = vmatpush.msra.mxu0 %v5281
      %v5283 = vand.u32 %v2204, 4294901760
      %5284 = vmatpush.msra.mxu0 %v5283
      %v5285 = vand.u32 %v2213, 4294901760
      %5286 = vmatmul.f32.gmra.mxu0 %v5285
      %v5287 = vpop.f32.mrf.mxu0
      %v5288 = vadd.f32 %v5167, %v5287
      %v5289 = vand.u32 %v2216, 4294901760
      %5290 = vmatmul.f32.gmra.mxu0 %v5289
      %v5291 = vpop.f32.mrf.mxu0
      %v5292 = vadd.f32 %v5171, %v5291
      %v5293 = vand.u32 %v2219, 4294901760
      %5294 = vmatmul.f32.gmra.mxu0 %v5293
      %v5295 = vpop.f32.mrf.mxu0
      %v5296 = vadd.f32 %v5175, %v5295
      %v5297 = vand.u32 %v2222, 4294901760
      %5298 = vmatmul.f32.gmra.mxu0 %v5297
      %v5299 = vpop.f32.mrf.mxu0
      %v5300 = vadd.f32 %v5179, %v5299
      %v5301 = vand.u32 %v2225, 4294901760
      %5302 = vmatmul.f32.gmra.mxu0 %v5301
      %v5303 = vpop.f32.mrf.mxu0
      %v5304 = vadd.f32 %v5183, %v5303
      %v5305 = vand.u32 %v2228, 4294901760
      %5306 = vmatmul.f32.gmra.mxu0 %v5305
      %v5307 = vpop.f32.mrf.mxu0
      %v5308 = vadd.f32 %v5187, %v5307
      %v5309 = vand.u32 %v2231, 4294901760
      %5310 = vmatmul.f32.gmra.mxu0 %v5309
      %v5311 = vpop.f32.mrf.mxu0
      %v5312 = vadd.f32 %v5191, %v5311
      %v5313 = vand.u32 %v2234, 4294901760
      %5314 = vmatmul.f32.gmra.mxu0 %v5313
      %v5315 = vpop.f32.mrf.mxu0
      %v5316 = vadd.f32 %v5195, %v5315
      %v5317 = vand.u32 %v2237, 4294901760
      %5318 = vmatmul.f32.gmra.mxu0 %v5317
      %v5319 = vpop.f32.mrf.mxu0
      %v5320 = vadd.f32 %v5199, %v5319
      %v5321 = vand.u32 %v2240, 4294901760
      %5322 = vmatmul.f32.gmra.mxu0 %v5321
      %v5323 = vpop.f32.mrf.mxu0
      %v5324 = vadd.f32 %v5203, %v5323
      %v5325 = vand.u32 %v2243, 4294901760
      %5326 = vmatmul.f32.gmra.mxu0 %v5325
      %v5327 = vpop.f32.mrf.mxu0
      %v5328 = vadd.f32 %v5207, %v5327
      %v5329 = vand.u32 %v2246, 4294901760
      %5330 = vmatmul.f32.gmra.mxu0 %v5329
      %v5331 = vpop.f32.mrf.mxu0
      %v5332 = vadd.f32 %v5211, %v5331
      %v5333 = vand.u32 %v2249, 4294901760
      %5334 = vmatmul.f32.gmra.mxu0 %v5333
      %v5335 = vpop.f32.mrf.mxu0
      %v5336 = vadd.f32 %v5215, %v5335
      %v5337 = vand.u32 %v2252, 4294901760
      %5338 = vmatmul.f32.gmra.mxu0 %v5337
      %v5339 = vpop.f32.mrf.mxu0
      %v5340 = vadd.f32 %v5219, %v5339
      %v5341 = vand.u32 %v2255, 4294901760
      %5342 = vmatmul.f32.gmra.mxu0 %v5341
      %v5343 = vpop.f32.mrf.mxu0
      %v5344 = vadd.f32 %v5223, %v5343
      %v5345 = vand.u32 %v2258, 4294901760
      %5346 = vmatmul.f32.gmra.mxu0 %v5345
      %v5347 = vpop.f32.mrf.mxu0
      %v5348 = vadd.f32 %v5227, %v5347
      %v5349 = vand.u32 %v2261, 4294901760
      %5350 = vmatmul.f32.gmra.mxu0 %v5349
      %v5351 = vpop.f32.mrf.mxu0
      %v5352 = vadd.f32 %v5231, %v5351
      %v5353 = vand.u32 %v2264, 4294901760
      %5354 = vmatmul.f32.gmra.mxu0 %v5353
      %v5355 = vpop.f32.mrf.mxu0
      %v5356 = vadd.f32 %v5235, %v5355
      %v5357 = vand.u32 %v2267, 4294901760
      %5358 = vmatmul.f32.gmra.mxu0 %v5357
      %v5359 = vpop.f32.mrf.mxu0
      %v5360 = vadd.f32 %v5239, %v5359
      %v5361 = vand.u32 %v2270, 4294901760
      %5362 = vmatmul.f32.gmra.mxu0 %v5361
      %v5363 = vpop.f32.mrf.mxu0
      %v5364 = vadd.f32 %v5243, %v5363
      %v5365 = vand.u32 %v2273, 4294901760
      %5366 = vmatmul.f32.gmra.mxu0 %v5365
      %v5367 = vpop.f32.mrf.mxu0
      %v5368 = vadd.f32 %v5247, %v5367
      %v5369 = vand.u32 %v2276, 4294901760
      %5370 = vmatmul.f32.gmra.mxu0 %v5369
      %v5371 = vpop.f32.mrf.mxu0
      %v5372 = vadd.f32 %v5251, %v5371
      %v5373 = vand.u32 %v2279, 4294901760
      %5374 = vmatmul.f32.gmra.mxu0 %v5373
      %v5375 = vpop.f32.mrf.mxu0
      %v5376 = vadd.f32 %v5255, %v5375
      %v5377 = vand.u32 %v2282, 4294901760
      %5378 = vmatmul.f32.gmra.mxu0 %v5377
      %v5379 = vpop.f32.mrf.mxu0
      %v5380 = vadd.f32 %v5259, %v5379
      %v5381 = vand.u32 %v2285, 4294901760
      %5382 = vmatmul.f32.gmra.mxu0 %v5381
      %v5383 = vpop.f32.mrf.mxu0
      %v5384 = vadd.f32 %v5263, %v5383
      %5385 = vdwg.mxu0
      %v5386 = vmax.f32 %v5288, 0.0
      %v5387 = vmax.f32 %v5292, 0.0
      %v5388 = vmax.f32 %v5296, 0.0
      %v5389 = vmax.f32 %v5300, 0.0
      %v5390 = vmax.f32 %v5304, 0.0
      %v5391 = vmax.f32 %v5308, 0.0
      %v5392 = vmax.f32 %v5312, 0.0
      %v5393 = vmax.f32 %v5316, 0.0
      %v5394 = vmax.f32 %v5320, 0.0
      %v5395 = vmax.f32 %v5324, 0.0
      %v5396 = vmax.f32 %v5328, 0.0
      %v5397 = vmax.f32 %v5332, 0.0
      %v5398 = vmax.f32 %v5336, 0.0
      %v5399 = vmax.f32 %v5340, 0.0
      %v5400 = vmax.f32 %v5344, 0.0
      %v5401 = vmax.f32 %v5348, 0.0
      %v5402 = vmax.f32 %v5352, 0.0
      %v5403 = vmax.f32 %v5356, 0.0
      %v5404 = vmax.f32 %v5360, 0.0
      %v5405 = vmax.f32 %v5364, 0.0
      %v5406 = vmax.f32 %v5368, 0.0
      %v5407 = vmax.f32 %v5372, 0.0
      %v5408 = vmax.f32 %v5376, 0.0
      %v5409 = vmax.f32 %v5380, 0.0
      %v5410 = vmax.f32 %v5384, 0.0
      %5411 = vst.msk [vmem:[#allocation3] sm:$0xff] %vm1450, %v5386
      %5412 = vst.msk [vmem:[#allocation3 + $0x8] sm:$0xff] %vm1450, %v5387
      %5413 = vst.msk [vmem:[#allocation3 + $0x10] sm:$0xff] %vm1450, %v5388
      %5414 = vst.msk [vmem:[#allocation3 + $0x18] sm:$0xff] %vm1450, %v5389
      %5415 = vst.msk [vmem:[#allocation3 + $0x20] sm:$0xff] %vm1450, %v5390
      %5416 = vst.msk [vmem:[#allocation3 + $0x28] sm:$0xff] %vm1450, %v5391
      %5417 = vst.msk [vmem:[#allocation3 + $0x30] sm:$0xff] %vm1450, %v5392
      %5418 = vst.msk [vmem:[#allocation3 + $0x38] sm:$0xff] %vm1450, %v5393
      %5419 = vst.msk [vmem:[#allocation3 + $0x40] sm:$0xff] %vm1450, %v5394
      %5420 = vst.msk [vmem:[#allocation3 + $0x48] sm:$0xff] %vm1450, %v5395
      %5421 = vst.msk [vmem:[#allocation3 + $0x50] sm:$0xff] %vm1450, %v5396
      %5422 = vst.msk [vmem:[#allocation3 + $0x58] sm:$0xff] %vm1450, %v5397
      %5423 = vst.msk [vmem:[#allocation3 + $0x60] sm:$0xff] %vm1450, %v5398
      %5424 = vst.msk [vmem:[#allocation3 + $0x68] sm:$0xff] %vm1450, %v5399
      %5425 = vst.msk [vmem:[#allocation3 + $0x70] sm:$0xff] %vm1450, %v5400
      %5426 = vst.msk [vmem:[#allocation3 + $0x78] sm:$0xff] %vm1450, %v5401
      %5427 = vst.msk [vmem:[#allocation3 + $0x80] sm:$0xff] %vm1450, %v5402
      %5428 = vst.msk [vmem:[#allocation3 + $0x88] sm:$0xff] %vm1450, %v5403
      %5429 = vst.msk [vmem:[#allocation3 + $0x90] sm:$0xff] %vm1450, %v5404
      %5430 = vst.msk [vmem:[#allocation3 + $0x98] sm:$0xff] %vm1450, %v5405
      %5431 = vst.msk [vmem:[#allocation3 + $0xa0] sm:$0xff] %vm1450, %v5406
      %5432 = vst.msk [vmem:[#allocation3 + $0xa8] sm:$0xff] %vm1450, %v5407
      %5433 = vst.msk [vmem:[#allocation3 + $0xb0] sm:$0xff] %vm1450, %v5408
      %5434 = vst.msk [vmem:[#allocation3 + $0xb8] sm:$0xff] %vm1450, %v5409
      %vm5435 = vcmask 256000
      %5436 = vst.msk [vmem:[#allocation3 + $0xc0] sm:$0x7] %vm5435, %v5410
      %v5437 = vld [vmem:[#allocation3] sm:$0xff]
      %v5438 = vld [vmem:[#allocation3 + $0x8] sm:$0xff]
      %v5439 = vld [vmem:[#allocation3 + $0x10] sm:$0xff]
      %v5440 = vld [vmem:[#allocation3 + $0x18] sm:$0xff]
      %v5441 = vld [vmem:[#allocation3 + $0x20] sm:$0xff]
      %v5442 = vld [vmem:[#allocation3 + $0x28] sm:$0xff]
      %v5443 = vld [vmem:[#allocation3 + $0x30] sm:$0xff]
      %v5444 = vld [vmem:[#allocation3 + $0x38] sm:$0xff]
      %v5445 = vld [vmem:[#allocation3 + $0x40] sm:$0xff]
      %v5446 = vld [vmem:[#allocation3 + $0x48] sm:$0xff]
      %v5447 = vld [vmem:[#allocation3 + $0x50] sm:$0xff]
      %v5448 = vld [vmem:[#allocation3 + $0x58] sm:$0xff]
      %v5449 = vld [vmem:[#allocation3 + $0x60] sm:$0xff]
      %v5450 = vld [vmem:[#allocation3 + $0x68] sm:$0xff]
      %v5451 = vld [vmem:[#allocation3 + $0x70] sm:$0xff]
      %v5452 = vld [vmem:[#allocation3 + $0x78] sm:$0xff]
      %v5453 = vld [vmem:[#allocation3 + $0x80] sm:$0xff]
      %v5454 = vld [vmem:[#allocation3 + $0x88] sm:$0xff]
      %v5455 = vld [vmem:[#allocation3 + $0x90] sm:$0xff]
      %v5456 = vld [vmem:[#allocation3 + $0x98] sm:$0xff]
      %v5457 = vld [vmem:[#allocation3 + $0xa0] sm:$0x1f]
      %v5458 = vld [vmem:[#allocation3 + $0x1] sm:$0xff]
      %v5459 = vld [vmem:[#allocation3 + $0x9] sm:$0xff]
      %v5460 = vld [vmem:[#allocation3 + $0x11] sm:$0xff]
      %v5461 = vld [vmem:[#allocation3 + $0x19] sm:$0xff]
      %v5462 = vld [vmem:[#allocation3 + $0x21] sm:$0xff]
      %v5463 = vld [vmem:[#allocation3 + $0x29] sm:$0xff]
      %v5464 = vld [vmem:[#allocation3 + $0x31] sm:$0xff]
      %v5465 = vld [vmem:[#allocation3 + $0x39] sm:$0xff]
      %v5466 = vld [vmem:[#allocation3 + $0x41] sm:$0xff]
      %v5467 = vld [vmem:[#allocation3 + $0x49] sm:$0xff]
      %v5468 = vld [vmem:[#allocation3 + $0x51] sm:$0xff]
      %v5469 = vld [vmem:[#allocation3 + $0x59] sm:$0xff]
      %v5470 = vld [vmem:[#allocation3 + $0x61] sm:$0xff]
      %v5471 = vld [vmem:[#allocation3 + $0x69] sm:$0xff]
      %v5472 = vld [vmem:[#allocation3 + $0x71] sm:$0xff]
      %v5473 = vld [vmem:[#allocation3 + $0x79] sm:$0xff]
      %v5474 = vld [vmem:[#allocation3 + $0x81] sm:$0xff]
      %v5475 = vld [vmem:[#allocation3 + $0x89] sm:$0xff]
      %v5476 = vld [vmem:[#allocation3 + $0x91] sm:$0xff]
      %v5477 = vld [vmem:[#allocation3 + $0x99] sm:$0xff]
      %v5478 = vld [vmem:[#allocation3 + $0xa1] sm:$0x1f]
      %v5479 = vld [vmem:[#allocation3 + $0x2] sm:$0xff]
      %v5480 = vld [vmem:[#allocation3 + $0xa] sm:$0xff]
      %v5481 = vld [vmem:[#allocation3 + $0x12] sm:$0xff]
      %v5482 = vld [vmem:[#allocation3 + $0x1a] sm:$0xff]
      %v5483 = vld [vmem:[#allocation3 + $0x22] sm:$0xff]
      %v5484 = vld [vmem:[#allocation3 + $0x2a] sm:$0xff]
      %v5485 = vld [vmem:[#allocation3 + $0x32] sm:$0xff]
      %v5486 = vld [vmem:[#allocation3 + $0x3a] sm:$0xff]
      %v5487 = vld [vmem:[#allocation3 + $0x42] sm:$0xff]
      %v5488 = vld [vmem:[#allocation3 + $0x4a] sm:$0xff]
      %v5489 = vld [vmem:[#allocation3 + $0x52] sm:$0xff]
      %v5490 = vld [vmem:[#allocation3 + $0x5a] sm:$0xff]
      %v5491 = vld [vmem:[#allocation3 + $0x62] sm:$0xff]
      %v5492 = vld [vmem:[#allocation3 + $0x6a] sm:$0xff]
      %v5493 = vld [vmem:[#allocation3 + $0x72] sm:$0xff]
      %v5494 = vld [vmem:[#allocation3 + $0x7a] sm:$0xff]
      %v5495 = vld [vmem:[#allocation3 + $0x82] sm:$0xff]
      %v5496 = vld [vmem:[#allocation3 + $0x8a] sm:$0xff]
      %v5497 = vld [vmem:[#allocation3 + $0x92] sm:$0xff]
      %v5498 = vld [vmem:[#allocation3 + $0x9a] sm:$0xff]
      %v5499 = vld [vmem:[#allocation3 + $0xa2] sm:$0x1f]
      %v5500 = vld [vmem:[#allocation3 + $0xf] sm:$0xff]
      %v5501 = vld [vmem:[#allocation3 + $0x17] sm:$0xff]
      %v5502 = vld [vmem:[#allocation3 + $0x1f] sm:$0xff]
      %v5503 = vld [vmem:[#allocation3 + $0x27] sm:$0xff]
      %v5504 = vld [vmem:[#allocation3 + $0x2f] sm:$0xff]
      %v5505 = vld [vmem:[#allocation3 + $0x37] sm:$0xff]
      %v5506 = vld [vmem:[#allocation3 + $0x3f] sm:$0xff]
      %v5507 = vld [vmem:[#allocation3 + $0x47] sm:$0xff]
      %v5508 = vld [vmem:[#allocation3 + $0x4f] sm:$0xff]
      %v5509 = vld [vmem:[#allocation3 + $0x57] sm:$0xff]
      %v5510 = vld [vmem:[#allocation3 + $0x5f] sm:$0xff]
      %v5511 = vld [vmem:[#allocation3 + $0x67] sm:$0xff]
      %v5512 = vld [vmem:[#allocation3 + $0x6f] sm:$0xff]
      %v5513 = vld [vmem:[#allocation3 + $0x77] sm:$0xff]
      %v5514 = vld [vmem:[#allocation3 + $0x7f] sm:$0xff]
      %v5515 = vld [vmem:[#allocation3 + $0x87] sm:$0xff]
      %v5516 = vld [vmem:[#allocation3 + $0x8f] sm:$0xff]
      %v5517 = vld [vmem:[#allocation3 + $0x97] sm:$0xff]
      %v5518 = vld [vmem:[#allocation3 + $0x9f] sm:$0xff]
      %v5519 = vld [vmem:[#allocation3 + $0xa7] sm:$0xff]
      %v5520 = vld [vmem:[#allocation3 + $0xaf] sm:$0x1f]
      %v5521 = vld [vmem:[#allocation3 + $0xa0] sm:$0xff]
      %v5522 = vld [vmem:[#allocation3 + $0xa8] sm:$0xff]
      %v5523 = vld [vmem:[#allocation3 + $0xb0] sm:$0x1f]
      %v5524 = vld [vmem:[#allocation3 + $0xa1] sm:$0xff]
      %v5525 = vld [vmem:[#allocation3 + $0xa9] sm:$0xff]
      %v5526 = vld [vmem:[#allocation3 + $0xb1] sm:$0x1f]
      %v5527 = vld [vmem:[#allocation3 + $0x1e] sm:$0xff]
      %v5528 = vld [vmem:[#allocation3 + $0x26] sm:$0xff]
      %v5529 = vld [vmem:[#allocation3 + $0x2e] sm:$0xff]
      %v5530 = vld [vmem:[#allocation3 + $0x36] sm:$0xff]
      %v5531 = vld [vmem:[#allocation3 + $0x3e] sm:$0xff]
      %v5532 = vld [vmem:[#allocation3 + $0x46] sm:$0xff]
      %v5533 = vld [vmem:[#allocation3 + $0x4e] sm:$0xff]
      %v5534 = vld [vmem:[#allocation3 + $0x56] sm:$0xff]
      %v5535 = vld [vmem:[#allocation3 + $0x5e] sm:$0xff]
      %v5536 = vld [vmem:[#allocation3 + $0x66] sm:$0xff]
      %v5537 = vld [vmem:[#allocation3 + $0x6e] sm:$0xff]
      %v5538 = vld [vmem:[#allocation3 + $0x76] sm:$0xff]
      %v5539 = vld [vmem:[#allocation3 + $0x7e] sm:$0xff]
      %v5540 = vld [vmem:[#allocation3 + $0x86] sm:$0xff]
      %v5541 = vld [vmem:[#allocation3 + $0x8e] sm:$0xff]
      %v5542 = vld [vmem:[#allocation3 + $0x96] sm:$0xff]
      %v5543 = vld [vmem:[#allocation3 + $0x9e] sm:$0xff]
      %v5544 = vld [vmem:[#allocation3 + $0xa6] sm:$0xff]
      %v5545 = vld [vmem:[#allocation3 + $0xae] sm:$0xff]
      %v5546 = vld [vmem:[#allocation3 + $0xb6] sm:$0xff]
      %v5547 = vld [vmem:[#allocation3 + $0xbe] sm:$0x1f]
      %v5548 = vld [vmem:[#allocation3 + $0xaf] sm:$0xff]
      %v5549 = vld [vmem:[#allocation3 + $0xb7] sm:$0xff]
      %v5550 = vld [vmem:[#allocation3 + $0xbf] sm:$0x1f]
      %v5551 = vld [vmem:[#allocation3 + $0xb0] sm:$0xff]
      %v5552 = vld [vmem:[#allocation3 + $0xb8] sm:$0xff]
      %v5553 = vld [vmem:[#allocation3 + $0xc0] sm:$0x1f]
      %5575 = vrot.lane.b32.xlu0 %v5458, 32
      %v5576 = vpop.permute.xlu0 %5575
      %5577 = vrot.lane.b32.xlu0 %v5459, 32
      %v5578 = vpop.permute.xlu0 %5577
      %5579 = vrot.lane.b32.xlu0 %v5460, 32
      %v5580 = vpop.permute.xlu0 %5579
      %5581 = vrot.lane.b32.xlu0 %v5461, 32
      %v5582 = vpop.permute.xlu0 %5581
      %5583 = vrot.lane.b32.xlu0 %v5462, 32
      %v5584 = vpop.permute.xlu0 %5583
      %5585 = vrot.lane.b32.xlu0 %v5463, 32
      %v5586 = vpop.permute.xlu0 %5585
      %5587 = vrot.lane.b32.xlu0 %v5464, 32
      %v5588 = vpop.permute.xlu0 %5587
      %5589 = vrot.lane.b32.xlu0 %v5465, 32
      %v5590 = vpop.permute.xlu0 %5589
      %5591 = vrot.lane.b32.xlu0 %v5466, 32
      %v5592 = vpop.permute.xlu0 %5591
      %5593 = vrot.lane.b32.xlu0 %v5467, 32
      %v5594 = vpop.permute.xlu0 %5593
      %5595 = vrot.lane.b32.xlu0 %v5468, 32
      %v5596 = vpop.permute.xlu0 %5595
      %5597 = vrot.lane.b32.xlu0 %v5469, 32
      %v5598 = vpop.permute.xlu0 %5597
      %5599 = vrot.lane.b32.xlu0 %v5470, 32
      %v5600 = vpop.permute.xlu0 %5599
      %5601 = vrot.lane.b32.xlu0 %v5471, 32
      %v5602 = vpop.permute.xlu0 %5601
      %5603 = vrot.lane.b32.xlu0 %v5472, 32
      %v5604 = vpop.permute.xlu0 %5603
      %5605 = vrot.lane.b32.xlu0 %v5473, 32
      %v5606 = vpop.permute.xlu0 %5605
      %5607 = vrot.lane.b32.xlu0 %v5474, 32
      %v5608 = vpop.permute.xlu0 %5607
      %5609 = vrot.lane.b32.xlu0 %v5475, 32
      %v5610 = vpop.permute.xlu0 %5609
      %5611 = vrot.lane.b32.xlu0 %v5476, 32
      %v5612 = vpop.permute.xlu0 %5611
      %5613 = vrot.lane.b32.xlu0 %v5477, 32
      %v5614 = vpop.permute.xlu0 %5613
      %5615 = vrot.lane.b32.xlu0 %v5478, 32
      %v5616 = vpop.permute.xlu0 %5615
      %5659 = vrot.lane.b32.xlu0 %v5479, 64
      %v5660 = vpop.permute.xlu0 %5659
      %5661 = vrot.lane.b32.xlu0 %v5480, 64
      %v5662 = vpop.permute.xlu0 %5661
      %5663 = vrot.lane.b32.xlu0 %v5481, 64
      %v5664 = vpop.permute.xlu0 %5663
      %5665 = vrot.lane.b32.xlu0 %v5482, 64
      %v5666 = vpop.permute.xlu0 %5665
      %5667 = vrot.lane.b32.xlu0 %v5483, 64
      %v5668 = vpop.permute.xlu0 %5667
      %5669 = vrot.lane.b32.xlu0 %v5484, 64
      %v5670 = vpop.permute.xlu0 %5669
      %5671 = vrot.lane.b32.xlu0 %v5485, 64
      %v5672 = vpop.permute.xlu0 %5671
      %5673 = vrot.lane.b32.xlu0 %v5486, 64
      %v5674 = vpop.permute.xlu0 %5673
      %5675 = vrot.lane.b32.xlu0 %v5487, 64
      %v5676 = vpop.permute.xlu0 %5675
      %5677 = vrot.lane.b32.xlu0 %v5488, 64
      %v5678 = vpop.permute.xlu0 %5677
      %5679 = vrot.lane.b32.xlu0 %v5489, 64
      %v5680 = vpop.permute.xlu0 %5679
      %5681 = vrot.lane.b32.xlu0 %v5490, 64
      %v5682 = vpop.permute.xlu0 %5681
      %5683 = vrot.lane.b32.xlu0 %v5491, 64
      %v5684 = vpop.permute.xlu0 %5683
      %5685 = vrot.lane.b32.xlu0 %v5492, 64
      %v5686 = vpop.permute.xlu0 %5685
      %5687 = vrot.lane.b32.xlu0 %v5493, 64
      %v5688 = vpop.permute.xlu0 %5687
      %5689 = vrot.lane.b32.xlu0 %v5494, 64
      %v5690 = vpop.permute.xlu0 %5689
      %5691 = vrot.lane.b32.xlu0 %v5495, 64
      %v5692 = vpop.permute.xlu0 %5691
      %5693 = vrot.lane.b32.xlu0 %v5496, 64
      %v5694 = vpop.permute.xlu0 %5693
      %5695 = vrot.lane.b32.xlu0 %v5497, 64
      %v5696 = vpop.permute.xlu0 %5695
      %5697 = vrot.lane.b32.xlu0 %v5498, 64
      %v5698 = vpop.permute.xlu0 %5697
      %5699 = vrot.lane.b32.xlu0 %v5499, 64
      %v5700 = vpop.permute.xlu0 %5699
      %5743 = vrot.lane.b32.xlu0 %v5500, 96
      %v5744 = vpop.permute.xlu0 %5743
      %5745 = vrot.lane.b32.xlu0 %v5501, 96
      %v5746 = vpop.permute.xlu0 %5745
      %5747 = vrot.lane.b32.xlu0 %v5502, 96
      %v5748 = vpop.permute.xlu0 %5747
      %5749 = vrot.lane.b32.xlu0 %v5503, 96
      %v5750 = vpop.permute.xlu0 %5749
      %5751 = vrot.lane.b32.xlu0 %v5504, 96
      %v5752 = vpop.permute.xlu0 %5751
      %5753 = vrot.lane.b32.xlu0 %v5505, 96
      %v5754 = vpop.permute.xlu0 %5753
      %5755 = vrot.lane.b32.xlu0 %v5506, 96
      %v5756 = vpop.permute.xlu0 %5755
      %5757 = vrot.lane.b32.xlu0 %v5507, 96
      %v5758 = vpop.permute.xlu0 %5757
      %5759 = vrot.lane.b32.xlu0 %v5508, 96
      %v5760 = vpop.permute.xlu0 %5759
      %5761 = vrot.lane.b32.xlu0 %v5509, 96
      %v5762 = vpop.permute.xlu0 %5761
      %5763 = vrot.lane.b32.xlu0 %v5510, 96
      %v5764 = vpop.permute.xlu0 %5763
      %5765 = vrot.lane.b32.xlu0 %v5511, 96
      %v5766 = vpop.permute.xlu0 %5765
      %5767 = vrot.lane.b32.xlu0 %v5512, 96
      %v5768 = vpop.permute.xlu0 %5767
      %5769 = vrot.lane.b32.xlu0 %v5513, 96
      %v5770 = vpop.permute.xlu0 %5769
      %5771 = vrot.lane.b32.xlu0 %v5514, 96
      %v5772 = vpop.permute.xlu0 %5771
      %5773 = vrot.lane.b32.xlu0 %v5515, 96
      %v5774 = vpop.permute.xlu0 %5773
      %5775 = vrot.lane.b32.xlu0 %v5516, 96
      %v5776 = vpop.permute.xlu0 %5775
      %5777 = vrot.lane.b32.xlu0 %v5517, 96
      %v5778 = vpop.permute.xlu0 %5777
      %5779 = vrot.lane.b32.xlu0 %v5518, 96
      %v5780 = vpop.permute.xlu0 %5779
      %5781 = vrot.lane.b32.xlu0 %v5519, 96
      %v5782 = vpop.permute.xlu0 %5781
      %5783 = vrot.lane.b32.xlu0 %v5520, 96
      %v5784 = vpop.permute.xlu0 %5783
      %5809 = vrot.lane.b32.xlu0 %v5524, 32
      %v5810 = vpop.permute.xlu0 %5809
      %5811 = vrot.lane.b32.xlu0 %v5525, 32
      %v5812 = vpop.permute.xlu0 %5811
      %5813 = vrot.lane.b32.xlu0 %v5526, 32
      %v5814 = vpop.permute.xlu0 %5813
      %5839 = vrot.lane.b32.xlu0 %v5527, 64
      %v5840 = vpop.permute.xlu0 %5839
      %5841 = vrot.lane.b32.xlu0 %v5528, 64
      %v5842 = vpop.permute.xlu0 %5841
      %5843 = vrot.lane.b32.xlu0 %v5529, 64
      %v5844 = vpop.permute.xlu0 %5843
      %5845 = vrot.lane.b32.xlu0 %v5530, 64
      %v5846 = vpop.permute.xlu0 %5845
      %5847 = vrot.lane.b32.xlu0 %v5531, 64
      %v5848 = vpop.permute.xlu0 %5847
      %5849 = vrot.lane.b32.xlu0 %v5532, 64
      %v5850 = vpop.permute.xlu0 %5849
      %5851 = vrot.lane.b32.xlu0 %v5533, 64
      %v5852 = vpop.permute.xlu0 %5851
      %5853 = vrot.lane.b32.xlu0 %v5534, 64
      %v5854 = vpop.permute.xlu0 %5853
      %5855 = vrot.lane.b32.xlu0 %v5535, 64
      %v5856 = vpop.permute.xlu0 %5855
      %5857 = vrot.lane.b32.xlu0 %v5536, 64
      %v5858 = vpop.permute.xlu0 %5857
      %5859 = vrot.lane.b32.xlu0 %v5537, 64
      %v5860 = vpop.permute.xlu0 %5859
      %5861 = vrot.lane.b32.xlu0 %v5538, 64
      %v5862 = vpop.permute.xlu0 %5861
      %5863 = vrot.lane.b32.xlu0 %v5539, 64
      %v5864 = vpop.permute.xlu0 %5863
      %5865 = vrot.lane.b32.xlu0 %v5540, 64
      %v5866 = vpop.permute.xlu0 %5865
      %5867 = vrot.lane.b32.xlu0 %v5541, 64
      %v5868 = vpop.permute.xlu0 %5867
      %5869 = vrot.lane.b32.xlu0 %v5542, 64
      %v5870 = vpop.permute.xlu0 %5869
      %5871 = vrot.lane.b32.xlu0 %v5543, 64
      %v5872 = vpop.permute.xlu0 %5871
      %5873 = vrot.lane.b32.xlu0 %v5544, 64
      %v5874 = vpop.permute.xlu0 %5873
      %5875 = vrot.lane.b32.xlu0 %v5545, 64
      %v5876 = vpop.permute.xlu0 %5875
      %5877 = vrot.lane.b32.xlu0 %v5546, 64
      %v5878 = vpop.permute.xlu0 %5877
      %5879 = vrot.lane.b32.xlu0 %v5547, 64
      %v5880 = vpop.permute.xlu0 %5879
      %5905 = vrot.lane.b32.xlu0 %v5548, 96
      %v5906 = vpop.permute.xlu0 %5905
      %5907 = vrot.lane.b32.xlu0 %v5549, 96
      %v5908 = vpop.permute.xlu0 %5907
      %5909 = vrot.lane.b32.xlu0 %v5550, 96
      %v5910 = vpop.permute.xlu0 %5909
      %v5914 = vsel %vm1450, %v5437, %v5576
      %v5915 = vsel %vm1450, %v5438, %v5578
      %v5916 = vsel %vm1450, %v5439, %v5580
      %v5917 = vsel %vm1450, %v5440, %v5582
      %v5918 = vsel %vm1450, %v5441, %v5584
      %v5919 = vsel %vm1450, %v5442, %v5586
      %v5920 = vsel %vm1450, %v5443, %v5588
      %v5921 = vsel %vm1450, %v5444, %v5590
      %v5922 = vsel %vm1450, %v5445, %v5592
      %v5923 = vsel %vm1450, %v5446, %v5594
      %v5924 = vsel %vm1450, %v5447, %v5596
      %v5925 = vsel %vm1450, %v5448, %v5598
      %v5926 = vsel %vm1450, %v5449, %v5600
      %v5927 = vsel %vm1450, %v5450, %v5602
      %v5928 = vsel %vm1450, %v5451, %v5604
      %v5929 = vsel %vm1450, %v5452, %v5606
      %v5930 = vsel %vm1450, %v5453, %v5608
      %v5931 = vsel %vm1450, %v5454, %v5610
      %v5932 = vsel %vm1450, %v5455, %v5612
      %v5933 = vsel %vm1450, %v5456, %v5614
      %v5934 = vsel %vm1450, %v5457, %v5616
      %v5935 = vsel %vm2067, %v5914, %v5660
      %v5936 = vsel %vm2067, %v5915, %v5662
      %v5937 = vsel %vm2067, %v5916, %v5664
      %v5938 = vsel %vm2067, %v5917, %v5666
      %v5939 = vsel %vm2067, %v5918, %v5668
      %v5940 = vsel %vm2067, %v5919, %v5670
      %v5941 = vsel %vm2067, %v5920, %v5672
      %v5942 = vsel %vm2067, %v5921, %v5674
      %v5943 = vsel %vm2067, %v5922, %v5676
      %v5944 = vsel %vm2067, %v5923, %v5678
      %v5945 = vsel %vm2067, %v5924, %v5680
      %v5946 = vsel %vm2067, %v5925, %v5682
      %v5947 = vsel %vm2067, %v5926, %v5684
      %v5948 = vsel %vm2067, %v5927, %v5686
      %v5949 = vsel %vm2067, %v5928, %v5688
      %v5950 = vsel %vm2067, %v5929, %v5690
      %v5951 = vsel %vm2067, %v5930, %v5692
      %v5952 = vsel %vm2067, %v5931, %v5694
      %v5953 = vsel %vm2067, %v5932, %v5696
      %v5954 = vsel %vm2067, %v5933, %v5698
      %v5955 = vsel %vm2067, %v5934, %v5700
      %v5956 = vsel %vm2093, %v5935, %v5744
      %v5957 = vsel %vm2093, %v5936, %v5746
      %v5958 = vsel %vm2093, %v5937, %v5748
      %v5959 = vsel %vm2093, %v5938, %v5750
      %v5960 = vsel %vm2093, %v5939, %v5752
      %v5961 = vsel %vm2093, %v5940, %v5754
      %v5962 = vsel %vm2093, %v5941, %v5756
      %v5963 = vsel %vm2093, %v5942, %v5758
      %v5964 = vsel %vm2093, %v5943, %v5760
      %v5965 = vsel %vm2093, %v5944, %v5762
      %v5966 = vsel %vm2093, %v5945, %v5764
      %v5967 = vsel %vm2093, %v5946, %v5766
      %v5968 = vsel %vm2093, %v5947, %v5768
      %v5969 = vsel %vm2093, %v5948, %v5770
      %v5970 = vsel %vm2093, %v5949, %v5772
      %v5971 = vsel %vm2093, %v5950, %v5774
      %v5972 = vsel %vm2093, %v5951, %v5776
      %v5973 = vsel %vm2093, %v5952, %v5778
      %v5974 = vsel %vm2093, %v5953, %v5780
      %v5975 = vsel %vm2093, %v5954, %v5782
      %v5976 = vsel %vm2093, %v5955, %v5784
      %v5977 = vsel %vm1450, %v5521, %v5810
      %v5978 = vsel %vm1450, %v5522, %v5812
      %v5979 = vsel %vm1450, %v5523, %v5814
      %v5980 = vsel %vm2067, %v5916, %v5840
      %v5981 = vsel %vm2067, %v5917, %v5842
      %v5982 = vsel %vm2067, %v5918, %v5844
      %v5983 = vsel %vm2067, %v5919, %v5846
      %v5984 = vsel %vm2067, %v5920, %v5848
      %v5985 = vsel %vm2067, %v5921, %v5850
      %v5986 = vsel %vm2067, %v5922, %v5852
      %v5987 = vsel %vm2067, %v5923, %v5854
      %v5988 = vsel %vm2067, %v5924, %v5856
      %v5989 = vsel %vm2067, %v5925, %v5858
      %v5990 = vsel %vm2067, %v5926, %v5860
      %v5991 = vsel %vm2067, %v5927, %v5862
      %v5992 = vsel %vm2067, %v5928, %v5864
      %v5993 = vsel %vm2067, %v5929, %v5866
      %v5994 = vsel %vm2067, %v5930, %v5868
      %v5995 = vsel %vm2067, %v5931, %v5870
      %v5996 = vsel %vm2067, %v5932, %v5872
      %v5997 = vsel %vm2067, %v5933, %v5874
      %v5998 = vsel %vm2067, %v5977, %v5876
      %v5999 = vsel %vm2067, %v5978, %v5878
      %v6000 = vsel %vm2067, %v5979, %v5880
      %v6001 = vsel %vm2093, %v5980, %v5748
      %v6002 = vsel %vm2093, %v5981, %v5750
      %v6003 = vsel %vm2093, %v5982, %v5752
      %v6004 = vsel %vm2093, %v5983, %v5754
      %v6005 = vsel %vm2093, %v5984, %v5756
      %v6006 = vsel %vm2093, %v5985, %v5758
      %v6007 = vsel %vm2093, %v5986, %v5760
      %v6008 = vsel %vm2093, %v5987, %v5762
      %v6009 = vsel %vm2093, %v5988, %v5764
      %v6010 = vsel %vm2093, %v5989, %v5766
      %v6011 = vsel %vm2093, %v5990, %v5768
      %v6012 = vsel %vm2093, %v5991, %v5770
      %v6013 = vsel %vm2093, %v5992, %v5772
      %v6014 = vsel %vm2093, %v5993, %v5774
      %v6015 = vsel %vm2093, %v5994, %v5776
      %v6016 = vsel %vm2093, %v5995, %v5778
      %v6017 = vsel %vm2093, %v5996, %v5780
      %v6018 = vsel %vm2093, %v5997, %v5782
      %v6019 = vsel %vm2093, %v5998, %v5906
      %v6020 = vsel %vm2093, %v5999, %v5908
      %v6021 = vsel %vm2093, %v6000, %v5910
      %s6022 = scalar_lea.vmem %s3, 288
      %v6023 = vld [vmem:[%s6022] sm:$0xff]
      %v6024 = vld [vmem:[%s6022 + $0x8] sm:$0xff]
      %v6025 = vld [vmem:[%s6022 + $0x10] sm:$0xff]
      %v6026 = vld [vmem:[%s6022 + $0x18] sm:$0xff]
      %v6027 = vld [vmem:[%s6022 + $0x20] sm:$0xff]
      %v6028 = vld [vmem:[%s6022 + $0x28] sm:$0xff]
      %v6029 = vld [vmem:[%s6022 + $0x30] sm:$0xff]
      %v6030 = vld [vmem:[%s6022 + $0x38] sm:$0xff]
      %v6031 = vld [vmem:[%s6022 + $0x40] sm:$0xff]
      %v6032 = vld [vmem:[%s6022 + $0x48] sm:$0xff]
      %v6033 = vld [vmem:[%s6022 + $0x50] sm:$0xff]
      %v6034 = vld [vmem:[%s6022 + $0x58] sm:$0xff]
      %v6035 = vld [vmem:[%s6022 + $0x60] sm:$0xff]
      %v6036 = vld [vmem:[%s6022 + $0x68] sm:$0xff]
      %v6037 = vld [vmem:[%s6022 + $0x70] sm:$0xff]
      %v6038 = vld [vmem:[%s6022 + $0x78] sm:$0xff]
      %v6039 = vld [vmem:[%s6022 + $0x80] sm:$0xff]
      %v6040 = vld [vmem:[%s6022 + $0x88] sm:$0xff]
      %v6041 = vld [vmem:[%s6022 + $0x90] sm:$0xff]
      %v6042 = vld [vmem:[%s6022 + $0x98] sm:$0xff]
      %v6043 = vld [vmem:[%s6022 + $0xa0] sm:$0xff]
      %v6044 = vld [vmem:[%s6022 + $0xa8] sm:$0xff]
      %v6045 = vld [vmem:[%s6022 + $0xb0] sm:$0xff]
      %v6046 = vld [vmem:[%s6022 + $0xb8] sm:$0xff]
      %v6047 = vld [vmem:[%s6022 + $0xc0] sm:$0xff]
      %v6048 = vld [vmem:[%s6022 + $0xc8] sm:$0xff]
      %v6049 = vld [vmem:[%s6022 + $0xd0] sm:$0xff]
      %v6050 = vld [vmem:[%s6022 + $0xd8] sm:$0xff]
      %v6051 = vld [vmem:[%s6022 + $0xe0] sm:$0xff]
      %v6052 = vld [vmem:[%s6022 + $0xe8] sm:$0xff]
      %v6053 = vld [vmem:[%s6022 + $0xf0] sm:$0xff]
      %v6054 = vld [vmem:[%s6022 + $0xf8] sm:$0xff]
      %v6055 = vld [vmem:[%s6022 + $0x100] sm:$0xff]
      %v6056 = vld [vmem:[%s6022 + $0x108] sm:$0xff]
      %v6057 = vld [vmem:[%s6022 + $0x110] sm:$0xff]
      %v6058 = vld [vmem:[%s6022 + $0x118] sm:$0xff]
      %s6059 = scalar_lea.vmem %s4, 1
      %v6060 = vld [vmem:[%s6059] sm:$0x1]
      %v6062 = vperm.slane %v6060, 0
      %v6065 = vsel %vm1450, %v5441, 0
      %v6068 = vsel %vm1450, %v5442, 0
      %v6071 = vsel %vm1450, %v5443, 0
      %v6074 = vsel %vm1450, %v5444, 0
      %v6077 = vsel %vm1450, %v5445, 0
      %v6080 = vsel %vm1450, %v5446, 0
      %v6083 = vsel %vm1450, %v5447, 0
      %v6086 = vsel %vm1450, %v5448, 0
      %v6089 = vsel %vm1450, %v5449, 0
      %v6092 = vsel %vm1450, %v5450, 0
      %v6095 = vsel %vm1450, %v5451, 0
      %v6098 = vsel %vm1450, %v5452, 0
      %v6101 = vsel %vm1450, %v5453, 0
      %v6104 = vsel %vm1450, %v5454, 0
      %v6107 = vsel %vm1450, %v5455, 0
      %v6110 = vsel %vm1450, %v5456, 0
      %v6113 = vsel %vm1450, %v5521, 0
      %v6116 = vsel %vm1450, %v5522, 0
      %v6119 = vsel %vm1450, %v5551, 0
      %v6122 = vsel %vm1450, %v5552, 0
      %v6125 = vsel %vm1450, %v5553, 0
      %v6127 = vand.u32 %v6038, 4294901760
      %6128 = vmatpush.msra.mxu0 %v6127
      %v6129 = vand.u32 %v6037, 4294901760
      %6130 = vmatpush.msra.mxu0 %v6129
      %v6131 = vand.u32 %v6036, 4294901760
      %6132 = vmatpush.msra.mxu0 %v6131
      %v6133 = vand.u32 %v6035, 4294901760
      %6134 = vmatpush.msra.mxu0 %v6133
      %v6135 = vand.u32 %v6034, 4294901760
      %6136 = vmatpush.msra.mxu0 %v6135
      %v6137 = vand.u32 %v6033, 4294901760
      %6138 = vmatpush.msra.mxu0 %v6137
      %v6139 = vand.u32 %v6032, 4294901760
      %6140 = vmatpush.msra.mxu0 %v6139
      %v6141 = vand.u32 %v6031, 4294901760
      %6142 = vmatpush.msra.mxu0 %v6141
      %v6143 = vand.u32 %v6030, 4294901760
      %6144 = vmatpush.msra.mxu0 %v6143
      %v6145 = vand.u32 %v6029, 4294901760
      %6146 = vmatpush.msra.mxu0 %v6145
      %v6147 = vand.u32 %v6028, 4294901760
      %6148 = vmatpush.msra.mxu0 %v6147
      %v6149 = vand.u32 %v6027, 4294901760
      %6150 = vmatpush.msra.mxu0 %v6149
      %v6151 = vand.u32 %v6026, 4294901760
      %6152 = vmatpush.msra.mxu0 %v6151
      %v6153 = vand.u32 %v6025, 4294901760
      %6154 = vmatpush.msra.mxu0 %v6153
      %v6155 = vand.u32 %v6024, 4294901760
      %6156 = vmatpush.msra.mxu0 %v6155
      %v6157 = vand.u32 %v6023, 4294901760
      %6158 = vmatpush.msra.mxu0 %v6157
      %v6159 = vand.u32 %v5956, 4294901760
      %v6160 = vsub.f32 %v5956, %v6159
      %v6161 = vand.u32 %v6160, 4294901760
      %v6162 = vsub.f32 %v6160, %v6161
      %v6163 = vand.u32 %v6162, 4294901760
      %6164 = vmatmul.f32.gmra.mxu0 %v6163
      %v6165 = vpop.f32.mrf.mxu0
      %v6166 = vadd.f32 %v6062, %v6165
      %v6167 = vand.u32 %v5957, 4294901760
      %v6168 = vsub.f32 %v5957, %v6167
      %v6169 = vand.u32 %v6168, 4294901760
      %v6170 = vsub.f32 %v6168, %v6169
      %v6171 = vand.u32 %v6170, 4294901760
      %6172 = vmatmul.f32.gmra.mxu0 %v6171
      %v6173 = vpop.f32.mrf.mxu0
      %v6174 = vadd.f32 %v6062, %v6173
      %v6175 = vand.u32 %v5958, 4294901760
      %v6176 = vsub.f32 %v5958, %v6175
      %v6177 = vand.u32 %v6176, 4294901760
      %v6178 = vsub.f32 %v6176, %v6177
      %v6179 = vand.u32 %v6178, 4294901760
      %6180 = vmatmul.f32.gmra.mxu0 %v6179
      %v6181 = vpop.f32.mrf.mxu0
      %v6182 = vadd.f32 %v6062, %v6181
      %v6183 = vand.u32 %v5959, 4294901760
      %v6184 = vsub.f32 %v5959, %v6183
      %v6185 = vand.u32 %v6184, 4294901760
      %v6186 = vsub.f32 %v6184, %v6185
      %v6187 = vand.u32 %v6186, 4294901760
      %6188 = vmatmul.f32.gmra.mxu0 %v6187
      %v6189 = vpop.f32.mrf.mxu0
      %v6190 = vadd.f32 %v6062, %v6189
      %v6191 = vand.u32 %v5960, 4294901760
      %v6192 = vsub.f32 %v5960, %v6191
      %v6193 = vand.u32 %v6192, 4294901760
      %v6194 = vsub.f32 %v6192, %v6193
      %v6195 = vand.u32 %v6194, 4294901760
      %6196 = vmatmul.f32.gmra.mxu0 %v6195
      %v6197 = vpop.f32.mrf.mxu0
      %v6198 = vadd.f32 %v6062, %v6197
      %v6199 = vand.u32 %v5961, 4294901760
      %v6200 = vsub.f32 %v5961, %v6199
      %v6201 = vand.u32 %v6200, 4294901760
      %v6202 = vsub.f32 %v6200, %v6201
      %v6203 = vand.u32 %v6202, 4294901760
      %6204 = vmatmul.f32.gmra.mxu0 %v6203
      %v6205 = vpop.f32.mrf.mxu0
      %v6206 = vadd.f32 %v6062, %v6205
      %v6207 = vand.u32 %v5962, 4294901760
      %v6208 = vsub.f32 %v5962, %v6207
      %v6209 = vand.u32 %v6208, 4294901760
      %v6210 = vsub.f32 %v6208, %v6209
      %v6211 = vand.u32 %v6210, 4294901760
      %6212 = vmatmul.f32.gmra.mxu0 %v6211
      %v6213 = vpop.f32.mrf.mxu0
      %v6214 = vadd.f32 %v6062, %v6213
      %v6215 = vand.u32 %v5963, 4294901760
      %v6216 = vsub.f32 %v5963, %v6215
      %v6217 = vand.u32 %v6216, 4294901760
      %v6218 = vsub.f32 %v6216, %v6217
      %v6219 = vand.u32 %v6218, 4294901760
      %6220 = vmatmul.f32.gmra.mxu0 %v6219
      %v6221 = vpop.f32.mrf.mxu0
      %v6222 = vadd.f32 %v6062, %v6221
      %v6223 = vand.u32 %v5964, 4294901760
      %v6224 = vsub.f32 %v5964, %v6223
      %v6225 = vand.u32 %v6224, 4294901760
      %v6226 = vsub.f32 %v6224, %v6225
      %v6227 = vand.u32 %v6226, 4294901760
      %6228 = vmatmul.f32.gmra.mxu0 %v6227
      %v6229 = vpop.f32.mrf.mxu0
      %v6230 = vadd.f32 %v6062, %v6229
      %v6231 = vand.u32 %v5965, 4294901760
      %v6232 = vsub.f32 %v5965, %v6231
      %v6233 = vand.u32 %v6232, 4294901760
      %v6234 = vsub.f32 %v6232, %v6233
      %v6235 = vand.u32 %v6234, 4294901760
      %6236 = vmatmul.f32.gmra.mxu0 %v6235
      %v6237 = vpop.f32.mrf.mxu0
      %v6238 = vadd.f32 %v6062, %v6237
      %v6239 = vand.u32 %v5966, 4294901760
      %v6240 = vsub.f32 %v5966, %v6239
      %v6241 = vand.u32 %v6240, 4294901760
      %v6242 = vsub.f32 %v6240, %v6241
      %v6243 = vand.u32 %v6242, 4294901760
      %6244 = vmatmul.f32.gmra.mxu0 %v6243
      %v6245 = vpop.f32.mrf.mxu0
      %v6246 = vadd.f32 %v6062, %v6245
      %v6247 = vand.u32 %v5967, 4294901760
      %v6248 = vsub.f32 %v5967, %v6247
      %v6249 = vand.u32 %v6248, 4294901760
      %v6250 = vsub.f32 %v6248, %v6249
      %v6251 = vand.u32 %v6250, 4294901760
      %6252 = vmatmul.f32.gmra.mxu0 %v6251
      %v6253 = vpop.f32.mrf.mxu0
      %v6254 = vadd.f32 %v6062, %v6253
      %v6255 = vand.u32 %v5968, 4294901760
      %v6256 = vsub.f32 %v5968, %v6255
      %v6257 = vand.u32 %v6256, 4294901760
      %v6258 = vsub.f32 %v6256, %v6257
      %v6259 = vand.u32 %v6258, 4294901760
      %6260 = vmatmul.f32.gmra.mxu0 %v6259
      %v6261 = vpop.f32.mrf.mxu0
      %v6262 = vadd.f32 %v6062, %v6261
      %v6263 = vand.u32 %v5969, 4294901760
      %v6264 = vsub.f32 %v5969, %v6263
      %v6265 = vand.u32 %v6264, 4294901760
      %v6266 = vsub.f32 %v6264, %v6265
      %v6267 = vand.u32 %v6266, 4294901760
      %6268 = vmatmul.f32.gmra.mxu0 %v6267
      %v6269 = vpop.f32.mrf.mxu0
      %v6270 = vadd.f32 %v6062, %v6269
      %v6271 = vand.u32 %v5970, 4294901760
      %v6272 = vsub.f32 %v5970, %v6271
      %v6273 = vand.u32 %v6272, 4294901760
      %v6274 = vsub.f32 %v6272, %v6273
      %v6275 = vand.u32 %v6274, 4294901760
      %6276 = vmatmul.f32.gmra.mxu0 %v6275
      %v6277 = vpop.f32.mrf.mxu0
      %v6278 = vadd.f32 %v6062, %v6277
      %v6279 = vand.u32 %v5971, 4294901760
      %v6280 = vsub.f32 %v5971, %v6279
      %v6281 = vand.u32 %v6280, 4294901760
      %v6282 = vsub.f32 %v6280, %v6281
      %v6283 = vand.u32 %v6282, 4294901760
      %6284 = vmatmul.f32.gmra.mxu0 %v6283
      %v6285 = vpop.f32.mrf.mxu0
      %v6286 = vadd.f32 %v6062, %v6285
      %v6287 = vand.u32 %v5972, 4294901760
      %v6288 = vsub.f32 %v5972, %v6287
      %v6289 = vand.u32 %v6288, 4294901760
      %v6290 = vsub.f32 %v6288, %v6289
      %v6291 = vand.u32 %v6290, 4294901760
      %6292 = vmatmul.f32.gmra.mxu0 %v6291
      %v6293 = vpop.f32.mrf.mxu0
      %v6294 = vadd.f32 %v6062, %v6293
      %v6295 = vand.u32 %v5973, 4294901760
      %v6296 = vsub.f32 %v5973, %v6295
      %v6297 = vand.u32 %v6296, 4294901760
      %v6298 = vsub.f32 %v6296, %v6297
      %v6299 = vand.u32 %v6298, 4294901760
      %6300 = vmatmul.f32.gmra.mxu0 %v6299
      %v6301 = vpop.f32.mrf.mxu0
      %v6302 = vadd.f32 %v6062, %v6301
      %v6303 = vand.u32 %v5974, 4294901760
      %v6304 = vsub.f32 %v5974, %v6303
      %v6305 = vand.u32 %v6304, 4294901760
      %v6306 = vsub.f32 %v6304, %v6305
      %v6307 = vand.u32 %v6306, 4294901760
      %6308 = vmatmul.f32.gmra.mxu0 %v6307
      %v6309 = vpop.f32.mrf.mxu0
      %v6310 = vadd.f32 %v6062, %v6309
      %v6311 = vand.u32 %v5975, 4294901760
      %v6312 = vsub.f32 %v5975, %v6311
      %v6313 = vand.u32 %v6312, 4294901760
      %v6314 = vsub.f32 %v6312, %v6313
      %v6315 = vand.u32 %v6314, 4294901760
      %6316 = vmatmul.f32.gmra.mxu0 %v6315
      %v6317 = vpop.f32.mrf.mxu0
      %v6318 = vadd.f32 %v6062, %v6317
      %v6319 = vand.u32 %v5976, 4294901760
      %v6320 = vsub.f32 %v5976, %v6319
      %v6321 = vand.u32 %v6320, 4294901760
      %v6322 = vsub.f32 %v6320, %v6321
      %v6323 = vand.u32 %v6322, 4294901760
      %6324 = vmatmul.f32.gmra.mxu0 %v6323
      %v6325 = vpop.f32.mrf.mxu0
      %v6326 = vadd.f32 %v6062, %v6325
      %6327 = vdwg.mxu0
      %v6328 = vand.u32 %v6038, 4294901760
      %v6329 = vsub.f32 %v6038, %v6328
      %v6330 = vand.u32 %v6329, 4294901760
      %v6331 = vsub.f32 %v6329, %v6330
      %v6332 = vand.u32 %v6331, 4294901760
      %6333 = vmatpush.msra.mxu0 %v6332
      %v6334 = vand.u32 %v6037, 4294901760
      %v6335 = vsub.f32 %v6037, %v6334
      %v6336 = vand.u32 %v6335, 4294901760
      %v6337 = vsub.f32 %v6335, %v6336
      %v6338 = vand.u32 %v6337, 4294901760
      %6339 = vmatpush.msra.mxu0 %v6338
      %v6340 = vand.u32 %v6036, 4294901760
      %v6341 = vsub.f32 %v6036, %v6340
      %v6342 = vand.u32 %v6341, 4294901760
      %v6343 = vsub.f32 %v6341, %v6342
      %v6344 = vand.u32 %v6343, 4294901760
      %6345 = vmatpush.msra.mxu0 %v6344
      %v6346 = vand.u32 %v6035, 4294901760
      %v6347 = vsub.f32 %v6035, %v6346
      %v6348 = vand.u32 %v6347, 4294901760
      %v6349 = vsub.f32 %v6347, %v6348
      %v6350 = vand.u32 %v6349, 4294901760
      %6351 = vmatpush.msra.mxu0 %v6350
      %v6352 = vand.u32 %v6034, 4294901760
      %v6353 = vsub.f32 %v6034, %v6352
      %v6354 = vand.u32 %v6353, 4294901760
      %v6355 = vsub.f32 %v6353, %v6354
      %v6356 = vand.u32 %v6355, 4294901760
      %6357 = vmatpush.msra.mxu0 %v6356
      %v6358 = vand.u32 %v6033, 4294901760
      %v6359 = vsub.f32 %v6033, %v6358
      %v6360 = vand.u32 %v6359, 4294901760
      %v6361 = vsub.f32 %v6359, %v6360
      %v6362 = vand.u32 %v6361, 4294901760
      %6363 = vmatpush.msra.mxu0 %v6362
      %v6364 = vand.u32 %v6032, 4294901760
      %v6365 = vsub.f32 %v6032, %v6364
      %v6366 = vand.u32 %v6365, 4294901760
      %v6367 = vsub.f32 %v6365, %v6366
      %v6368 = vand.u32 %v6367, 4294901760
      %6369 = vmatpush.msra.mxu0 %v6368
      %v6370 = vand.u32 %v6031, 4294901760
      %v6371 = vsub.f32 %v6031, %v6370
      %v6372 = vand.u32 %v6371, 4294901760
      %v6373 = vsub.f32 %v6371, %v6372
      %v6374 = vand.u32 %v6373, 4294901760
      %6375 = vmatpush.msra.mxu0 %v6374
      %v6376 = vand.u32 %v6030, 4294901760
      %v6377 = vsub.f32 %v6030, %v6376
      %v6378 = vand.u32 %v6377, 4294901760
      %v6379 = vsub.f32 %v6377, %v6378
      %v6380 = vand.u32 %v6379, 4294901760
      %6381 = vmatpush.msra.mxu0 %v6380
      %v6382 = vand.u32 %v6029, 4294901760
      %v6383 = vsub.f32 %v6029, %v6382
      %v6384 = vand.u32 %v6383, 4294901760
      %v6385 = vsub.f32 %v6383, %v6384
      %v6386 = vand.u32 %v6385, 4294901760
      %6387 = vmatpush.msra.mxu0 %v6386
      %v6388 = vand.u32 %v6028, 4294901760
      %v6389 = vsub.f32 %v6028, %v6388
      %v6390 = vand.u32 %v6389, 4294901760
      %v6391 = vsub.f32 %v6389, %v6390
      %v6392 = vand.u32 %v6391, 4294901760
      %6393 = vmatpush.msra.mxu0 %v6392
      %v6394 = vand.u32 %v6027, 4294901760
      %v6395 = vsub.f32 %v6027, %v6394
      %v6396 = vand.u32 %v6395, 4294901760
      %v6397 = vsub.f32 %v6395, %v6396
      %v6398 = vand.u32 %v6397, 4294901760
      %6399 = vmatpush.msra.mxu0 %v6398
      %v6400 = vand.u32 %v6026, 4294901760
      %v6401 = vsub.f32 %v6026, %v6400
      %v6402 = vand.u32 %v6401, 4294901760
      %v6403 = vsub.f32 %v6401, %v6402
      %v6404 = vand.u32 %v6403, 4294901760
      %6405 = vmatpush.msra.mxu0 %v6404
      %v6406 = vand.u32 %v6025, 4294901760
      %v6407 = vsub.f32 %v6025, %v6406
      %v6408 = vand.u32 %v6407, 4294901760
      %v6409 = vsub.f32 %v6407, %v6408
      %v6410 = vand.u32 %v6409, 4294901760
      %6411 = vmatpush.msra.mxu0 %v6410
      %v6412 = vand.u32 %v6024, 4294901760
      %v6413 = vsub.f32 %v6024, %v6412
      %v6414 = vand.u32 %v6413, 4294901760
      %v6415 = vsub.f32 %v6413, %v6414
      %v6416 = vand.u32 %v6415, 4294901760
      %6417 = vmatpush.msra.mxu0 %v6416
      %v6418 = vand.u32 %v6023, 4294901760
      %v6419 = vsub.f32 %v6023, %v6418
      %v6420 = vand.u32 %v6419, 4294901760
      %v6421 = vsub.f32 %v6419, %v6420
      %v6422 = vand.u32 %v6421, 4294901760
      %6423 = vmatpush.msra.mxu0 %v6422
      %v6424 = vand.u32 %v5956, 4294901760
      %6425 = vmatmul.f32.gmra.mxu0 %v6424
      %v6426 = vpop.f32.mrf.mxu0
      %v6427 = vadd.f32 %v6166, %v6426
      %v6428 = vand.u32 %v5957, 4294901760
      %6429 = vmatmul.f32.gmra.mxu0 %v6428
      %v6430 = vpop.f32.mrf.mxu0
      %v6431 = vadd.f32 %v6174, %v6430
      %v6432 = vand.u32 %v5958, 4294901760
      %6433 = vmatmul.f32.gmra.mxu0 %v6432
      %v6434 = vpop.f32.mrf.mxu0
      %v6435 = vadd.f32 %v6182, %v6434
      %v6436 = vand.u32 %v5959, 4294901760
      %6437 = vmatmul.f32.gmra.mxu0 %v6436
      %v6438 = vpop.f32.mrf.mxu0
      %v6439 = vadd.f32 %v6190, %v6438
      %v6440 = vand.u32 %v5960, 4294901760
      %6441 = vmatmul.f32.gmra.mxu0 %v6440
      %v6442 = vpop.f32.mrf.mxu0
      %v6443 = vadd.f32 %v6198, %v6442
      %v6444 = vand.u32 %v5961, 4294901760
      %6445 = vmatmul.f32.gmra.mxu0 %v6444
      %v6446 = vpop.f32.mrf.mxu0
      %v6447 = vadd.f32 %v6206, %v6446
      %v6448 = vand.u32 %v5962, 4294901760
      %6449 = vmatmul.f32.gmra.mxu0 %v6448
      %v6450 = vpop.f32.mrf.mxu0
      %v6451 = vadd.f32 %v6214, %v6450
      %v6452 = vand.u32 %v5963, 4294901760
      %6453 = vmatmul.f32.gmra.mxu0 %v6452
      %v6454 = vpop.f32.mrf.mxu0
      %v6455 = vadd.f32 %v6222, %v6454
      %v6456 = vand.u32 %v5964, 4294901760
      %6457 = vmatmul.f32.gmra.mxu0 %v6456
      %v6458 = vpop.f32.mrf.mxu0
      %v6459 = vadd.f32 %v6230, %v6458
      %v6460 = vand.u32 %v5965, 4294901760
      %6461 = vmatmul.f32.gmra.mxu0 %v6460
      %v6462 = vpop.f32.mrf.mxu0
      %v6463 = vadd.f32 %v6238, %v6462
      %v6464 = vand.u32 %v5966, 4294901760
      %6465 = vmatmul.f32.gmra.mxu0 %v6464
      %v6466 = vpop.f32.mrf.mxu0
      %v6467 = vadd.f32 %v6246, %v6466
      %v6468 = vand.u32 %v5967, 4294901760
      %6469 = vmatmul.f32.gmra.mxu0 %v6468
      %v6470 = vpop.f32.mrf.mxu0
      %v6471 = vadd.f32 %v6254, %v6470
      %v6472 = vand.u32 %v5968, 4294901760
      %6473 = vmatmul.f32.gmra.mxu0 %v6472
      %v6474 = vpop.f32.mrf.mxu0
      %v6475 = vadd.f32 %v6262, %v6474
      %v6476 = vand.u32 %v5969, 4294901760
      %6477 = vmatmul.f32.gmra.mxu0 %v6476
      %v6478 = vpop.f32.mrf.mxu0
      %v6479 = vadd.f32 %v6270, %v6478
      %v6480 = vand.u32 %v5970, 4294901760
      %6481 = vmatmul.f32.gmra.mxu0 %v6480
      %v6482 = vpop.f32.mrf.mxu0
      %v6483 = vadd.f32 %v6278, %v6482
      %v6484 = vand.u32 %v5971, 4294901760
      %6485 = vmatmul.f32.gmra.mxu0 %v6484
      %v6486 = vpop.f32.mrf.mxu0
      %v6487 = vadd.f32 %v6286, %v6486
      %v6488 = vand.u32 %v5972, 4294901760
      %6489 = vmatmul.f32.gmra.mxu0 %v6488
      %v6490 = vpop.f32.mrf.mxu0
      %v6491 = vadd.f32 %v6294, %v6490
      %v6492 = vand.u32 %v5973, 4294901760
      %6493 = vmatmul.f32.gmra.mxu0 %v6492
      %v6494 = vpop.f32.mrf.mxu0
      %v6495 = vadd.f32 %v6302, %v6494
      %v6496 = vand.u32 %v5974, 4294901760
      %6497 = vmatmul.f32.gmra.mxu0 %v6496
      %v6498 = vpop.f32.mrf.mxu0
      %v6499 = vadd.f32 %v6310, %v6498
      %v6500 = vand.u32 %v5975, 4294901760
      %6501 = vmatmul.f32.gmra.mxu0 %v6500
      %v6502 = vpop.f32.mrf.mxu0
      %v6503 = vadd.f32 %v6318, %v6502
      %v6504 = vand.u32 %v5976, 4294901760
      %6505 = vmatmul.f32.gmra.mxu0 %v6504
      %v6506 = vpop.f32.mrf.mxu0
      %v6507 = vadd.f32 %v6326, %v6506
      %6508 = vdwg.mxu0
      %v6509 = vand.u32 %v6038, 4294901760
      %v6510 = vsub.f32 %v6038, %v6509
      %6511 = vmatpush.msra.mxu0 %v6510
      %v6512 = vand.u32 %v6037, 4294901760
      %v6513 = vsub.f32 %v6037, %v6512
      %6514 = vmatpush.msra.mxu0 %v6513
      %v6515 = vand.u32 %v6036, 4294901760
      %v6516 = vsub.f32 %v6036, %v6515
      %6517 = vmatpush.msra.mxu0 %v6516
      %v6518 = vand.u32 %v6035, 4294901760
      %v6519 = vsub.f32 %v6035, %v6518
      %6520 = vmatpush.msra.mxu0 %v6519
      %v6521 = vand.u32 %v6034, 4294901760
      %v6522 = vsub.f32 %v6034, %v6521
      %6523 = vmatpush.msra.mxu0 %v6522
      %v6524 = vand.u32 %v6033, 4294901760
      %v6525 = vsub.f32 %v6033, %v6524
      %6526 = vmatpush.msra.mxu0 %v6525
      %v6527 = vand.u32 %v6032, 4294901760
      %v6528 = vsub.f32 %v6032, %v6527
      %6529 = vmatpush.msra.mxu0 %v6528
      %v6530 = vand.u32 %v6031, 4294901760
      %v6531 = vsub.f32 %v6031, %v6530
      %6532 = vmatpush.msra.mxu0 %v6531
      %v6533 = vand.u32 %v6030, 4294901760
      %v6534 = vsub.f32 %v6030, %v6533
      %6535 = vmatpush.msra.mxu0 %v6534
      %v6536 = vand.u32 %v6029, 4294901760
      %v6537 = vsub.f32 %v6029, %v6536
      %6538 = vmatpush.msra.mxu0 %v6537
      %v6539 = vand.u32 %v6028, 4294901760
      %v6540 = vsub.f32 %v6028, %v6539
      %6541 = vmatpush.msra.mxu0 %v6540
      %v6542 = vand.u32 %v6027, 4294901760
      %v6543 = vsub.f32 %v6027, %v6542
      %6544 = vmatpush.msra.mxu0 %v6543
      %v6545 = vand.u32 %v6026, 4294901760
      %v6546 = vsub.f32 %v6026, %v6545
      %6547 = vmatpush.msra.mxu0 %v6546
      %v6548 = vand.u32 %v6025, 4294901760
      %v6549 = vsub.f32 %v6025, %v6548
      %6550 = vmatpush.msra.mxu0 %v6549
      %v6551 = vand.u32 %v6024, 4294901760
      %v6552 = vsub.f32 %v6024, %v6551
      %6553 = vmatpush.msra.mxu0 %v6552
      %v6554 = vand.u32 %v6023, 4294901760
      %v6555 = vsub.f32 %v6023, %v6554
      %6556 = vmatpush.msra.mxu0 %v6555
      %v6557 = vand.u32 %v5956, 4294901760
      %v6558 = vsub.f32 %v5956, %v6557
      %6559 = vmatmul.f32.gmra.mxu0 %v6558
      %v6560 = vpop.f32.mrf.mxu0
      %v6561 = vadd.f32 %v6427, %v6560
      %v6562 = vand.u32 %v5957, 4294901760
      %v6563 = vsub.f32 %v5957, %v6562
      %6564 = vmatmul.f32.gmra.mxu0 %v6563
      %v6565 = vpop.f32.mrf.mxu0
      %v6566 = vadd.f32 %v6431, %v6565
      %v6567 = vand.u32 %v5958, 4294901760
      %v6568 = vsub.f32 %v5958, %v6567
      %6569 = vmatmul.f32.gmra.mxu0 %v6568
      %v6570 = vpop.f32.mrf.mxu0
      %v6571 = vadd.f32 %v6435, %v6570
      %v6572 = vand.u32 %v5959, 4294901760
      %v6573 = vsub.f32 %v5959, %v6572
      %6574 = vmatmul.f32.gmra.mxu0 %v6573
      %v6575 = vpop.f32.mrf.mxu0
      %v6576 = vadd.f32 %v6439, %v6575
      %v6577 = vand.u32 %v5960, 4294901760
      %v6578 = vsub.f32 %v5960, %v6577
      %6579 = vmatmul.f32.gmra.mxu0 %v6578
      %v6580 = vpop.f32.mrf.mxu0
      %v6581 = vadd.f32 %v6443, %v6580
      %v6582 = vand.u32 %v5961, 4294901760
      %v6583 = vsub.f32 %v5961, %v6582
      %6584 = vmatmul.f32.gmra.mxu0 %v6583
      %v6585 = vpop.f32.mrf.mxu0
      %v6586 = vadd.f32 %v6447, %v6585
      %v6587 = vand.u32 %v5962, 4294901760
      %v6588 = vsub.f32 %v5962, %v6587
      %6589 = vmatmul.f32.gmra.mxu0 %v6588
      %v6590 = vpop.f32.mrf.mxu0
      %v6591 = vadd.f32 %v6451, %v6590
      %v6592 = vand.u32 %v5963, 4294901760
      %v6593 = vsub.f32 %v5963, %v6592
      %6594 = vmatmul.f32.gmra.mxu0 %v6593
      %v6595 = vpop.f32.mrf.mxu0
      %v6596 = vadd.f32 %v6455, %v6595
      %v6597 = vand.u32 %v5964, 4294901760
      %v6598 = vsub.f32 %v5964, %v6597
      %6599 = vmatmul.f32.gmra.mxu0 %v6598
      %v6600 = vpop.f32.mrf.mxu0
      %v6601 = vadd.f32 %v6459, %v6600
      %v6602 = vand.u32 %v5965, 4294901760
      %v6603 = vsub.f32 %v5965, %v6602
      %6604 = vmatmul.f32.gmra.mxu0 %v6603
      %v6605 = vpop.f32.mrf.mxu0
      %v6606 = vadd.f32 %v6463, %v6605
      %v6607 = vand.u32 %v5966, 4294901760
      %v6608 = vsub.f32 %v5966, %v6607
      %6609 = vmatmul.f32.gmra.mxu0 %v6608
      %v6610 = vpop.f32.mrf.mxu0
      %v6611 = vadd.f32 %v6467, %v6610
      %v6612 = vand.u32 %v5967, 4294901760
      %v6613 = vsub.f32 %v5967, %v6612
      %6614 = vmatmul.f32.gmra.mxu0 %v6613
      %v6615 = vpop.f32.mrf.mxu0
      %v6616 = vadd.f32 %v6471, %v6615
      %v6617 = vand.u32 %v5968, 4294901760
      %v6618 = vsub.f32 %v5968, %v6617
      %6619 = vmatmul.f32.gmra.mxu0 %v6618
      %v6620 = vpop.f32.mrf.mxu0
      %v6621 = vadd.f32 %v6475, %v6620
      %v6622 = vand.u32 %v5969, 4294901760
      %v6623 = vsub.f32 %v5969, %v6622
      %6624 = vmatmul.f32.gmra.mxu0 %v6623
      %v6625 = vpop.f32.mrf.mxu0
      %v6626 = vadd.f32 %v6479, %v6625
      %v6627 = vand.u32 %v5970, 4294901760
      %v6628 = vsub.f32 %v5970, %v6627
      %6629 = vmatmul.f32.gmra.mxu0 %v6628
      %v6630 = vpop.f32.mrf.mxu0
      %v6631 = vadd.f32 %v6483, %v6630
      %v6632 = vand.u32 %v5971, 4294901760
      %v6633 = vsub.f32 %v5971, %v6632
      %6634 = vmatmul.f32.gmra.mxu0 %v6633
      %v6635 = vpop.f32.mrf.mxu0
      %v6636 = vadd.f32 %v6487, %v6635
      %v6637 = vand.u32 %v5972, 4294901760
      %v6638 = vsub.f32 %v5972, %v6637
      %6639 = vmatmul.f32.gmra.mxu0 %v6638
      %v6640 = vpop.f32.mrf.mxu0
      %v6641 = vadd.f32 %v6491, %v6640
      %v6642 = vand.u32 %v5973, 4294901760
      %v6643 = vsub.f32 %v5973, %v6642
      %6644 = vmatmul.f32.gmra.mxu0 %v6643
      %v6645 = vpop.f32.mrf.mxu0
      %v6646 = vadd.f32 %v6495, %v6645
      %v6647 = vand.u32 %v5974, 4294901760
      %v6648 = vsub.f32 %v5974, %v6647
      %6649 = vmatmul.f32.gmra.mxu0 %v6648
      %v6650 = vpop.f32.mrf.mxu0
      %v6651 = vadd.f32 %v6499, %v6650
      %v6652 = vand.u32 %v5975, 4294901760
      %v6653 = vsub.f32 %v5975, %v6652
      %6654 = vmatmul.f32.gmra.mxu0 %v6653
      %v6655 = vpop.f32.mrf.mxu0
      %v6656 = vadd.f32 %v6503, %v6655
      %v6657 = vand.u32 %v5976, 4294901760
      %v6658 = vsub.f32 %v5976, %v6657
      %6659 = vmatmul.f32.gmra.mxu0 %v6658
      %v6660 = vpop.f32.mrf.mxu0
      %v6661 = vadd.f32 %v6507, %v6660
      %6662 = vdwg.mxu0
      %v6663 = vand.u32 %v6038, 4294901760
      %6664 = vmatpush.msra.mxu0 %v6663
      %v6665 = vand.u32 %v6037, 4294901760
      %6666 = vmatpush.msra.mxu0 %v6665
      %v6667 = vand.u32 %v6036, 4294901760
      %6668 = vmatpush.msra.mxu0 %v6667
      %v6669 = vand.u32 %v6035, 4294901760
      %6670 = vmatpush.msra.mxu0 %v6669
      %v6671 = vand.u32 %v6034, 4294901760
      %6672 = vmatpush.msra.mxu0 %v6671
      %v6673 = vand.u32 %v6033, 4294901760
      %6674 = vmatpush.msra.mxu0 %v6673
      %v6675 = vand.u32 %v6032, 4294901760
      %6676 = vmatpush.msra.mxu0 %v6675
      %v6677 = vand.u32 %v6031, 4294901760
      %6678 = vmatpush.msra.mxu0 %v6677
      %v6679 = vand.u32 %v6030, 4294901760
      %6680 = vmatpush.msra.mxu0 %v6679
      %v6681 = vand.u32 %v6029, 4294901760
      %6682 = vmatpush.msra.mxu0 %v6681
      %v6683 = vand.u32 %v6028, 4294901760
      %6684 = vmatpush.msra.mxu0 %v6683
      %v6685 = vand.u32 %v6027, 4294901760
      %6686 = vmatpush.msra.mxu0 %v6685
      %v6687 = vand.u32 %v6026, 4294901760
      %6688 = vmatpush.msra.mxu0 %v6687
      %v6689 = vand.u32 %v6025, 4294901760
      %6690 = vmatpush.msra.mxu0 %v6689
      %v6691 = vand.u32 %v6024, 4294901760
      %6692 = vmatpush.msra.mxu0 %v6691
      %v6693 = vand.u32 %v6023, 4294901760
      %6694 = vmatpush.msra.mxu0 %v6693
      %v6695 = vand.u32 %v5956, 4294901760
      %v6696 = vsub.f32 %v5956, %v6695
      %v6697 = vand.u32 %v6696, 4294901760
      %6698 = vmatmul.f32.gmra.mxu0 %v6697
      %v6699 = vpop.f32.mrf.mxu0
      %v6700 = vadd.f32 %v6561, %v6699
      %v6701 = vand.u32 %v5957, 4294901760
      %v6702 = vsub.f32 %v5957, %v6701
      %v6703 = vand.u32 %v6702, 4294901760
      %6704 = vmatmul.f32.gmra.mxu0 %v6703
      %v6705 = vpop.f32.mrf.mxu0
      %v6706 = vadd.f32 %v6566, %v6705
      %v6707 = vand.u32 %v5958, 4294901760
      %v6708 = vsub.f32 %v5958, %v6707
      %v6709 = vand.u32 %v6708, 4294901760
      %6710 = vmatmul.f32.gmra.mxu0 %v6709
      %v6711 = vpop.f32.mrf.mxu0
      %v6712 = vadd.f32 %v6571, %v6711
      %v6713 = vand.u32 %v5959, 4294901760
      %v6714 = vsub.f32 %v5959, %v6713
      %v6715 = vand.u32 %v6714, 4294901760
      %6716 = vmatmul.f32.gmra.mxu0 %v6715
      %v6717 = vpop.f32.mrf.mxu0
      %v6718 = vadd.f32 %v6576, %v6717
      %v6719 = vand.u32 %v5960, 4294901760
      %v6720 = vsub.f32 %v5960, %v6719
      %v6721 = vand.u32 %v6720, 4294901760
      %6722 = vmatmul.f32.gmra.mxu0 %v6721
      %v6723 = vpop.f32.mrf.mxu0
      %v6724 = vadd.f32 %v6581, %v6723
      %v6725 = vand.u32 %v5961, 4294901760
      %v6726 = vsub.f32 %v5961, %v6725
      %v6727 = vand.u32 %v6726, 4294901760
      %6728 = vmatmul.f32.gmra.mxu0 %v6727
      %v6729 = vpop.f32.mrf.mxu0
      %v6730 = vadd.f32 %v6586, %v6729
      %v6731 = vand.u32 %v5962, 4294901760
      %v6732 = vsub.f32 %v5962, %v6731
      %v6733 = vand.u32 %v6732, 4294901760
      %6734 = vmatmul.f32.gmra.mxu0 %v6733
      %v6735 = vpop.f32.mrf.mxu0
      %v6736 = vadd.f32 %v6591, %v6735
      %v6737 = vand.u32 %v5963, 4294901760
      %v6738 = vsub.f32 %v5963, %v6737
      %v6739 = vand.u32 %v6738, 4294901760
      %6740 = vmatmul.f32.gmra.mxu0 %v6739
      %v6741 = vpop.f32.mrf.mxu0
      %v6742 = vadd.f32 %v6596, %v6741
      %v6743 = vand.u32 %v5964, 4294901760
      %v6744 = vsub.f32 %v5964, %v6743
      %v6745 = vand.u32 %v6744, 4294901760
      %6746 = vmatmul.f32.gmra.mxu0 %v6745
      %v6747 = vpop.f32.mrf.mxu0
      %v6748 = vadd.f32 %v6601, %v6747
      %v6749 = vand.u32 %v5965, 4294901760
      %v6750 = vsub.f32 %v5965, %v6749
      %v6751 = vand.u32 %v6750, 4294901760
      %6752 = vmatmul.f32.gmra.mxu0 %v6751
      %v6753 = vpop.f32.mrf.mxu0
      %v6754 = vadd.f32 %v6606, %v6753
      %v6755 = vand.u32 %v5966, 4294901760
      %v6756 = vsub.f32 %v5966, %v6755
      %v6757 = vand.u32 %v6756, 4294901760
      %6758 = vmatmul.f32.gmra.mxu0 %v6757
      %v6759 = vpop.f32.mrf.mxu0
      %v6760 = vadd.f32 %v6611, %v6759
      %v6761 = vand.u32 %v5967, 4294901760
      %v6762 = vsub.f32 %v5967, %v6761
      %v6763 = vand.u32 %v6762, 4294901760
      %6764 = vmatmul.f32.gmra.mxu0 %v6763
      %v6765 = vpop.f32.mrf.mxu0
      %v6766 = vadd.f32 %v6616, %v6765
      %v6767 = vand.u32 %v5968, 4294901760
      %v6768 = vsub.f32 %v5968, %v6767
      %v6769 = vand.u32 %v6768, 4294901760
      %6770 = vmatmul.f32.gmra.mxu0 %v6769
      %v6771 = vpop.f32.mrf.mxu0
      %v6772 = vadd.f32 %v6621, %v6771
      %v6773 = vand.u32 %v5969, 4294901760
      %v6774 = vsub.f32 %v5969, %v6773
      %v6775 = vand.u32 %v6774, 4294901760
      %6776 = vmatmul.f32.gmra.mxu0 %v6775
      %v6777 = vpop.f32.mrf.mxu0
      %v6778 = vadd.f32 %v6626, %v6777
      %v6779 = vand.u32 %v5970, 4294901760
      %v6780 = vsub.f32 %v5970, %v6779
      %v6781 = vand.u32 %v6780, 4294901760
      %6782 = vmatmul.f32.gmra.mxu0 %v6781
      %v6783 = vpop.f32.mrf.mxu0
      %v6784 = vadd.f32 %v6631, %v6783
      %v6785 = vand.u32 %v5971, 4294901760
      %v6786 = vsub.f32 %v5971, %v6785
      %v6787 = vand.u32 %v6786, 4294901760
      %6788 = vmatmul.f32.gmra.mxu0 %v6787
      %v6789 = vpop.f32.mrf.mxu0
      %v6790 = vadd.f32 %v6636, %v6789
      %v6791 = vand.u32 %v5972, 4294901760
      %v6792 = vsub.f32 %v5972, %v6791
      %v6793 = vand.u32 %v6792, 4294901760
      %6794 = vmatmul.f32.gmra.mxu0 %v6793
      %v6795 = vpop.f32.mrf.mxu0
      %v6796 = vadd.f32 %v6641, %v6795
      %v6797 = vand.u32 %v5973, 4294901760
      %v6798 = vsub.f32 %v5973, %v6797
      %v6799 = vand.u32 %v6798, 4294901760
      %6800 = vmatmul.f32.gmra.mxu0 %v6799
      %v6801 = vpop.f32.mrf.mxu0
      %v6802 = vadd.f32 %v6646, %v6801
      %v6803 = vand.u32 %v5974, 4294901760
      %v6804 = vsub.f32 %v5974, %v6803
      %v6805 = vand.u32 %v6804, 4294901760
      %6806 = vmatmul.f32.gmra.mxu0 %v6805
      %v6807 = vpop.f32.mrf.mxu0
      %v6808 = vadd.f32 %v6651, %v6807
      %v6809 = vand.u32 %v5975, 4294901760
      %v6810 = vsub.f32 %v5975, %v6809
      %v6811 = vand.u32 %v6810, 4294901760
      %6812 = vmatmul.f32.gmra.mxu0 %v6811
      %v6813 = vpop.f32.mrf.mxu0
      %v6814 = vadd.f32 %v6656, %v6813
      %v6815 = vand.u32 %v5976, 4294901760
      %v6816 = vsub.f32 %v5976, %v6815
      %v6817 = vand.u32 %v6816, 4294901760
      %6818 = vmatmul.f32.gmra.mxu0 %v6817
      %v6819 = vpop.f32.mrf.mxu0
      %v6820 = vadd.f32 %v6661, %v6819
      %6821 = vdwg.mxu0
      %v6822 = vand.u32 %v6038, 4294901760
      %v6823 = vsub.f32 %v6038, %v6822
      %v6824 = vand.u32 %v6823, 4294901760
      %6825 = vmatpush.msra.mxu0 %v6824
      %v6826 = vand.u32 %v6037, 4294901760
      %v6827 = vsub.f32 %v6037, %v6826
      %v6828 = vand.u32 %v6827, 4294901760
      %6829 = vmatpush.msra.mxu0 %v6828
      %v6830 = vand.u32 %v6036, 4294901760
      %v6831 = vsub.f32 %v6036, %v6830
      %v6832 = vand.u32 %v6831, 4294901760
      %6833 = vmatpush.msra.mxu0 %v6832
      %v6834 = vand.u32 %v6035, 4294901760
      %v6835 = vsub.f32 %v6035, %v6834
      %v6836 = vand.u32 %v6835, 4294901760
      %6837 = vmatpush.msra.mxu0 %v6836
      %v6838 = vand.u32 %v6034, 4294901760
      %v6839 = vsub.f32 %v6034, %v6838
      %v6840 = vand.u32 %v6839, 4294901760
      %6841 = vmatpush.msra.mxu0 %v6840
      %v6842 = vand.u32 %v6033, 4294901760
      %v6843 = vsub.f32 %v6033, %v6842
      %v6844 = vand.u32 %v6843, 4294901760
      %6845 = vmatpush.msra.mxu0 %v6844
      %v6846 = vand.u32 %v6032, 4294901760
      %v6847 = vsub.f32 %v6032, %v6846
      %v6848 = vand.u32 %v6847, 4294901760
      %6849 = vmatpush.msra.mxu0 %v6848
      %v6850 = vand.u32 %v6031, 4294901760
      %v6851 = vsub.f32 %v6031, %v6850
      %v6852 = vand.u32 %v6851, 4294901760
      %6853 = vmatpush.msra.mxu0 %v6852
      %v6854 = vand.u32 %v6030, 4294901760
      %v6855 = vsub.f32 %v6030, %v6854
      %v6856 = vand.u32 %v6855, 4294901760
      %6857 = vmatpush.msra.mxu0 %v6856
      %v6858 = vand.u32 %v6029, 4294901760
      %v6859 = vsub.f32 %v6029, %v6858
      %v6860 = vand.u32 %v6859, 4294901760
      %6861 = vmatpush.msra.mxu0 %v6860
      %v6862 = vand.u32 %v6028, 4294901760
      %v6863 = vsub.f32 %v6028, %v6862
      %v6864 = vand.u32 %v6863, 4294901760
      %6865 = vmatpush.msra.mxu0 %v6864
      %v6866 = vand.u32 %v6027, 4294901760
      %v6867 = vsub.f32 %v6027, %v6866
      %v6868 = vand.u32 %v6867, 4294901760
      %6869 = vmatpush.msra.mxu0 %v6868
      %v6870 = vand.u32 %v6026, 4294901760
      %v6871 = vsub.f32 %v6026, %v6870
      %v6872 = vand.u32 %v6871, 4294901760
      %6873 = vmatpush.msra.mxu0 %v6872
      %v6874 = vand.u32 %v6025, 4294901760
      %v6875 = vsub.f32 %v6025, %v6874
      %v6876 = vand.u32 %v6875, 4294901760
      %6877 = vmatpush.msra.mxu0 %v6876
      %v6878 = vand.u32 %v6024, 4294901760
      %v6879 = vsub.f32 %v6024, %v6878
      %v6880 = vand.u32 %v6879, 4294901760
      %6881 = vmatpush.msra.mxu0 %v6880
      %v6882 = vand.u32 %v6023, 4294901760
      %v6883 = vsub.f32 %v6023, %v6882
      %v6884 = vand.u32 %v6883, 4294901760
      %6885 = vmatpush.msra.mxu0 %v6884
      %v6886 = vand.u32 %v5956, 4294901760
      %6887 = vmatmul.f32.gmra.mxu0 %v6886
      %v6888 = vpop.f32.mrf.mxu0
      %v6889 = vadd.f32 %v6700, %v6888
      %v6890 = vand.u32 %v5957, 4294901760
      %6891 = vmatmul.f32.gmra.mxu0 %v6890
      %v6892 = vpop.f32.mrf.mxu0
      %v6893 = vadd.f32 %v6706, %v6892
      %v6894 = vand.u32 %v5958, 4294901760
      %6895 = vmatmul.f32.gmra.mxu0 %v6894
      %v6896 = vpop.f32.mrf.mxu0
      %v6897 = vadd.f32 %v6712, %v6896
      %v6898 = vand.u32 %v5959, 4294901760
      %6899 = vmatmul.f32.gmra.mxu0 %v6898
      %v6900 = vpop.f32.mrf.mxu0
      %v6901 = vadd.f32 %v6718, %v6900
      %v6902 = vand.u32 %v5960, 4294901760
      %6903 = vmatmul.f32.gmra.mxu0 %v6902
      %v6904 = vpop.f32.mrf.mxu0
      %v6905 = vadd.f32 %v6724, %v6904
      %v6906 = vand.u32 %v5961, 4294901760
      %6907 = vmatmul.f32.gmra.mxu0 %v6906
      %v6908 = vpop.f32.mrf.mxu0
      %v6909 = vadd.f32 %v6730, %v6908
      %v6910 = vand.u32 %v5962, 4294901760
      %6911 = vmatmul.f32.gmra.mxu0 %v6910
      %v6912 = vpop.f32.mrf.mxu0
      %v6913 = vadd.f32 %v6736, %v6912
      %v6914 = vand.u32 %v5963, 4294901760
      %6915 = vmatmul.f32.gmra.mxu0 %v6914
      %v6916 = vpop.f32.mrf.mxu0
      %v6917 = vadd.f32 %v6742, %v6916
      %v6918 = vand.u32 %v5964, 4294901760
      %6919 = vmatmul.f32.gmra.mxu0 %v6918
      %v6920 = vpop.f32.mrf.mxu0
      %v6921 = vadd.f32 %v6748, %v6920
      %v6922 = vand.u32 %v5965, 4294901760
      %6923 = vmatmul.f32.gmra.mxu0 %v6922
      %v6924 = vpop.f32.mrf.mxu0
      %v6925 = vadd.f32 %v6754, %v6924
      %v6926 = vand.u32 %v5966, 4294901760
      %6927 = vmatmul.f32.gmra.mxu0 %v6926
      %v6928 = vpop.f32.mrf.mxu0
      %v6929 = vadd.f32 %v6760, %v6928
      %v6930 = vand.u32 %v5967, 4294901760
      %6931 = vmatmul.f32.gmra.mxu0 %v6930
      %v6932 = vpop.f32.mrf.mxu0
      %v6933 = vadd.f32 %v6766, %v6932
      %v6934 = vand.u32 %v5968, 4294901760
      %6935 = vmatmul.f32.gmra.mxu0 %v6934
      %v6936 = vpop.f32.mrf.mxu0
      %v6937 = vadd.f32 %v6772, %v6936
      %v6938 = vand.u32 %v5969, 4294901760
      %6939 = vmatmul.f32.gmra.mxu0 %v6938
      %v6940 = vpop.f32.mrf.mxu0
      %v6941 = vadd.f32 %v6778, %v6940
      %v6942 = vand.u32 %v5970, 4294901760
      %6943 = vmatmul.f32.gmra.mxu0 %v6942
      %v6944 = vpop.f32.mrf.mxu0
      %v6945 = vadd.f32 %v6784, %v6944
      %v6946 = vand.u32 %v5971, 4294901760
      %6947 = vmatmul.f32.gmra.mxu0 %v6946
      %v6948 = vpop.f32.mrf.mxu0
      %v6949 = vadd.f32 %v6790, %v6948
      %v6950 = vand.u32 %v5972, 4294901760
      %6951 = vmatmul.f32.gmra.mxu0 %v6950
      %v6952 = vpop.f32.mrf.mxu0
      %v6953 = vadd.f32 %v6796, %v6952
      %v6954 = vand.u32 %v5973, 4294901760
      %6955 = vmatmul.f32.gmra.mxu0 %v6954
      %v6956 = vpop.f32.mrf.mxu0
      %v6957 = vadd.f32 %v6802, %v6956
      %v6958 = vand.u32 %v5974, 4294901760
      %6959 = vmatmul.f32.gmra.mxu0 %v6958
      %v6960 = vpop.f32.mrf.mxu0
      %v6961 = vadd.f32 %v6808, %v6960
      %v6962 = vand.u32 %v5975, 4294901760
      %6963 = vmatmul.f32.gmra.mxu0 %v6962
      %v6964 = vpop.f32.mrf.mxu0
      %v6965 = vadd.f32 %v6814, %v6964
      %v6966 = vand.u32 %v5976, 4294901760
      %6967 = vmatmul.f32.gmra.mxu0 %v6966
      %v6968 = vpop.f32.mrf.mxu0
      %v6969 = vadd.f32 %v6820, %v6968
      %6970 = vdwg.mxu0
      %v6971 = vand.u32 %v6038, 4294901760
      %6972 = vmatpush.msra.mxu0 %v6971
      %v6973 = vand.u32 %v6037, 4294901760
      %6974 = vmatpush.msra.mxu0 %v6973
      %v6975 = vand.u32 %v6036, 4294901760
      %6976 = vmatpush.msra.mxu0 %v6975
      %v6977 = vand.u32 %v6035, 4294901760
      %6978 = vmatpush.msra.mxu0 %v6977
      %v6979 = vand.u32 %v6034, 4294901760
      %6980 = vmatpush.msra.mxu0 %v6979
      %v6981 = vand.u32 %v6033, 4294901760
      %6982 = vmatpush.msra.mxu0 %v6981
      %v6983 = vand.u32 %v6032, 4294901760
      %6984 = vmatpush.msra.mxu0 %v6983
      %v6985 = vand.u32 %v6031, 4294901760
      %6986 = vmatpush.msra.mxu0 %v6985
      %v6987 = vand.u32 %v6030, 4294901760
      %6988 = vmatpush.msra.mxu0 %v6987
      %v6989 = vand.u32 %v6029, 4294901760
      %6990 = vmatpush.msra.mxu0 %v6989
      %v6991 = vand.u32 %v6028, 4294901760
      %6992 = vmatpush.msra.mxu0 %v6991
      %v6993 = vand.u32 %v6027, 4294901760
      %6994 = vmatpush.msra.mxu0 %v6993
      %v6995 = vand.u32 %v6026, 4294901760
      %6996 = vmatpush.msra.mxu0 %v6995
      %v6997 = vand.u32 %v6025, 4294901760
      %6998 = vmatpush.msra.mxu0 %v6997
      %v6999 = vand.u32 %v6024, 4294901760
      %7000 = vmatpush.msra.mxu0 %v6999
      %v7001 = vand.u32 %v6023, 4294901760
      %7002 = vmatpush.msra.mxu0 %v7001
      %v7003 = vand.u32 %v5956, 4294901760
      %7004 = vmatmul.f32.gmra.mxu0 %v7003
      %v7005 = vpop.f32.mrf.mxu0
      %v7006 = vadd.f32 %v6889, %v7005
      %v7007 = vand.u32 %v5957, 4294901760
      %7008 = vmatmul.f32.gmra.mxu0 %v7007
      %v7009 = vpop.f32.mrf.mxu0
      %v7010 = vadd.f32 %v6893, %v7009
      %v7011 = vand.u32 %v5958, 4294901760
      %7012 = vmatmul.f32.gmra.mxu0 %v7011
      %v7013 = vpop.f32.mrf.mxu0
      %v7014 = vadd.f32 %v6897, %v7013
      %v7015 = vand.u32 %v5959, 4294901760
      %7016 = vmatmul.f32.gmra.mxu0 %v7015
      %v7017 = vpop.f32.mrf.mxu0
      %v7018 = vadd.f32 %v6901, %v7017
      %v7019 = vand.u32 %v5960, 4294901760
      %7020 = vmatmul.f32.gmra.mxu0 %v7019
      %v7021 = vpop.f32.mrf.mxu0
      %v7022 = vadd.f32 %v6905, %v7021
      %v7023 = vand.u32 %v5961, 4294901760
      %7024 = vmatmul.f32.gmra.mxu0 %v7023
      %v7025 = vpop.f32.mrf.mxu0
      %v7026 = vadd.f32 %v6909, %v7025
      %v7027 = vand.u32 %v5962, 4294901760
      %7028 = vmatmul.f32.gmra.mxu0 %v7027
      %v7029 = vpop.f32.mrf.mxu0
      %v7030 = vadd.f32 %v6913, %v7029
      %v7031 = vand.u32 %v5963, 4294901760
      %7032 = vmatmul.f32.gmra.mxu0 %v7031
      %v7033 = vpop.f32.mrf.mxu0
      %v7034 = vadd.f32 %v6917, %v7033
      %v7035 = vand.u32 %v5964, 4294901760
      %7036 = vmatmul.f32.gmra.mxu0 %v7035
      %v7037 = vpop.f32.mrf.mxu0
      %v7038 = vadd.f32 %v6921, %v7037
      %v7039 = vand.u32 %v5965, 4294901760
      %7040 = vmatmul.f32.gmra.mxu0 %v7039
      %v7041 = vpop.f32.mrf.mxu0
      %v7042 = vadd.f32 %v6925, %v7041
      %v7043 = vand.u32 %v5966, 4294901760
      %7044 = vmatmul.f32.gmra.mxu0 %v7043
      %v7045 = vpop.f32.mrf.mxu0
      %v7046 = vadd.f32 %v6929, %v7045
      %v7047 = vand.u32 %v5967, 4294901760
      %7048 = vmatmul.f32.gmra.mxu0 %v7047
      %v7049 = vpop.f32.mrf.mxu0
      %v7050 = vadd.f32 %v6933, %v7049
      %v7051 = vand.u32 %v5968, 4294901760
      %7052 = vmatmul.f32.gmra.mxu0 %v7051
      %v7053 = vpop.f32.mrf.mxu0
      %v7054 = vadd.f32 %v6937, %v7053
      %v7055 = vand.u32 %v5969, 4294901760
      %7056 = vmatmul.f32.gmra.mxu0 %v7055
      %v7057 = vpop.f32.mrf.mxu0
      %v7058 = vadd.f32 %v6941, %v7057
      %v7059 = vand.u32 %v5970, 4294901760
      %7060 = vmatmul.f32.gmra.mxu0 %v7059
      %v7061 = vpop.f32.mrf.mxu0
      %v7062 = vadd.f32 %v6945, %v7061
      %v7063 = vand.u32 %v5971, 4294901760
      %7064 = vmatmul.f32.gmra.mxu0 %v7063
      %v7065 = vpop.f32.mrf.mxu0
      %v7066 = vadd.f32 %v6949, %v7065
      %v7067 = vand.u32 %v5972, 4294901760
      %7068 = vmatmul.f32.gmra.mxu0 %v7067
      %v7069 = vpop.f32.mrf.mxu0
      %v7070 = vadd.f32 %v6953, %v7069
      %v7071 = vand.u32 %v5973, 4294901760
      %7072 = vmatmul.f32.gmra.mxu0 %v7071
      %v7073 = vpop.f32.mrf.mxu0
      %v7074 = vadd.f32 %v6957, %v7073
      %v7075 = vand.u32 %v5974, 4294901760
      %7076 = vmatmul.f32.gmra.mxu0 %v7075
      %v7077 = vpop.f32.mrf.mxu0
      %v7078 = vadd.f32 %v6961, %v7077
      %v7079 = vand.u32 %v5975, 4294901760
      %7080 = vmatmul.f32.gmra.mxu0 %v7079
      %v7081 = vpop.f32.mrf.mxu0
      %v7082 = vadd.f32 %v6965, %v7081
      %v7083 = vand.u32 %v5976, 4294901760
      %7084 = vmatmul.f32.gmra.mxu0 %v7083
      %v7085 = vpop.f32.mrf.mxu0
      %v7086 = vadd.f32 %v6969, %v7085
      %7087 = vdwg.mxu0
      %v7088 = vand.u32 %v6054, 4294901760
      %7089 = vmatpush.msra.mxu0 %v7088
      %v7090 = vand.u32 %v6053, 4294901760
      %7091 = vmatpush.msra.mxu0 %v7090
      %v7092 = vand.u32 %v6052, 4294901760
      %7093 = vmatpush.msra.mxu0 %v7092
      %v7094 = vand.u32 %v6051, 4294901760
      %7095 = vmatpush.msra.mxu0 %v7094
      %v7096 = vand.u32 %v6050, 4294901760
      %7097 = vmatpush.msra.mxu0 %v7096
      %v7098 = vand.u32 %v6049, 4294901760
      %7099 = vmatpush.msra.mxu0 %v7098
      %v7100 = vand.u32 %v6048, 4294901760
      %7101 = vmatpush.msra.mxu0 %v7100
      %v7102 = vand.u32 %v6047, 4294901760
      %7103 = vmatpush.msra.mxu0 %v7102
      %v7104 = vand.u32 %v6046, 4294901760
      %7105 = vmatpush.msra.mxu0 %v7104
      %v7106 = vand.u32 %v6045, 4294901760
      %7107 = vmatpush.msra.mxu0 %v7106
      %v7108 = vand.u32 %v6044, 4294901760
      %7109 = vmatpush.msra.mxu0 %v7108
      %v7110 = vand.u32 %v6043, 4294901760
      %7111 = vmatpush.msra.mxu0 %v7110
      %v7112 = vand.u32 %v6042, 4294901760
      %7113 = vmatpush.msra.mxu0 %v7112
      %v7114 = vand.u32 %v6041, 4294901760
      %7115 = vmatpush.msra.mxu0 %v7114
      %v7116 = vand.u32 %v6040, 4294901760
      %7117 = vmatpush.msra.mxu0 %v7116
      %v7118 = vand.u32 %v6039, 4294901760
      %7119 = vmatpush.msra.mxu0 %v7118
      %v7120 = vand.u32 %v6001, 4294901760
      %v7121 = vsub.f32 %v6001, %v7120
      %v7122 = vand.u32 %v7121, 4294901760
      %v7123 = vsub.f32 %v7121, %v7122
      %v7124 = vand.u32 %v7123, 4294901760
      %7125 = vmatmul.f32.gmra.mxu0 %v7124
      %v7126 = vpop.f32.mrf.mxu0
      %v7127 = vadd.f32 %v7006, %v7126
      %v7128 = vand.u32 %v6002, 4294901760
      %v7129 = vsub.f32 %v6002, %v7128
      %v7130 = vand.u32 %v7129, 4294901760
      %v7131 = vsub.f32 %v7129, %v7130
      %v7132 = vand.u32 %v7131, 4294901760
      %7133 = vmatmul.f32.gmra.mxu0 %v7132
      %v7134 = vpop.f32.mrf.mxu0
      %v7135 = vadd.f32 %v7010, %v7134
      %v7136 = vand.u32 %v6003, 4294901760
      %v7137 = vsub.f32 %v6003, %v7136
      %v7138 = vand.u32 %v7137, 4294901760
      %v7139 = vsub.f32 %v7137, %v7138
      %v7140 = vand.u32 %v7139, 4294901760
      %7141 = vmatmul.f32.gmra.mxu0 %v7140
      %v7142 = vpop.f32.mrf.mxu0
      %v7143 = vadd.f32 %v7014, %v7142
      %v7144 = vand.u32 %v6004, 4294901760
      %v7145 = vsub.f32 %v6004, %v7144
      %v7146 = vand.u32 %v7145, 4294901760
      %v7147 = vsub.f32 %v7145, %v7146
      %v7148 = vand.u32 %v7147, 4294901760
      %7149 = vmatmul.f32.gmra.mxu0 %v7148
      %v7150 = vpop.f32.mrf.mxu0
      %v7151 = vadd.f32 %v7018, %v7150
      %v7152 = vand.u32 %v6005, 4294901760
      %v7153 = vsub.f32 %v6005, %v7152
      %v7154 = vand.u32 %v7153, 4294901760
      %v7155 = vsub.f32 %v7153, %v7154
      %v7156 = vand.u32 %v7155, 4294901760
      %7157 = vmatmul.f32.gmra.mxu0 %v7156
      %v7158 = vpop.f32.mrf.mxu0
      %v7159 = vadd.f32 %v7022, %v7158
      %v7160 = vand.u32 %v6006, 4294901760
      %v7161 = vsub.f32 %v6006, %v7160
      %v7162 = vand.u32 %v7161, 4294901760
      %v7163 = vsub.f32 %v7161, %v7162
      %v7164 = vand.u32 %v7163, 4294901760
      %7165 = vmatmul.f32.gmra.mxu0 %v7164
      %v7166 = vpop.f32.mrf.mxu0
      %v7167 = vadd.f32 %v7026, %v7166
      %v7168 = vand.u32 %v6007, 4294901760
      %v7169 = vsub.f32 %v6007, %v7168
      %v7170 = vand.u32 %v7169, 4294901760
      %v7171 = vsub.f32 %v7169, %v7170
      %v7172 = vand.u32 %v7171, 4294901760
      %7173 = vmatmul.f32.gmra.mxu0 %v7172
      %v7174 = vpop.f32.mrf.mxu0
      %v7175 = vadd.f32 %v7030, %v7174
      %v7176 = vand.u32 %v6008, 4294901760
      %v7177 = vsub.f32 %v6008, %v7176
      %v7178 = vand.u32 %v7177, 4294901760
      %v7179 = vsub.f32 %v7177, %v7178
      %v7180 = vand.u32 %v7179, 4294901760
      %7181 = vmatmul.f32.gmra.mxu0 %v7180
      %v7182 = vpop.f32.mrf.mxu0
      %v7183 = vadd.f32 %v7034, %v7182
      %v7184 = vand.u32 %v6009, 4294901760
      %v7185 = vsub.f32 %v6009, %v7184
      %v7186 = vand.u32 %v7185, 4294901760
      %v7187 = vsub.f32 %v7185, %v7186
      %v7188 = vand.u32 %v7187, 4294901760
      %7189 = vmatmul.f32.gmra.mxu0 %v7188
      %v7190 = vpop.f32.mrf.mxu0
      %v7191 = vadd.f32 %v7038, %v7190
      %v7192 = vand.u32 %v6010, 4294901760
      %v7193 = vsub.f32 %v6010, %v7192
      %v7194 = vand.u32 %v7193, 4294901760
      %v7195 = vsub.f32 %v7193, %v7194
      %v7196 = vand.u32 %v7195, 4294901760
      %7197 = vmatmul.f32.gmra.mxu0 %v7196
      %v7198 = vpop.f32.mrf.mxu0
      %v7199 = vadd.f32 %v7042, %v7198
      %v7200 = vand.u32 %v6011, 4294901760
      %v7201 = vsub.f32 %v6011, %v7200
      %v7202 = vand.u32 %v7201, 4294901760
      %v7203 = vsub.f32 %v7201, %v7202
      %v7204 = vand.u32 %v7203, 4294901760
      %7205 = vmatmul.f32.gmra.mxu0 %v7204
      %v7206 = vpop.f32.mrf.mxu0
      %v7207 = vadd.f32 %v7046, %v7206
      %v7208 = vand.u32 %v6012, 4294901760
      %v7209 = vsub.f32 %v6012, %v7208
      %v7210 = vand.u32 %v7209, 4294901760
      %v7211 = vsub.f32 %v7209, %v7210
      %v7212 = vand.u32 %v7211, 4294901760
      %7213 = vmatmul.f32.gmra.mxu0 %v7212
      %v7214 = vpop.f32.mrf.mxu0
      %v7215 = vadd.f32 %v7050, %v7214
      %v7216 = vand.u32 %v6013, 4294901760
      %v7217 = vsub.f32 %v6013, %v7216
      %v7218 = vand.u32 %v7217, 4294901760
      %v7219 = vsub.f32 %v7217, %v7218
      %v7220 = vand.u32 %v7219, 4294901760
      %7221 = vmatmul.f32.gmra.mxu0 %v7220
      %v7222 = vpop.f32.mrf.mxu0
      %v7223 = vadd.f32 %v7054, %v7222
      %v7224 = vand.u32 %v6014, 4294901760
      %v7225 = vsub.f32 %v6014, %v7224
      %v7226 = vand.u32 %v7225, 4294901760
      %v7227 = vsub.f32 %v7225, %v7226
      %v7228 = vand.u32 %v7227, 4294901760
      %7229 = vmatmul.f32.gmra.mxu0 %v7228
      %v7230 = vpop.f32.mrf.mxu0
      %v7231 = vadd.f32 %v7058, %v7230
      %v7232 = vand.u32 %v6015, 4294901760
      %v7233 = vsub.f32 %v6015, %v7232
      %v7234 = vand.u32 %v7233, 4294901760
      %v7235 = vsub.f32 %v7233, %v7234
      %v7236 = vand.u32 %v7235, 4294901760
      %7237 = vmatmul.f32.gmra.mxu0 %v7236
      %v7238 = vpop.f32.mrf.mxu0
      %v7239 = vadd.f32 %v7062, %v7238
      %v7240 = vand.u32 %v6016, 4294901760
      %v7241 = vsub.f32 %v6016, %v7240
      %v7242 = vand.u32 %v7241, 4294901760
      %v7243 = vsub.f32 %v7241, %v7242
      %v7244 = vand.u32 %v7243, 4294901760
      %7245 = vmatmul.f32.gmra.mxu0 %v7244
      %v7246 = vpop.f32.mrf.mxu0
      %v7247 = vadd.f32 %v7066, %v7246
      %v7248 = vand.u32 %v6017, 4294901760
      %v7249 = vsub.f32 %v6017, %v7248
      %v7250 = vand.u32 %v7249, 4294901760
      %v7251 = vsub.f32 %v7249, %v7250
      %v7252 = vand.u32 %v7251, 4294901760
      %7253 = vmatmul.f32.gmra.mxu0 %v7252
      %v7254 = vpop.f32.mrf.mxu0
      %v7255 = vadd.f32 %v7070, %v7254
      %v7256 = vand.u32 %v6018, 4294901760
      %v7257 = vsub.f32 %v6018, %v7256
      %v7258 = vand.u32 %v7257, 4294901760
      %v7259 = vsub.f32 %v7257, %v7258
      %v7260 = vand.u32 %v7259, 4294901760
      %7261 = vmatmul.f32.gmra.mxu0 %v7260
      %v7262 = vpop.f32.mrf.mxu0
      %v7263 = vadd.f32 %v7074, %v7262
      %v7264 = vand.u32 %v6019, 4294901760
      %v7265 = vsub.f32 %v6019, %v7264
      %v7266 = vand.u32 %v7265, 4294901760
      %v7267 = vsub.f32 %v7265, %v7266
      %v7268 = vand.u32 %v7267, 4294901760
      %7269 = vmatmul.f32.gmra.mxu0 %v7268
      %v7270 = vpop.f32.mrf.mxu0
      %v7271 = vadd.f32 %v7078, %v7270
      %v7272 = vand.u32 %v6020, 4294901760
      %v7273 = vsub.f32 %v6020, %v7272
      %v7274 = vand.u32 %v7273, 4294901760
      %v7275 = vsub.f32 %v7273, %v7274
      %v7276 = vand.u32 %v7275, 4294901760
      %7277 = vmatmul.f32.gmra.mxu0 %v7276
      %v7278 = vpop.f32.mrf.mxu0
      %v7279 = vadd.f32 %v7082, %v7278
      %v7280 = vand.u32 %v6021, 4294901760
      %v7281 = vsub.f32 %v6021, %v7280
      %v7282 = vand.u32 %v7281, 4294901760
      %v7283 = vsub.f32 %v7281, %v7282
      %v7284 = vand.u32 %v7283, 4294901760
      %7285 = vmatmul.f32.gmra.mxu0 %v7284
      %v7286 = vpop.f32.mrf.mxu0
      %v7287 = vadd.f32 %v7086, %v7286
      %7288 = vdwg.mxu0
      %v7289 = vand.u32 %v6054, 4294901760
      %v7290 = vsub.f32 %v6054, %v7289
      %v7291 = vand.u32 %v7290, 4294901760
      %v7292 = vsub.f32 %v7290, %v7291
      %v7293 = vand.u32 %v7292, 4294901760
      %7294 = vmatpush.msra.mxu0 %v7293
      %v7295 = vand.u32 %v6053, 4294901760
      %v7296 = vsub.f32 %v6053, %v7295
      %v7297 = vand.u32 %v7296, 4294901760
      %v7298 = vsub.f32 %v7296, %v7297
      %v7299 = vand.u32 %v7298, 4294901760
      %7300 = vmatpush.msra.mxu0 %v7299
      %v7301 = vand.u32 %v6052, 4294901760
      %v7302 = vsub.f32 %v6052, %v7301
      %v7303 = vand.u32 %v7302, 4294901760
      %v7304 = vsub.f32 %v7302, %v7303
      %v7305 = vand.u32 %v7304, 4294901760
      %7306 = vmatpush.msra.mxu0 %v7305
      %v7307 = vand.u32 %v6051, 4294901760
      %v7308 = vsub.f32 %v6051, %v7307
      %v7309 = vand.u32 %v7308, 4294901760
      %v7310 = vsub.f32 %v7308, %v7309
      %v7311 = vand.u32 %v7310, 4294901760
      %7312 = vmatpush.msra.mxu0 %v7311
      %v7313 = vand.u32 %v6050, 4294901760
      %v7314 = vsub.f32 %v6050, %v7313
      %v7315 = vand.u32 %v7314, 4294901760
      %v7316 = vsub.f32 %v7314, %v7315
      %v7317 = vand.u32 %v7316, 4294901760
      %7318 = vmatpush.msra.mxu0 %v7317
      %v7319 = vand.u32 %v6049, 4294901760
      %v7320 = vsub.f32 %v6049, %v7319
      %v7321 = vand.u32 %v7320, 4294901760
      %v7322 = vsub.f32 %v7320, %v7321
      %v7323 = vand.u32 %v7322, 4294901760
      %7324 = vmatpush.msra.mxu0 %v7323
      %v7325 = vand.u32 %v6048, 4294901760
      %v7326 = vsub.f32 %v6048, %v7325
      %v7327 = vand.u32 %v7326, 4294901760
      %v7328 = vsub.f32 %v7326, %v7327
      %v7329 = vand.u32 %v7328, 4294901760
      %7330 = vmatpush.msra.mxu0 %v7329
      %v7331 = vand.u32 %v6047, 4294901760
      %v7332 = vsub.f32 %v6047, %v7331
      %v7333 = vand.u32 %v7332, 4294901760
      %v7334 = vsub.f32 %v7332, %v7333
      %v7335 = vand.u32 %v7334, 4294901760
      %7336 = vmatpush.msra.mxu0 %v7335
      %v7337 = vand.u32 %v6046, 4294901760
      %v7338 = vsub.f32 %v6046, %v7337
      %v7339 = vand.u32 %v7338, 4294901760
      %v7340 = vsub.f32 %v7338, %v7339
      %v7341 = vand.u32 %v7340, 4294901760
      %7342 = vmatpush.msra.mxu0 %v7341
      %v7343 = vand.u32 %v6045, 4294901760
      %v7344 = vsub.f32 %v6045, %v7343
      %v7345 = vand.u32 %v7344, 4294901760
      %v7346 = vsub.f32 %v7344, %v7345
      %v7347 = vand.u32 %v7346, 4294901760
      %7348 = vmatpush.msra.mxu0 %v7347
      %v7349 = vand.u32 %v6044, 4294901760
      %v7350 = vsub.f32 %v6044, %v7349
      %v7351 = vand.u32 %v7350, 4294901760
      %v7352 = vsub.f32 %v7350, %v7351
      %v7353 = vand.u32 %v7352, 4294901760
      %7354 = vmatpush.msra.mxu0 %v7353
      %v7355 = vand.u32 %v6043, 4294901760
      %v7356 = vsub.f32 %v6043, %v7355
      %v7357 = vand.u32 %v7356, 4294901760
      %v7358 = vsub.f32 %v7356, %v7357
      %v7359 = vand.u32 %v7358, 4294901760
      %7360 = vmatpush.msra.mxu0 %v7359
      %v7361 = vand.u32 %v6042, 4294901760
      %v7362 = vsub.f32 %v6042, %v7361
      %v7363 = vand.u32 %v7362, 4294901760
      %v7364 = vsub.f32 %v7362, %v7363
      %v7365 = vand.u32 %v7364, 4294901760
      %7366 = vmatpush.msra.mxu0 %v7365
      %v7367 = vand.u32 %v6041, 4294901760
      %v7368 = vsub.f32 %v6041, %v7367
      %v7369 = vand.u32 %v7368, 4294901760
      %v7370 = vsub.f32 %v7368, %v7369
      %v7371 = vand.u32 %v7370, 4294901760
      %7372 = vmatpush.msra.mxu0 %v7371
      %v7373 = vand.u32 %v6040, 4294901760
      %v7374 = vsub.f32 %v6040, %v7373
      %v7375 = vand.u32 %v7374, 4294901760
      %v7376 = vsub.f32 %v7374, %v7375
      %v7377 = vand.u32 %v7376, 4294901760
      %7378 = vmatpush.msra.mxu0 %v7377
      %v7379 = vand.u32 %v6039, 4294901760
      %v7380 = vsub.f32 %v6039, %v7379
      %v7381 = vand.u32 %v7380, 4294901760
      %v7382 = vsub.f32 %v7380, %v7381
      %v7383 = vand.u32 %v7382, 4294901760
      %7384 = vmatpush.msra.mxu0 %v7383
      %v7385 = vand.u32 %v6001, 4294901760
      %7386 = vmatmul.f32.gmra.mxu0 %v7385
      %v7387 = vpop.f32.mrf.mxu0
      %v7388 = vadd.f32 %v7127, %v7387
      %v7389 = vand.u32 %v6002, 4294901760
      %7390 = vmatmul.f32.gmra.mxu0 %v7389
      %v7391 = vpop.f32.mrf.mxu0
      %v7392 = vadd.f32 %v7135, %v7391
      %v7393 = vand.u32 %v6003, 4294901760
      %7394 = vmatmul.f32.gmra.mxu0 %v7393
      %v7395 = vpop.f32.mrf.mxu0
      %v7396 = vadd.f32 %v7143, %v7395
      %v7397 = vand.u32 %v6004, 4294901760
      %7398 = vmatmul.f32.gmra.mxu0 %v7397
      %v7399 = vpop.f32.mrf.mxu0
      %v7400 = vadd.f32 %v7151, %v7399
      %v7401 = vand.u32 %v6005, 4294901760
      %7402 = vmatmul.f32.gmra.mxu0 %v7401
      %v7403 = vpop.f32.mrf.mxu0
      %v7404 = vadd.f32 %v7159, %v7403
      %v7405 = vand.u32 %v6006, 4294901760
      %7406 = vmatmul.f32.gmra.mxu0 %v7405
      %v7407 = vpop.f32.mrf.mxu0
      %v7408 = vadd.f32 %v7167, %v7407
      %v7409 = vand.u32 %v6007, 4294901760
      %7410 = vmatmul.f32.gmra.mxu0 %v7409
      %v7411 = vpop.f32.mrf.mxu0
      %v7412 = vadd.f32 %v7175, %v7411
      %v7413 = vand.u32 %v6008, 4294901760
      %7414 = vmatmul.f32.gmra.mxu0 %v7413
      %v7415 = vpop.f32.mrf.mxu0
      %v7416 = vadd.f32 %v7183, %v7415
      %v7417 = vand.u32 %v6009, 4294901760
      %7418 = vmatmul.f32.gmra.mxu0 %v7417
      %v7419 = vpop.f32.mrf.mxu0
      %v7420 = vadd.f32 %v7191, %v7419
      %v7421 = vand.u32 %v6010, 4294901760
      %7422 = vmatmul.f32.gmra.mxu0 %v7421
      %v7423 = vpop.f32.mrf.mxu0
      %v7424 = vadd.f32 %v7199, %v7423
      %v7425 = vand.u32 %v6011, 4294901760
      %7426 = vmatmul.f32.gmra.mxu0 %v7425
      %v7427 = vpop.f32.mrf.mxu0
      %v7428 = vadd.f32 %v7207, %v7427
      %v7429 = vand.u32 %v6012, 4294901760
      %7430 = vmatmul.f32.gmra.mxu0 %v7429
      %v7431 = vpop.f32.mrf.mxu0
      %v7432 = vadd.f32 %v7215, %v7431
      %v7433 = vand.u32 %v6013, 4294901760
      %7434 = vmatmul.f32.gmra.mxu0 %v7433
      %v7435 = vpop.f32.mrf.mxu0
      %v7436 = vadd.f32 %v7223, %v7435
      %v7437 = vand.u32 %v6014, 4294901760
      %7438 = vmatmul.f32.gmra.mxu0 %v7437
      %v7439 = vpop.f32.mrf.mxu0
      %v7440 = vadd.f32 %v7231, %v7439
      %v7441 = vand.u32 %v6015, 4294901760
      %7442 = vmatmul.f32.gmra.mxu0 %v7441
      %v7443 = vpop.f32.mrf.mxu0
      %v7444 = vadd.f32 %v7239, %v7443
      %v7445 = vand.u32 %v6016, 4294901760
      %7446 = vmatmul.f32.gmra.mxu0 %v7445
      %v7447 = vpop.f32.mrf.mxu0
      %v7448 = vadd.f32 %v7247, %v7447
      %v7449 = vand.u32 %v6017, 4294901760
      %7450 = vmatmul.f32.gmra.mxu0 %v7449
      %v7451 = vpop.f32.mrf.mxu0
      %v7452 = vadd.f32 %v7255, %v7451
      %v7453 = vand.u32 %v6018, 4294901760
      %7454 = vmatmul.f32.gmra.mxu0 %v7453
      %v7455 = vpop.f32.mrf.mxu0
      %v7456 = vadd.f32 %v7263, %v7455
      %v7457 = vand.u32 %v6019, 4294901760
      %7458 = vmatmul.f32.gmra.mxu0 %v7457
      %v7459 = vpop.f32.mrf.mxu0
      %v7460 = vadd.f32 %v7271, %v7459
      %v7461 = vand.u32 %v6020, 4294901760
      %7462 = vmatmul.f32.gmra.mxu0 %v7461
      %v7463 = vpop.f32.mrf.mxu0
      %v7464 = vadd.f32 %v7279, %v7463
      %v7465 = vand.u32 %v6021, 4294901760
      %7466 = vmatmul.f32.gmra.mxu0 %v7465
      %v7467 = vpop.f32.mrf.mxu0
      %v7468 = vadd.f32 %v7287, %v7467
      %7469 = vdwg.mxu0
      %v7470 = vand.u32 %v6054, 4294901760
      %v7471 = vsub.f32 %v6054, %v7470
      %7472 = vmatpush.msra.mxu0 %v7471
      %v7473 = vand.u32 %v6053, 4294901760
      %v7474 = vsub.f32 %v6053, %v7473
      %7475 = vmatpush.msra.mxu0 %v7474
      %v7476 = vand.u32 %v6052, 4294901760
      %v7477 = vsub.f32 %v6052, %v7476
      %7478 = vmatpush.msra.mxu0 %v7477
      %v7479 = vand.u32 %v6051, 4294901760
      %v7480 = vsub.f32 %v6051, %v7479
      %7481 = vmatpush.msra.mxu0 %v7480
      %v7482 = vand.u32 %v6050, 4294901760
      %v7483 = vsub.f32 %v6050, %v7482
      %7484 = vmatpush.msra.mxu0 %v7483
      %v7485 = vand.u32 %v6049, 4294901760
      %v7486 = vsub.f32 %v6049, %v7485
      %7487 = vmatpush.msra.mxu0 %v7486
      %v7488 = vand.u32 %v6048, 4294901760
      %v7489 = vsub.f32 %v6048, %v7488
      %7490 = vmatpush.msra.mxu0 %v7489
      %v7491 = vand.u32 %v6047, 4294901760
      %v7492 = vsub.f32 %v6047, %v7491
      %7493 = vmatpush.msra.mxu0 %v7492
      %v7494 = vand.u32 %v6046, 4294901760
      %v7495 = vsub.f32 %v6046, %v7494
      %7496 = vmatpush.msra.mxu0 %v7495
      %v7497 = vand.u32 %v6045, 4294901760
      %v7498 = vsub.f32 %v6045, %v7497
      %7499 = vmatpush.msra.mxu0 %v7498
      %v7500 = vand.u32 %v6044, 4294901760
      %v7501 = vsub.f32 %v6044, %v7500
      %7502 = vmatpush.msra.mxu0 %v7501
      %v7503 = vand.u32 %v6043, 4294901760
      %v7504 = vsub.f32 %v6043, %v7503
      %7505 = vmatpush.msra.mxu0 %v7504
      %v7506 = vand.u32 %v6042, 4294901760
      %v7507 = vsub.f32 %v6042, %v7506
      %7508 = vmatpush.msra.mxu0 %v7507
      %v7509 = vand.u32 %v6041, 4294901760
      %v7510 = vsub.f32 %v6041, %v7509
      %7511 = vmatpush.msra.mxu0 %v7510
      %v7512 = vand.u32 %v6040, 4294901760
      %v7513 = vsub.f32 %v6040, %v7512
      %7514 = vmatpush.msra.mxu0 %v7513
      %v7515 = vand.u32 %v6039, 4294901760
      %v7516 = vsub.f32 %v6039, %v7515
      %7517 = vmatpush.msra.mxu0 %v7516
      %v7518 = vand.u32 %v6001, 4294901760
      %v7519 = vsub.f32 %v6001, %v7518
      %7520 = vmatmul.f32.gmra.mxu0 %v7519
      %v7521 = vpop.f32.mrf.mxu0
      %v7522 = vadd.f32 %v7388, %v7521
      %v7523 = vand.u32 %v6002, 4294901760
      %v7524 = vsub.f32 %v6002, %v7523
      %7525 = vmatmul.f32.gmra.mxu0 %v7524
      %v7526 = vpop.f32.mrf.mxu0
      %v7527 = vadd.f32 %v7392, %v7526
      %v7528 = vand.u32 %v6003, 4294901760
      %v7529 = vsub.f32 %v6003, %v7528
      %7530 = vmatmul.f32.gmra.mxu0 %v7529
      %v7531 = vpop.f32.mrf.mxu0
      %v7532 = vadd.f32 %v7396, %v7531
      %v7533 = vand.u32 %v6004, 4294901760
      %v7534 = vsub.f32 %v6004, %v7533
      %7535 = vmatmul.f32.gmra.mxu0 %v7534
      %v7536 = vpop.f32.mrf.mxu0
      %v7537 = vadd.f32 %v7400, %v7536
      %v7538 = vand.u32 %v6005, 4294901760
      %v7539 = vsub.f32 %v6005, %v7538
      %7540 = vmatmul.f32.gmra.mxu0 %v7539
      %v7541 = vpop.f32.mrf.mxu0
      %v7542 = vadd.f32 %v7404, %v7541
      %v7543 = vand.u32 %v6006, 4294901760
      %v7544 = vsub.f32 %v6006, %v7543
      %7545 = vmatmul.f32.gmra.mxu0 %v7544
      %v7546 = vpop.f32.mrf.mxu0
      %v7547 = vadd.f32 %v7408, %v7546
      %v7548 = vand.u32 %v6007, 4294901760
      %v7549 = vsub.f32 %v6007, %v7548
      %7550 = vmatmul.f32.gmra.mxu0 %v7549
      %v7551 = vpop.f32.mrf.mxu0
      %v7552 = vadd.f32 %v7412, %v7551
      %v7553 = vand.u32 %v6008, 4294901760
      %v7554 = vsub.f32 %v6008, %v7553
      %7555 = vmatmul.f32.gmra.mxu0 %v7554
      %v7556 = vpop.f32.mrf.mxu0
      %v7557 = vadd.f32 %v7416, %v7556
      %v7558 = vand.u32 %v6009, 4294901760
      %v7559 = vsub.f32 %v6009, %v7558
      %7560 = vmatmul.f32.gmra.mxu0 %v7559
      %v7561 = vpop.f32.mrf.mxu0
      %v7562 = vadd.f32 %v7420, %v7561
      %v7563 = vand.u32 %v6010, 4294901760
      %v7564 = vsub.f32 %v6010, %v7563
      %7565 = vmatmul.f32.gmra.mxu0 %v7564
      %v7566 = vpop.f32.mrf.mxu0
      %v7567 = vadd.f32 %v7424, %v7566
      %v7568 = vand.u32 %v6011, 4294901760
      %v7569 = vsub.f32 %v6011, %v7568
      %7570 = vmatmul.f32.gmra.mxu0 %v7569
      %v7571 = vpop.f32.mrf.mxu0
      %v7572 = vadd.f32 %v7428, %v7571
      %v7573 = vand.u32 %v6012, 4294901760
      %v7574 = vsub.f32 %v6012, %v7573
      %7575 = vmatmul.f32.gmra.mxu0 %v7574
      %v7576 = vpop.f32.mrf.mxu0
      %v7577 = vadd.f32 %v7432, %v7576
      %v7578 = vand.u32 %v6013, 4294901760
      %v7579 = vsub.f32 %v6013, %v7578
      %7580 = vmatmul.f32.gmra.mxu0 %v7579
      %v7581 = vpop.f32.mrf.mxu0
      %v7582 = vadd.f32 %v7436, %v7581
      %v7583 = vand.u32 %v6014, 4294901760
      %v7584 = vsub.f32 %v6014, %v7583
      %7585 = vmatmul.f32.gmra.mxu0 %v7584
      %v7586 = vpop.f32.mrf.mxu0
      %v7587 = vadd.f32 %v7440, %v7586
      %v7588 = vand.u32 %v6015, 4294901760
      %v7589 = vsub.f32 %v6015, %v7588
      %7590 = vmatmul.f32.gmra.mxu0 %v7589
      %v7591 = vpop.f32.mrf.mxu0
      %v7592 = vadd.f32 %v7444, %v7591
      %v7593 = vand.u32 %v6016, 4294901760
      %v7594 = vsub.f32 %v6016, %v7593
      %7595 = vmatmul.f32.gmra.mxu0 %v7594
      %v7596 = vpop.f32.mrf.mxu0
      %v7597 = vadd.f32 %v7448, %v7596
      %v7598 = vand.u32 %v6017, 4294901760
      %v7599 = vsub.f32 %v6017, %v7598
      %7600 = vmatmul.f32.gmra.mxu0 %v7599
      %v7601 = vpop.f32.mrf.mxu0
      %v7602 = vadd.f32 %v7452, %v7601
      %v7603 = vand.u32 %v6018, 4294901760
      %v7604 = vsub.f32 %v6018, %v7603
      %7605 = vmatmul.f32.gmra.mxu0 %v7604
      %v7606 = vpop.f32.mrf.mxu0
      %v7607 = vadd.f32 %v7456, %v7606
      %v7608 = vand.u32 %v6019, 4294901760
      %v7609 = vsub.f32 %v6019, %v7608
      %7610 = vmatmul.f32.gmra.mxu0 %v7609
      %v7611 = vpop.f32.mrf.mxu0
      %v7612 = vadd.f32 %v7460, %v7611
      %v7613 = vand.u32 %v6020, 4294901760
      %v7614 = vsub.f32 %v6020, %v7613
      %7615 = vmatmul.f32.gmra.mxu0 %v7614
      %v7616 = vpop.f32.mrf.mxu0
      %v7617 = vadd.f32 %v7464, %v7616
      %v7618 = vand.u32 %v6021, 4294901760
      %v7619 = vsub.f32 %v6021, %v7618
      %7620 = vmatmul.f32.gmra.mxu0 %v7619
      %v7621 = vpop.f32.mrf.mxu0
      %v7622 = vadd.f32 %v7468, %v7621
      %7623 = vdwg.mxu0
      %v7624 = vand.u32 %v6054, 4294901760
      %7625 = vmatpush.msra.mxu0 %v7624
      %v7626 = vand.u32 %v6053, 4294901760
      %7627 = vmatpush.msra.mxu0 %v7626
      %v7628 = vand.u32 %v6052, 4294901760
      %7629 = vmatpush.msra.mxu0 %v7628
      %v7630 = vand.u32 %v6051, 4294901760
      %7631 = vmatpush.msra.mxu0 %v7630
      %v7632 = vand.u32 %v6050, 4294901760
      %7633 = vmatpush.msra.mxu0 %v7632
      %v7634 = vand.u32 %v6049, 4294901760
      %7635 = vmatpush.msra.mxu0 %v7634
      %v7636 = vand.u32 %v6048, 4294901760
      %7637 = vmatpush.msra.mxu0 %v7636
      %v7638 = vand.u32 %v6047, 4294901760
      %7639 = vmatpush.msra.mxu0 %v7638
      %v7640 = vand.u32 %v6046, 4294901760
      %7641 = vmatpush.msra.mxu0 %v7640
      %v7642 = vand.u32 %v6045, 4294901760
      %7643 = vmatpush.msra.mxu0 %v7642
      %v7644 = vand.u32 %v6044, 4294901760
      %7645 = vmatpush.msra.mxu0 %v7644
      %v7646 = vand.u32 %v6043, 4294901760
      %7647 = vmatpush.msra.mxu0 %v7646
      %v7648 = vand.u32 %v6042, 4294901760
      %7649 = vmatpush.msra.mxu0 %v7648
      %v7650 = vand.u32 %v6041, 4294901760
      %7651 = vmatpush.msra.mxu0 %v7650
      %v7652 = vand.u32 %v6040, 4294901760
      %7653 = vmatpush.msra.mxu0 %v7652
      %v7654 = vand.u32 %v6039, 4294901760
      %7655 = vmatpush.msra.mxu0 %v7654
      %v7656 = vand.u32 %v6001, 4294901760
      %v7657 = vsub.f32 %v6001, %v7656
      %v7658 = vand.u32 %v7657, 4294901760
      %7659 = vmatmul.f32.gmra.mxu0 %v7658
      %v7660 = vpop.f32.mrf.mxu0
      %v7661 = vadd.f32 %v7522, %v7660
      %v7662 = vand.u32 %v6002, 4294901760
      %v7663 = vsub.f32 %v6002, %v7662
      %v7664 = vand.u32 %v7663, 4294901760
      %7665 = vmatmul.f32.gmra.mxu0 %v7664
      %v7666 = vpop.f32.mrf.mxu0
      %v7667 = vadd.f32 %v7527, %v7666
      %v7668 = vand.u32 %v6003, 4294901760
      %v7669 = vsub.f32 %v6003, %v7668
      %v7670 = vand.u32 %v7669, 4294901760
      %7671 = vmatmul.f32.gmra.mxu0 %v7670
      %v7672 = vpop.f32.mrf.mxu0
      %v7673 = vadd.f32 %v7532, %v7672
      %v7674 = vand.u32 %v6004, 4294901760
      %v7675 = vsub.f32 %v6004, %v7674
      %v7676 = vand.u32 %v7675, 4294901760
      %7677 = vmatmul.f32.gmra.mxu0 %v7676
      %v7678 = vpop.f32.mrf.mxu0
      %v7679 = vadd.f32 %v7537, %v7678
      %v7680 = vand.u32 %v6005, 4294901760
      %v7681 = vsub.f32 %v6005, %v7680
      %v7682 = vand.u32 %v7681, 4294901760
      %7683 = vmatmul.f32.gmra.mxu0 %v7682
      %v7684 = vpop.f32.mrf.mxu0
      %v7685 = vadd.f32 %v7542, %v7684
      %v7686 = vand.u32 %v6006, 4294901760
      %v7687 = vsub.f32 %v6006, %v7686
      %v7688 = vand.u32 %v7687, 4294901760
      %7689 = vmatmul.f32.gmra.mxu0 %v7688
      %v7690 = vpop.f32.mrf.mxu0
      %v7691 = vadd.f32 %v7547, %v7690
      %v7692 = vand.u32 %v6007, 4294901760
      %v7693 = vsub.f32 %v6007, %v7692
      %v7694 = vand.u32 %v7693, 4294901760
      %7695 = vmatmul.f32.gmra.mxu0 %v7694
      %v7696 = vpop.f32.mrf.mxu0
      %v7697 = vadd.f32 %v7552, %v7696
      %v7698 = vand.u32 %v6008, 4294901760
      %v7699 = vsub.f32 %v6008, %v7698
      %v7700 = vand.u32 %v7699, 4294901760
      %7701 = vmatmul.f32.gmra.mxu0 %v7700
      %v7702 = vpop.f32.mrf.mxu0
      %v7703 = vadd.f32 %v7557, %v7702
      %v7704 = vand.u32 %v6009, 4294901760
      %v7705 = vsub.f32 %v6009, %v7704
      %v7706 = vand.u32 %v7705, 4294901760
      %7707 = vmatmul.f32.gmra.mxu0 %v7706
      %v7708 = vpop.f32.mrf.mxu0
      %v7709 = vadd.f32 %v7562, %v7708
      %v7710 = vand.u32 %v6010, 4294901760
      %v7711 = vsub.f32 %v6010, %v7710
      %v7712 = vand.u32 %v7711, 4294901760
      %7713 = vmatmul.f32.gmra.mxu0 %v7712
      %v7714 = vpop.f32.mrf.mxu0
      %v7715 = vadd.f32 %v7567, %v7714
      %v7716 = vand.u32 %v6011, 4294901760
      %v7717 = vsub.f32 %v6011, %v7716
      %v7718 = vand.u32 %v7717, 4294901760
      %7719 = vmatmul.f32.gmra.mxu0 %v7718
      %v7720 = vpop.f32.mrf.mxu0
      %v7721 = vadd.f32 %v7572, %v7720
      %v7722 = vand.u32 %v6012, 4294901760
      %v7723 = vsub.f32 %v6012, %v7722
      %v7724 = vand.u32 %v7723, 4294901760
      %7725 = vmatmul.f32.gmra.mxu0 %v7724
      %v7726 = vpop.f32.mrf.mxu0
      %v7727 = vadd.f32 %v7577, %v7726
      %v7728 = vand.u32 %v6013, 4294901760
      %v7729 = vsub.f32 %v6013, %v7728
      %v7730 = vand.u32 %v7729, 4294901760
      %7731 = vmatmul.f32.gmra.mxu0 %v7730
      %v7732 = vpop.f32.mrf.mxu0
      %v7733 = vadd.f32 %v7582, %v7732
      %v7734 = vand.u32 %v6014, 4294901760
      %v7735 = vsub.f32 %v6014, %v7734
      %v7736 = vand.u32 %v7735, 4294901760
      %7737 = vmatmul.f32.gmra.mxu0 %v7736
      %v7738 = vpop.f32.mrf.mxu0
      %v7739 = vadd.f32 %v7587, %v7738
      %v7740 = vand.u32 %v6015, 4294901760
      %v7741 = vsub.f32 %v6015, %v7740
      %v7742 = vand.u32 %v7741, 4294901760
      %7743 = vmatmul.f32.gmra.mxu0 %v7742
      %v7744 = vpop.f32.mrf.mxu0
      %v7745 = vadd.f32 %v7592, %v7744
      %v7746 = vand.u32 %v6016, 4294901760
      %v7747 = vsub.f32 %v6016, %v7746
      %v7748 = vand.u32 %v7747, 4294901760
      %7749 = vmatmul.f32.gmra.mxu0 %v7748
      %v7750 = vpop.f32.mrf.mxu0
      %v7751 = vadd.f32 %v7597, %v7750
      %v7752 = vand.u32 %v6017, 4294901760
      %v7753 = vsub.f32 %v6017, %v7752
      %v7754 = vand.u32 %v7753, 4294901760
      %7755 = vmatmul.f32.gmra.mxu0 %v7754
      %v7756 = vpop.f32.mrf.mxu0
      %v7757 = vadd.f32 %v7602, %v7756
      %v7758 = vand.u32 %v6018, 4294901760
      %v7759 = vsub.f32 %v6018, %v7758
      %v7760 = vand.u32 %v7759, 4294901760
      %7761 = vmatmul.f32.gmra.mxu0 %v7760
      %v7762 = vpop.f32.mrf.mxu0
      %v7763 = vadd.f32 %v7607, %v7762
      %v7764 = vand.u32 %v6019, 4294901760
      %v7765 = vsub.f32 %v6019, %v7764
      %v7766 = vand.u32 %v7765, 4294901760
      %7767 = vmatmul.f32.gmra.mxu0 %v7766
      %v7768 = vpop.f32.mrf.mxu0
      %v7769 = vadd.f32 %v7612, %v7768
      %v7770 = vand.u32 %v6020, 4294901760
      %v7771 = vsub.f32 %v6020, %v7770
      %v7772 = vand.u32 %v7771, 4294901760
      %7773 = vmatmul.f32.gmra.mxu0 %v7772
      %v7774 = vpop.f32.mrf.mxu0
      %v7775 = vadd.f32 %v7617, %v7774
      %v7776 = vand.u32 %v6021, 4294901760
      %v7777 = vsub.f32 %v6021, %v7776
      %v7778 = vand.u32 %v7777, 4294901760
      %7779 = vmatmul.f32.gmra.mxu0 %v7778
      %v7780 = vpop.f32.mrf.mxu0
      %v7781 = vadd.f32 %v7622, %v7780
      %7782 = vdwg.mxu0
      %v7783 = vand.u32 %v6054, 4294901760
      %v7784 = vsub.f32 %v6054, %v7783
      %v7785 = vand.u32 %v7784, 4294901760
      %7786 = vmatpush.msra.mxu0 %v7785
      %v7787 = vand.u32 %v6053, 4294901760
      %v7788 = vsub.f32 %v6053, %v7787
      %v7789 = vand.u32 %v7788, 4294901760
      %7790 = vmatpush.msra.mxu0 %v7789
      %v7791 = vand.u32 %v6052, 4294901760
      %v7792 = vsub.f32 %v6052, %v7791
      %v7793 = vand.u32 %v7792, 4294901760
      %7794 = vmatpush.msra.mxu0 %v7793
      %v7795 = vand.u32 %v6051, 4294901760
      %v7796 = vsub.f32 %v6051, %v7795
      %v7797 = vand.u32 %v7796, 4294901760
      %7798 = vmatpush.msra.mxu0 %v7797
      %v7799 = vand.u32 %v6050, 4294901760
      %v7800 = vsub.f32 %v6050, %v7799
      %v7801 = vand.u32 %v7800, 4294901760
      %7802 = vmatpush.msra.mxu0 %v7801
      %v7803 = vand.u32 %v6049, 4294901760
      %v7804 = vsub.f32 %v6049, %v7803
      %v7805 = vand.u32 %v7804, 4294901760
      %7806 = vmatpush.msra.mxu0 %v7805
      %v7807 = vand.u32 %v6048, 4294901760
      %v7808 = vsub.f32 %v6048, %v7807
      %v7809 = vand.u32 %v7808, 4294901760
      %7810 = vmatpush.msra.mxu0 %v7809
      %v7811 = vand.u32 %v6047, 4294901760
      %v7812 = vsub.f32 %v6047, %v7811
      %v7813 = vand.u32 %v7812, 4294901760
      %7814 = vmatpush.msra.mxu0 %v7813
      %v7815 = vand.u32 %v6046, 4294901760
      %v7816 = vsub.f32 %v6046, %v7815
      %v7817 = vand.u32 %v7816, 4294901760
      %7818 = vmatpush.msra.mxu0 %v7817
      %v7819 = vand.u32 %v6045, 4294901760
      %v7820 = vsub.f32 %v6045, %v7819
      %v7821 = vand.u32 %v7820, 4294901760
      %7822 = vmatpush.msra.mxu0 %v7821
      %v7823 = vand.u32 %v6044, 4294901760
      %v7824 = vsub.f32 %v6044, %v7823
      %v7825 = vand.u32 %v7824, 4294901760
      %7826 = vmatpush.msra.mxu0 %v7825
      %v7827 = vand.u32 %v6043, 4294901760
      %v7828 = vsub.f32 %v6043, %v7827
      %v7829 = vand.u32 %v7828, 4294901760
      %7830 = vmatpush.msra.mxu0 %v7829
      %v7831 = vand.u32 %v6042, 4294901760
      %v7832 = vsub.f32 %v6042, %v7831
      %v7833 = vand.u32 %v7832, 4294901760
      %7834 = vmatpush.msra.mxu0 %v7833
      %v7835 = vand.u32 %v6041, 4294901760
      %v7836 = vsub.f32 %v6041, %v7835
      %v7837 = vand.u32 %v7836, 4294901760
      %7838 = vmatpush.msra.mxu0 %v7837
      %v7839 = vand.u32 %v6040, 4294901760
      %v7840 = vsub.f32 %v6040, %v7839
      %v7841 = vand.u32 %v7840, 4294901760
      %7842 = vmatpush.msra.mxu0 %v7841
      %v7843 = vand.u32 %v6039, 4294901760
      %v7844 = vsub.f32 %v6039, %v7843
      %v7845 = vand.u32 %v7844, 4294901760
      %7846 = vmatpush.msra.mxu0 %v7845
      %v7847 = vand.u32 %v6001, 4294901760
      %7848 = vmatmul.f32.gmra.mxu0 %v7847
      %v7849 = vpop.f32.mrf.mxu0
      %v7850 = vadd.f32 %v7661, %v7849
      %v7851 = vand.u32 %v6002, 4294901760
      %7852 = vmatmul.f32.gmra.mxu0 %v7851
      %v7853 = vpop.f32.mrf.mxu0
      %v7854 = vadd.f32 %v7667, %v7853
      %v7855 = vand.u32 %v6003, 4294901760
      %7856 = vmatmul.f32.gmra.mxu0 %v7855
      %v7857 = vpop.f32.mrf.mxu0
      %v7858 = vadd.f32 %v7673, %v7857
      %v7859 = vand.u32 %v6004, 4294901760
      %7860 = vmatmul.f32.gmra.mxu0 %v7859
      %v7861 = vpop.f32.mrf.mxu0
      %v7862 = vadd.f32 %v7679, %v7861
      %v7863 = vand.u32 %v6005, 4294901760
      %7864 = vmatmul.f32.gmra.mxu0 %v7863
      %v7865 = vpop.f32.mrf.mxu0
      %v7866 = vadd.f32 %v7685, %v7865
      %v7867 = vand.u32 %v6006, 4294901760
      %7868 = vmatmul.f32.gmra.mxu0 %v7867
      %v7869 = vpop.f32.mrf.mxu0
      %v7870 = vadd.f32 %v7691, %v7869
      %v7871 = vand.u32 %v6007, 4294901760
      %7872 = vmatmul.f32.gmra.mxu0 %v7871
      %v7873 = vpop.f32.mrf.mxu0
      %v7874 = vadd.f32 %v7697, %v7873
      %v7875 = vand.u32 %v6008, 4294901760
      %7876 = vmatmul.f32.gmra.mxu0 %v7875
      %v7877 = vpop.f32.mrf.mxu0
      %v7878 = vadd.f32 %v7703, %v7877
      %v7879 = vand.u32 %v6009, 4294901760
      %7880 = vmatmul.f32.gmra.mxu0 %v7879
      %v7881 = vpop.f32.mrf.mxu0
      %v7882 = vadd.f32 %v7709, %v7881
      %v7883 = vand.u32 %v6010, 4294901760
      %7884 = vmatmul.f32.gmra.mxu0 %v7883
      %v7885 = vpop.f32.mrf.mxu0
      %v7886 = vadd.f32 %v7715, %v7885
      %v7887 = vand.u32 %v6011, 4294901760
      %7888 = vmatmul.f32.gmra.mxu0 %v7887
      %v7889 = vpop.f32.mrf.mxu0
      %v7890 = vadd.f32 %v7721, %v7889
      %v7891 = vand.u32 %v6012, 4294901760
      %7892 = vmatmul.f32.gmra.mxu0 %v7891
      %v7893 = vpop.f32.mrf.mxu0
      %v7894 = vadd.f32 %v7727, %v7893
      %v7895 = vand.u32 %v6013, 4294901760
      %7896 = vmatmul.f32.gmra.mxu0 %v7895
      %v7897 = vpop.f32.mrf.mxu0
      %v7898 = vadd.f32 %v7733, %v7897
      %v7899 = vand.u32 %v6014, 4294901760
      %7900 = vmatmul.f32.gmra.mxu0 %v7899
      %v7901 = vpop.f32.mrf.mxu0
      %v7902 = vadd.f32 %v7739, %v7901
      %v7903 = vand.u32 %v6015, 4294901760
      %7904 = vmatmul.f32.gmra.mxu0 %v7903
      %v7905 = vpop.f32.mrf.mxu0
      %v7906 = vadd.f32 %v7745, %v7905
      %v7907 = vand.u32 %v6016, 4294901760
      %7908 = vmatmul.f32.gmra.mxu0 %v7907
      %v7909 = vpop.f32.mrf.mxu0
      %v7910 = vadd.f32 %v7751, %v7909
      %v7911 = vand.u32 %v6017, 4294901760
      %7912 = vmatmul.f32.gmra.mxu0 %v7911
      %v7913 = vpop.f32.mrf.mxu0
      %v7914 = vadd.f32 %v7757, %v7913
      %v7915 = vand.u32 %v6018, 4294901760
      %7916 = vmatmul.f32.gmra.mxu0 %v7915
      %v7917 = vpop.f32.mrf.mxu0
      %v7918 = vadd.f32 %v7763, %v7917
      %v7919 = vand.u32 %v6019, 4294901760
      %7920 = vmatmul.f32.gmra.mxu0 %v7919
      %v7921 = vpop.f32.mrf.mxu0
      %v7922 = vadd.f32 %v7769, %v7921
      %v7923 = vand.u32 %v6020, 4294901760
      %7924 = vmatmul.f32.gmra.mxu0 %v7923
      %v7925 = vpop.f32.mrf.mxu0
      %v7926 = vadd.f32 %v7775, %v7925
      %v7927 = vand.u32 %v6021, 4294901760
      %7928 = vmatmul.f32.gmra.mxu0 %v7927
      %v7929 = vpop.f32.mrf.mxu0
      %v7930 = vadd.f32 %v7781, %v7929
      %7931 = vdwg.mxu0
      %v7932 = vand.u32 %v6054, 4294901760
      %7933 = vmatpush.msra.mxu0 %v7932
      %v7934 = vand.u32 %v6053, 4294901760
      %7935 = vmatpush.msra.mxu0 %v7934
      %v7936 = vand.u32 %v6052, 4294901760
      %7937 = vmatpush.msra.mxu0 %v7936
      %v7938 = vand.u32 %v6051, 4294901760
      %7939 = vmatpush.msra.mxu0 %v7938
      %v7940 = vand.u32 %v6050, 4294901760
      %7941 = vmatpush.msra.mxu0 %v7940
      %v7942 = vand.u32 %v6049, 4294901760
      %7943 = vmatpush.msra.mxu0 %v7942
      %v7944 = vand.u32 %v6048, 4294901760
      %7945 = vmatpush.msra.mxu0 %v7944
      %v7946 = vand.u32 %v6047, 4294901760
      %7947 = vmatpush.msra.mxu0 %v7946
      %v7948 = vand.u32 %v6046, 4294901760
      %7949 = vmatpush.msra.mxu0 %v7948
      %v7950 = vand.u32 %v6045, 4294901760
      %7951 = vmatpush.msra.mxu0 %v7950
      %v7952 = vand.u32 %v6044, 4294901760
      %7953 = vmatpush.msra.mxu0 %v7952
      %v7954 = vand.u32 %v6043, 4294901760
      %7955 = vmatpush.msra.mxu0 %v7954
      %v7956 = vand.u32 %v6042, 4294901760
      %7957 = vmatpush.msra.mxu0 %v7956
      %v7958 = vand.u32 %v6041, 4294901760
      %7959 = vmatpush.msra.mxu0 %v7958
      %v7960 = vand.u32 %v6040, 4294901760
      %7961 = vmatpush.msra.mxu0 %v7960
      %v7962 = vand.u32 %v6039, 4294901760
      %7963 = vmatpush.msra.mxu0 %v7962
      %v7964 = vand.u32 %v6001, 4294901760
      %7965 = vmatmul.f32.gmra.mxu0 %v7964
      %v7966 = vpop.f32.mrf.mxu0
      %v7967 = vadd.f32 %v7850, %v7966
      %v7968 = vand.u32 %v6002, 4294901760
      %7969 = vmatmul.f32.gmra.mxu0 %v7968
      %v7970 = vpop.f32.mrf.mxu0
      %v7971 = vadd.f32 %v7854, %v7970
      %v7972 = vand.u32 %v6003, 4294901760
      %7973 = vmatmul.f32.gmra.mxu0 %v7972
      %v7974 = vpop.f32.mrf.mxu0
      %v7975 = vadd.f32 %v7858, %v7974
      %v7976 = vand.u32 %v6004, 4294901760
      %7977 = vmatmul.f32.gmra.mxu0 %v7976
      %v7978 = vpop.f32.mrf.mxu0
      %v7979 = vadd.f32 %v7862, %v7978
      %v7980 = vand.u32 %v6005, 4294901760
      %7981 = vmatmul.f32.gmra.mxu0 %v7980
      %v7982 = vpop.f32.mrf.mxu0
      %v7983 = vadd.f32 %v7866, %v7982
      %v7984 = vand.u32 %v6006, 4294901760
      %7985 = vmatmul.f32.gmra.mxu0 %v7984
      %v7986 = vpop.f32.mrf.mxu0
      %v7987 = vadd.f32 %v7870, %v7986
      %v7988 = vand.u32 %v6007, 4294901760
      %7989 = vmatmul.f32.gmra.mxu0 %v7988
      %v7990 = vpop.f32.mrf.mxu0
      %v7991 = vadd.f32 %v7874, %v7990
      %v7992 = vand.u32 %v6008, 4294901760
      %7993 = vmatmul.f32.gmra.mxu0 %v7992
      %v7994 = vpop.f32.mrf.mxu0
      %v7995 = vadd.f32 %v7878, %v7994
      %v7996 = vand.u32 %v6009, 4294901760
      %7997 = vmatmul.f32.gmra.mxu0 %v7996
      %v7998 = vpop.f32.mrf.mxu0
      %v7999 = vadd.f32 %v7882, %v7998
      %v8000 = vand.u32 %v6010, 4294901760
      %8001 = vmatmul.f32.gmra.mxu0 %v8000
      %v8002 = vpop.f32.mrf.mxu0
      %v8003 = vadd.f32 %v7886, %v8002
      %v8004 = vand.u32 %v6011, 4294901760
      %8005 = vmatmul.f32.gmra.mxu0 %v8004
      %v8006 = vpop.f32.mrf.mxu0
      %v8007 = vadd.f32 %v7890, %v8006
      %v8008 = vand.u32 %v6012, 4294901760
      %8009 = vmatmul.f32.gmra.mxu0 %v8008
      %v8010 = vpop.f32.mrf.mxu0
      %v8011 = vadd.f32 %v7894, %v8010
      %v8012 = vand.u32 %v6013, 4294901760
      %8013 = vmatmul.f32.gmra.mxu0 %v8012
      %v8014 = vpop.f32.mrf.mxu0
      %v8015 = vadd.f32 %v7898, %v8014
      %v8016 = vand.u32 %v6014, 4294901760
      %8017 = vmatmul.f32.gmra.mxu0 %v8016
      %v8018 = vpop.f32.mrf.mxu0
      %v8019 = vadd.f32 %v7902, %v8018
      %v8020 = vand.u32 %v6015, 4294901760
      %8021 = vmatmul.f32.gmra.mxu0 %v8020
      %v8022 = vpop.f32.mrf.mxu0
      %v8023 = vadd.f32 %v7906, %v8022
      %v8024 = vand.u32 %v6016, 4294901760
      %8025 = vmatmul.f32.gmra.mxu0 %v8024
      %v8026 = vpop.f32.mrf.mxu0
      %v8027 = vadd.f32 %v7910, %v8026
      %v8028 = vand.u32 %v6017, 4294901760
      %8029 = vmatmul.f32.gmra.mxu0 %v8028
      %v8030 = vpop.f32.mrf.mxu0
      %v8031 = vadd.f32 %v7914, %v8030
      %v8032 = vand.u32 %v6018, 4294901760
      %8033 = vmatmul.f32.gmra.mxu0 %v8032
      %v8034 = vpop.f32.mrf.mxu0
      %v8035 = vadd.f32 %v7918, %v8034
      %v8036 = vand.u32 %v6019, 4294901760
      %8037 = vmatmul.f32.gmra.mxu0 %v8036
      %v8038 = vpop.f32.mrf.mxu0
      %v8039 = vadd.f32 %v7922, %v8038
      %v8040 = vand.u32 %v6020, 4294901760
      %8041 = vmatmul.f32.gmra.mxu0 %v8040
      %v8042 = vpop.f32.mrf.mxu0
      %v8043 = vadd.f32 %v7926, %v8042
      %v8044 = vand.u32 %v6021, 4294901760
      %8045 = vmatmul.f32.gmra.mxu0 %v8044
      %v8046 = vpop.f32.mrf.mxu0
      %v8047 = vadd.f32 %v7930, %v8046
      %8048 = vdwg.mxu0
      %8049 = vmatpush.msra.mxu0 0.0
      %8050 = vmatpush.msra.mxu0 0.0
      %8051 = vmatpush.msra.mxu0 0.0
      %8052 = vmatpush.msra.mxu0 0.0
      %8053 = vmatpush.msra.mxu0 0.0
      %8054 = vmatpush.msra.mxu0 0.0
      %8055 = vmatpush.msra.mxu0 0.0
      %8056 = vmatpush.msra.mxu0 0.0
      %8057 = vmatpush.msra.mxu0 0.0
      %8058 = vmatpush.msra.mxu0 0.0
      %8059 = vmatpush.msra.mxu0 0.0
      %8060 = vmatpush.msra.mxu0 0.0
      %v8061 = vand.u32 %v6058, 4294901760
      %8062 = vmatpush.msra.mxu0 %v8061
      %v8063 = vand.u32 %v6057, 4294901760
      %8064 = vmatpush.msra.mxu0 %v8063
      %v8065 = vand.u32 %v6056, 4294901760
      %8066 = vmatpush.msra.mxu0 %v8065
      %v8067 = vand.u32 %v6055, 4294901760
      %8068 = vmatpush.msra.mxu0 %v8067
      %v8069 = vand.u32 %v6065, 4294901760
      %v8070 = vsub.f32 %v6065, %v8069
      %v8071 = vand.u32 %v8070, 4294901760
      %v8072 = vsub.f32 %v8070, %v8071
      %v8073 = vand.u32 %v8072, 4294901760
      %8074 = vmatmul.f32.gmra.mxu0 %v8073
      %v8075 = vpop.f32.mrf.mxu0
      %v8076 = vadd.f32 %v7967, %v8075
      %v8077 = vand.u32 %v6068, 4294901760
      %v8078 = vsub.f32 %v6068, %v8077
      %v8079 = vand.u32 %v8078, 4294901760
      %v8080 = vsub.f32 %v8078, %v8079
      %v8081 = vand.u32 %v8080, 4294901760
      %8082 = vmatmul.f32.gmra.mxu0 %v8081
      %v8083 = vpop.f32.mrf.mxu0
      %v8084 = vadd.f32 %v7971, %v8083
      %v8085 = vand.u32 %v6071, 4294901760
      %v8086 = vsub.f32 %v6071, %v8085
      %v8087 = vand.u32 %v8086, 4294901760
      %v8088 = vsub.f32 %v8086, %v8087
      %v8089 = vand.u32 %v8088, 4294901760
      %8090 = vmatmul.f32.gmra.mxu0 %v8089
      %v8091 = vpop.f32.mrf.mxu0
      %v8092 = vadd.f32 %v7975, %v8091
      %v8093 = vand.u32 %v6074, 4294901760
      %v8094 = vsub.f32 %v6074, %v8093
      %v8095 = vand.u32 %v8094, 4294901760
      %v8096 = vsub.f32 %v8094, %v8095
      %v8097 = vand.u32 %v8096, 4294901760
      %8098 = vmatmul.f32.gmra.mxu0 %v8097
      %v8099 = vpop.f32.mrf.mxu0
      %v8100 = vadd.f32 %v7979, %v8099
      %v8101 = vand.u32 %v6077, 4294901760
      %v8102 = vsub.f32 %v6077, %v8101
      %v8103 = vand.u32 %v8102, 4294901760
      %v8104 = vsub.f32 %v8102, %v8103
      %v8105 = vand.u32 %v8104, 4294901760
      %8106 = vmatmul.f32.gmra.mxu0 %v8105
      %v8107 = vpop.f32.mrf.mxu0
      %v8108 = vadd.f32 %v7983, %v8107
      %v8109 = vand.u32 %v6080, 4294901760
      %v8110 = vsub.f32 %v6080, %v8109
      %v8111 = vand.u32 %v8110, 4294901760
      %v8112 = vsub.f32 %v8110, %v8111
      %v8113 = vand.u32 %v8112, 4294901760
      %8114 = vmatmul.f32.gmra.mxu0 %v8113
      %v8115 = vpop.f32.mrf.mxu0
      %v8116 = vadd.f32 %v7987, %v8115
      %v8117 = vand.u32 %v6083, 4294901760
      %v8118 = vsub.f32 %v6083, %v8117
      %v8119 = vand.u32 %v8118, 4294901760
      %v8120 = vsub.f32 %v8118, %v8119
      %v8121 = vand.u32 %v8120, 4294901760
      %8122 = vmatmul.f32.gmra.mxu0 %v8121
      %v8123 = vpop.f32.mrf.mxu0
      %v8124 = vadd.f32 %v7991, %v8123
      %v8125 = vand.u32 %v6086, 4294901760
      %v8126 = vsub.f32 %v6086, %v8125
      %v8127 = vand.u32 %v8126, 4294901760
      %v8128 = vsub.f32 %v8126, %v8127
      %v8129 = vand.u32 %v8128, 4294901760
      %8130 = vmatmul.f32.gmra.mxu0 %v8129
      %v8131 = vpop.f32.mrf.mxu0
      %v8132 = vadd.f32 %v7995, %v8131
      %v8133 = vand.u32 %v6089, 4294901760
      %v8134 = vsub.f32 %v6089, %v8133
      %v8135 = vand.u32 %v8134, 4294901760
      %v8136 = vsub.f32 %v8134, %v8135
      %v8137 = vand.u32 %v8136, 4294901760
      %8138 = vmatmul.f32.gmra.mxu0 %v8137
      %v8139 = vpop.f32.mrf.mxu0
      %v8140 = vadd.f32 %v7999, %v8139
      %v8141 = vand.u32 %v6092, 4294901760
      %v8142 = vsub.f32 %v6092, %v8141
      %v8143 = vand.u32 %v8142, 4294901760
      %v8144 = vsub.f32 %v8142, %v8143
      %v8145 = vand.u32 %v8144, 4294901760
      %8146 = vmatmul.f32.gmra.mxu0 %v8145
      %v8147 = vpop.f32.mrf.mxu0
      %v8148 = vadd.f32 %v8003, %v8147
      %v8149 = vand.u32 %v6095, 4294901760
      %v8150 = vsub.f32 %v6095, %v8149
      %v8151 = vand.u32 %v8150, 4294901760
      %v8152 = vsub.f32 %v8150, %v8151
      %v8153 = vand.u32 %v8152, 4294901760
      %8154 = vmatmul.f32.gmra.mxu0 %v8153
      %v8155 = vpop.f32.mrf.mxu0
      %v8156 = vadd.f32 %v8007, %v8155
      %v8157 = vand.u32 %v6098, 4294901760
      %v8158 = vsub.f32 %v6098, %v8157
      %v8159 = vand.u32 %v8158, 4294901760
      %v8160 = vsub.f32 %v8158, %v8159
      %v8161 = vand.u32 %v8160, 4294901760
      %8162 = vmatmul.f32.gmra.mxu0 %v8161
      %v8163 = vpop.f32.mrf.mxu0
      %v8164 = vadd.f32 %v8011, %v8163
      %v8165 = vand.u32 %v6101, 4294901760
      %v8166 = vsub.f32 %v6101, %v8165
      %v8167 = vand.u32 %v8166, 4294901760
      %v8168 = vsub.f32 %v8166, %v8167
      %v8169 = vand.u32 %v8168, 4294901760
      %8170 = vmatmul.f32.gmra.mxu0 %v8169
      %v8171 = vpop.f32.mrf.mxu0
      %v8172 = vadd.f32 %v8015, %v8171
      %v8173 = vand.u32 %v6104, 4294901760
      %v8174 = vsub.f32 %v6104, %v8173
      %v8175 = vand.u32 %v8174, 4294901760
      %v8176 = vsub.f32 %v8174, %v8175
      %v8177 = vand.u32 %v8176, 4294901760
      %8178 = vmatmul.f32.gmra.mxu0 %v8177
      %v8179 = vpop.f32.mrf.mxu0
      %v8180 = vadd.f32 %v8019, %v8179
      %v8181 = vand.u32 %v6107, 4294901760
      %v8182 = vsub.f32 %v6107, %v8181
      %v8183 = vand.u32 %v8182, 4294901760
      %v8184 = vsub.f32 %v8182, %v8183
      %v8185 = vand.u32 %v8184, 4294901760
      %8186 = vmatmul.f32.gmra.mxu0 %v8185
      %v8187 = vpop.f32.mrf.mxu0
      %v8188 = vadd.f32 %v8023, %v8187
      %v8189 = vand.u32 %v6110, 4294901760
      %v8190 = vsub.f32 %v6110, %v8189
      %v8191 = vand.u32 %v8190, 4294901760
      %v8192 = vsub.f32 %v8190, %v8191
      %v8193 = vand.u32 %v8192, 4294901760
      %8194 = vmatmul.f32.gmra.mxu0 %v8193
      %v8195 = vpop.f32.mrf.mxu0
      %v8196 = vadd.f32 %v8027, %v8195
      %v8197 = vand.u32 %v6113, 4294901760
      %v8198 = vsub.f32 %v6113, %v8197
      %v8199 = vand.u32 %v8198, 4294901760
      %v8200 = vsub.f32 %v8198, %v8199
      %v8201 = vand.u32 %v8200, 4294901760
      %8202 = vmatmul.f32.gmra.mxu0 %v8201
      %v8203 = vpop.f32.mrf.mxu0
      %v8204 = vadd.f32 %v8031, %v8203
      %v8205 = vand.u32 %v6116, 4294901760
      %v8206 = vsub.f32 %v6116, %v8205
      %v8207 = vand.u32 %v8206, 4294901760
      %v8208 = vsub.f32 %v8206, %v8207
      %v8209 = vand.u32 %v8208, 4294901760
      %8210 = vmatmul.f32.gmra.mxu0 %v8209
      %v8211 = vpop.f32.mrf.mxu0
      %v8212 = vadd.f32 %v8035, %v8211
      %v8213 = vand.u32 %v6119, 4294901760
      %v8214 = vsub.f32 %v6119, %v8213
      %v8215 = vand.u32 %v8214, 4294901760
      %v8216 = vsub.f32 %v8214, %v8215
      %v8217 = vand.u32 %v8216, 4294901760
      %8218 = vmatmul.f32.gmra.mxu0 %v8217
      %v8219 = vpop.f32.mrf.mxu0
      %v8220 = vadd.f32 %v8039, %v8219
      %v8221 = vand.u32 %v6122, 4294901760
      %v8222 = vsub.f32 %v6122, %v8221
      %v8223 = vand.u32 %v8222, 4294901760
      %v8224 = vsub.f32 %v8222, %v8223
      %v8225 = vand.u32 %v8224, 4294901760
      %8226 = vmatmul.f32.gmra.mxu0 %v8225
      %v8227 = vpop.f32.mrf.mxu0
      %v8228 = vadd.f32 %v8043, %v8227
      %v8229 = vand.u32 %v6125, 4294901760
      %v8230 = vsub.f32 %v6125, %v8229
      %v8231 = vand.u32 %v8230, 4294901760
      %v8232 = vsub.f32 %v8230, %v8231
      %v8233 = vand.u32 %v8232, 4294901760
      %8234 = vmatmul.f32.gmra.mxu0 %v8233
      %v8235 = vpop.f32.mrf.mxu0
      %v8236 = vadd.f32 %v8047, %v8235
      %8237 = vdwg.mxu0
      %8238 = vmatpush.msra.mxu0 0.0
      %8239 = vmatpush.msra.mxu0 0.0
      %8240 = vmatpush.msra.mxu0 0.0
      %8241 = vmatpush.msra.mxu0 0.0
      %8242 = vmatpush.msra.mxu0 0.0
      %8243 = vmatpush.msra.mxu0 0.0
      %8244 = vmatpush.msra.mxu0 0.0
      %8245 = vmatpush.msra.mxu0 0.0
      %8246 = vmatpush.msra.mxu0 0.0
      %8247 = vmatpush.msra.mxu0 0.0
      %8248 = vmatpush.msra.mxu0 0.0
      %8249 = vmatpush.msra.mxu0 0.0
      %v8250 = vand.u32 %v6058, 4294901760
      %v8251 = vsub.f32 %v6058, %v8250
      %v8252 = vand.u32 %v8251, 4294901760
      %v8253 = vsub.f32 %v8251, %v8252
      %v8254 = vand.u32 %v8253, 4294901760
      %8255 = vmatpush.msra.mxu0 %v8254
      %v8256 = vand.u32 %v6057, 4294901760
      %v8257 = vsub.f32 %v6057, %v8256
      %v8258 = vand.u32 %v8257, 4294901760
      %v8259 = vsub.f32 %v8257, %v8258
      %v8260 = vand.u32 %v8259, 4294901760
      %8261 = vmatpush.msra.mxu0 %v8260
      %v8262 = vand.u32 %v6056, 4294901760
      %v8263 = vsub.f32 %v6056, %v8262
      %v8264 = vand.u32 %v8263, 4294901760
      %v8265 = vsub.f32 %v8263, %v8264
      %v8266 = vand.u32 %v8265, 4294901760
      %8267 = vmatpush.msra.mxu0 %v8266
      %v8268 = vand.u32 %v6055, 4294901760
      %v8269 = vsub.f32 %v6055, %v8268
      %v8270 = vand.u32 %v8269, 4294901760
      %v8271 = vsub.f32 %v8269, %v8270
      %v8272 = vand.u32 %v8271, 4294901760
      %8273 = vmatpush.msra.mxu0 %v8272
      %v8274 = vand.u32 %v6065, 4294901760
      %8275 = vmatmul.f32.gmra.mxu0 %v8274
      %v8276 = vpop.f32.mrf.mxu0
      %v8277 = vadd.f32 %v8076, %v8276
      %v8278 = vand.u32 %v6068, 4294901760
      %8279 = vmatmul.f32.gmra.mxu0 %v8278
      %v8280 = vpop.f32.mrf.mxu0
      %v8281 = vadd.f32 %v8084, %v8280
      %v8282 = vand.u32 %v6071, 4294901760
      %8283 = vmatmul.f32.gmra.mxu0 %v8282
      %v8284 = vpop.f32.mrf.mxu0
      %v8285 = vadd.f32 %v8092, %v8284
      %v8286 = vand.u32 %v6074, 4294901760
      %8287 = vmatmul.f32.gmra.mxu0 %v8286
      %v8288 = vpop.f32.mrf.mxu0
      %v8289 = vadd.f32 %v8100, %v8288
      %v8290 = vand.u32 %v6077, 4294901760
      %8291 = vmatmul.f32.gmra.mxu0 %v8290
      %v8292 = vpop.f32.mrf.mxu0
      %v8293 = vadd.f32 %v8108, %v8292
      %v8294 = vand.u32 %v6080, 4294901760
      %8295 = vmatmul.f32.gmra.mxu0 %v8294
      %v8296 = vpop.f32.mrf.mxu0
      %v8297 = vadd.f32 %v8116, %v8296
      %v8298 = vand.u32 %v6083, 4294901760
      %8299 = vmatmul.f32.gmra.mxu0 %v8298
      %v8300 = vpop.f32.mrf.mxu0
      %v8301 = vadd.f32 %v8124, %v8300
      %v8302 = vand.u32 %v6086, 4294901760
      %8303 = vmatmul.f32.gmra.mxu0 %v8302
      %v8304 = vpop.f32.mrf.mxu0
      %v8305 = vadd.f32 %v8132, %v8304
      %v8306 = vand.u32 %v6089, 4294901760
      %8307 = vmatmul.f32.gmra.mxu0 %v8306
      %v8308 = vpop.f32.mrf.mxu0
      %v8309 = vadd.f32 %v8140, %v8308
      %v8310 = vand.u32 %v6092, 4294901760
      %8311 = vmatmul.f32.gmra.mxu0 %v8310
      %v8312 = vpop.f32.mrf.mxu0
      %v8313 = vadd.f32 %v8148, %v8312
      %v8314 = vand.u32 %v6095, 4294901760
      %8315 = vmatmul.f32.gmra.mxu0 %v8314
      %v8316 = vpop.f32.mrf.mxu0
      %v8317 = vadd.f32 %v8156, %v8316
      %v8318 = vand.u32 %v6098, 4294901760
      %8319 = vmatmul.f32.gmra.mxu0 %v8318
      %v8320 = vpop.f32.mrf.mxu0
      %v8321 = vadd.f32 %v8164, %v8320
      %v8322 = vand.u32 %v6101, 4294901760
      %8323 = vmatmul.f32.gmra.mxu0 %v8322
      %v8324 = vpop.f32.mrf.mxu0
      %v8325 = vadd.f32 %v8172, %v8324
      %v8326 = vand.u32 %v6104, 4294901760
      %8327 = vmatmul.f32.gmra.mxu0 %v8326
      %v8328 = vpop.f32.mrf.mxu0
      %v8329 = vadd.f32 %v8180, %v8328
      %v8330 = vand.u32 %v6107, 4294901760
      %8331 = vmatmul.f32.gmra.mxu0 %v8330
      %v8332 = vpop.f32.mrf.mxu0
      %v8333 = vadd.f32 %v8188, %v8332
      %v8334 = vand.u32 %v6110, 4294901760
      %8335 = vmatmul.f32.gmra.mxu0 %v8334
      %v8336 = vpop.f32.mrf.mxu0
      %v8337 = vadd.f32 %v8196, %v8336
      %v8338 = vand.u32 %v6113, 4294901760
      %8339 = vmatmul.f32.gmra.mxu0 %v8338
      %v8340 = vpop.f32.mrf.mxu0
      %v8341 = vadd.f32 %v8204, %v8340
      %v8342 = vand.u32 %v6116, 4294901760
      %8343 = vmatmul.f32.gmra.mxu0 %v8342
      %v8344 = vpop.f32.mrf.mxu0
      %v8345 = vadd.f32 %v8212, %v8344
      %v8346 = vand.u32 %v6119, 4294901760
      %8347 = vmatmul.f32.gmra.mxu0 %v8346
      %v8348 = vpop.f32.mrf.mxu0
      %v8349 = vadd.f32 %v8220, %v8348
      %v8350 = vand.u32 %v6122, 4294901760
      %8351 = vmatmul.f32.gmra.mxu0 %v8350
      %v8352 = vpop.f32.mrf.mxu0
      %v8353 = vadd.f32 %v8228, %v8352
      %v8354 = vand.u32 %v6125, 4294901760
      %8355 = vmatmul.f32.gmra.mxu0 %v8354
      %v8356 = vpop.f32.mrf.mxu0
      %v8357 = vadd.f32 %v8236, %v8356
      %8358 = vdwg.mxu0
      %8359 = vmatpush.msra.mxu0 0.0
      %8360 = vmatpush.msra.mxu0 0.0
      %8361 = vmatpush.msra.mxu0 0.0
      %8362 = vmatpush.msra.mxu0 0.0
      %8363 = vmatpush.msra.mxu0 0.0
      %8364 = vmatpush.msra.mxu0 0.0
      %8365 = vmatpush.msra.mxu0 0.0
      %8366 = vmatpush.msra.mxu0 0.0
      %8367 = vmatpush.msra.mxu0 0.0
      %8368 = vmatpush.msra.mxu0 0.0
      %8369 = vmatpush.msra.mxu0 0.0
      %8370 = vmatpush.msra.mxu0 0.0
      %v8371 = vand.u32 %v6058, 4294901760
      %v8372 = vsub.f32 %v6058, %v8371
      %8373 = vmatpush.msra.mxu0 %v8372
      %v8374 = vand.u32 %v6057, 4294901760
      %v8375 = vsub.f32 %v6057, %v8374
      %8376 = vmatpush.msra.mxu0 %v8375
      %v8377 = vand.u32 %v6056, 4294901760
      %v8378 = vsub.f32 %v6056, %v8377
      %8379 = vmatpush.msra.mxu0 %v8378
      %v8380 = vand.u32 %v6055, 4294901760
      %v8381 = vsub.f32 %v6055, %v8380
      %8382 = vmatpush.msra.mxu0 %v8381
      %v8383 = vand.u32 %v6065, 4294901760
      %v8384 = vsub.f32 %v6065, %v8383
      %8385 = vmatmul.f32.gmra.mxu0 %v8384
      %v8386 = vpop.f32.mrf.mxu0
      %v8387 = vadd.f32 %v8277, %v8386
      %v8388 = vand.u32 %v6068, 4294901760
      %v8389 = vsub.f32 %v6068, %v8388
      %8390 = vmatmul.f32.gmra.mxu0 %v8389
      %v8391 = vpop.f32.mrf.mxu0
      %v8392 = vadd.f32 %v8281, %v8391
      %v8393 = vand.u32 %v6071, 4294901760
      %v8394 = vsub.f32 %v6071, %v8393
      %8395 = vmatmul.f32.gmra.mxu0 %v8394
      %v8396 = vpop.f32.mrf.mxu0
      %v8397 = vadd.f32 %v8285, %v8396
      %v8398 = vand.u32 %v6074, 4294901760
      %v8399 = vsub.f32 %v6074, %v8398
      %8400 = vmatmul.f32.gmra.mxu0 %v8399
      %v8401 = vpop.f32.mrf.mxu0
      %v8402 = vadd.f32 %v8289, %v8401
      %v8403 = vand.u32 %v6077, 4294901760
      %v8404 = vsub.f32 %v6077, %v8403
      %8405 = vmatmul.f32.gmra.mxu0 %v8404
      %v8406 = vpop.f32.mrf.mxu0
      %v8407 = vadd.f32 %v8293, %v8406
      %v8408 = vand.u32 %v6080, 4294901760
      %v8409 = vsub.f32 %v6080, %v8408
      %8410 = vmatmul.f32.gmra.mxu0 %v8409
      %v8411 = vpop.f32.mrf.mxu0
      %v8412 = vadd.f32 %v8297, %v8411
      %v8413 = vand.u32 %v6083, 4294901760
      %v8414 = vsub.f32 %v6083, %v8413
      %8415 = vmatmul.f32.gmra.mxu0 %v8414
      %v8416 = vpop.f32.mrf.mxu0
      %v8417 = vadd.f32 %v8301, %v8416
      %v8418 = vand.u32 %v6086, 4294901760
      %v8419 = vsub.f32 %v6086, %v8418
      %8420 = vmatmul.f32.gmra.mxu0 %v8419
      %v8421 = vpop.f32.mrf.mxu0
      %v8422 = vadd.f32 %v8305, %v8421
      %v8423 = vand.u32 %v6089, 4294901760
      %v8424 = vsub.f32 %v6089, %v8423
      %8425 = vmatmul.f32.gmra.mxu0 %v8424
      %v8426 = vpop.f32.mrf.mxu0
      %v8427 = vadd.f32 %v8309, %v8426
      %v8428 = vand.u32 %v6092, 4294901760
      %v8429 = vsub.f32 %v6092, %v8428
      %8430 = vmatmul.f32.gmra.mxu0 %v8429
      %v8431 = vpop.f32.mrf.mxu0
      %v8432 = vadd.f32 %v8313, %v8431
      %v8433 = vand.u32 %v6095, 4294901760
      %v8434 = vsub.f32 %v6095, %v8433
      %8435 = vmatmul.f32.gmra.mxu0 %v8434
      %v8436 = vpop.f32.mrf.mxu0
      %v8437 = vadd.f32 %v8317, %v8436
      %v8438 = vand.u32 %v6098, 4294901760
      %v8439 = vsub.f32 %v6098, %v8438
      %8440 = vmatmul.f32.gmra.mxu0 %v8439
      %v8441 = vpop.f32.mrf.mxu0
      %v8442 = vadd.f32 %v8321, %v8441
      %v8443 = vand.u32 %v6101, 4294901760
      %v8444 = vsub.f32 %v6101, %v8443
      %8445 = vmatmul.f32.gmra.mxu0 %v8444
      %v8446 = vpop.f32.mrf.mxu0
      %v8447 = vadd.f32 %v8325, %v8446
      %v8448 = vand.u32 %v6104, 4294901760
      %v8449 = vsub.f32 %v6104, %v8448
      %8450 = vmatmul.f32.gmra.mxu0 %v8449
      %v8451 = vpop.f32.mrf.mxu0
      %v8452 = vadd.f32 %v8329, %v8451
      %v8453 = vand.u32 %v6107, 4294901760
      %v8454 = vsub.f32 %v6107, %v8453
      %8455 = vmatmul.f32.gmra.mxu0 %v8454
      %v8456 = vpop.f32.mrf.mxu0
      %v8457 = vadd.f32 %v8333, %v8456
      %v8458 = vand.u32 %v6110, 4294901760
      %v8459 = vsub.f32 %v6110, %v8458
      %8460 = vmatmul.f32.gmra.mxu0 %v8459
      %v8461 = vpop.f32.mrf.mxu0
      %v8462 = vadd.f32 %v8337, %v8461
      %v8463 = vand.u32 %v6113, 4294901760
      %v8464 = vsub.f32 %v6113, %v8463
      %8465 = vmatmul.f32.gmra.mxu0 %v8464
      %v8466 = vpop.f32.mrf.mxu0
      %v8467 = vadd.f32 %v8341, %v8466
      %v8468 = vand.u32 %v6116, 4294901760
      %v8469 = vsub.f32 %v6116, %v8468
      %8470 = vmatmul.f32.gmra.mxu0 %v8469
      %v8471 = vpop.f32.mrf.mxu0
      %v8472 = vadd.f32 %v8345, %v8471
      %v8473 = vand.u32 %v6119, 4294901760
      %v8474 = vsub.f32 %v6119, %v8473
      %8475 = vmatmul.f32.gmra.mxu0 %v8474
      %v8476 = vpop.f32.mrf.mxu0
      %v8477 = vadd.f32 %v8349, %v8476
      %v8478 = vand.u32 %v6122, 4294901760
      %v8479 = vsub.f32 %v6122, %v8478
      %8480 = vmatmul.f32.gmra.mxu0 %v8479
      %v8481 = vpop.f32.mrf.mxu0
      %v8482 = vadd.f32 %v8353, %v8481
      %v8483 = vand.u32 %v6125, 4294901760
      %v8484 = vsub.f32 %v6125, %v8483
      %8485 = vmatmul.f32.gmra.mxu0 %v8484
      %v8486 = vpop.f32.mrf.mxu0
      %v8487 = vadd.f32 %v8357, %v8486
      %8488 = vdwg.mxu0
      %8489 = vmatpush.msra.mxu0 0.0
      %8490 = vmatpush.msra.mxu0 0.0
      %8491 = vmatpush.msra.mxu0 0.0
      %8492 = vmatpush.msra.mxu0 0.0
      %8493 = vmatpush.msra.mxu0 0.0
      %8494 = vmatpush.msra.mxu0 0.0
      %8495 = vmatpush.msra.mxu0 0.0
      %8496 = vmatpush.msra.mxu0 0.0
      %8497 = vmatpush.msra.mxu0 0.0
      %8498 = vmatpush.msra.mxu0 0.0
      %8499 = vmatpush.msra.mxu0 0.0
      %8500 = vmatpush.msra.mxu0 0.0
      %v8501 = vand.u32 %v6058, 4294901760
      %8502 = vmatpush.msra.mxu0 %v8501
      %v8503 = vand.u32 %v6057, 4294901760
      %8504 = vmatpush.msra.mxu0 %v8503
      %v8505 = vand.u32 %v6056, 4294901760
      %8506 = vmatpush.msra.mxu0 %v8505
      %v8507 = vand.u32 %v6055, 4294901760
      %8508 = vmatpush.msra.mxu0 %v8507
      %v8509 = vand.u32 %v6065, 4294901760
      %v8510 = vsub.f32 %v6065, %v8509
      %v8511 = vand.u32 %v8510, 4294901760
      %8512 = vmatmul.f32.gmra.mxu0 %v8511
      %v8513 = vpop.f32.mrf.mxu0
      %v8514 = vadd.f32 %v8387, %v8513
      %v8515 = vand.u32 %v6068, 4294901760
      %v8516 = vsub.f32 %v6068, %v8515
      %v8517 = vand.u32 %v8516, 4294901760
      %8518 = vmatmul.f32.gmra.mxu0 %v8517
      %v8519 = vpop.f32.mrf.mxu0
      %v8520 = vadd.f32 %v8392, %v8519
      %v8521 = vand.u32 %v6071, 4294901760
      %v8522 = vsub.f32 %v6071, %v8521
      %v8523 = vand.u32 %v8522, 4294901760
      %8524 = vmatmul.f32.gmra.mxu0 %v8523
      %v8525 = vpop.f32.mrf.mxu0
      %v8526 = vadd.f32 %v8397, %v8525
      %v8527 = vand.u32 %v6074, 4294901760
      %v8528 = vsub.f32 %v6074, %v8527
      %v8529 = vand.u32 %v8528, 4294901760
      %8530 = vmatmul.f32.gmra.mxu0 %v8529
      %v8531 = vpop.f32.mrf.mxu0
      %v8532 = vadd.f32 %v8402, %v8531
      %v8533 = vand.u32 %v6077, 4294901760
      %v8534 = vsub.f32 %v6077, %v8533
      %v8535 = vand.u32 %v8534, 4294901760
      %8536 = vmatmul.f32.gmra.mxu0 %v8535
      %v8537 = vpop.f32.mrf.mxu0
      %v8538 = vadd.f32 %v8407, %v8537
      %v8539 = vand.u32 %v6080, 4294901760
      %v8540 = vsub.f32 %v6080, %v8539
      %v8541 = vand.u32 %v8540, 4294901760
      %8542 = vmatmul.f32.gmra.mxu0 %v8541
      %v8543 = vpop.f32.mrf.mxu0
      %v8544 = vadd.f32 %v8412, %v8543
      %v8545 = vand.u32 %v6083, 4294901760
      %v8546 = vsub.f32 %v6083, %v8545
      %v8547 = vand.u32 %v8546, 4294901760
      %8548 = vmatmul.f32.gmra.mxu0 %v8547
      %v8549 = vpop.f32.mrf.mxu0
      %v8550 = vadd.f32 %v8417, %v8549
      %v8551 = vand.u32 %v6086, 4294901760
      %v8552 = vsub.f32 %v6086, %v8551
      %v8553 = vand.u32 %v8552, 4294901760
      %8554 = vmatmul.f32.gmra.mxu0 %v8553
      %v8555 = vpop.f32.mrf.mxu0
      %v8556 = vadd.f32 %v8422, %v8555
      %v8557 = vand.u32 %v6089, 4294901760
      %v8558 = vsub.f32 %v6089, %v8557
      %v8559 = vand.u32 %v8558, 4294901760
      %8560 = vmatmul.f32.gmra.mxu0 %v8559
      %v8561 = vpop.f32.mrf.mxu0
      %v8562 = vadd.f32 %v8427, %v8561
      %v8563 = vand.u32 %v6092, 4294901760
      %v8564 = vsub.f32 %v6092, %v8563
      %v8565 = vand.u32 %v8564, 4294901760
      %8566 = vmatmul.f32.gmra.mxu0 %v8565
      %v8567 = vpop.f32.mrf.mxu0
      %v8568 = vadd.f32 %v8432, %v8567
      %v8569 = vand.u32 %v6095, 4294901760
      %v8570 = vsub.f32 %v6095, %v8569
      %v8571 = vand.u32 %v8570, 4294901760
      %8572 = vmatmul.f32.gmra.mxu0 %v8571
      %v8573 = vpop.f32.mrf.mxu0
      %v8574 = vadd.f32 %v8437, %v8573
      %v8575 = vand.u32 %v6098, 4294901760
      %v8576 = vsub.f32 %v6098, %v8575
      %v8577 = vand.u32 %v8576, 4294901760
      %8578 = vmatmul.f32.gmra.mxu0 %v8577
      %v8579 = vpop.f32.mrf.mxu0
      %v8580 = vadd.f32 %v8442, %v8579
      %v8581 = vand.u32 %v6101, 4294901760
      %v8582 = vsub.f32 %v6101, %v8581
      %v8583 = vand.u32 %v8582, 4294901760
      %8584 = vmatmul.f32.gmra.mxu0 %v8583
      %v8585 = vpop.f32.mrf.mxu0
      %v8586 = vadd.f32 %v8447, %v8585
      %v8587 = vand.u32 %v6104, 4294901760
      %v8588 = vsub.f32 %v6104, %v8587
      %v8589 = vand.u32 %v8588, 4294901760
      %8590 = vmatmul.f32.gmra.mxu0 %v8589
      %v8591 = vpop.f32.mrf.mxu0
      %v8592 = vadd.f32 %v8452, %v8591
      %v8593 = vand.u32 %v6107, 4294901760
      %v8594 = vsub.f32 %v6107, %v8593
      %v8595 = vand.u32 %v8594, 4294901760
      %8596 = vmatmul.f32.gmra.mxu0 %v8595
      %v8597 = vpop.f32.mrf.mxu0
      %v8598 = vadd.f32 %v8457, %v8597
      %v8599 = vand.u32 %v6110, 4294901760
      %v8600 = vsub.f32 %v6110, %v8599
      %v8601 = vand.u32 %v8600, 4294901760
      %8602 = vmatmul.f32.gmra.mxu0 %v8601
      %v8603 = vpop.f32.mrf.mxu0
      %v8604 = vadd.f32 %v8462, %v8603
      %v8605 = vand.u32 %v6113, 4294901760
      %v8606 = vsub.f32 %v6113, %v8605
      %v8607 = vand.u32 %v8606, 4294901760
      %8608 = vmatmul.f32.gmra.mxu0 %v8607
      %v8609 = vpop.f32.mrf.mxu0
      %v8610 = vadd.f32 %v8467, %v8609
      %v8611 = vand.u32 %v6116, 4294901760
      %v8612 = vsub.f32 %v6116, %v8611
      %v8613 = vand.u32 %v8612, 4294901760
      %8614 = vmatmul.f32.gmra.mxu0 %v8613
      %v8615 = vpop.f32.mrf.mxu0
      %v8616 = vadd.f32 %v8472, %v8615
      %v8617 = vand.u32 %v6119, 4294901760
      %v8618 = vsub.f32 %v6119, %v8617
      %v8619 = vand.u32 %v8618, 4294901760
      %8620 = vmatmul.f32.gmra.mxu0 %v8619
      %v8621 = vpop.f32.mrf.mxu0
      %v8622 = vadd.f32 %v8477, %v8621
      %v8623 = vand.u32 %v6122, 4294901760
      %v8624 = vsub.f32 %v6122, %v8623
      %v8625 = vand.u32 %v8624, 4294901760
      %8626 = vmatmul.f32.gmra.mxu0 %v8625
      %v8627 = vpop.f32.mrf.mxu0
      %v8628 = vadd.f32 %v8482, %v8627
      %v8629 = vand.u32 %v6125, 4294901760
      %v8630 = vsub.f32 %v6125, %v8629
      %v8631 = vand.u32 %v8630, 4294901760
      %8632 = vmatmul.f32.gmra.mxu0 %v8631
      %v8633 = vpop.f32.mrf.mxu0
      %v8634 = vadd.f32 %v8487, %v8633
      %8635 = vdwg.mxu0
      %8636 = vmatpush.msra.mxu0 0.0
      %8637 = vmatpush.msra.mxu0 0.0
      %8638 = vmatpush.msra.mxu0 0.0
      %8639 = vmatpush.msra.mxu0 0.0
      %8640 = vmatpush.msra.mxu0 0.0
      %8641 = vmatpush.msra.mxu0 0.0
      %8642 = vmatpush.msra.mxu0 0.0
      %8643 = vmatpush.msra.mxu0 0.0
      %8644 = vmatpush.msra.mxu0 0.0
      %8645 = vmatpush.msra.mxu0 0.0
      %8646 = vmatpush.msra.mxu0 0.0
      %8647 = vmatpush.msra.mxu0 0.0
      %v8648 = vand.u32 %v6058, 4294901760
      %v8649 = vsub.f32 %v6058, %v8648
      %v8650 = vand.u32 %v8649, 4294901760
      %8651 = vmatpush.msra.mxu0 %v8650
      %v8652 = vand.u32 %v6057, 4294901760
      %v8653 = vsub.f32 %v6057, %v8652
      %v8654 = vand.u32 %v8653, 4294901760
      %8655 = vmatpush.msra.mxu0 %v8654
      %v8656 = vand.u32 %v6056, 4294901760
      %v8657 = vsub.f32 %v6056, %v8656
      %v8658 = vand.u32 %v8657, 4294901760
      %8659 = vmatpush.msra.mxu0 %v8658
      %v8660 = vand.u32 %v6055, 4294901760
      %v8661 = vsub.f32 %v6055, %v8660
      %v8662 = vand.u32 %v8661, 4294901760
      %8663 = vmatpush.msra.mxu0 %v8662
      %v8664 = vand.u32 %v6065, 4294901760
      %8665 = vmatmul.f32.gmra.mxu0 %v8664
      %v8666 = vpop.f32.mrf.mxu0
      %v8667 = vadd.f32 %v8514, %v8666
      %v8668 = vand.u32 %v6068, 4294901760
      %8669 = vmatmul.f32.gmra.mxu0 %v8668
      %v8670 = vpop.f32.mrf.mxu0
      %v8671 = vadd.f32 %v8520, %v8670
      %v8672 = vand.u32 %v6071, 4294901760
      %8673 = vmatmul.f32.gmra.mxu0 %v8672
      %v8674 = vpop.f32.mrf.mxu0
      %v8675 = vadd.f32 %v8526, %v8674
      %v8676 = vand.u32 %v6074, 4294901760
      %8677 = vmatmul.f32.gmra.mxu0 %v8676
      %v8678 = vpop.f32.mrf.mxu0
      %v8679 = vadd.f32 %v8532, %v8678
      %v8680 = vand.u32 %v6077, 4294901760
      %8681 = vmatmul.f32.gmra.mxu0 %v8680
      %v8682 = vpop.f32.mrf.mxu0
      %v8683 = vadd.f32 %v8538, %v8682
      %v8684 = vand.u32 %v6080, 4294901760
      %8685 = vmatmul.f32.gmra.mxu0 %v8684
      %v8686 = vpop.f32.mrf.mxu0
      %v8687 = vadd.f32 %v8544, %v8686
      %v8688 = vand.u32 %v6083, 4294901760
      %8689 = vmatmul.f32.gmra.mxu0 %v8688
      %v8690 = vpop.f32.mrf.mxu0
      %v8691 = vadd.f32 %v8550, %v8690
      %v8692 = vand.u32 %v6086, 4294901760
      %8693 = vmatmul.f32.gmra.mxu0 %v8692
      %v8694 = vpop.f32.mrf.mxu0
      %v8695 = vadd.f32 %v8556, %v8694
      %v8696 = vand.u32 %v6089, 4294901760
      %8697 = vmatmul.f32.gmra.mxu0 %v8696
      %v8698 = vpop.f32.mrf.mxu0
      %v8699 = vadd.f32 %v8562, %v8698
      %v8700 = vand.u32 %v6092, 4294901760
      %8701 = vmatmul.f32.gmra.mxu0 %v8700
      %v8702 = vpop.f32.mrf.mxu0
      %v8703 = vadd.f32 %v8568, %v8702
      %v8704 = vand.u32 %v6095, 4294901760
      %8705 = vmatmul.f32.gmra.mxu0 %v8704
      %v8706 = vpop.f32.mrf.mxu0
      %v8707 = vadd.f32 %v8574, %v8706
      %v8708 = vand.u32 %v6098, 4294901760
      %8709 = vmatmul.f32.gmra.mxu0 %v8708
      %v8710 = vpop.f32.mrf.mxu0
      %v8711 = vadd.f32 %v8580, %v8710
      %v8712 = vand.u32 %v6101, 4294901760
      %8713 = vmatmul.f32.gmra.mxu0 %v8712
      %v8714 = vpop.f32.mrf.mxu0
      %v8715 = vadd.f32 %v8586, %v8714
      %v8716 = vand.u32 %v6104, 4294901760
      %8717 = vmatmul.f32.gmra.mxu0 %v8716
      %v8718 = vpop.f32.mrf.mxu0
      %v8719 = vadd.f32 %v8592, %v8718
      %v8720 = vand.u32 %v6107, 4294901760
      %8721 = vmatmul.f32.gmra.mxu0 %v8720
      %v8722 = vpop.f32.mrf.mxu0
      %v8723 = vadd.f32 %v8598, %v8722
      %v8724 = vand.u32 %v6110, 4294901760
      %8725 = vmatmul.f32.gmra.mxu0 %v8724
      %v8726 = vpop.f32.mrf.mxu0
      %v8727 = vadd.f32 %v8604, %v8726
      %v8728 = vand.u32 %v6113, 4294901760
      %8729 = vmatmul.f32.gmra.mxu0 %v8728
      %v8730 = vpop.f32.mrf.mxu0
      %v8731 = vadd.f32 %v8610, %v8730
      %v8732 = vand.u32 %v6116, 4294901760
      %8733 = vmatmul.f32.gmra.mxu0 %v8732
      %v8734 = vpop.f32.mrf.mxu0
      %v8735 = vadd.f32 %v8616, %v8734
      %v8736 = vand.u32 %v6119, 4294901760
      %8737 = vmatmul.f32.gmra.mxu0 %v8736
      %v8738 = vpop.f32.mrf.mxu0
      %v8739 = vadd.f32 %v8622, %v8738
      %v8740 = vand.u32 %v6122, 4294901760
      %8741 = vmatmul.f32.gmra.mxu0 %v8740
      %v8742 = vpop.f32.mrf.mxu0
      %v8743 = vadd.f32 %v8628, %v8742
      %v8744 = vand.u32 %v6125, 4294901760
      %8745 = vmatmul.f32.gmra.mxu0 %v8744
      %v8746 = vpop.f32.mrf.mxu0
      %v8747 = vadd.f32 %v8634, %v8746
      %8748 = vdwg.mxu0
      %8749 = vmatpush.msra.mxu0 0.0
      %8750 = vmatpush.msra.mxu0 0.0
      %8751 = vmatpush.msra.mxu0 0.0
      %8752 = vmatpush.msra.mxu0 0.0
      %8753 = vmatpush.msra.mxu0 0.0
      %8754 = vmatpush.msra.mxu0 0.0
      %8755 = vmatpush.msra.mxu0 0.0
      %8756 = vmatpush.msra.mxu0 0.0
      %8757 = vmatpush.msra.mxu0 0.0
      %8758 = vmatpush.msra.mxu0 0.0
      %8759 = vmatpush.msra.mxu0 0.0
      %8760 = vmatpush.msra.mxu0 0.0
      %v8761 = vand.u32 %v6058, 4294901760
      %8762 = vmatpush.msra.mxu0 %v8761
      %v8763 = vand.u32 %v6057, 4294901760
      %8764 = vmatpush.msra.mxu0 %v8763
      %v8765 = vand.u32 %v6056, 4294901760
      %8766 = vmatpush.msra.mxu0 %v8765
      %v8767 = vand.u32 %v6055, 4294901760
      %8768 = vmatpush.msra.mxu0 %v8767
      %v8769 = vand.u32 %v6065, 4294901760
      %8770 = vmatmul.f32.gmra.mxu0 %v8769
      %v8771 = vpop.f32.mrf.mxu0
      %v8772 = vadd.f32 %v8667, %v8771
      %v8773 = vand.u32 %v6068, 4294901760
      %8774 = vmatmul.f32.gmra.mxu0 %v8773
      %v8775 = vpop.f32.mrf.mxu0
      %v8776 = vadd.f32 %v8671, %v8775
      %v8777 = vand.u32 %v6071, 4294901760
      %8778 = vmatmul.f32.gmra.mxu0 %v8777
      %v8779 = vpop.f32.mrf.mxu0
      %v8780 = vadd.f32 %v8675, %v8779
      %v8781 = vand.u32 %v6074, 4294901760
      %8782 = vmatmul.f32.gmra.mxu0 %v8781
      %v8783 = vpop.f32.mrf.mxu0
      %v8784 = vadd.f32 %v8679, %v8783
      %v8785 = vand.u32 %v6077, 4294901760
      %8786 = vmatmul.f32.gmra.mxu0 %v8785
      %v8787 = vpop.f32.mrf.mxu0
      %v8788 = vadd.f32 %v8683, %v8787
      %v8789 = vand.u32 %v6080, 4294901760
      %8790 = vmatmul.f32.gmra.mxu0 %v8789
      %v8791 = vpop.f32.mrf.mxu0
      %v8792 = vadd.f32 %v8687, %v8791
      %v8793 = vand.u32 %v6083, 4294901760
      %8794 = vmatmul.f32.gmra.mxu0 %v8793
      %v8795 = vpop.f32.mrf.mxu0
      %v8796 = vadd.f32 %v8691, %v8795
      %v8797 = vand.u32 %v6086, 4294901760
      %8798 = vmatmul.f32.gmra.mxu0 %v8797
      %v8799 = vpop.f32.mrf.mxu0
      %v8800 = vadd.f32 %v8695, %v8799
      %v8801 = vand.u32 %v6089, 4294901760
      %8802 = vmatmul.f32.gmra.mxu0 %v8801
      %v8803 = vpop.f32.mrf.mxu0
      %v8804 = vadd.f32 %v8699, %v8803
      %v8805 = vand.u32 %v6092, 4294901760
      %8806 = vmatmul.f32.gmra.mxu0 %v8805
      %v8807 = vpop.f32.mrf.mxu0
      %v8808 = vadd.f32 %v8703, %v8807
      %v8809 = vand.u32 %v6095, 4294901760
      %8810 = vmatmul.f32.gmra.mxu0 %v8809
      %v8811 = vpop.f32.mrf.mxu0
      %v8812 = vadd.f32 %v8707, %v8811
      %v8813 = vand.u32 %v6098, 4294901760
      %8814 = vmatmul.f32.gmra.mxu0 %v8813
      %v8815 = vpop.f32.mrf.mxu0
      %v8816 = vadd.f32 %v8711, %v8815
      %v8817 = vand.u32 %v6101, 4294901760
      %8818 = vmatmul.f32.gmra.mxu0 %v8817
      %v8819 = vpop.f32.mrf.mxu0
      %v8820 = vadd.f32 %v8715, %v8819
      %v8821 = vand.u32 %v6104, 4294901760
      %8822 = vmatmul.f32.gmra.mxu0 %v8821
      %v8823 = vpop.f32.mrf.mxu0
      %v8824 = vadd.f32 %v8719, %v8823
      %v8825 = vand.u32 %v6107, 4294901760
      %8826 = vmatmul.f32.gmra.mxu0 %v8825
      %v8827 = vpop.f32.mrf.mxu0
      %v8828 = vadd.f32 %v8723, %v8827
      %v8829 = vand.u32 %v6110, 4294901760
      %8830 = vmatmul.f32.gmra.mxu0 %v8829
      %v8831 = vpop.f32.mrf.mxu0
      %v8832 = vadd.f32 %v8727, %v8831
      %v8833 = vand.u32 %v6113, 4294901760
      %8834 = vmatmul.f32.gmra.mxu0 %v8833
      %v8835 = vpop.f32.mrf.mxu0
      %v8836 = vadd.f32 %v8731, %v8835
      %v8837 = vand.u32 %v6116, 4294901760
      %8838 = vmatmul.f32.gmra.mxu0 %v8837
      %v8839 = vpop.f32.mrf.mxu0
      %v8840 = vadd.f32 %v8735, %v8839
      %v8841 = vand.u32 %v6119, 4294901760
      %8842 = vmatmul.f32.gmra.mxu0 %v8841
      %v8843 = vpop.f32.mrf.mxu0
      %v8844 = vadd.f32 %v8739, %v8843
      %v8845 = vand.u32 %v6122, 4294901760
      %8846 = vmatmul.f32.gmra.mxu0 %v8845
      %v8847 = vpop.f32.mrf.mxu0
      %v8848 = vadd.f32 %v8743, %v8847
      %v8849 = vand.u32 %v6125, 4294901760
      %8850 = vmatmul.f32.gmra.mxu0 %v8849
      %v8851 = vpop.f32.mrf.mxu0
      %v8852 = vadd.f32 %v8747, %v8851
      %8853 = vdwg.mxu0
      %v8854 = vmax.f32 %v8772, 0.0
      %v8855 = vmax.f32 %v8776, 0.0
      %v8856 = vmax.f32 %v8780, 0.0
      %v8857 = vmax.f32 %v8784, 0.0
      %v8858 = vmax.f32 %v8788, 0.0
      %v8859 = vmax.f32 %v8792, 0.0
      %v8860 = vmax.f32 %v8796, 0.0
      %v8861 = vmax.f32 %v8800, 0.0
      %v8862 = vmax.f32 %v8804, 0.0
      %v8863 = vmax.f32 %v8808, 0.0
      %v8864 = vmax.f32 %v8812, 0.0
      %v8865 = vmax.f32 %v8816, 0.0
      %v8866 = vmax.f32 %v8820, 0.0
      %v8867 = vmax.f32 %v8824, 0.0
      %v8868 = vmax.f32 %v8828, 0.0
      %v8869 = vmax.f32 %v8832, 0.0
      %v8870 = vmax.f32 %v8836, 0.0
      %v8871 = vmax.f32 %v8840, 0.0
      %v8872 = vmax.f32 %v8844, 0.0
      %v8873 = vmax.f32 %v8848, 0.0
      %v8874 = vmax.f32 %v8852, 0.0
      %8875 = vst.msk [vmem:[#allocation2] sm:$0xff] %vm1450, %v8854
      %8876 = vst.msk [vmem:[#allocation2 + $0x8] sm:$0xff] %vm1450, %v8855
      %8877 = vst.msk [vmem:[#allocation2 + $0x10] sm:$0xff] %vm1450, %v8856
      %8878 = vst.msk [vmem:[#allocation2 + $0x18] sm:$0xff] %vm1450, %v8857
      %8879 = vst.msk [vmem:[#allocation2 + $0x20] sm:$0xff] %vm1450, %v8858
      %8880 = vst.msk [vmem:[#allocation2 + $0x28] sm:$0xff] %vm1450, %v8859
      %8881 = vst.msk [vmem:[#allocation2 + $0x30] sm:$0xff] %vm1450, %v8860
      %8882 = vst.msk [vmem:[#allocation2 + $0x38] sm:$0xff] %vm1450, %v8861
      %8883 = vst.msk [vmem:[#allocation2 + $0x40] sm:$0xff] %vm1450, %v8862
      %8884 = vst.msk [vmem:[#allocation2 + $0x48] sm:$0xff] %vm1450, %v8863
      %8885 = vst.msk [vmem:[#allocation2 + $0x50] sm:$0xff] %vm1450, %v8864
      %8886 = vst.msk [vmem:[#allocation2 + $0x58] sm:$0xff] %vm1450, %v8865
      %8887 = vst.msk [vmem:[#allocation2 + $0x60] sm:$0xff] %vm1450, %v8866
      %8888 = vst.msk [vmem:[#allocation2 + $0x68] sm:$0xff] %vm1450, %v8867
      %8889 = vst.msk [vmem:[#allocation2 + $0x70] sm:$0xff] %vm1450, %v8868
      %8890 = vst.msk [vmem:[#allocation2 + $0x78] sm:$0xff] %vm1450, %v8869
      %8891 = vst.msk [vmem:[#allocation2 + $0x80] sm:$0xff] %vm1450, %v8870
      %8892 = vst.msk [vmem:[#allocation2 + $0x88] sm:$0xff] %vm1450, %v8871
      %8893 = vst.msk [vmem:[#allocation2 + $0x90] sm:$0xff] %vm1450, %v8872
      %8894 = vst.msk [vmem:[#allocation2 + $0x98] sm:$0xff] %vm1450, %v8873
      %vm8895 = vcmask 258048
      %8896 = vst.msk [vmem:[#allocation2 + $0xa0] sm:$0x1f] %vm8895, %v8874
      %v8897 = vld [vmem:[#allocation2] sm:$0xff]
      %v8898 = vld [vmem:[#allocation2 + $0x8] sm:$0xff]
      %v8899 = vld [vmem:[#allocation2 + $0x10] sm:$0xff]
      %v8900 = vld [vmem:[#allocation2 + $0x18] sm:$0xff]
      %v8901 = vld [vmem:[#allocation2 + $0x20] sm:$0xff]
      %v8902 = vld [vmem:[#allocation2 + $0x28] sm:$0xff]
      %v8903 = vld [vmem:[#allocation2 + $0x30] sm:$0xff]
      %v8904 = vld [vmem:[#allocation2 + $0x38] sm:$0xff]
      %v8905 = vld [vmem:[#allocation2 + $0x40] sm:$0xff]
      %v8906 = vld [vmem:[#allocation2 + $0x48] sm:$0xff]
      %v8907 = vld [vmem:[#allocation2 + $0x50] sm:$0xff]
      %v8908 = vld [vmem:[#allocation2 + $0x58] sm:$0xff]
      %v8909 = vld [vmem:[#allocation2 + $0x60] sm:$0xff]
      %v8910 = vld [vmem:[#allocation2 + $0x68] sm:$0xff]
      %v8911 = vld [vmem:[#allocation2 + $0x70] sm:$0xff]
      %v8912 = vld [vmem:[#allocation2 + $0x78] sm:$0xff]
      %v8913 = vld [vmem:[#allocation2 + $0x80] sm:$0x7f]
      %v8914 = vld [vmem:[#allocation2 + $0x1] sm:$0xff]
      %v8915 = vld [vmem:[#allocation2 + $0x9] sm:$0xff]
      %v8916 = vld [vmem:[#allocation2 + $0x11] sm:$0xff]
      %v8917 = vld [vmem:[#allocation2 + $0x19] sm:$0xff]
      %v8918 = vld [vmem:[#allocation2 + $0x21] sm:$0xff]
      %v8919 = vld [vmem:[#allocation2 + $0x29] sm:$0xff]
      %v8920 = vld [vmem:[#allocation2 + $0x31] sm:$0xff]
      %v8921 = vld [vmem:[#allocation2 + $0x39] sm:$0xff]
      %v8922 = vld [vmem:[#allocation2 + $0x41] sm:$0xff]
      %v8923 = vld [vmem:[#allocation2 + $0x49] sm:$0xff]
      %v8924 = vld [vmem:[#allocation2 + $0x51] sm:$0xff]
      %v8925 = vld [vmem:[#allocation2 + $0x59] sm:$0xff]
      %v8926 = vld [vmem:[#allocation2 + $0x61] sm:$0xff]
      %v8927 = vld [vmem:[#allocation2 + $0x69] sm:$0xff]
      %v8928 = vld [vmem:[#allocation2 + $0x71] sm:$0xff]
      %v8929 = vld [vmem:[#allocation2 + $0x79] sm:$0xff]
      %v8930 = vld [vmem:[#allocation2 + $0x81] sm:$0x7f]
      %v8931 = vld [vmem:[#allocation2 + $0x2] sm:$0xff]
      %v8932 = vld [vmem:[#allocation2 + $0xa] sm:$0xff]
      %v8933 = vld [vmem:[#allocation2 + $0x12] sm:$0xff]
      %v8934 = vld [vmem:[#allocation2 + $0x1a] sm:$0xff]
      %v8935 = vld [vmem:[#allocation2 + $0x22] sm:$0xff]
      %v8936 = vld [vmem:[#allocation2 + $0x2a] sm:$0xff]
      %v8937 = vld [vmem:[#allocation2 + $0x32] sm:$0xff]
      %v8938 = vld [vmem:[#allocation2 + $0x3a] sm:$0xff]
      %v8939 = vld [vmem:[#allocation2 + $0x42] sm:$0xff]
      %v8940 = vld [vmem:[#allocation2 + $0x4a] sm:$0xff]
      %v8941 = vld [vmem:[#allocation2 + $0x52] sm:$0xff]
      %v8942 = vld [vmem:[#allocation2 + $0x5a] sm:$0xff]
      %v8943 = vld [vmem:[#allocation2 + $0x62] sm:$0xff]
      %v8944 = vld [vmem:[#allocation2 + $0x6a] sm:$0xff]
      %v8945 = vld [vmem:[#allocation2 + $0x72] sm:$0xff]
      %v8946 = vld [vmem:[#allocation2 + $0x7a] sm:$0xff]
      %v8947 = vld [vmem:[#allocation2 + $0x82] sm:$0x7f]
      %v8948 = vld [vmem:[#allocation2 + $0xf] sm:$0xff]
      %v8949 = vld [vmem:[#allocation2 + $0x17] sm:$0xff]
      %v8950 = vld [vmem:[#allocation2 + $0x1f] sm:$0xff]
      %v8951 = vld [vmem:[#allocation2 + $0x27] sm:$0xff]
      %v8952 = vld [vmem:[#allocation2 + $0x2f] sm:$0xff]
      %v8953 = vld [vmem:[#allocation2 + $0x37] sm:$0xff]
      %v8954 = vld [vmem:[#allocation2 + $0x3f] sm:$0xff]
      %v8955 = vld [vmem:[#allocation2 + $0x47] sm:$0xff]
      %v8956 = vld [vmem:[#allocation2 + $0x4f] sm:$0xff]
      %v8957 = vld [vmem:[#allocation2 + $0x57] sm:$0xff]
      %v8958 = vld [vmem:[#allocation2 + $0x5f] sm:$0xff]
      %v8959 = vld [vmem:[#allocation2 + $0x67] sm:$0xff]
      %v8960 = vld [vmem:[#allocation2 + $0x6f] sm:$0xff]
      %v8961 = vld [vmem:[#allocation2 + $0x77] sm:$0xff]
      %v8962 = vld [vmem:[#allocation2 + $0x7f] sm:$0xff]
      %v8963 = vld [vmem:[#allocation2 + $0x87] sm:$0xff]
      %v8964 = vld [vmem:[#allocation2 + $0x8f] sm:$0x7f]
      %v8965 = vld [vmem:[#allocation2 + $0x80] sm:$0xff]
      %v8966 = vld [vmem:[#allocation2 + $0x88] sm:$0xff]
      %v8967 = vld [vmem:[#allocation2 + $0x90] sm:$0x7f]
      %v8968 = vld [vmem:[#allocation2 + $0x81] sm:$0xff]
      %v8969 = vld [vmem:[#allocation2 + $0x89] sm:$0xff]
      %v8970 = vld [vmem:[#allocation2 + $0x91] sm:$0x7f]
      %v8971 = vld [vmem:[#allocation2 + $0x1e] sm:$0xff]
      %v8972 = vld [vmem:[#allocation2 + $0x26] sm:$0xff]
      %v8973 = vld [vmem:[#allocation2 + $0x2e] sm:$0xff]
      %v8974 = vld [vmem:[#allocation2 + $0x36] sm:$0xff]
      %v8975 = vld [vmem:[#allocation2 + $0x3e] sm:$0xff]
      %v8976 = vld [vmem:[#allocation2 + $0x46] sm:$0xff]
      %v8977 = vld [vmem:[#allocation2 + $0x4e] sm:$0xff]
      %v8978 = vld [vmem:[#allocation2 + $0x56] sm:$0xff]
      %v8979 = vld [vmem:[#allocation2 + $0x5e] sm:$0xff]
      %v8980 = vld [vmem:[#allocation2 + $0x66] sm:$0xff]
      %v8981 = vld [vmem:[#allocation2 + $0x6e] sm:$0xff]
      %v8982 = vld [vmem:[#allocation2 + $0x76] sm:$0xff]
      %v8983 = vld [vmem:[#allocation2 + $0x7e] sm:$0xff]
      %v8984 = vld [vmem:[#allocation2 + $0x86] sm:$0xff]
      %v8985 = vld [vmem:[#allocation2 + $0x8e] sm:$0xff]
      %v8986 = vld [vmem:[#allocation2 + $0x96] sm:$0xff]
      %v8987 = vld [vmem:[#allocation2 + $0x9e] sm:$0x7f]
      %v8988 = vld [vmem:[#allocation2 + $0x8f] sm:$0xff]
      %v8989 = vld [vmem:[#allocation2 + $0x97] sm:$0xff]
      %v8990 = vld [vmem:[#allocation2 + $0x9f] sm:$0x7f]
      %v8991 = vld [vmem:[#allocation2 + $0x90] sm:$0xff]
      %v8992 = vld [vmem:[#allocation2 + $0x98] sm:$0xff]
      %v8993 = vld [vmem:[#allocation2 + $0xa0] sm:$0x7f]
      %9011 = vrot.lane.b32.xlu0 %v8914, 32
      %v9012 = vpop.permute.xlu0 %9011
      %9013 = vrot.lane.b32.xlu0 %v8915, 32
      %v9014 = vpop.permute.xlu0 %9013
      %9015 = vrot.lane.b32.xlu0 %v8916, 32
      %v9016 = vpop.permute.xlu0 %9015
      %9017 = vrot.lane.b32.xlu0 %v8917, 32
      %v9018 = vpop.permute.xlu0 %9017
      %9019 = vrot.lane.b32.xlu0 %v8918, 32
      %v9020 = vpop.permute.xlu0 %9019
      %9021 = vrot.lane.b32.xlu0 %v8919, 32
      %v9022 = vpop.permute.xlu0 %9021
      %9023 = vrot.lane.b32.xlu0 %v8920, 32
      %v9024 = vpop.permute.xlu0 %9023
      %9025 = vrot.lane.b32.xlu0 %v8921, 32
      %v9026 = vpop.permute.xlu0 %9025
      %9027 = vrot.lane.b32.xlu0 %v8922, 32
      %v9028 = vpop.permute.xlu0 %9027
      %9029 = vrot.lane.b32.xlu0 %v8923, 32
      %v9030 = vpop.permute.xlu0 %9029
      %9031 = vrot.lane.b32.xlu0 %v8924, 32
      %v9032 = vpop.permute.xlu0 %9031
      %9033 = vrot.lane.b32.xlu0 %v8925, 32
      %v9034 = vpop.permute.xlu0 %9033
      %9035 = vrot.lane.b32.xlu0 %v8926, 32
      %v9036 = vpop.permute.xlu0 %9035
      %9037 = vrot.lane.b32.xlu0 %v8927, 32
      %v9038 = vpop.permute.xlu0 %9037
      %9039 = vrot.lane.b32.xlu0 %v8928, 32
      %v9040 = vpop.permute.xlu0 %9039
      %9041 = vrot.lane.b32.xlu0 %v8929, 32
      %v9042 = vpop.permute.xlu0 %9041
      %9043 = vrot.lane.b32.xlu0 %v8930, 32
      %v9044 = vpop.permute.xlu0 %9043
      %9079 = vrot.lane.b32.xlu0 %v8931, 64
      %v9080 = vpop.permute.xlu0 %9079
      %9081 = vrot.lane.b32.xlu0 %v8932, 64
      %v9082 = vpop.permute.xlu0 %9081
      %9083 = vrot.lane.b32.xlu0 %v8933, 64
      %v9084 = vpop.permute.xlu0 %9083
      %9085 = vrot.lane.b32.xlu0 %v8934, 64
      %v9086 = vpop.permute.xlu0 %9085
      %9087 = vrot.lane.b32.xlu0 %v8935, 64
      %v9088 = vpop.permute.xlu0 %9087
      %9089 = vrot.lane.b32.xlu0 %v8936, 64
      %v9090 = vpop.permute.xlu0 %9089
      %9091 = vrot.lane.b32.xlu0 %v8937, 64
      %v9092 = vpop.permute.xlu0 %9091
      %9093 = vrot.lane.b32.xlu0 %v8938, 64
      %v9094 = vpop.permute.xlu0 %9093
      %9095 = vrot.lane.b32.xlu0 %v8939, 64
      %v9096 = vpop.permute.xlu0 %9095
      %9097 = vrot.lane.b32.xlu0 %v8940, 64
      %v9098 = vpop.permute.xlu0 %9097
      %9099 = vrot.lane.b32.xlu0 %v8941, 64
      %v9100 = vpop.permute.xlu0 %9099
      %9101 = vrot.lane.b32.xlu0 %v8942, 64
      %v9102 = vpop.permute.xlu0 %9101
      %9103 = vrot.lane.b32.xlu0 %v8943, 64
      %v9104 = vpop.permute.xlu0 %9103
      %9105 = vrot.lane.b32.xlu0 %v8944, 64
      %v9106 = vpop.permute.xlu0 %9105
      %9107 = vrot.lane.b32.xlu0 %v8945, 64
      %v9108 = vpop.permute.xlu0 %9107
      %9109 = vrot.lane.b32.xlu0 %v8946, 64
      %v9110 = vpop.permute.xlu0 %9109
      %9111 = vrot.lane.b32.xlu0 %v8947, 64
      %v9112 = vpop.permute.xlu0 %9111
      %9147 = vrot.lane.b32.xlu0 %v8948, 96
      %v9148 = vpop.permute.xlu0 %9147
      %9149 = vrot.lane.b32.xlu0 %v8949, 96
      %v9150 = vpop.permute.xlu0 %9149
      %9151 = vrot.lane.b32.xlu0 %v8950, 96
      %v9152 = vpop.permute.xlu0 %9151
      %9153 = vrot.lane.b32.xlu0 %v8951, 96
      %v9154 = vpop.permute.xlu0 %9153
      %9155 = vrot.lane.b32.xlu0 %v8952, 96
      %v9156 = vpop.permute.xlu0 %9155
      %9157 = vrot.lane.b32.xlu0 %v8953, 96
      %v9158 = vpop.permute.xlu0 %9157
      %9159 = vrot.lane.b32.xlu0 %v8954, 96
      %v9160 = vpop.permute.xlu0 %9159
      %9161 = vrot.lane.b32.xlu0 %v8955, 96
      %v9162 = vpop.permute.xlu0 %9161
      %9163 = vrot.lane.b32.xlu0 %v8956, 96
      %v9164 = vpop.permute.xlu0 %9163
      %9165 = vrot.lane.b32.xlu0 %v8957, 96
      %v9166 = vpop.permute.xlu0 %9165
      %9167 = vrot.lane.b32.xlu0 %v8958, 96
      %v9168 = vpop.permute.xlu0 %9167
      %9169 = vrot.lane.b32.xlu0 %v8959, 96
      %v9170 = vpop.permute.xlu0 %9169
      %9171 = vrot.lane.b32.xlu0 %v8960, 96
      %v9172 = vpop.permute.xlu0 %9171
      %9173 = vrot.lane.b32.xlu0 %v8961, 96
      %v9174 = vpop.permute.xlu0 %9173
      %9175 = vrot.lane.b32.xlu0 %v8962, 96
      %v9176 = vpop.permute.xlu0 %9175
      %9177 = vrot.lane.b32.xlu0 %v8963, 96
      %v9178 = vpop.permute.xlu0 %9177
      %9179 = vrot.lane.b32.xlu0 %v8964, 96
      %v9180 = vpop.permute.xlu0 %9179
      %9201 = vrot.lane.b32.xlu0 %v8968, 32
      %v9202 = vpop.permute.xlu0 %9201
      %9203 = vrot.lane.b32.xlu0 %v8969, 32
      %v9204 = vpop.permute.xlu0 %9203
      %9205 = vrot.lane.b32.xlu0 %v8970, 32
      %v9206 = vpop.permute.xlu0 %9205
      %9227 = vrot.lane.b32.xlu0 %v8971, 64
      %v9228 = vpop.permute.xlu0 %9227
      %9229 = vrot.lane.b32.xlu0 %v8972, 64
      %v9230 = vpop.permute.xlu0 %9229
      %9231 = vrot.lane.b32.xlu0 %v8973, 64
      %v9232 = vpop.permute.xlu0 %9231
      %9233 = vrot.lane.b32.xlu0 %v8974, 64
      %v9234 = vpop.permute.xlu0 %9233
      %9235 = vrot.lane.b32.xlu0 %v8975, 64
      %v9236 = vpop.permute.xlu0 %9235
      %9237 = vrot.lane.b32.xlu0 %v8976, 64
      %v9238 = vpop.permute.xlu0 %9237
      %9239 = vrot.lane.b32.xlu0 %v8977, 64
      %v9240 = vpop.permute.xlu0 %9239
      %9241 = vrot.lane.b32.xlu0 %v8978, 64
      %v9242 = vpop.permute.xlu0 %9241
      %9243 = vrot.lane.b32.xlu0 %v8979, 64
      %v9244 = vpop.permute.xlu0 %9243
      %9245 = vrot.lane.b32.xlu0 %v8980, 64
      %v9246 = vpop.permute.xlu0 %9245
      %9247 = vrot.lane.b32.xlu0 %v8981, 64
      %v9248 = vpop.permute.xlu0 %9247
      %9249 = vrot.lane.b32.xlu0 %v8982, 64
      %v9250 = vpop.permute.xlu0 %9249
      %9251 = vrot.lane.b32.xlu0 %v8983, 64
      %v9252 = vpop.permute.xlu0 %9251
      %9253 = vrot.lane.b32.xlu0 %v8984, 64
      %v9254 = vpop.permute.xlu0 %9253
      %9255 = vrot.lane.b32.xlu0 %v8985, 64
      %v9256 = vpop.permute.xlu0 %9255
      %9257 = vrot.lane.b32.xlu0 %v8986, 64
      %v9258 = vpop.permute.xlu0 %9257
      %9259 = vrot.lane.b32.xlu0 %v8987, 64
      %v9260 = vpop.permute.xlu0 %9259
      %9281 = vrot.lane.b32.xlu0 %v8988, 96
      %v9282 = vpop.permute.xlu0 %9281
      %9283 = vrot.lane.b32.xlu0 %v8989, 96
      %v9284 = vpop.permute.xlu0 %9283
      %9285 = vrot.lane.b32.xlu0 %v8990, 96
      %v9286 = vpop.permute.xlu0 %9285
      %v9290 = vsel %vm1450, %v8897, %v9012
      %v9291 = vsel %vm1450, %v8898, %v9014
      %v9292 = vsel %vm1450, %v8899, %v9016
      %v9293 = vsel %vm1450, %v8900, %v9018
      %v9294 = vsel %vm1450, %v8901, %v9020
      %v9295 = vsel %vm1450, %v8902, %v9022
      %v9296 = vsel %vm1450, %v8903, %v9024
      %v9297 = vsel %vm1450, %v8904, %v9026
      %v9298 = vsel %vm1450, %v8905, %v9028
      %v9299 = vsel %vm1450, %v8906, %v9030
      %v9300 = vsel %vm1450, %v8907, %v9032
      %v9301 = vsel %vm1450, %v8908, %v9034
      %v9302 = vsel %vm1450, %v8909, %v9036
      %v9303 = vsel %vm1450, %v8910, %v9038
      %v9304 = vsel %vm1450, %v8911, %v9040
      %v9305 = vsel %vm1450, %v8912, %v9042
      %v9306 = vsel %vm1450, %v8913, %v9044
      %v9307 = vsel %vm2067, %v9290, %v9080
      %v9308 = vsel %vm2067, %v9291, %v9082
      %v9309 = vsel %vm2067, %v9292, %v9084
      %v9310 = vsel %vm2067, %v9293, %v9086
      %v9311 = vsel %vm2067, %v9294, %v9088
      %v9312 = vsel %vm2067, %v9295, %v9090
      %v9313 = vsel %vm2067, %v9296, %v9092
      %v9314 = vsel %vm2067, %v9297, %v9094
      %v9315 = vsel %vm2067, %v9298, %v9096
      %v9316 = vsel %vm2067, %v9299, %v9098
      %v9317 = vsel %vm2067, %v9300, %v9100
      %v9318 = vsel %vm2067, %v9301, %v9102
      %v9319 = vsel %vm2067, %v9302, %v9104
      %v9320 = vsel %vm2067, %v9303, %v9106
      %v9321 = vsel %vm2067, %v9304, %v9108
      %v9322 = vsel %vm2067, %v9305, %v9110
      %v9323 = vsel %vm2067, %v9306, %v9112
      %v9324 = vsel %vm2093, %v9307, %v9148
      %v9325 = vsel %vm2093, %v9308, %v9150
      %v9326 = vsel %vm2093, %v9309, %v9152
      %v9327 = vsel %vm2093, %v9310, %v9154
      %v9328 = vsel %vm2093, %v9311, %v9156
      %v9329 = vsel %vm2093, %v9312, %v9158
      %v9330 = vsel %vm2093, %v9313, %v9160
      %v9331 = vsel %vm2093, %v9314, %v9162
      %v9332 = vsel %vm2093, %v9315, %v9164
      %v9333 = vsel %vm2093, %v9316, %v9166
      %v9334 = vsel %vm2093, %v9317, %v9168
      %v9335 = vsel %vm2093, %v9318, %v9170
      %v9336 = vsel %vm2093, %v9319, %v9172
      %v9337 = vsel %vm2093, %v9320, %v9174
      %v9338 = vsel %vm2093, %v9321, %v9176
      %v9339 = vsel %vm2093, %v9322, %v9178
      %v9340 = vsel %vm2093, %v9323, %v9180
      %v9341 = vsel %vm1450, %v8965, %v9202
      %v9342 = vsel %vm1450, %v8966, %v9204
      %v9343 = vsel %vm1450, %v8967, %v9206
      %v9344 = vsel %vm2067, %v9292, %v9228
      %v9345 = vsel %vm2067, %v9293, %v9230
      %v9346 = vsel %vm2067, %v9294, %v9232
      %v9347 = vsel %vm2067, %v9295, %v9234
      %v9348 = vsel %vm2067, %v9296, %v9236
      %v9349 = vsel %vm2067, %v9297, %v9238
      %v9350 = vsel %vm2067, %v9298, %v9240
      %v9351 = vsel %vm2067, %v9299, %v9242
      %v9352 = vsel %vm2067, %v9300, %v9244
      %v9353 = vsel %vm2067, %v9301, %v9246
      %v9354 = vsel %vm2067, %v9302, %v9248
      %v9355 = vsel %vm2067, %v9303, %v9250
      %v9356 = vsel %vm2067, %v9304, %v9252
      %v9357 = vsel %vm2067, %v9305, %v9254
      %v9358 = vsel %vm2067, %v9341, %v9256
      %v9359 = vsel %vm2067, %v9342, %v9258
      %v9360 = vsel %vm2067, %v9343, %v9260
      %v9361 = vsel %vm2093, %v9344, %v9152
      %v9362 = vsel %vm2093, %v9345, %v9154
      %v9363 = vsel %vm2093, %v9346, %v9156
      %v9364 = vsel %vm2093, %v9347, %v9158
      %v9365 = vsel %vm2093, %v9348, %v9160
      %v9366 = vsel %vm2093, %v9349, %v9162
      %v9367 = vsel %vm2093, %v9350, %v9164
      %v9368 = vsel %vm2093, %v9351, %v9166
      %v9369 = vsel %vm2093, %v9352, %v9168
      %v9370 = vsel %vm2093, %v9353, %v9170
      %v9371 = vsel %vm2093, %v9354, %v9172
      %v9372 = vsel %vm2093, %v9355, %v9174
      %v9373 = vsel %vm2093, %v9356, %v9176
      %v9374 = vsel %vm2093, %v9357, %v9178
      %v9375 = vsel %vm2093, %v9358, %v9282
      %v9376 = vsel %vm2093, %v9359, %v9284
      %v9377 = vsel %vm2093, %v9360, %v9286
      %s9378 = scalar_lea.vmem %s3, 576
      %v9379 = vld [vmem:[%s9378] sm:$0xff]
      %v9380 = vld [vmem:[%s9378 + $0x8] sm:$0xff]
      %v9381 = vld [vmem:[%s9378 + $0x10] sm:$0xff]
      %v9382 = vld [vmem:[%s9378 + $0x18] sm:$0xff]
      %v9383 = vld [vmem:[%s9378 + $0x20] sm:$0xff]
      %v9384 = vld [vmem:[%s9378 + $0x28] sm:$0xff]
      %v9385 = vld [vmem:[%s9378 + $0x30] sm:$0xff]
      %v9386 = vld [vmem:[%s9378 + $0x38] sm:$0xff]
      %v9387 = vld [vmem:[%s9378 + $0x40] sm:$0xff]
      %v9388 = vld [vmem:[%s9378 + $0x48] sm:$0xff]
      %v9389 = vld [vmem:[%s9378 + $0x50] sm:$0xff]
      %v9390 = vld [vmem:[%s9378 + $0x58] sm:$0xff]
      %v9391 = vld [vmem:[%s9378 + $0x60] sm:$0xff]
      %v9392 = vld [vmem:[%s9378 + $0x68] sm:$0xff]
      %v9393 = vld [vmem:[%s9378 + $0x70] sm:$0xff]
      %v9394 = vld [vmem:[%s9378 + $0x78] sm:$0xff]
      %v9395 = vld [vmem:[%s9378 + $0x80] sm:$0xff]
      %v9396 = vld [vmem:[%s9378 + $0x88] sm:$0xff]
      %v9397 = vld [vmem:[%s9378 + $0x90] sm:$0xff]
      %v9398 = vld [vmem:[%s9378 + $0x98] sm:$0xff]
      %v9399 = vld [vmem:[%s9378 + $0xa0] sm:$0xff]
      %v9400 = vld [vmem:[%s9378 + $0xa8] sm:$0xff]
      %v9401 = vld [vmem:[%s9378 + $0xb0] sm:$0xff]
      %v9402 = vld [vmem:[%s9378 + $0xb8] sm:$0xff]
      %v9403 = vld [vmem:[%s9378 + $0xc0] sm:$0xff]
      %v9404 = vld [vmem:[%s9378 + $0xc8] sm:$0xff]
      %v9405 = vld [vmem:[%s9378 + $0xd0] sm:$0xff]
      %v9406 = vld [vmem:[%s9378 + $0xd8] sm:$0xff]
      %v9407 = vld [vmem:[%s9378 + $0xe0] sm:$0xff]
      %v9408 = vld [vmem:[%s9378 + $0xe8] sm:$0xff]
      %v9409 = vld [vmem:[%s9378 + $0xf0] sm:$0xff]
      %v9410 = vld [vmem:[%s9378 + $0xf8] sm:$0xff]
      %v9411 = vld [vmem:[%s9378 + $0x100] sm:$0xff]
      %v9412 = vld [vmem:[%s9378 + $0x108] sm:$0xff]
      %v9413 = vld [vmem:[%s9378 + $0x110] sm:$0xff]
      %v9414 = vld [vmem:[%s9378 + $0x118] sm:$0xff]
      %s9415 = scalar_lea.vmem %s4, 2
      %v9416 = vld [vmem:[%s9415] sm:$0x1]
      %v9418 = vperm.slane %v9416, 0
      %v9421 = vsel %vm1450, %v8901, 0
      %v9424 = vsel %vm1450, %v8902, 0
      %v9427 = vsel %vm1450, %v8903, 0
      %v9430 = vsel %vm1450, %v8904, 0
      %v9433 = vsel %vm1450, %v8905, 0
      %v9436 = vsel %vm1450, %v8906, 0
      %v9439 = vsel %vm1450, %v8907, 0
      %v9442 = vsel %vm1450, %v8908, 0
      %v9445 = vsel %vm1450, %v8909, 0
      %v9448 = vsel %vm1450, %v8910, 0
      %v9451 = vsel %vm1450, %v8911, 0
      %v9454 = vsel %vm1450, %v8912, 0
      %v9457 = vsel %vm1450, %v8965, 0
      %v9460 = vsel %vm1450, %v8966, 0
      %v9463 = vsel %vm1450, %v8991, 0
      %v9466 = vsel %vm1450, %v8992, 0
      %v9469 = vsel %vm1450, %v8993, 0
      %v9471 = vand.u32 %v9394, 4294901760
      %9472 = vmatpush.msra.mxu0 %v9471
      %v9473 = vand.u32 %v9393, 4294901760
      %9474 = vmatpush.msra.mxu0 %v9473
      %v9475 = vand.u32 %v9392, 4294901760
      %9476 = vmatpush.msra.mxu0 %v9475
      %v9477 = vand.u32 %v9391, 4294901760
      %9478 = vmatpush.msra.mxu0 %v9477
      %v9479 = vand.u32 %v9390, 4294901760
      %9480 = vmatpush.msra.mxu0 %v9479
      %v9481 = vand.u32 %v9389, 4294901760
      %9482 = vmatpush.msra.mxu0 %v9481
      %v9483 = vand.u32 %v9388, 4294901760
      %9484 = vmatpush.msra.mxu0 %v9483
      %v9485 = vand.u32 %v9387, 4294901760
      %9486 = vmatpush.msra.mxu0 %v9485
      %v9487 = vand.u32 %v9386, 4294901760
      %9488 = vmatpush.msra.mxu0 %v9487
      %v9489 = vand.u32 %v9385, 4294901760
      %9490 = vmatpush.msra.mxu0 %v9489
      %v9491 = vand.u32 %v9384, 4294901760
      %9492 = vmatpush.msra.mxu0 %v9491
      %v9493 = vand.u32 %v9383, 4294901760
      %9494 = vmatpush.msra.mxu0 %v9493
      %v9495 = vand.u32 %v9382, 4294901760
      %9496 = vmatpush.msra.mxu0 %v9495
      %v9497 = vand.u32 %v9381, 4294901760
      %9498 = vmatpush.msra.mxu0 %v9497
      %v9499 = vand.u32 %v9380, 4294901760
      %9500 = vmatpush.msra.mxu0 %v9499
      %v9501 = vand.u32 %v9379, 4294901760
      %9502 = vmatpush.msra.mxu0 %v9501
      %v9503 = vand.u32 %v9324, 4294901760
      %v9504 = vsub.f32 %v9324, %v9503
      %v9505 = vand.u32 %v9504, 4294901760
      %v9506 = vsub.f32 %v9504, %v9505
      %v9507 = vand.u32 %v9506, 4294901760
      %9508 = vmatmul.f32.gmra.mxu0 %v9507
      %v9509 = vpop.f32.mrf.mxu0
      %v9510 = vadd.f32 %v9418, %v9509
      %v9511 = vand.u32 %v9325, 4294901760
      %v9512 = vsub.f32 %v9325, %v9511
      %v9513 = vand.u32 %v9512, 4294901760
      %v9514 = vsub.f32 %v9512, %v9513
      %v9515 = vand.u32 %v9514, 4294901760
      %9516 = vmatmul.f32.gmra.mxu0 %v9515
      %v9517 = vpop.f32.mrf.mxu0
      %v9518 = vadd.f32 %v9418, %v9517
      %v9519 = vand.u32 %v9326, 4294901760
      %v9520 = vsub.f32 %v9326, %v9519
      %v9521 = vand.u32 %v9520, 4294901760
      %v9522 = vsub.f32 %v9520, %v9521
      %v9523 = vand.u32 %v9522, 4294901760
      %9524 = vmatmul.f32.gmra.mxu0 %v9523
      %v9525 = vpop.f32.mrf.mxu0
      %v9526 = vadd.f32 %v9418, %v9525
      %v9527 = vand.u32 %v9327, 4294901760
      %v9528 = vsub.f32 %v9327, %v9527
      %v9529 = vand.u32 %v9528, 4294901760
      %v9530 = vsub.f32 %v9528, %v9529
      %v9531 = vand.u32 %v9530, 4294901760
      %9532 = vmatmul.f32.gmra.mxu0 %v9531
      %v9533 = vpop.f32.mrf.mxu0
      %v9534 = vadd.f32 %v9418, %v9533
      %v9535 = vand.u32 %v9328, 4294901760
      %v9536 = vsub.f32 %v9328, %v9535
      %v9537 = vand.u32 %v9536, 4294901760
      %v9538 = vsub.f32 %v9536, %v9537
      %v9539 = vand.u32 %v9538, 4294901760
      %9540 = vmatmul.f32.gmra.mxu0 %v9539
      %v9541 = vpop.f32.mrf.mxu0
      %v9542 = vadd.f32 %v9418, %v9541
      %v9543 = vand.u32 %v9329, 4294901760
      %v9544 = vsub.f32 %v9329, %v9543
      %v9545 = vand.u32 %v9544, 4294901760
      %v9546 = vsub.f32 %v9544, %v9545
      %v9547 = vand.u32 %v9546, 4294901760
      %9548 = vmatmul.f32.gmra.mxu0 %v9547
      %v9549 = vpop.f32.mrf.mxu0
      %v9550 = vadd.f32 %v9418, %v9549
      %v9551 = vand.u32 %v9330, 4294901760
      %v9552 = vsub.f32 %v9330, %v9551
      %v9553 = vand.u32 %v9552, 4294901760
      %v9554 = vsub.f32 %v9552, %v9553
      %v9555 = vand.u32 %v9554, 4294901760
      %9556 = vmatmul.f32.gmra.mxu0 %v9555
      %v9557 = vpop.f32.mrf.mxu0
      %v9558 = vadd.f32 %v9418, %v9557
      %v9559 = vand.u32 %v9331, 4294901760
      %v9560 = vsub.f32 %v9331, %v9559
      %v9561 = vand.u32 %v9560, 4294901760
      %v9562 = vsub.f32 %v9560, %v9561
      %v9563 = vand.u32 %v9562, 4294901760
      %9564 = vmatmul.f32.gmra.mxu0 %v9563
      %v9565 = vpop.f32.mrf.mxu0
      %v9566 = vadd.f32 %v9418, %v9565
      %v9567 = vand.u32 %v9332, 4294901760
      %v9568 = vsub.f32 %v9332, %v9567
      %v9569 = vand.u32 %v9568, 4294901760
      %v9570 = vsub.f32 %v9568, %v9569
      %v9571 = vand.u32 %v9570, 4294901760
      %9572 = vmatmul.f32.gmra.mxu0 %v9571
      %v9573 = vpop.f32.mrf.mxu0
      %v9574 = vadd.f32 %v9418, %v9573
      %v9575 = vand.u32 %v9333, 4294901760
      %v9576 = vsub.f32 %v9333, %v9575
      %v9577 = vand.u32 %v9576, 4294901760
      %v9578 = vsub.f32 %v9576, %v9577
      %v9579 = vand.u32 %v9578, 4294901760
      %9580 = vmatmul.f32.gmra.mxu0 %v9579
      %v9581 = vpop.f32.mrf.mxu0
      %v9582 = vadd.f32 %v9418, %v9581
      %v9583 = vand.u32 %v9334, 4294901760
      %v9584 = vsub.f32 %v9334, %v9583
      %v9585 = vand.u32 %v9584, 4294901760
      %v9586 = vsub.f32 %v9584, %v9585
      %v9587 = vand.u32 %v9586, 4294901760
      %9588 = vmatmul.f32.gmra.mxu0 %v9587
      %v9589 = vpop.f32.mrf.mxu0
      %v9590 = vadd.f32 %v9418, %v9589
      %v9591 = vand.u32 %v9335, 4294901760
      %v9592 = vsub.f32 %v9335, %v9591
      %v9593 = vand.u32 %v9592, 4294901760
      %v9594 = vsub.f32 %v9592, %v9593
      %v9595 = vand.u32 %v9594, 4294901760
      %9596 = vmatmul.f32.gmra.mxu0 %v9595
      %v9597 = vpop.f32.mrf.mxu0
      %v9598 = vadd.f32 %v9418, %v9597
      %v9599 = vand.u32 %v9336, 4294901760
      %v9600 = vsub.f32 %v9336, %v9599
      %v9601 = vand.u32 %v9600, 4294901760
      %v9602 = vsub.f32 %v9600, %v9601
      %v9603 = vand.u32 %v9602, 4294901760
      %9604 = vmatmul.f32.gmra.mxu0 %v9603
      %v9605 = vpop.f32.mrf.mxu0
      %v9606 = vadd.f32 %v9418, %v9605
      %v9607 = vand.u32 %v9337, 4294901760
      %v9608 = vsub.f32 %v9337, %v9607
      %v9609 = vand.u32 %v9608, 4294901760
      %v9610 = vsub.f32 %v9608, %v9609
      %v9611 = vand.u32 %v9610, 4294901760
      %9612 = vmatmul.f32.gmra.mxu0 %v9611
      %v9613 = vpop.f32.mrf.mxu0
      %v9614 = vadd.f32 %v9418, %v9613
      %v9615 = vand.u32 %v9338, 4294901760
      %v9616 = vsub.f32 %v9338, %v9615
      %v9617 = vand.u32 %v9616, 4294901760
      %v9618 = vsub.f32 %v9616, %v9617
      %v9619 = vand.u32 %v9618, 4294901760
      %9620 = vmatmul.f32.gmra.mxu0 %v9619
      %v9621 = vpop.f32.mrf.mxu0
      %v9622 = vadd.f32 %v9418, %v9621
      %v9623 = vand.u32 %v9339, 4294901760
      %v9624 = vsub.f32 %v9339, %v9623
      %v9625 = vand.u32 %v9624, 4294901760
      %v9626 = vsub.f32 %v9624, %v9625
      %v9627 = vand.u32 %v9626, 4294901760
      %9628 = vmatmul.f32.gmra.mxu0 %v9627
      %v9629 = vpop.f32.mrf.mxu0
      %v9630 = vadd.f32 %v9418, %v9629
      %v9631 = vand.u32 %v9340, 4294901760
      %v9632 = vsub.f32 %v9340, %v9631
      %v9633 = vand.u32 %v9632, 4294901760
      %v9634 = vsub.f32 %v9632, %v9633
      %v9635 = vand.u32 %v9634, 4294901760
      %9636 = vmatmul.f32.gmra.mxu0 %v9635
      %v9637 = vpop.f32.mrf.mxu0
      %v9638 = vadd.f32 %v9418, %v9637
      %9639 = vdwg.mxu0
      %v9640 = vand.u32 %v9394, 4294901760
      %v9641 = vsub.f32 %v9394, %v9640
      %v9642 = vand.u32 %v9641, 4294901760
      %v9643 = vsub.f32 %v9641, %v9642
      %v9644 = vand.u32 %v9643, 4294901760
      %9645 = vmatpush.msra.mxu0 %v9644
      %v9646 = vand.u32 %v9393, 4294901760
      %v9647 = vsub.f32 %v9393, %v9646
      %v9648 = vand.u32 %v9647, 4294901760
      %v9649 = vsub.f32 %v9647, %v9648
      %v9650 = vand.u32 %v9649, 4294901760
      %9651 = vmatpush.msra.mxu0 %v9650
      %v9652 = vand.u32 %v9392, 4294901760
      %v9653 = vsub.f32 %v9392, %v9652
      %v9654 = vand.u32 %v9653, 4294901760
      %v9655 = vsub.f32 %v9653, %v9654
      %v9656 = vand.u32 %v9655, 4294901760
      %9657 = vmatpush.msra.mxu0 %v9656
      %v9658 = vand.u32 %v9391, 4294901760
      %v9659 = vsub.f32 %v9391, %v9658
      %v9660 = vand.u32 %v9659, 4294901760
      %v9661 = vsub.f32 %v9659, %v9660
      %v9662 = vand.u32 %v9661, 4294901760
      %9663 = vmatpush.msra.mxu0 %v9662
      %v9664 = vand.u32 %v9390, 4294901760
      %v9665 = vsub.f32 %v9390, %v9664
      %v9666 = vand.u32 %v9665, 4294901760
      %v9667 = vsub.f32 %v9665, %v9666
      %v9668 = vand.u32 %v9667, 4294901760
      %9669 = vmatpush.msra.mxu0 %v9668
      %v9670 = vand.u32 %v9389, 4294901760
      %v9671 = vsub.f32 %v9389, %v9670
      %v9672 = vand.u32 %v9671, 4294901760
      %v9673 = vsub.f32 %v9671, %v9672
      %v9674 = vand.u32 %v9673, 4294901760
      %9675 = vmatpush.msra.mxu0 %v9674
      %v9676 = vand.u32 %v9388, 4294901760
      %v9677 = vsub.f32 %v9388, %v9676
      %v9678 = vand.u32 %v9677, 4294901760
      %v9679 = vsub.f32 %v9677, %v9678
      %v9680 = vand.u32 %v9679, 4294901760
      %9681 = vmatpush.msra.mxu0 %v9680
      %v9682 = vand.u32 %v9387, 4294901760
      %v9683 = vsub.f32 %v9387, %v9682
      %v9684 = vand.u32 %v9683, 4294901760
      %v9685 = vsub.f32 %v9683, %v9684
      %v9686 = vand.u32 %v9685, 4294901760
      %9687 = vmatpush.msra.mxu0 %v9686
      %v9688 = vand.u32 %v9386, 4294901760
      %v9689 = vsub.f32 %v9386, %v9688
      %v9690 = vand.u32 %v9689, 4294901760
      %v9691 = vsub.f32 %v9689, %v9690
      %v9692 = vand.u32 %v9691, 4294901760
      %9693 = vmatpush.msra.mxu0 %v9692
      %v9694 = vand.u32 %v9385, 4294901760
      %v9695 = vsub.f32 %v9385, %v9694
      %v9696 = vand.u32 %v9695, 4294901760
      %v9697 = vsub.f32 %v9695, %v9696
      %v9698 = vand.u32 %v9697, 4294901760
      %9699 = vmatpush.msra.mxu0 %v9698
      %v9700 = vand.u32 %v9384, 4294901760
      %v9701 = vsub.f32 %v9384, %v9700
      %v9702 = vand.u32 %v9701, 4294901760
      %v9703 = vsub.f32 %v9701, %v9702
      %v9704 = vand.u32 %v9703, 4294901760
      %9705 = vmatpush.msra.mxu0 %v9704
      %v9706 = vand.u32 %v9383, 4294901760
      %v9707 = vsub.f32 %v9383, %v9706
      %v9708 = vand.u32 %v9707, 4294901760
      %v9709 = vsub.f32 %v9707, %v9708
      %v9710 = vand.u32 %v9709, 4294901760
      %9711 = vmatpush.msra.mxu0 %v9710
      %v9712 = vand.u32 %v9382, 4294901760
      %v9713 = vsub.f32 %v9382, %v9712
      %v9714 = vand.u32 %v9713, 4294901760
      %v9715 = vsub.f32 %v9713, %v9714
      %v9716 = vand.u32 %v9715, 4294901760
      %9717 = vmatpush.msra.mxu0 %v9716
      %v9718 = vand.u32 %v9381, 4294901760
      %v9719 = vsub.f32 %v9381, %v9718
      %v9720 = vand.u32 %v9719, 4294901760
      %v9721 = vsub.f32 %v9719, %v9720
      %v9722 = vand.u32 %v9721, 4294901760
      %9723 = vmatpush.msra.mxu0 %v9722
      %v9724 = vand.u32 %v9380, 4294901760
      %v9725 = vsub.f32 %v9380, %v9724
      %v9726 = vand.u32 %v9725, 4294901760
      %v9727 = vsub.f32 %v9725, %v9726
      %v9728 = vand.u32 %v9727, 4294901760
      %9729 = vmatpush.msra.mxu0 %v9728
      %v9730 = vand.u32 %v9379, 4294901760
      %v9731 = vsub.f32 %v9379, %v9730
      %v9732 = vand.u32 %v9731, 4294901760
      %v9733 = vsub.f32 %v9731, %v9732
      %v9734 = vand.u32 %v9733, 4294901760
      %9735 = vmatpush.msra.mxu0 %v9734
      %v9736 = vand.u32 %v9324, 4294901760
      %9737 = vmatmul.f32.gmra.mxu0 %v9736
      %v9738 = vpop.f32.mrf.mxu0
      %v9739 = vadd.f32 %v9510, %v9738
      %v9740 = vand.u32 %v9325, 4294901760
      %9741 = vmatmul.f32.gmra.mxu0 %v9740
      %v9742 = vpop.f32.mrf.mxu0
      %v9743 = vadd.f32 %v9518, %v9742
      %v9744 = vand.u32 %v9326, 4294901760
      %9745 = vmatmul.f32.gmra.mxu0 %v9744
      %v9746 = vpop.f32.mrf.mxu0
      %v9747 = vadd.f32 %v9526, %v9746
      %v9748 = vand.u32 %v9327, 4294901760
      %9749 = vmatmul.f32.gmra.mxu0 %v9748
      %v9750 = vpop.f32.mrf.mxu0
      %v9751 = vadd.f32 %v9534, %v9750
      %v9752 = vand.u32 %v9328, 4294901760
      %9753 = vmatmul.f32.gmra.mxu0 %v9752
      %v9754 = vpop.f32.mrf.mxu0
      %v9755 = vadd.f32 %v9542, %v9754
      %v9756 = vand.u32 %v9329, 4294901760
      %9757 = vmatmul.f32.gmra.mxu0 %v9756
      %v9758 = vpop.f32.mrf.mxu0
      %v9759 = vadd.f32 %v9550, %v9758
      %v9760 = vand.u32 %v9330, 4294901760
      %9761 = vmatmul.f32.gmra.mxu0 %v9760
      %v9762 = vpop.f32.mrf.mxu0
      %v9763 = vadd.f32 %v9558, %v9762
      %v9764 = vand.u32 %v9331, 4294901760
      %9765 = vmatmul.f32.gmra.mxu0 %v9764
      %v9766 = vpop.f32.mrf.mxu0
      %v9767 = vadd.f32 %v9566, %v9766
      %v9768 = vand.u32 %v9332, 4294901760
      %9769 = vmatmul.f32.gmra.mxu0 %v9768
      %v9770 = vpop.f32.mrf.mxu0
      %v9771 = vadd.f32 %v9574, %v9770
      %v9772 = vand.u32 %v9333, 4294901760
      %9773 = vmatmul.f32.gmra.mxu0 %v9772
      %v9774 = vpop.f32.mrf.mxu0
      %v9775 = vadd.f32 %v9582, %v9774
      %v9776 = vand.u32 %v9334, 4294901760
      %9777 = vmatmul.f32.gmra.mxu0 %v9776
      %v9778 = vpop.f32.mrf.mxu0
      %v9779 = vadd.f32 %v9590, %v9778
      %v9780 = vand.u32 %v9335, 4294901760
      %9781 = vmatmul.f32.gmra.mxu0 %v9780
      %v9782 = vpop.f32.mrf.mxu0
      %v9783 = vadd.f32 %v9598, %v9782
      %v9784 = vand.u32 %v9336, 4294901760
      %9785 = vmatmul.f32.gmra.mxu0 %v9784
      %v9786 = vpop.f32.mrf.mxu0
      %v9787 = vadd.f32 %v9606, %v9786
      %v9788 = vand.u32 %v9337, 4294901760
      %9789 = vmatmul.f32.gmra.mxu0 %v9788
      %v9790 = vpop.f32.mrf.mxu0
      %v9791 = vadd.f32 %v9614, %v9790
      %v9792 = vand.u32 %v9338, 4294901760
      %9793 = vmatmul.f32.gmra.mxu0 %v9792
      %v9794 = vpop.f32.mrf.mxu0
      %v9795 = vadd.f32 %v9622, %v9794
      %v9796 = vand.u32 %v9339, 4294901760
      %9797 = vmatmul.f32.gmra.mxu0 %v9796
      %v9798 = vpop.f32.mrf.mxu0
      %v9799 = vadd.f32 %v9630, %v9798
      %v9800 = vand.u32 %v9340, 4294901760
      %9801 = vmatmul.f32.gmra.mxu0 %v9800
      %v9802 = vpop.f32.mrf.mxu0
      %v9803 = vadd.f32 %v9638, %v9802
      %9804 = vdwg.mxu0
      %v9805 = vand.u32 %v9394, 4294901760
      %v9806 = vsub.f32 %v9394, %v9805
      %9807 = vmatpush.msra.mxu0 %v9806
      %v9808 = vand.u32 %v9393, 4294901760
      %v9809 = vsub.f32 %v9393, %v9808
      %9810 = vmatpush.msra.mxu0 %v9809
      %v9811 = vand.u32 %v9392, 4294901760
      %v9812 = vsub.f32 %v9392, %v9811
      %9813 = vmatpush.msra.mxu0 %v9812
      %v9814 = vand.u32 %v9391, 4294901760
      %v9815 = vsub.f32 %v9391, %v9814
      %9816 = vmatpush.msra.mxu0 %v9815
      %v9817 = vand.u32 %v9390, 4294901760
      %v9818 = vsub.f32 %v9390, %v9817
      %9819 = vmatpush.msra.mxu0 %v9818
      %v9820 = vand.u32 %v9389, 4294901760
      %v9821 = vsub.f32 %v9389, %v9820
      %9822 = vmatpush.msra.mxu0 %v9821
      %v9823 = vand.u32 %v9388, 4294901760
      %v9824 = vsub.f32 %v9388, %v9823
      %9825 = vmatpush.msra.mxu0 %v9824
      %v9826 = vand.u32 %v9387, 4294901760
      %v9827 = vsub.f32 %v9387, %v9826
      %9828 = vmatpush.msra.mxu0 %v9827
      %v9829 = vand.u32 %v9386, 4294901760
      %v9830 = vsub.f32 %v9386, %v9829
      %9831 = vmatpush.msra.mxu0 %v9830
      %v9832 = vand.u32 %v9385, 4294901760
      %v9833 = vsub.f32 %v9385, %v9832
      %9834 = vmatpush.msra.mxu0 %v9833
      %v9835 = vand.u32 %v9384, 4294901760
      %v9836 = vsub.f32 %v9384, %v9835
      %9837 = vmatpush.msra.mxu0 %v9836
      %v9838 = vand.u32 %v9383, 4294901760
      %v9839 = vsub.f32 %v9383, %v9838
      %9840 = vmatpush.msra.mxu0 %v9839
      %v9841 = vand.u32 %v9382, 4294901760
      %v9842 = vsub.f32 %v9382, %v9841
      %9843 = vmatpush.msra.mxu0 %v9842
      %v9844 = vand.u32 %v9381, 4294901760
      %v9845 = vsub.f32 %v9381, %v9844
      %9846 = vmatpush.msra.mxu0 %v9845
      %v9847 = vand.u32 %v9380, 4294901760
      %v9848 = vsub.f32 %v9380, %v9847
      %9849 = vmatpush.msra.mxu0 %v9848
      %v9850 = vand.u32 %v9379, 4294901760
      %v9851 = vsub.f32 %v9379, %v9850
      %9852 = vmatpush.msra.mxu0 %v9851
      %v9853 = vand.u32 %v9324, 4294901760
      %v9854 = vsub.f32 %v9324, %v9853
      %9855 = vmatmul.f32.gmra.mxu0 %v9854
      %v9856 = vpop.f32.mrf.mxu0
      %v9857 = vadd.f32 %v9739, %v9856
      %v9858 = vand.u32 %v9325, 4294901760
      %v9859 = vsub.f32 %v9325, %v9858
      %9860 = vmatmul.f32.gmra.mxu0 %v9859
      %v9861 = vpop.f32.mrf.mxu0
      %v9862 = vadd.f32 %v9743, %v9861
      %v9863 = vand.u32 %v9326, 4294901760
      %v9864 = vsub.f32 %v9326, %v9863
      %9865 = vmatmul.f32.gmra.mxu0 %v9864
      %v9866 = vpop.f32.mrf.mxu0
      %v9867 = vadd.f32 %v9747, %v9866
      %v9868 = vand.u32 %v9327, 4294901760
      %v9869 = vsub.f32 %v9327, %v9868
      %9870 = vmatmul.f32.gmra.mxu0 %v9869
      %v9871 = vpop.f32.mrf.mxu0
      %v9872 = vadd.f32 %v9751, %v9871
      %v9873 = vand.u32 %v9328, 4294901760
      %v9874 = vsub.f32 %v9328, %v9873
      %9875 = vmatmul.f32.gmra.mxu0 %v9874
      %v9876 = vpop.f32.mrf.mxu0
      %v9877 = vadd.f32 %v9755, %v9876
      %v9878 = vand.u32 %v9329, 4294901760
      %v9879 = vsub.f32 %v9329, %v9878
      %9880 = vmatmul.f32.gmra.mxu0 %v9879
      %v9881 = vpop.f32.mrf.mxu0
      %v9882 = vadd.f32 %v9759, %v9881
      %v9883 = vand.u32 %v9330, 4294901760
      %v9884 = vsub.f32 %v9330, %v9883
      %9885 = vmatmul.f32.gmra.mxu0 %v9884
      %v9886 = vpop.f32.mrf.mxu0
      %v9887 = vadd.f32 %v9763, %v9886
      %v9888 = vand.u32 %v9331, 4294901760
      %v9889 = vsub.f32 %v9331, %v9888
      %9890 = vmatmul.f32.gmra.mxu0 %v9889
      %v9891 = vpop.f32.mrf.mxu0
      %v9892 = vadd.f32 %v9767, %v9891
      %v9893 = vand.u32 %v9332, 4294901760
      %v9894 = vsub.f32 %v9332, %v9893
      %9895 = vmatmul.f32.gmra.mxu0 %v9894
      %v9896 = vpop.f32.mrf.mxu0
      %v9897 = vadd.f32 %v9771, %v9896
      %v9898 = vand.u32 %v9333, 4294901760
      %v9899 = vsub.f32 %v9333, %v9898
      %9900 = vmatmul.f32.gmra.mxu0 %v9899
      %v9901 = vpop.f32.mrf.mxu0
      %v9902 = vadd.f32 %v9775, %v9901
      %v9903 = vand.u32 %v9334, 4294901760
      %v9904 = vsub.f32 %v9334, %v9903
      %9905 = vmatmul.f32.gmra.mxu0 %v9904
      %v9906 = vpop.f32.mrf.mxu0
      %v9907 = vadd.f32 %v9779, %v9906
      %v9908 = vand.u32 %v9335, 4294901760
      %v9909 = vsub.f32 %v9335, %v9908
      %9910 = vmatmul.f32.gmra.mxu0 %v9909
      %v9911 = vpop.f32.mrf.mxu0
      %v9912 = vadd.f32 %v9783, %v9911
      %v9913 = vand.u32 %v9336, 4294901760
      %v9914 = vsub.f32 %v9336, %v9913
      %9915 = vmatmul.f32.gmra.mxu0 %v9914
      %v9916 = vpop.f32.mrf.mxu0
      %v9917 = vadd.f32 %v9787, %v9916
      %v9918 = vand.u32 %v9337, 4294901760
      %v9919 = vsub.f32 %v9337, %v9918
      %9920 = vmatmul.f32.gmra.mxu0 %v9919
      %v9921 = vpop.f32.mrf.mxu0
      %v9922 = vadd.f32 %v9791, %v9921
      %v9923 = vand.u32 %v9338, 4294901760
      %v9924 = vsub.f32 %v9338, %v9923
      %9925 = vmatmul.f32.gmra.mxu0 %v9924
      %v9926 = vpop.f32.mrf.mxu0
      %v9927 = vadd.f32 %v9795, %v9926
      %v9928 = vand.u32 %v9339, 4294901760
      %v9929 = vsub.f32 %v9339, %v9928
      %9930 = vmatmul.f32.gmra.mxu0 %v9929
      %v9931 = vpop.f32.mrf.mxu0
      %v9932 = vadd.f32 %v9799, %v9931
      %v9933 = vand.u32 %v9340, 4294901760
      %v9934 = vsub.f32 %v9340, %v9933
      %9935 = vmatmul.f32.gmra.mxu0 %v9934
      %v9936 = vpop.f32.mrf.mxu0
      %v9937 = vadd.f32 %v9803, %v9936
      %9938 = vdwg.mxu0
      %v9939 = vand.u32 %v9394, 4294901760
      %9940 = vmatpush.msra.mxu0 %v9939
      %v9941 = vand.u32 %v9393, 4294901760
      %9942 = vmatpush.msra.mxu0 %v9941
      %v9943 = vand.u32 %v9392, 4294901760
      %9944 = vmatpush.msra.mxu0 %v9943
      %v9945 = vand.u32 %v9391, 4294901760
      %9946 = vmatpush.msra.mxu0 %v9945
      %v9947 = vand.u32 %v9390, 4294901760
      %9948 = vmatpush.msra.mxu0 %v9947
      %v9949 = vand.u32 %v9389, 4294901760
      %9950 = vmatpush.msra.mxu0 %v9949
      %v9951 = vand.u32 %v9388, 4294901760
      %9952 = vmatpush.msra.mxu0 %v9951
      %v9953 = vand.u32 %v9387, 4294901760
      %9954 = vmatpush.msra.mxu0 %v9953
      %v9955 = vand.u32 %v9386, 4294901760
      %9956 = vmatpush.msra.mxu0 %v9955
      %v9957 = vand.u32 %v9385, 4294901760
      %9958 = vmatpush.msra.mxu0 %v9957
      %v9959 = vand.u32 %v9384, 4294901760
      %9960 = vmatpush.msra.mxu0 %v9959
      %v9961 = vand.u32 %v9383, 4294901760
      %9962 = vmatpush.msra.mxu0 %v9961
      %v9963 = vand.u32 %v9382, 4294901760
      %9964 = vmatpush.msra.mxu0 %v9963
      %v9965 = vand.u32 %v9381, 4294901760
      %9966 = vmatpush.msra.mxu0 %v9965
      %v9967 = vand.u32 %v9380, 4294901760
      %9968 = vmatpush.msra.mxu0 %v9967
      %v9969 = vand.u32 %v9379, 4294901760
      %9970 = vmatpush.msra.mxu0 %v9969
      %v9971 = vand.u32 %v9324, 4294901760
      %v9972 = vsub.f32 %v9324, %v9971
      %v9973 = vand.u32 %v9972, 4294901760
      %9974 = vmatmul.f32.gmra.mxu0 %v9973
      %v9975 = vpop.f32.mrf.mxu0
      %v9976 = vadd.f32 %v9857, %v9975
      %v9977 = vand.u32 %v9325, 4294901760
      %v9978 = vsub.f32 %v9325, %v9977
      %v9979 = vand.u32 %v9978, 4294901760
      %9980 = vmatmul.f32.gmra.mxu0 %v9979
      %v9981 = vpop.f32.mrf.mxu0
      %v9982 = vadd.f32 %v9862, %v9981
      %v9983 = vand.u32 %v9326, 4294901760
      %v9984 = vsub.f32 %v9326, %v9983
      %v9985 = vand.u32 %v9984, 4294901760
      %9986 = vmatmul.f32.gmra.mxu0 %v9985
      %v9987 = vpop.f32.mrf.mxu0
      %v9988 = vadd.f32 %v9867, %v9987
      %v9989 = vand.u32 %v9327, 4294901760
      %v9990 = vsub.f32 %v9327, %v9989
      %v9991 = vand.u32 %v9990, 4294901760
      %9992 = vmatmul.f32.gmra.mxu0 %v9991
      %v9993 = vpop.f32.mrf.mxu0
      %v9994 = vadd.f32 %v9872, %v9993
      %v9995 = vand.u32 %v9328, 4294901760
      %v9996 = vsub.f32 %v9328, %v9995
      %v9997 = vand.u32 %v9996, 4294901760
      %9998 = vmatmul.f32.gmra.mxu0 %v9997
      %v9999 = vpop.f32.mrf.mxu0
      %v10000 = vadd.f32 %v9877, %v9999
      %v10001 = vand.u32 %v9329, 4294901760
      %v10002 = vsub.f32 %v9329, %v10001
      %v10003 = vand.u32 %v10002, 4294901760
      %10004 = vmatmul.f32.gmra.mxu0 %v10003
      %v10005 = vpop.f32.mrf.mxu0
      %v10006 = vadd.f32 %v9882, %v10005
      %v10007 = vand.u32 %v9330, 4294901760
      %v10008 = vsub.f32 %v9330, %v10007
      %v10009 = vand.u32 %v10008, 4294901760
      %10010 = vmatmul.f32.gmra.mxu0 %v10009
      %v10011 = vpop.f32.mrf.mxu0
      %v10012 = vadd.f32 %v9887, %v10011
      %v10013 = vand.u32 %v9331, 4294901760
      %v10014 = vsub.f32 %v9331, %v10013
      %v10015 = vand.u32 %v10014, 4294901760
      %10016 = vmatmul.f32.gmra.mxu0 %v10015
      %v10017 = vpop.f32.mrf.mxu0
      %v10018 = vadd.f32 %v9892, %v10017
      %v10019 = vand.u32 %v9332, 4294901760
      %v10020 = vsub.f32 %v9332, %v10019
      %v10021 = vand.u32 %v10020, 4294901760
      %10022 = vmatmul.f32.gmra.mxu0 %v10021
      %v10023 = vpop.f32.mrf.mxu0
      %v10024 = vadd.f32 %v9897, %v10023
      %v10025 = vand.u32 %v9333, 4294901760
      %v10026 = vsub.f32 %v9333, %v10025
      %v10027 = vand.u32 %v10026, 4294901760
      %10028 = vmatmul.f32.gmra.mxu0 %v10027
      %v10029 = vpop.f32.mrf.mxu0
      %v10030 = vadd.f32 %v9902, %v10029
      %v10031 = vand.u32 %v9334, 4294901760
      %v10032 = vsub.f32 %v9334, %v10031
      %v10033 = vand.u32 %v10032, 4294901760
      %10034 = vmatmul.f32.gmra.mxu0 %v10033
      %v10035 = vpop.f32.mrf.mxu0
      %v10036 = vadd.f32 %v9907, %v10035
      %v10037 = vand.u32 %v9335, 4294901760
      %v10038 = vsub.f32 %v9335, %v10037
      %v10039 = vand.u32 %v10038, 4294901760
      %10040 = vmatmul.f32.gmra.mxu0 %v10039
      %v10041 = vpop.f32.mrf.mxu0
      %v10042 = vadd.f32 %v9912, %v10041
      %v10043 = vand.u32 %v9336, 4294901760
      %v10044 = vsub.f32 %v9336, %v10043
      %v10045 = vand.u32 %v10044, 4294901760
      %10046 = vmatmul.f32.gmra.mxu0 %v10045
      %v10047 = vpop.f32.mrf.mxu0
      %v10048 = vadd.f32 %v9917, %v10047
      %v10049 = vand.u32 %v9337, 4294901760
      %v10050 = vsub.f32 %v9337, %v10049
      %v10051 = vand.u32 %v10050, 4294901760
      %10052 = vmatmul.f32.gmra.mxu0 %v10051
      %v10053 = vpop.f32.mrf.mxu0
      %v10054 = vadd.f32 %v9922, %v10053
      %v10055 = vand.u32 %v9338, 4294901760
      %v10056 = vsub.f32 %v9338, %v10055
      %v10057 = vand.u32 %v10056, 4294901760
      %10058 = vmatmul.f32.gmra.mxu0 %v10057
      %v10059 = vpop.f32.mrf.mxu0
      %v10060 = vadd.f32 %v9927, %v10059
      %v10061 = vand.u32 %v9339, 4294901760
      %v10062 = vsub.f32 %v9339, %v10061
      %v10063 = vand.u32 %v10062, 4294901760
      %10064 = vmatmul.f32.gmra.mxu0 %v10063
      %v10065 = vpop.f32.mrf.mxu0
      %v10066 = vadd.f32 %v9932, %v10065
      %v10067 = vand.u32 %v9340, 4294901760
      %v10068 = vsub.f32 %v9340, %v10067
      %v10069 = vand.u32 %v10068, 4294901760
      %10070 = vmatmul.f32.gmra.mxu0 %v10069
      %v10071 = vpop.f32.mrf.mxu0
      %v10072 = vadd.f32 %v9937, %v10071
      %10073 = vdwg.mxu0
      %v10074 = vand.u32 %v9394, 4294901760
      %v10075 = vsub.f32 %v9394, %v10074
      %v10076 = vand.u32 %v10075, 4294901760
      %10077 = vmatpush.msra.mxu0 %v10076
      %v10078 = vand.u32 %v9393, 4294901760
      %v10079 = vsub.f32 %v9393, %v10078
      %v10080 = vand.u32 %v10079, 4294901760
      %10081 = vmatpush.msra.mxu0 %v10080
      %v10082 = vand.u32 %v9392, 4294901760
      %v10083 = vsub.f32 %v9392, %v10082
      %v10084 = vand.u32 %v10083, 4294901760
      %10085 = vmatpush.msra.mxu0 %v10084
      %v10086 = vand.u32 %v9391, 4294901760
      %v10087 = vsub.f32 %v9391, %v10086
      %v10088 = vand.u32 %v10087, 4294901760
      %10089 = vmatpush.msra.mxu0 %v10088
      %v10090 = vand.u32 %v9390, 4294901760
      %v10091 = vsub.f32 %v9390, %v10090
      %v10092 = vand.u32 %v10091, 4294901760
      %10093 = vmatpush.msra.mxu0 %v10092
      %v10094 = vand.u32 %v9389, 4294901760
      %v10095 = vsub.f32 %v9389, %v10094
      %v10096 = vand.u32 %v10095, 4294901760
      %10097 = vmatpush.msra.mxu0 %v10096
      %v10098 = vand.u32 %v9388, 4294901760
      %v10099 = vsub.f32 %v9388, %v10098
      %v10100 = vand.u32 %v10099, 4294901760
      %10101 = vmatpush.msra.mxu0 %v10100
      %v10102 = vand.u32 %v9387, 4294901760
      %v10103 = vsub.f32 %v9387, %v10102
      %v10104 = vand.u32 %v10103, 4294901760
      %10105 = vmatpush.msra.mxu0 %v10104
      %v10106 = vand.u32 %v9386, 4294901760
      %v10107 = vsub.f32 %v9386, %v10106
      %v10108 = vand.u32 %v10107, 4294901760
      %10109 = vmatpush.msra.mxu0 %v10108
      %v10110 = vand.u32 %v9385, 4294901760
      %v10111 = vsub.f32 %v9385, %v10110
      %v10112 = vand.u32 %v10111, 4294901760
      %10113 = vmatpush.msra.mxu0 %v10112
      %v10114 = vand.u32 %v9384, 4294901760
      %v10115 = vsub.f32 %v9384, %v10114
      %v10116 = vand.u32 %v10115, 4294901760
      %10117 = vmatpush.msra.mxu0 %v10116
      %v10118 = vand.u32 %v9383, 4294901760
      %v10119 = vsub.f32 %v9383, %v10118
      %v10120 = vand.u32 %v10119, 4294901760
      %10121 = vmatpush.msra.mxu0 %v10120
      %v10122 = vand.u32 %v9382, 4294901760
      %v10123 = vsub.f32 %v9382, %v10122
      %v10124 = vand.u32 %v10123, 4294901760
      %10125 = vmatpush.msra.mxu0 %v10124
      %v10126 = vand.u32 %v9381, 4294901760
      %v10127 = vsub.f32 %v9381, %v10126
      %v10128 = vand.u32 %v10127, 4294901760
      %10129 = vmatpush.msra.mxu0 %v10128
      %v10130 = vand.u32 %v9380, 4294901760
      %v10131 = vsub.f32 %v9380, %v10130
      %v10132 = vand.u32 %v10131, 4294901760
      %10133 = vmatpush.msra.mxu0 %v10132
      %v10134 = vand.u32 %v9379, 4294901760
      %v10135 = vsub.f32 %v9379, %v10134
      %v10136 = vand.u32 %v10135, 4294901760
      %10137 = vmatpush.msra.mxu0 %v10136
      %v10138 = vand.u32 %v9324, 4294901760
      %10139 = vmatmul.f32.gmra.mxu0 %v10138
      %v10140 = vpop.f32.mrf.mxu0
      %v10141 = vadd.f32 %v9976, %v10140
      %v10142 = vand.u32 %v9325, 4294901760
      %10143 = vmatmul.f32.gmra.mxu0 %v10142
      %v10144 = vpop.f32.mrf.mxu0
      %v10145 = vadd.f32 %v9982, %v10144
      %v10146 = vand.u32 %v9326, 4294901760
      %10147 = vmatmul.f32.gmra.mxu0 %v10146
      %v10148 = vpop.f32.mrf.mxu0
      %v10149 = vadd.f32 %v9988, %v10148
      %v10150 = vand.u32 %v9327, 4294901760
      %10151 = vmatmul.f32.gmra.mxu0 %v10150
      %v10152 = vpop.f32.mrf.mxu0
      %v10153 = vadd.f32 %v9994, %v10152
      %v10154 = vand.u32 %v9328, 4294901760
      %10155 = vmatmul.f32.gmra.mxu0 %v10154
      %v10156 = vpop.f32.mrf.mxu0
      %v10157 = vadd.f32 %v10000, %v10156
      %v10158 = vand.u32 %v9329, 4294901760
      %10159 = vmatmul.f32.gmra.mxu0 %v10158
      %v10160 = vpop.f32.mrf.mxu0
      %v10161 = vadd.f32 %v10006, %v10160
      %v10162 = vand.u32 %v9330, 4294901760
      %10163 = vmatmul.f32.gmra.mxu0 %v10162
      %v10164 = vpop.f32.mrf.mxu0
      %v10165 = vadd.f32 %v10012, %v10164
      %v10166 = vand.u32 %v9331, 4294901760
      %10167 = vmatmul.f32.gmra.mxu0 %v10166
      %v10168 = vpop.f32.mrf.mxu0
      %v10169 = vadd.f32 %v10018, %v10168
      %v10170 = vand.u32 %v9332, 4294901760
      %10171 = vmatmul.f32.gmra.mxu0 %v10170
      %v10172 = vpop.f32.mrf.mxu0
      %v10173 = vadd.f32 %v10024, %v10172
      %v10174 = vand.u32 %v9333, 4294901760
      %10175 = vmatmul.f32.gmra.mxu0 %v10174
      %v10176 = vpop.f32.mrf.mxu0
      %v10177 = vadd.f32 %v10030, %v10176
      %v10178 = vand.u32 %v9334, 4294901760
      %10179 = vmatmul.f32.gmra.mxu0 %v10178
      %v10180 = vpop.f32.mrf.mxu0
      %v10181 = vadd.f32 %v10036, %v10180
      %v10182 = vand.u32 %v9335, 4294901760
      %10183 = vmatmul.f32.gmra.mxu0 %v10182
      %v10184 = vpop.f32.mrf.mxu0
      %v10185 = vadd.f32 %v10042, %v10184
      %v10186 = vand.u32 %v9336, 4294901760
      %10187 = vmatmul.f32.gmra.mxu0 %v10186
      %v10188 = vpop.f32.mrf.mxu0
      %v10189 = vadd.f32 %v10048, %v10188
      %v10190 = vand.u32 %v9337, 4294901760
      %10191 = vmatmul.f32.gmra.mxu0 %v10190
      %v10192 = vpop.f32.mrf.mxu0
      %v10193 = vadd.f32 %v10054, %v10192
      %v10194 = vand.u32 %v9338, 4294901760
      %10195 = vmatmul.f32.gmra.mxu0 %v10194
      %v10196 = vpop.f32.mrf.mxu0
      %v10197 = vadd.f32 %v10060, %v10196
      %v10198 = vand.u32 %v9339, 4294901760
      %10199 = vmatmul.f32.gmra.mxu0 %v10198
      %v10200 = vpop.f32.mrf.mxu0
      %v10201 = vadd.f32 %v10066, %v10200
      %v10202 = vand.u32 %v9340, 4294901760
      %10203 = vmatmul.f32.gmra.mxu0 %v10202
      %v10204 = vpop.f32.mrf.mxu0
      %v10205 = vadd.f32 %v10072, %v10204
      %10206 = vdwg.mxu0
      %v10207 = vand.u32 %v9394, 4294901760
      %10208 = vmatpush.msra.mxu0 %v10207
      %v10209 = vand.u32 %v9393, 4294901760
      %10210 = vmatpush.msra.mxu0 %v10209
      %v10211 = vand.u32 %v9392, 4294901760
      %10212 = vmatpush.msra.mxu0 %v10211
      %v10213 = vand.u32 %v9391, 4294901760
      %10214 = vmatpush.msra.mxu0 %v10213
      %v10215 = vand.u32 %v9390, 4294901760
      %10216 = vmatpush.msra.mxu0 %v10215
      %v10217 = vand.u32 %v9389, 4294901760
      %10218 = vmatpush.msra.mxu0 %v10217
      %v10219 = vand.u32 %v9388, 4294901760
      %10220 = vmatpush.msra.mxu0 %v10219
      %v10221 = vand.u32 %v9387, 4294901760
      %10222 = vmatpush.msra.mxu0 %v10221
      %v10223 = vand.u32 %v9386, 4294901760
      %10224 = vmatpush.msra.mxu0 %v10223
      %v10225 = vand.u32 %v9385, 4294901760
      %10226 = vmatpush.msra.mxu0 %v10225
      %v10227 = vand.u32 %v9384, 4294901760
      %10228 = vmatpush.msra.mxu0 %v10227
      %v10229 = vand.u32 %v9383, 4294901760
      %10230 = vmatpush.msra.mxu0 %v10229
      %v10231 = vand.u32 %v9382, 4294901760
      %10232 = vmatpush.msra.mxu0 %v10231
      %v10233 = vand.u32 %v9381, 4294901760
      %10234 = vmatpush.msra.mxu0 %v10233
      %v10235 = vand.u32 %v9380, 4294901760
      %10236 = vmatpush.msra.mxu0 %v10235
      %v10237 = vand.u32 %v9379, 4294901760
      %10238 = vmatpush.msra.mxu0 %v10237
      %v10239 = vand.u32 %v9324, 4294901760
      %10240 = vmatmul.f32.gmra.mxu0 %v10239
      %v10241 = vpop.f32.mrf.mxu0
      %v10242 = vadd.f32 %v10141, %v10241
      %v10243 = vand.u32 %v9325, 4294901760
      %10244 = vmatmul.f32.gmra.mxu0 %v10243
      %v10245 = vpop.f32.mrf.mxu0
      %v10246 = vadd.f32 %v10145, %v10245
      %v10247 = vand.u32 %v9326, 4294901760
      %10248 = vmatmul.f32.gmra.mxu0 %v10247
      %v10249 = vpop.f32.mrf.mxu0
      %v10250 = vadd.f32 %v10149, %v10249
      %v10251 = vand.u32 %v9327, 4294901760
      %10252 = vmatmul.f32.gmra.mxu0 %v10251
      %v10253 = vpop.f32.mrf.mxu0
      %v10254 = vadd.f32 %v10153, %v10253
      %v10255 = vand.u32 %v9328, 4294901760
      %10256 = vmatmul.f32.gmra.mxu0 %v10255
      %v10257 = vpop.f32.mrf.mxu0
      %v10258 = vadd.f32 %v10157, %v10257
      %v10259 = vand.u32 %v9329, 4294901760
      %10260 = vmatmul.f32.gmra.mxu0 %v10259
      %v10261 = vpop.f32.mrf.mxu0
      %v10262 = vadd.f32 %v10161, %v10261
      %v10263 = vand.u32 %v9330, 4294901760
      %10264 = vmatmul.f32.gmra.mxu0 %v10263
      %v10265 = vpop.f32.mrf.mxu0
      %v10266 = vadd.f32 %v10165, %v10265
      %v10267 = vand.u32 %v9331, 4294901760
      %10268 = vmatmul.f32.gmra.mxu0 %v10267
      %v10269 = vpop.f32.mrf.mxu0
      %v10270 = vadd.f32 %v10169, %v10269
      %v10271 = vand.u32 %v9332, 4294901760
      %10272 = vmatmul.f32.gmra.mxu0 %v10271
      %v10273 = vpop.f32.mrf.mxu0
      %v10274 = vadd.f32 %v10173, %v10273
      %v10275 = vand.u32 %v9333, 4294901760
      %10276 = vmatmul.f32.gmra.mxu0 %v10275
      %v10277 = vpop.f32.mrf.mxu0
      %v10278 = vadd.f32 %v10177, %v10277
      %v10279 = vand.u32 %v9334, 4294901760
      %10280 = vmatmul.f32.gmra.mxu0 %v10279
      %v10281 = vpop.f32.mrf.mxu0
      %v10282 = vadd.f32 %v10181, %v10281
      %v10283 = vand.u32 %v9335, 4294901760
      %10284 = vmatmul.f32.gmra.mxu0 %v10283
      %v10285 = vpop.f32.mrf.mxu0
      %v10286 = vadd.f32 %v10185, %v10285
      %v10287 = vand.u32 %v9336, 4294901760
      %10288 = vmatmul.f32.gmra.mxu0 %v10287
      %v10289 = vpop.f32.mrf.mxu0
      %v10290 = vadd.f32 %v10189, %v10289
      %v10291 = vand.u32 %v9337, 4294901760
      %10292 = vmatmul.f32.gmra.mxu0 %v10291
      %v10293 = vpop.f32.mrf.mxu0
      %v10294 = vadd.f32 %v10193, %v10293
      %v10295 = vand.u32 %v9338, 4294901760
      %10296 = vmatmul.f32.gmra.mxu0 %v10295
      %v10297 = vpop.f32.mrf.mxu0
      %v10298 = vadd.f32 %v10197, %v10297
      %v10299 = vand.u32 %v9339, 4294901760
      %10300 = vmatmul.f32.gmra.mxu0 %v10299
      %v10301 = vpop.f32.mrf.mxu0
      %v10302 = vadd.f32 %v10201, %v10301
      %v10303 = vand.u32 %v9340, 4294901760
      %10304 = vmatmul.f32.gmra.mxu0 %v10303
      %v10305 = vpop.f32.mrf.mxu0
      %v10306 = vadd.f32 %v10205, %v10305
      %10307 = vdwg.mxu0
      %v10308 = vand.u32 %v9410, 4294901760
      %10309 = vmatpush.msra.mxu0 %v10308
      %v10310 = vand.u32 %v9409, 4294901760
      %10311 = vmatpush.msra.mxu0 %v10310
      %v10312 = vand.u32 %v9408, 4294901760
      %10313 = vmatpush.msra.mxu0 %v10312
      %v10314 = vand.u32 %v9407, 4294901760
      %10315 = vmatpush.msra.mxu0 %v10314
      %v10316 = vand.u32 %v9406, 4294901760
      %10317 = vmatpush.msra.mxu0 %v10316
      %v10318 = vand.u32 %v9405, 4294901760
      %10319 = vmatpush.msra.mxu0 %v10318
      %v10320 = vand.u32 %v9404, 4294901760
      %10321 = vmatpush.msra.mxu0 %v10320
      %v10322 = vand.u32 %v9403, 4294901760
      %10323 = vmatpush.msra.mxu0 %v10322
      %v10324 = vand.u32 %v9402, 4294901760
      %10325 = vmatpush.msra.mxu0 %v10324
      %v10326 = vand.u32 %v9401, 4294901760
      %10327 = vmatpush.msra.mxu0 %v10326
      %v10328 = vand.u32 %v9400, 4294901760
      %10329 = vmatpush.msra.mxu0 %v10328
      %v10330 = vand.u32 %v9399, 4294901760
      %10331 = vmatpush.msra.mxu0 %v10330
      %v10332 = vand.u32 %v9398, 4294901760
      %10333 = vmatpush.msra.mxu0 %v10332
      %v10334 = vand.u32 %v9397, 4294901760
      %10335 = vmatpush.msra.mxu0 %v10334
      %v10336 = vand.u32 %v9396, 4294901760
      %10337 = vmatpush.msra.mxu0 %v10336
      %v10338 = vand.u32 %v9395, 4294901760
      %10339 = vmatpush.msra.mxu0 %v10338
      %v10340 = vand.u32 %v9361, 4294901760
      %v10341 = vsub.f32 %v9361, %v10340
      %v10342 = vand.u32 %v10341, 4294901760
      %v10343 = vsub.f32 %v10341, %v10342
      %v10344 = vand.u32 %v10343, 4294901760
      %10345 = vmatmul.f32.gmra.mxu0 %v10344
      %v10346 = vpop.f32.mrf.mxu0
      %v10347 = vadd.f32 %v10242, %v10346
      %v10348 = vand.u32 %v9362, 4294901760
      %v10349 = vsub.f32 %v9362, %v10348
      %v10350 = vand.u32 %v10349, 4294901760
      %v10351 = vsub.f32 %v10349, %v10350
      %v10352 = vand.u32 %v10351, 4294901760
      %10353 = vmatmul.f32.gmra.mxu0 %v10352
      %v10354 = vpop.f32.mrf.mxu0
      %v10355 = vadd.f32 %v10246, %v10354
      %v10356 = vand.u32 %v9363, 4294901760
      %v10357 = vsub.f32 %v9363, %v10356
      %v10358 = vand.u32 %v10357, 4294901760
      %v10359 = vsub.f32 %v10357, %v10358
      %v10360 = vand.u32 %v10359, 4294901760
      %10361 = vmatmul.f32.gmra.mxu0 %v10360
      %v10362 = vpop.f32.mrf.mxu0
      %v10363 = vadd.f32 %v10250, %v10362
      %v10364 = vand.u32 %v9364, 4294901760
      %v10365 = vsub.f32 %v9364, %v10364
      %v10366 = vand.u32 %v10365, 4294901760
      %v10367 = vsub.f32 %v10365, %v10366
      %v10368 = vand.u32 %v10367, 4294901760
      %10369 = vmatmul.f32.gmra.mxu0 %v10368
      %v10370 = vpop.f32.mrf.mxu0
      %v10371 = vadd.f32 %v10254, %v10370
      %v10372 = vand.u32 %v9365, 4294901760
      %v10373 = vsub.f32 %v9365, %v10372
      %v10374 = vand.u32 %v10373, 4294901760
      %v10375 = vsub.f32 %v10373, %v10374
      %v10376 = vand.u32 %v10375, 4294901760
      %10377 = vmatmul.f32.gmra.mxu0 %v10376
      %v10378 = vpop.f32.mrf.mxu0
      %v10379 = vadd.f32 %v10258, %v10378
      %v10380 = vand.u32 %v9366, 4294901760
      %v10381 = vsub.f32 %v9366, %v10380
      %v10382 = vand.u32 %v10381, 4294901760
      %v10383 = vsub.f32 %v10381, %v10382
      %v10384 = vand.u32 %v10383, 4294901760
      %10385 = vmatmul.f32.gmra.mxu0 %v10384
      %v10386 = vpop.f32.mrf.mxu0
      %v10387 = vadd.f32 %v10262, %v10386
      %v10388 = vand.u32 %v9367, 4294901760
      %v10389 = vsub.f32 %v9367, %v10388
      %v10390 = vand.u32 %v10389, 4294901760
      %v10391 = vsub.f32 %v10389, %v10390
      %v10392 = vand.u32 %v10391, 4294901760
      %10393 = vmatmul.f32.gmra.mxu0 %v10392
      %v10394 = vpop.f32.mrf.mxu0
      %v10395 = vadd.f32 %v10266, %v10394
      %v10396 = vand.u32 %v9368, 4294901760
      %v10397 = vsub.f32 %v9368, %v10396
      %v10398 = vand.u32 %v10397, 4294901760
      %v10399 = vsub.f32 %v10397, %v10398
      %v10400 = vand.u32 %v10399, 4294901760
      %10401 = vmatmul.f32.gmra.mxu0 %v10400
      %v10402 = vpop.f32.mrf.mxu0
      %v10403 = vadd.f32 %v10270, %v10402
      %v10404 = vand.u32 %v9369, 4294901760
      %v10405 = vsub.f32 %v9369, %v10404
      %v10406 = vand.u32 %v10405, 4294901760
      %v10407 = vsub.f32 %v10405, %v10406
      %v10408 = vand.u32 %v10407, 4294901760
      %10409 = vmatmul.f32.gmra.mxu0 %v10408
      %v10410 = vpop.f32.mrf.mxu0
      %v10411 = vadd.f32 %v10274, %v10410
      %v10412 = vand.u32 %v9370, 4294901760
      %v10413 = vsub.f32 %v9370, %v10412
      %v10414 = vand.u32 %v10413, 4294901760
      %v10415 = vsub.f32 %v10413, %v10414
      %v10416 = vand.u32 %v10415, 4294901760
      %10417 = vmatmul.f32.gmra.mxu0 %v10416
      %v10418 = vpop.f32.mrf.mxu0
      %v10419 = vadd.f32 %v10278, %v10418
      %v10420 = vand.u32 %v9371, 4294901760
      %v10421 = vsub.f32 %v9371, %v10420
      %v10422 = vand.u32 %v10421, 4294901760
      %v10423 = vsub.f32 %v10421, %v10422
      %v10424 = vand.u32 %v10423, 4294901760
      %10425 = vmatmul.f32.gmra.mxu0 %v10424
      %v10426 = vpop.f32.mrf.mxu0
      %v10427 = vadd.f32 %v10282, %v10426
      %v10428 = vand.u32 %v9372, 4294901760
      %v10429 = vsub.f32 %v9372, %v10428
      %v10430 = vand.u32 %v10429, 4294901760
      %v10431 = vsub.f32 %v10429, %v10430
      %v10432 = vand.u32 %v10431, 4294901760
      %10433 = vmatmul.f32.gmra.mxu0 %v10432
      %v10434 = vpop.f32.mrf.mxu0
      %v10435 = vadd.f32 %v10286, %v10434
      %v10436 = vand.u32 %v9373, 4294901760
      %v10437 = vsub.f32 %v9373, %v10436
      %v10438 = vand.u32 %v10437, 4294901760
      %v10439 = vsub.f32 %v10437, %v10438
      %v10440 = vand.u32 %v10439, 4294901760
      %10441 = vmatmul.f32.gmra.mxu0 %v10440
      %v10442 = vpop.f32.mrf.mxu0
      %v10443 = vadd.f32 %v10290, %v10442
      %v10444 = vand.u32 %v9374, 4294901760
      %v10445 = vsub.f32 %v9374, %v10444
      %v10446 = vand.u32 %v10445, 4294901760
      %v10447 = vsub.f32 %v10445, %v10446
      %v10448 = vand.u32 %v10447, 4294901760
      %10449 = vmatmul.f32.gmra.mxu0 %v10448
      %v10450 = vpop.f32.mrf.mxu0
      %v10451 = vadd.f32 %v10294, %v10450
      %v10452 = vand.u32 %v9375, 4294901760
      %v10453 = vsub.f32 %v9375, %v10452
      %v10454 = vand.u32 %v10453, 4294901760
      %v10455 = vsub.f32 %v10453, %v10454
      %v10456 = vand.u32 %v10455, 4294901760
      %10457 = vmatmul.f32.gmra.mxu0 %v10456
      %v10458 = vpop.f32.mrf.mxu0
      %v10459 = vadd.f32 %v10298, %v10458
      %v10460 = vand.u32 %v9376, 4294901760
      %v10461 = vsub.f32 %v9376, %v10460
      %v10462 = vand.u32 %v10461, 4294901760
      %v10463 = vsub.f32 %v10461, %v10462
      %v10464 = vand.u32 %v10463, 4294901760
      %10465 = vmatmul.f32.gmra.mxu0 %v10464
      %v10466 = vpop.f32.mrf.mxu0
      %v10467 = vadd.f32 %v10302, %v10466
      %v10468 = vand.u32 %v9377, 4294901760
      %v10469 = vsub.f32 %v9377, %v10468
      %v10470 = vand.u32 %v10469, 4294901760
      %v10471 = vsub.f32 %v10469, %v10470
      %v10472 = vand.u32 %v10471, 4294901760
      %10473 = vmatmul.f32.gmra.mxu0 %v10472
      %v10474 = vpop.f32.mrf.mxu0
      %v10475 = vadd.f32 %v10306, %v10474
      %10476 = vdwg.mxu0
      %v10477 = vand.u32 %v9410, 4294901760
      %v10478 = vsub.f32 %v9410, %v10477
      %v10479 = vand.u32 %v10478, 4294901760
      %v10480 = vsub.f32 %v10478, %v10479
      %v10481 = vand.u32 %v10480, 4294901760
      %10482 = vmatpush.msra.mxu0 %v10481
      %v10483 = vand.u32 %v9409, 4294901760
      %v10484 = vsub.f32 %v9409, %v10483
      %v10485 = vand.u32 %v10484, 4294901760
      %v10486 = vsub.f32 %v10484, %v10485
      %v10487 = vand.u32 %v10486, 4294901760
      %10488 = vmatpush.msra.mxu0 %v10487
      %v10489 = vand.u32 %v9408, 4294901760
      %v10490 = vsub.f32 %v9408, %v10489
      %v10491 = vand.u32 %v10490, 4294901760
      %v10492 = vsub.f32 %v10490, %v10491
      %v10493 = vand.u32 %v10492, 4294901760
      %10494 = vmatpush.msra.mxu0 %v10493
      %v10495 = vand.u32 %v9407, 4294901760
      %v10496 = vsub.f32 %v9407, %v10495
      %v10497 = vand.u32 %v10496, 4294901760
      %v10498 = vsub.f32 %v10496, %v10497
      %v10499 = vand.u32 %v10498, 4294901760
      %10500 = vmatpush.msra.mxu0 %v10499
      %v10501 = vand.u32 %v9406, 4294901760
      %v10502 = vsub.f32 %v9406, %v10501
      %v10503 = vand.u32 %v10502, 4294901760
      %v10504 = vsub.f32 %v10502, %v10503
      %v10505 = vand.u32 %v10504, 4294901760
      %10506 = vmatpush.msra.mxu0 %v10505
      %v10507 = vand.u32 %v9405, 4294901760
      %v10508 = vsub.f32 %v9405, %v10507
      %v10509 = vand.u32 %v10508, 4294901760
      %v10510 = vsub.f32 %v10508, %v10509
      %v10511 = vand.u32 %v10510, 4294901760
      %10512 = vmatpush.msra.mxu0 %v10511
      %v10513 = vand.u32 %v9404, 4294901760
      %v10514 = vsub.f32 %v9404, %v10513
      %v10515 = vand.u32 %v10514, 4294901760
      %v10516 = vsub.f32 %v10514, %v10515
      %v10517 = vand.u32 %v10516, 4294901760
      %10518 = vmatpush.msra.mxu0 %v10517
      %v10519 = vand.u32 %v9403, 4294901760
      %v10520 = vsub.f32 %v9403, %v10519
      %v10521 = vand.u32 %v10520, 4294901760
      %v10522 = vsub.f32 %v10520, %v10521
      %v10523 = vand.u32 %v10522, 4294901760
      %10524 = vmatpush.msra.mxu0 %v10523
      %v10525 = vand.u32 %v9402, 4294901760
      %v10526 = vsub.f32 %v9402, %v10525
      %v10527 = vand.u32 %v10526, 4294901760
      %v10528 = vsub.f32 %v10526, %v10527
      %v10529 = vand.u32 %v10528, 4294901760
      %10530 = vmatpush.msra.mxu0 %v10529
      %v10531 = vand.u32 %v9401, 4294901760
      %v10532 = vsub.f32 %v9401, %v10531
      %v10533 = vand.u32 %v10532, 4294901760
      %v10534 = vsub.f32 %v10532, %v10533
      %v10535 = vand.u32 %v10534, 4294901760
      %10536 = vmatpush.msra.mxu0 %v10535
      %v10537 = vand.u32 %v9400, 4294901760
      %v10538 = vsub.f32 %v9400, %v10537
      %v10539 = vand.u32 %v10538, 4294901760
      %v10540 = vsub.f32 %v10538, %v10539
      %v10541 = vand.u32 %v10540, 4294901760
      %10542 = vmatpush.msra.mxu0 %v10541
      %v10543 = vand.u32 %v9399, 4294901760
      %v10544 = vsub.f32 %v9399, %v10543
      %v10545 = vand.u32 %v10544, 4294901760
      %v10546 = vsub.f32 %v10544, %v10545
      %v10547 = vand.u32 %v10546, 4294901760
      %10548 = vmatpush.msra.mxu0 %v10547
      %v10549 = vand.u32 %v9398, 4294901760
      %v10550 = vsub.f32 %v9398, %v10549
      %v10551 = vand.u32 %v10550, 4294901760
      %v10552 = vsub.f32 %v10550, %v10551
      %v10553 = vand.u32 %v10552, 4294901760
      %10554 = vmatpush.msra.mxu0 %v10553
      %v10555 = vand.u32 %v9397, 4294901760
      %v10556 = vsub.f32 %v9397, %v10555
      %v10557 = vand.u32 %v10556, 4294901760
      %v10558 = vsub.f32 %v10556, %v10557
      %v10559 = vand.u32 %v10558, 4294901760
      %10560 = vmatpush.msra.mxu0 %v10559
      %v10561 = vand.u32 %v9396, 4294901760
      %v10562 = vsub.f32 %v9396, %v10561
      %v10563 = vand.u32 %v10562, 4294901760
      %v10564 = vsub.f32 %v10562, %v10563
      %v10565 = vand.u32 %v10564, 4294901760
      %10566 = vmatpush.msra.mxu0 %v10565
      %v10567 = vand.u32 %v9395, 4294901760
      %v10568 = vsub.f32 %v9395, %v10567
      %v10569 = vand.u32 %v10568, 4294901760
      %v10570 = vsub.f32 %v10568, %v10569
      %v10571 = vand.u32 %v10570, 4294901760
      %10572 = vmatpush.msra.mxu0 %v10571
      %v10573 = vand.u32 %v9361, 4294901760
      %10574 = vmatmul.f32.gmra.mxu0 %v10573
      %v10575 = vpop.f32.mrf.mxu0
      %v10576 = vadd.f32 %v10347, %v10575
      %v10577 = vand.u32 %v9362, 4294901760
      %10578 = vmatmul.f32.gmra.mxu0 %v10577
      %v10579 = vpop.f32.mrf.mxu0
      %v10580 = vadd.f32 %v10355, %v10579
      %v10581 = vand.u32 %v9363, 4294901760
      %10582 = vmatmul.f32.gmra.mxu0 %v10581
      %v10583 = vpop.f32.mrf.mxu0
      %v10584 = vadd.f32 %v10363, %v10583
      %v10585 = vand.u32 %v9364, 4294901760
      %10586 = vmatmul.f32.gmra.mxu0 %v10585
      %v10587 = vpop.f32.mrf.mxu0
      %v10588 = vadd.f32 %v10371, %v10587
      %v10589 = vand.u32 %v9365, 4294901760
      %10590 = vmatmul.f32.gmra.mxu0 %v10589
      %v10591 = vpop.f32.mrf.mxu0
      %v10592 = vadd.f32 %v10379, %v10591
      %v10593 = vand.u32 %v9366, 4294901760
      %10594 = vmatmul.f32.gmra.mxu0 %v10593
      %v10595 = vpop.f32.mrf.mxu0
      %v10596 = vadd.f32 %v10387, %v10595
      %v10597 = vand.u32 %v9367, 4294901760
      %10598 = vmatmul.f32.gmra.mxu0 %v10597
      %v10599 = vpop.f32.mrf.mxu0
      %v10600 = vadd.f32 %v10395, %v10599
      %v10601 = vand.u32 %v9368, 4294901760
      %10602 = vmatmul.f32.gmra.mxu0 %v10601
      %v10603 = vpop.f32.mrf.mxu0
      %v10604 = vadd.f32 %v10403, %v10603
      %v10605 = vand.u32 %v9369, 4294901760
      %10606 = vmatmul.f32.gmra.mxu0 %v10605
      %v10607 = vpop.f32.mrf.mxu0
      %v10608 = vadd.f32 %v10411, %v10607
      %v10609 = vand.u32 %v9370, 4294901760
      %10610 = vmatmul.f32.gmra.mxu0 %v10609
      %v10611 = vpop.f32.mrf.mxu0
      %v10612 = vadd.f32 %v10419, %v10611
      %v10613 = vand.u32 %v9371, 4294901760
      %10614 = vmatmul.f32.gmra.mxu0 %v10613
      %v10615 = vpop.f32.mrf.mxu0
      %v10616 = vadd.f32 %v10427, %v10615
      %v10617 = vand.u32 %v9372, 4294901760
      %10618 = vmatmul.f32.gmra.mxu0 %v10617
      %v10619 = vpop.f32.mrf.mxu0
      %v10620 = vadd.f32 %v10435, %v10619
      %v10621 = vand.u32 %v9373, 4294901760
      %10622 = vmatmul.f32.gmra.mxu0 %v10621
      %v10623 = vpop.f32.mrf.mxu0
      %v10624 = vadd.f32 %v10443, %v10623
      %v10625 = vand.u32 %v9374, 4294901760
      %10626 = vmatmul.f32.gmra.mxu0 %v10625
      %v10627 = vpop.f32.mrf.mxu0
      %v10628 = vadd.f32 %v10451, %v10627
      %v10629 = vand.u32 %v9375, 4294901760
      %10630 = vmatmul.f32.gmra.mxu0 %v10629
      %v10631 = vpop.f32.mrf.mxu0
      %v10632 = vadd.f32 %v10459, %v10631
      %v10633 = vand.u32 %v9376, 4294901760
      %10634 = vmatmul.f32.gmra.mxu0 %v10633
      %v10635 = vpop.f32.mrf.mxu0
      %v10636 = vadd.f32 %v10467, %v10635
      %v10637 = vand.u32 %v9377, 4294901760
      %10638 = vmatmul.f32.gmra.mxu0 %v10637
      %v10639 = vpop.f32.mrf.mxu0
      %v10640 = vadd.f32 %v10475, %v10639
      %10641 = vdwg.mxu0
      %v10642 = vand.u32 %v9410, 4294901760
      %v10643 = vsub.f32 %v9410, %v10642
      %10644 = vmatpush.msra.mxu0 %v10643
      %v10645 = vand.u32 %v9409, 4294901760
      %v10646 = vsub.f32 %v9409, %v10645
      %10647 = vmatpush.msra.mxu0 %v10646
      %v10648 = vand.u32 %v9408, 4294901760
      %v10649 = vsub.f32 %v9408, %v10648
      %10650 = vmatpush.msra.mxu0 %v10649
      %v10651 = vand.u32 %v9407, 4294901760
      %v10652 = vsub.f32 %v9407, %v10651
      %10653 = vmatpush.msra.mxu0 %v10652
      %v10654 = vand.u32 %v9406, 4294901760
      %v10655 = vsub.f32 %v9406, %v10654
      %10656 = vmatpush.msra.mxu0 %v10655
      %v10657 = vand.u32 %v9405, 4294901760
      %v10658 = vsub.f32 %v9405, %v10657
      %10659 = vmatpush.msra.mxu0 %v10658
      %v10660 = vand.u32 %v9404, 4294901760
      %v10661 = vsub.f32 %v9404, %v10660
      %10662 = vmatpush.msra.mxu0 %v10661
      %v10663 = vand.u32 %v9403, 4294901760
      %v10664 = vsub.f32 %v9403, %v10663
      %10665 = vmatpush.msra.mxu0 %v10664
      %v10666 = vand.u32 %v9402, 4294901760
      %v10667 = vsub.f32 %v9402, %v10666
      %10668 = vmatpush.msra.mxu0 %v10667
      %v10669 = vand.u32 %v9401, 4294901760
      %v10670 = vsub.f32 %v9401, %v10669
      %10671 = vmatpush.msra.mxu0 %v10670
      %v10672 = vand.u32 %v9400, 4294901760
      %v10673 = vsub.f32 %v9400, %v10672
      %10674 = vmatpush.msra.mxu0 %v10673
      %v10675 = vand.u32 %v9399, 4294901760
      %v10676 = vsub.f32 %v9399, %v10675
      %10677 = vmatpush.msra.mxu0 %v10676
      %v10678 = vand.u32 %v9398, 4294901760
      %v10679 = vsub.f32 %v9398, %v10678
      %10680 = vmatpush.msra.mxu0 %v10679
      %v10681 = vand.u32 %v9397, 4294901760
      %v10682 = vsub.f32 %v9397, %v10681
      %10683 = vmatpush.msra.mxu0 %v10682
      %v10684 = vand.u32 %v9396, 4294901760
      %v10685 = vsub.f32 %v9396, %v10684
      %10686 = vmatpush.msra.mxu0 %v10685
      %v10687 = vand.u32 %v9395, 4294901760
      %v10688 = vsub.f32 %v9395, %v10687
      %10689 = vmatpush.msra.mxu0 %v10688
      %v10690 = vand.u32 %v9361, 4294901760
      %v10691 = vsub.f32 %v9361, %v10690
      %10692 = vmatmul.f32.gmra.mxu0 %v10691
      %v10693 = vpop.f32.mrf.mxu0
      %v10694 = vadd.f32 %v10576, %v10693
      %v10695 = vand.u32 %v9362, 4294901760
      %v10696 = vsub.f32 %v9362, %v10695
      %10697 = vmatmul.f32.gmra.mxu0 %v10696
      %v10698 = vpop.f32.mrf.mxu0
      %v10699 = vadd.f32 %v10580, %v10698
      %v10700 = vand.u32 %v9363, 4294901760
      %v10701 = vsub.f32 %v9363, %v10700
      %10702 = vmatmul.f32.gmra.mxu0 %v10701
      %v10703 = vpop.f32.mrf.mxu0
      %v10704 = vadd.f32 %v10584, %v10703
      %v10705 = vand.u32 %v9364, 4294901760
      %v10706 = vsub.f32 %v9364, %v10705
      %10707 = vmatmul.f32.gmra.mxu0 %v10706
      %v10708 = vpop.f32.mrf.mxu0
      %v10709 = vadd.f32 %v10588, %v10708
      %v10710 = vand.u32 %v9365, 4294901760
      %v10711 = vsub.f32 %v9365, %v10710
      %10712 = vmatmul.f32.gmra.mxu0 %v10711
      %v10713 = vpop.f32.mrf.mxu0
      %v10714 = vadd.f32 %v10592, %v10713
      %v10715 = vand.u32 %v9366, 4294901760
      %v10716 = vsub.f32 %v9366, %v10715
      %10717 = vmatmul.f32.gmra.mxu0 %v10716
      %v10718 = vpop.f32.mrf.mxu0
      %v10719 = vadd.f32 %v10596, %v10718
      %v10720 = vand.u32 %v9367, 4294901760
      %v10721 = vsub.f32 %v9367, %v10720
      %10722 = vmatmul.f32.gmra.mxu0 %v10721
      %v10723 = vpop.f32.mrf.mxu0
      %v10724 = vadd.f32 %v10600, %v10723
      %v10725 = vand.u32 %v9368, 4294901760
      %v10726 = vsub.f32 %v9368, %v10725
      %10727 = vmatmul.f32.gmra.mxu0 %v10726
      %v10728 = vpop.f32.mrf.mxu0
      %v10729 = vadd.f32 %v10604, %v10728
      %v10730 = vand.u32 %v9369, 4294901760
      %v10731 = vsub.f32 %v9369, %v10730
      %10732 = vmatmul.f32.gmra.mxu0 %v10731
      %v10733 = vpop.f32.mrf.mxu0
      %v10734 = vadd.f32 %v10608, %v10733
      %v10735 = vand.u32 %v9370, 4294901760
      %v10736 = vsub.f32 %v9370, %v10735
      %10737 = vmatmul.f32.gmra.mxu0 %v10736
      %v10738 = vpop.f32.mrf.mxu0
      %v10739 = vadd.f32 %v10612, %v10738
      %v10740 = vand.u32 %v9371, 4294901760
      %v10741 = vsub.f32 %v9371, %v10740
      %10742 = vmatmul.f32.gmra.mxu0 %v10741
      %v10743 = vpop.f32.mrf.mxu0
      %v10744 = vadd.f32 %v10616, %v10743
      %v10745 = vand.u32 %v9372, 4294901760
      %v10746 = vsub.f32 %v9372, %v10745
      %10747 = vmatmul.f32.gmra.mxu0 %v10746
      %v10748 = vpop.f32.mrf.mxu0
      %v10749 = vadd.f32 %v10620, %v10748
      %v10750 = vand.u32 %v9373, 4294901760
      %v10751 = vsub.f32 %v9373, %v10750
      %10752 = vmatmul.f32.gmra.mxu0 %v10751
      %v10753 = vpop.f32.mrf.mxu0
      %v10754 = vadd.f32 %v10624, %v10753
      %v10755 = vand.u32 %v9374, 4294901760
      %v10756 = vsub.f32 %v9374, %v10755
      %10757 = vmatmul.f32.gmra.mxu0 %v10756
      %v10758 = vpop.f32.mrf.mxu0
      %v10759 = vadd.f32 %v10628, %v10758
      %v10760 = vand.u32 %v9375, 4294901760
      %v10761 = vsub.f32 %v9375, %v10760
      %10762 = vmatmul.f32.gmra.mxu0 %v10761
      %v10763 = vpop.f32.mrf.mxu0
      %v10764 = vadd.f32 %v10632, %v10763
      %v10765 = vand.u32 %v9376, 4294901760
      %v10766 = vsub.f32 %v9376, %v10765
      %10767 = vmatmul.f32.gmra.mxu0 %v10766
      %v10768 = vpop.f32.mrf.mxu0
      %v10769 = vadd.f32 %v10636, %v10768
      %v10770 = vand.u32 %v9377, 4294901760
      %v10771 = vsub.f32 %v9377, %v10770
      %10772 = vmatmul.f32.gmra.mxu0 %v10771
      %v10773 = vpop.f32.mrf.mxu0
      %v10774 = vadd.f32 %v10640, %v10773
      %10775 = vdwg.mxu0
      %v10776 = vand.u32 %v9410, 4294901760
      %10777 = vmatpush.msra.mxu0 %v10776
      %v10778 = vand.u32 %v9409, 4294901760
      %10779 = vmatpush.msra.mxu0 %v10778
      %v10780 = vand.u32 %v9408, 4294901760
      %10781 = vmatpush.msra.mxu0 %v10780
      %v10782 = vand.u32 %v9407, 4294901760
      %10783 = vmatpush.msra.mxu0 %v10782
      %v10784 = vand.u32 %v9406, 4294901760
      %10785 = vmatpush.msra.mxu0 %v10784
      %v10786 = vand.u32 %v9405, 4294901760
      %10787 = vmatpush.msra.mxu0 %v10786
      %v10788 = vand.u32 %v9404, 4294901760
      %10789 = vmatpush.msra.mxu0 %v10788
      %v10790 = vand.u32 %v9403, 4294901760
      %10791 = vmatpush.msra.mxu0 %v10790
      %v10792 = vand.u32 %v9402, 4294901760
      %10793 = vmatpush.msra.mxu0 %v10792
      %v10794 = vand.u32 %v9401, 4294901760
      %10795 = vmatpush.msra.mxu0 %v10794
      %v10796 = vand.u32 %v9400, 4294901760
      %10797 = vmatpush.msra.mxu0 %v10796
      %v10798 = vand.u32 %v9399, 4294901760
      %10799 = vmatpush.msra.mxu0 %v10798
      %v10800 = vand.u32 %v9398, 4294901760
      %10801 = vmatpush.msra.mxu0 %v10800
      %v10802 = vand.u32 %v9397, 4294901760
      %10803 = vmatpush.msra.mxu0 %v10802
      %v10804 = vand.u32 %v9396, 4294901760
      %10805 = vmatpush.msra.mxu0 %v10804
      %v10806 = vand.u32 %v9395, 4294901760
      %10807 = vmatpush.msra.mxu0 %v10806
      %v10808 = vand.u32 %v9361, 4294901760
      %v10809 = vsub.f32 %v9361, %v10808
      %v10810 = vand.u32 %v10809, 4294901760
      %10811 = vmatmul.f32.gmra.mxu0 %v10810
      %v10812 = vpop.f32.mrf.mxu0
      %v10813 = vadd.f32 %v10694, %v10812
      %v10814 = vand.u32 %v9362, 4294901760
      %v10815 = vsub.f32 %v9362, %v10814
      %v10816 = vand.u32 %v10815, 4294901760
      %10817 = vmatmul.f32.gmra.mxu0 %v10816
      %v10818 = vpop.f32.mrf.mxu0
      %v10819 = vadd.f32 %v10699, %v10818
      %v10820 = vand.u32 %v9363, 4294901760
      %v10821 = vsub.f32 %v9363, %v10820
      %v10822 = vand.u32 %v10821, 4294901760
      %10823 = vmatmul.f32.gmra.mxu0 %v10822
      %v10824 = vpop.f32.mrf.mxu0
      %v10825 = vadd.f32 %v10704, %v10824
      %v10826 = vand.u32 %v9364, 4294901760
      %v10827 = vsub.f32 %v9364, %v10826
      %v10828 = vand.u32 %v10827, 4294901760
      %10829 = vmatmul.f32.gmra.mxu0 %v10828
      %v10830 = vpop.f32.mrf.mxu0
      %v10831 = vadd.f32 %v10709, %v10830
      %v10832 = vand.u32 %v9365, 4294901760
      %v10833 = vsub.f32 %v9365, %v10832
      %v10834 = vand.u32 %v10833, 4294901760
      %10835 = vmatmul.f32.gmra.mxu0 %v10834
      %v10836 = vpop.f32.mrf.mxu0
      %v10837 = vadd.f32 %v10714, %v10836
      %v10838 = vand.u32 %v9366, 4294901760
      %v10839 = vsub.f32 %v9366, %v10838
      %v10840 = vand.u32 %v10839, 4294901760
      %10841 = vmatmul.f32.gmra.mxu0 %v10840
      %v10842 = vpop.f32.mrf.mxu0
      %v10843 = vadd.f32 %v10719, %v10842
      %v10844 = vand.u32 %v9367, 4294901760
      %v10845 = vsub.f32 %v9367, %v10844
      %v10846 = vand.u32 %v10845, 4294901760
      %10847 = vmatmul.f32.gmra.mxu0 %v10846
      %v10848 = vpop.f32.mrf.mxu0
      %v10849 = vadd.f32 %v10724, %v10848
      %v10850 = vand.u32 %v9368, 4294901760
      %v10851 = vsub.f32 %v9368, %v10850
      %v10852 = vand.u32 %v10851, 4294901760
      %10853 = vmatmul.f32.gmra.mxu0 %v10852
      %v10854 = vpop.f32.mrf.mxu0
      %v10855 = vadd.f32 %v10729, %v10854
      %v10856 = vand.u32 %v9369, 4294901760
      %v10857 = vsub.f32 %v9369, %v10856
      %v10858 = vand.u32 %v10857, 4294901760
      %10859 = vmatmul.f32.gmra.mxu0 %v10858
      %v10860 = vpop.f32.mrf.mxu0
      %v10861 = vadd.f32 %v10734, %v10860
      %v10862 = vand.u32 %v9370, 4294901760
      %v10863 = vsub.f32 %v9370, %v10862
      %v10864 = vand.u32 %v10863, 4294901760
      %10865 = vmatmul.f32.gmra.mxu0 %v10864
      %v10866 = vpop.f32.mrf.mxu0
      %v10867 = vadd.f32 %v10739, %v10866
      %v10868 = vand.u32 %v9371, 4294901760
      %v10869 = vsub.f32 %v9371, %v10868
      %v10870 = vand.u32 %v10869, 4294901760
      %10871 = vmatmul.f32.gmra.mxu0 %v10870
      %v10872 = vpop.f32.mrf.mxu0
      %v10873 = vadd.f32 %v10744, %v10872
      %v10874 = vand.u32 %v9372, 4294901760
      %v10875 = vsub.f32 %v9372, %v10874
      %v10876 = vand.u32 %v10875, 4294901760
      %10877 = vmatmul.f32.gmra.mxu0 %v10876
      %v10878 = vpop.f32.mrf.mxu0
      %v10879 = vadd.f32 %v10749, %v10878
      %v10880 = vand.u32 %v9373, 4294901760
      %v10881 = vsub.f32 %v9373, %v10880
      %v10882 = vand.u32 %v10881, 4294901760
      %10883 = vmatmul.f32.gmra.mxu0 %v10882
      %v10884 = vpop.f32.mrf.mxu0
      %v10885 = vadd.f32 %v10754, %v10884
      %v10886 = vand.u32 %v9374, 4294901760
      %v10887 = vsub.f32 %v9374, %v10886
      %v10888 = vand.u32 %v10887, 4294901760
      %10889 = vmatmul.f32.gmra.mxu0 %v10888
      %v10890 = vpop.f32.mrf.mxu0
      %v10891 = vadd.f32 %v10759, %v10890
      %v10892 = vand.u32 %v9375, 4294901760
      %v10893 = vsub.f32 %v9375, %v10892
      %v10894 = vand.u32 %v10893, 4294901760
      %10895 = vmatmul.f32.gmra.mxu0 %v10894
      %v10896 = vpop.f32.mrf.mxu0
      %v10897 = vadd.f32 %v10764, %v10896
      %v10898 = vand.u32 %v9376, 4294901760
      %v10899 = vsub.f32 %v9376, %v10898
      %v10900 = vand.u32 %v10899, 4294901760
      %10901 = vmatmul.f32.gmra.mxu0 %v10900
      %v10902 = vpop.f32.mrf.mxu0
      %v10903 = vadd.f32 %v10769, %v10902
      %v10904 = vand.u32 %v9377, 4294901760
      %v10905 = vsub.f32 %v9377, %v10904
      %v10906 = vand.u32 %v10905, 4294901760
      %10907 = vmatmul.f32.gmra.mxu0 %v10906
      %v10908 = vpop.f32.mrf.mxu0
      %v10909 = vadd.f32 %v10774, %v10908
      %10910 = vdwg.mxu0
      %v10911 = vand.u32 %v9410, 4294901760
      %v10912 = vsub.f32 %v9410, %v10911
      %v10913 = vand.u32 %v10912, 4294901760
      %10914 = vmatpush.msra.mxu0 %v10913
      %v10915 = vand.u32 %v9409, 4294901760
      %v10916 = vsub.f32 %v9409, %v10915
      %v10917 = vand.u32 %v10916, 4294901760
      %10918 = vmatpush.msra.mxu0 %v10917
      %v10919 = vand.u32 %v9408, 4294901760
      %v10920 = vsub.f32 %v9408, %v10919
      %v10921 = vand.u32 %v10920, 4294901760
      %10922 = vmatpush.msra.mxu0 %v10921
      %v10923 = vand.u32 %v9407, 4294901760
      %v10924 = vsub.f32 %v9407, %v10923
      %v10925 = vand.u32 %v10924, 4294901760
      %10926 = vmatpush.msra.mxu0 %v10925
      %v10927 = vand.u32 %v9406, 4294901760
      %v10928 = vsub.f32 %v9406, %v10927
      %v10929 = vand.u32 %v10928, 4294901760
      %10930 = vmatpush.msra.mxu0 %v10929
      %v10931 = vand.u32 %v9405, 4294901760
      %v10932 = vsub.f32 %v9405, %v10931
      %v10933 = vand.u32 %v10932, 4294901760
      %10934 = vmatpush.msra.mxu0 %v10933
      %v10935 = vand.u32 %v9404, 4294901760
      %v10936 = vsub.f32 %v9404, %v10935
      %v10937 = vand.u32 %v10936, 4294901760
      %10938 = vmatpush.msra.mxu0 %v10937
      %v10939 = vand.u32 %v9403, 4294901760
      %v10940 = vsub.f32 %v9403, %v10939
      %v10941 = vand.u32 %v10940, 4294901760
      %10942 = vmatpush.msra.mxu0 %v10941
      %v10943 = vand.u32 %v9402, 4294901760
      %v10944 = vsub.f32 %v9402, %v10943
      %v10945 = vand.u32 %v10944, 4294901760
      %10946 = vmatpush.msra.mxu0 %v10945
      %v10947 = vand.u32 %v9401, 4294901760
      %v10948 = vsub.f32 %v9401, %v10947
      %v10949 = vand.u32 %v10948, 4294901760
      %10950 = vmatpush.msra.mxu0 %v10949
      %v10951 = vand.u32 %v9400, 4294901760
      %v10952 = vsub.f32 %v9400, %v10951
      %v10953 = vand.u32 %v10952, 4294901760
      %10954 = vmatpush.msra.mxu0 %v10953
      %v10955 = vand.u32 %v9399, 4294901760
      %v10956 = vsub.f32 %v9399, %v10955
      %v10957 = vand.u32 %v10956, 4294901760
      %10958 = vmatpush.msra.mxu0 %v10957
      %v10959 = vand.u32 %v9398, 4294901760
      %v10960 = vsub.f32 %v9398, %v10959
      %v10961 = vand.u32 %v10960, 4294901760
      %10962 = vmatpush.msra.mxu0 %v10961
      %v10963 = vand.u32 %v9397, 4294901760
      %v10964 = vsub.f32 %v9397, %v10963
      %v10965 = vand.u32 %v10964, 4294901760
      %10966 = vmatpush.msra.mxu0 %v10965
      %v10967 = vand.u32 %v9396, 4294901760
      %v10968 = vsub.f32 %v9396, %v10967
      %v10969 = vand.u32 %v10968, 4294901760
      %10970 = vmatpush.msra.mxu0 %v10969
      %v10971 = vand.u32 %v9395, 4294901760
      %v10972 = vsub.f32 %v9395, %v10971
      %v10973 = vand.u32 %v10972, 4294901760
      %10974 = vmatpush.msra.mxu0 %v10973
      %v10975 = vand.u32 %v9361, 4294901760
      %10976 = vmatmul.f32.gmra.mxu0 %v10975
      %v10977 = vpop.f32.mrf.mxu0
      %v10978 = vadd.f32 %v10813, %v10977
      %v10979 = vand.u32 %v9362, 4294901760
      %10980 = vmatmul.f32.gmra.mxu0 %v10979
      %v10981 = vpop.f32.mrf.mxu0
      %v10982 = vadd.f32 %v10819, %v10981
      %v10983 = vand.u32 %v9363, 4294901760
      %10984 = vmatmul.f32.gmra.mxu0 %v10983
      %v10985 = vpop.f32.mrf.mxu0
      %v10986 = vadd.f32 %v10825, %v10985
      %v10987 = vand.u32 %v9364, 4294901760
      %10988 = vmatmul.f32.gmra.mxu0 %v10987
      %v10989 = vpop.f32.mrf.mxu0
      %v10990 = vadd.f32 %v10831, %v10989
      %v10991 = vand.u32 %v9365, 4294901760
      %10992 = vmatmul.f32.gmra.mxu0 %v10991
      %v10993 = vpop.f32.mrf.mxu0
      %v10994 = vadd.f32 %v10837, %v10993
      %v10995 = vand.u32 %v9366, 4294901760
      %10996 = vmatmul.f32.gmra.mxu0 %v10995
      %v10997 = vpop.f32.mrf.mxu0
      %v10998 = vadd.f32 %v10843, %v10997
      %v10999 = vand.u32 %v9367, 4294901760
      %11000 = vmatmul.f32.gmra.mxu0 %v10999
      %v11001 = vpop.f32.mrf.mxu0
      %v11002 = vadd.f32 %v10849, %v11001
      %v11003 = vand.u32 %v9368, 4294901760
      %11004 = vmatmul.f32.gmra.mxu0 %v11003
      %v11005 = vpop.f32.mrf.mxu0
      %v11006 = vadd.f32 %v10855, %v11005
      %v11007 = vand.u32 %v9369, 4294901760
      %11008 = vmatmul.f32.gmra.mxu0 %v11007
      %v11009 = vpop.f32.mrf.mxu0
      %v11010 = vadd.f32 %v10861, %v11009
      %v11011 = vand.u32 %v9370, 4294901760
      %11012 = vmatmul.f32.gmra.mxu0 %v11011
      %v11013 = vpop.f32.mrf.mxu0
      %v11014 = vadd.f32 %v10867, %v11013
      %v11015 = vand.u32 %v9371, 4294901760
      %11016 = vmatmul.f32.gmra.mxu0 %v11015
      %v11017 = vpop.f32.mrf.mxu0
      %v11018 = vadd.f32 %v10873, %v11017
      %v11019 = vand.u32 %v9372, 4294901760
      %11020 = vmatmul.f32.gmra.mxu0 %v11019
      %v11021 = vpop.f32.mrf.mxu0
      %v11022 = vadd.f32 %v10879, %v11021
      %v11023 = vand.u32 %v9373, 4294901760
      %11024 = vmatmul.f32.gmra.mxu0 %v11023
      %v11025 = vpop.f32.mrf.mxu0
      %v11026 = vadd.f32 %v10885, %v11025
      %v11027 = vand.u32 %v9374, 4294901760
      %11028 = vmatmul.f32.gmra.mxu0 %v11027
      %v11029 = vpop.f32.mrf.mxu0
      %v11030 = vadd.f32 %v10891, %v11029
      %v11031 = vand.u32 %v9375, 4294901760
      %11032 = vmatmul.f32.gmra.mxu0 %v11031
      %v11033 = vpop.f32.mrf.mxu0
      %v11034 = vadd.f32 %v10897, %v11033
      %v11035 = vand.u32 %v9376, 4294901760
      %11036 = vmatmul.f32.gmra.mxu0 %v11035
      %v11037 = vpop.f32.mrf.mxu0
      %v11038 = vadd.f32 %v10903, %v11037
      %v11039 = vand.u32 %v9377, 4294901760
      %11040 = vmatmul.f32.gmra.mxu0 %v11039
      %v11041 = vpop.f32.mrf.mxu0
      %v11042 = vadd.f32 %v10909, %v11041
      %11043 = vdwg.mxu0
      %v11044 = vand.u32 %v9410, 4294901760
      %11045 = vmatpush.msra.mxu0 %v11044
      %v11046 = vand.u32 %v9409, 4294901760
      %11047 = vmatpush.msra.mxu0 %v11046
      %v11048 = vand.u32 %v9408, 4294901760
      %11049 = vmatpush.msra.mxu0 %v11048
      %v11050 = vand.u32 %v9407, 4294901760
      %11051 = vmatpush.msra.mxu0 %v11050
      %v11052 = vand.u32 %v9406, 4294901760
      %11053 = vmatpush.msra.mxu0 %v11052
      %v11054 = vand.u32 %v9405, 4294901760
      %11055 = vmatpush.msra.mxu0 %v11054
      %v11056 = vand.u32 %v9404, 4294901760
      %11057 = vmatpush.msra.mxu0 %v11056
      %v11058 = vand.u32 %v9403, 4294901760
      %11059 = vmatpush.msra.mxu0 %v11058
      %v11060 = vand.u32 %v9402, 4294901760
      %11061 = vmatpush.msra.mxu0 %v11060
      %v11062 = vand.u32 %v9401, 4294901760
      %11063 = vmatpush.msra.mxu0 %v11062
      %v11064 = vand.u32 %v9400, 4294901760
      %11065 = vmatpush.msra.mxu0 %v11064
      %v11066 = vand.u32 %v9399, 4294901760
      %11067 = vmatpush.msra.mxu0 %v11066
      %v11068 = vand.u32 %v9398, 4294901760
      %11069 = vmatpush.msra.mxu0 %v11068
      %v11070 = vand.u32 %v9397, 4294901760
      %11071 = vmatpush.msra.mxu0 %v11070
      %v11072 = vand.u32 %v9396, 4294901760
      %11073 = vmatpush.msra.mxu0 %v11072
      %v11074 = vand.u32 %v9395, 4294901760
      %11075 = vmatpush.msra.mxu0 %v11074
      %v11076 = vand.u32 %v9361, 4294901760
      %11077 = vmatmul.f32.gmra.mxu0 %v11076
      %v11078 = vpop.f32.mrf.mxu0
      %v11079 = vadd.f32 %v10978, %v11078
      %v11080 = vand.u32 %v9362, 4294901760
      %11081 = vmatmul.f32.gmra.mxu0 %v11080
      %v11082 = vpop.f32.mrf.mxu0
      %v11083 = vadd.f32 %v10982, %v11082
      %v11084 = vand.u32 %v9363, 4294901760
      %11085 = vmatmul.f32.gmra.mxu0 %v11084
      %v11086 = vpop.f32.mrf.mxu0
      %v11087 = vadd.f32 %v10986, %v11086
      %v11088 = vand.u32 %v9364, 4294901760
      %11089 = vmatmul.f32.gmra.mxu0 %v11088
      %v11090 = vpop.f32.mrf.mxu0
      %v11091 = vadd.f32 %v10990, %v11090
      %v11092 = vand.u32 %v9365, 4294901760
      %11093 = vmatmul.f32.gmra.mxu0 %v11092
      %v11094 = vpop.f32.mrf.mxu0
      %v11095 = vadd.f32 %v10994, %v11094
      %v11096 = vand.u32 %v9366, 4294901760
      %11097 = vmatmul.f32.gmra.mxu0 %v11096
      %v11098 = vpop.f32.mrf.mxu0
      %v11099 = vadd.f32 %v10998, %v11098
      %v11100 = vand.u32 %v9367, 4294901760
      %11101 = vmatmul.f32.gmra.mxu0 %v11100
      %v11102 = vpop.f32.mrf.mxu0
      %v11103 = vadd.f32 %v11002, %v11102
      %v11104 = vand.u32 %v9368, 4294901760
      %11105 = vmatmul.f32.gmra.mxu0 %v11104
      %v11106 = vpop.f32.mrf.mxu0
      %v11107 = vadd.f32 %v11006, %v11106
      %v11108 = vand.u32 %v9369, 4294901760
      %11109 = vmatmul.f32.gmra.mxu0 %v11108
      %v11110 = vpop.f32.mrf.mxu0
      %v11111 = vadd.f32 %v11010, %v11110
      %v11112 = vand.u32 %v9370, 4294901760
      %11113 = vmatmul.f32.gmra.mxu0 %v11112
      %v11114 = vpop.f32.mrf.mxu0
      %v11115 = vadd.f32 %v11014, %v11114
      %v11116 = vand.u32 %v9371, 4294901760
      %11117 = vmatmul.f32.gmra.mxu0 %v11116
      %v11118 = vpop.f32.mrf.mxu0
      %v11119 = vadd.f32 %v11018, %v11118
      %v11120 = vand.u32 %v9372, 4294901760
      %11121 = vmatmul.f32.gmra.mxu0 %v11120
      %v11122 = vpop.f32.mrf.mxu0
      %v11123 = vadd.f32 %v11022, %v11122
      %v11124 = vand.u32 %v9373, 4294901760
      %11125 = vmatmul.f32.gmra.mxu0 %v11124
      %v11126 = vpop.f32.mrf.mxu0
      %v11127 = vadd.f32 %v11026, %v11126
      %v11128 = vand.u32 %v9374, 4294901760
      %11129 = vmatmul.f32.gmra.mxu0 %v11128
      %v11130 = vpop.f32.mrf.mxu0
      %v11131 = vadd.f32 %v11030, %v11130
      %v11132 = vand.u32 %v9375, 4294901760
      %11133 = vmatmul.f32.gmra.mxu0 %v11132
      %v11134 = vpop.f32.mrf.mxu0
      %v11135 = vadd.f32 %v11034, %v11134
      %v11136 = vand.u32 %v9376, 4294901760
      %11137 = vmatmul.f32.gmra.mxu0 %v11136
      %v11138 = vpop.f32.mrf.mxu0
      %v11139 = vadd.f32 %v11038, %v11138
      %v11140 = vand.u32 %v9377, 4294901760
      %11141 = vmatmul.f32.gmra.mxu0 %v11140
      %v11142 = vpop.f32.mrf.mxu0
      %v11143 = vadd.f32 %v11042, %v11142
      %11144 = vdwg.mxu0
      %11145 = vmatpush.msra.mxu0 0.0
      %11146 = vmatpush.msra.mxu0 0.0
      %11147 = vmatpush.msra.mxu0 0.0
      %11148 = vmatpush.msra.mxu0 0.0
      %11149 = vmatpush.msra.mxu0 0.0
      %11150 = vmatpush.msra.mxu0 0.0
      %11151 = vmatpush.msra.mxu0 0.0
      %11152 = vmatpush.msra.mxu0 0.0
      %11153 = vmatpush.msra.mxu0 0.0
      %11154 = vmatpush.msra.mxu0 0.0
      %11155 = vmatpush.msra.mxu0 0.0
      %11156 = vmatpush.msra.mxu0 0.0
      %v11157 = vand.u32 %v9414, 4294901760
      %11158 = vmatpush.msra.mxu0 %v11157
      %v11159 = vand.u32 %v9413, 4294901760
      %11160 = vmatpush.msra.mxu0 %v11159
      %v11161 = vand.u32 %v9412, 4294901760
      %11162 = vmatpush.msra.mxu0 %v11161
      %v11163 = vand.u32 %v9411, 4294901760
      %11164 = vmatpush.msra.mxu0 %v11163
      %v11165 = vand.u32 %v9421, 4294901760
      %v11166 = vsub.f32 %v9421, %v11165
      %v11167 = vand.u32 %v11166, 4294901760
      %v11168 = vsub.f32 %v11166, %v11167
      %v11169 = vand.u32 %v11168, 4294901760
      %11170 = vmatmul.f32.gmra.mxu0 %v11169
      %v11171 = vpop.f32.mrf.mxu0
      %v11172 = vadd.f32 %v11079, %v11171
      %v11173 = vand.u32 %v9424, 4294901760
      %v11174 = vsub.f32 %v9424, %v11173
      %v11175 = vand.u32 %v11174, 4294901760
      %v11176 = vsub.f32 %v11174, %v11175
      %v11177 = vand.u32 %v11176, 4294901760
      %11178 = vmatmul.f32.gmra.mxu0 %v11177
      %v11179 = vpop.f32.mrf.mxu0
      %v11180 = vadd.f32 %v11083, %v11179
      %v11181 = vand.u32 %v9427, 4294901760
      %v11182 = vsub.f32 %v9427, %v11181
      %v11183 = vand.u32 %v11182, 4294901760
      %v11184 = vsub.f32 %v11182, %v11183
      %v11185 = vand.u32 %v11184, 4294901760
      %11186 = vmatmul.f32.gmra.mxu0 %v11185
      %v11187 = vpop.f32.mrf.mxu0
      %v11188 = vadd.f32 %v11087, %v11187
      %v11189 = vand.u32 %v9430, 4294901760
      %v11190 = vsub.f32 %v9430, %v11189
      %v11191 = vand.u32 %v11190, 4294901760
      %v11192 = vsub.f32 %v11190, %v11191
      %v11193 = vand.u32 %v11192, 4294901760
      %11194 = vmatmul.f32.gmra.mxu0 %v11193
      %v11195 = vpop.f32.mrf.mxu0
      %v11196 = vadd.f32 %v11091, %v11195
      %v11197 = vand.u32 %v9433, 4294901760
      %v11198 = vsub.f32 %v9433, %v11197
      %v11199 = vand.u32 %v11198, 4294901760
      %v11200 = vsub.f32 %v11198, %v11199
      %v11201 = vand.u32 %v11200, 4294901760
      %11202 = vmatmul.f32.gmra.mxu0 %v11201
      %v11203 = vpop.f32.mrf.mxu0
      %v11204 = vadd.f32 %v11095, %v11203
      %v11205 = vand.u32 %v9436, 4294901760
      %v11206 = vsub.f32 %v9436, %v11205
      %v11207 = vand.u32 %v11206, 4294901760
      %v11208 = vsub.f32 %v11206, %v11207
      %v11209 = vand.u32 %v11208, 4294901760
      %11210 = vmatmul.f32.gmra.mxu0 %v11209
      %v11211 = vpop.f32.mrf.mxu0
      %v11212 = vadd.f32 %v11099, %v11211
      %v11213 = vand.u32 %v9439, 4294901760
      %v11214 = vsub.f32 %v9439, %v11213
      %v11215 = vand.u32 %v11214, 4294901760
      %v11216 = vsub.f32 %v11214, %v11215
      %v11217 = vand.u32 %v11216, 4294901760
      %11218 = vmatmul.f32.gmra.mxu0 %v11217
      %v11219 = vpop.f32.mrf.mxu0
      %v11220 = vadd.f32 %v11103, %v11219
      %v11221 = vand.u32 %v9442, 4294901760
      %v11222 = vsub.f32 %v9442, %v11221
      %v11223 = vand.u32 %v11222, 4294901760
      %v11224 = vsub.f32 %v11222, %v11223
      %v11225 = vand.u32 %v11224, 4294901760
      %11226 = vmatmul.f32.gmra.mxu0 %v11225
      %v11227 = vpop.f32.mrf.mxu0
      %v11228 = vadd.f32 %v11107, %v11227
      %v11229 = vand.u32 %v9445, 4294901760
      %v11230 = vsub.f32 %v9445, %v11229
      %v11231 = vand.u32 %v11230, 4294901760
      %v11232 = vsub.f32 %v11230, %v11231
      %v11233 = vand.u32 %v11232, 4294901760
      %11234 = vmatmul.f32.gmra.mxu0 %v11233
      %v11235 = vpop.f32.mrf.mxu0
      %v11236 = vadd.f32 %v11111, %v11235
      %v11237 = vand.u32 %v9448, 4294901760
      %v11238 = vsub.f32 %v9448, %v11237
      %v11239 = vand.u32 %v11238, 4294901760
      %v11240 = vsub.f32 %v11238, %v11239
      %v11241 = vand.u32 %v11240, 4294901760
      %11242 = vmatmul.f32.gmra.mxu0 %v11241
      %v11243 = vpop.f32.mrf.mxu0
      %v11244 = vadd.f32 %v11115, %v11243
      %v11245 = vand.u32 %v9451, 4294901760
      %v11246 = vsub.f32 %v9451, %v11245
      %v11247 = vand.u32 %v11246, 4294901760
      %v11248 = vsub.f32 %v11246, %v11247
      %v11249 = vand.u32 %v11248, 4294901760
      %11250 = vmatmul.f32.gmra.mxu0 %v11249
      %v11251 = vpop.f32.mrf.mxu0
      %v11252 = vadd.f32 %v11119, %v11251
      %v11253 = vand.u32 %v9454, 4294901760
      %v11254 = vsub.f32 %v9454, %v11253
      %v11255 = vand.u32 %v11254, 4294901760
      %v11256 = vsub.f32 %v11254, %v11255
      %v11257 = vand.u32 %v11256, 4294901760
      %11258 = vmatmul.f32.gmra.mxu0 %v11257
      %v11259 = vpop.f32.mrf.mxu0
      %v11260 = vadd.f32 %v11123, %v11259
      %v11261 = vand.u32 %v9457, 4294901760
      %v11262 = vsub.f32 %v9457, %v11261
      %v11263 = vand.u32 %v11262, 4294901760
      %v11264 = vsub.f32 %v11262, %v11263
      %v11265 = vand.u32 %v11264, 4294901760
      %11266 = vmatmul.f32.gmra.mxu0 %v11265
      %v11267 = vpop.f32.mrf.mxu0
      %v11268 = vadd.f32 %v11127, %v11267
      %v11269 = vand.u32 %v9460, 4294901760
      %v11270 = vsub.f32 %v9460, %v11269
      %v11271 = vand.u32 %v11270, 4294901760
      %v11272 = vsub.f32 %v11270, %v11271
      %v11273 = vand.u32 %v11272, 4294901760
      %11274 = vmatmul.f32.gmra.mxu0 %v11273
      %v11275 = vpop.f32.mrf.mxu0
      %v11276 = vadd.f32 %v11131, %v11275
      %v11277 = vand.u32 %v9463, 4294901760
      %v11278 = vsub.f32 %v9463, %v11277
      %v11279 = vand.u32 %v11278, 4294901760
      %v11280 = vsub.f32 %v11278, %v11279
      %v11281 = vand.u32 %v11280, 4294901760
      %11282 = vmatmul.f32.gmra.mxu0 %v11281
      %v11283 = vpop.f32.mrf.mxu0
      %v11284 = vadd.f32 %v11135, %v11283
      %v11285 = vand.u32 %v9466, 4294901760
      %v11286 = vsub.f32 %v9466, %v11285
      %v11287 = vand.u32 %v11286, 4294901760
      %v11288 = vsub.f32 %v11286, %v11287
      %v11289 = vand.u32 %v11288, 4294901760
      %11290 = vmatmul.f32.gmra.mxu0 %v11289
      %v11291 = vpop.f32.mrf.mxu0
      %v11292 = vadd.f32 %v11139, %v11291
      %v11293 = vand.u32 %v9469, 4294901760
      %v11294 = vsub.f32 %v9469, %v11293
      %v11295 = vand.u32 %v11294, 4294901760
      %v11296 = vsub.f32 %v11294, %v11295
      %v11297 = vand.u32 %v11296, 4294901760
      %11298 = vmatmul.f32.gmra.mxu0 %v11297
      %v11299 = vpop.f32.mrf.mxu0
      %v11300 = vadd.f32 %v11143, %v11299
      %11301 = vdwg.mxu0
      %11302 = vmatpush.msra.mxu0 0.0
      %11303 = vmatpush.msra.mxu0 0.0
      %11304 = vmatpush.msra.mxu0 0.0
      %11305 = vmatpush.msra.mxu0 0.0
      %11306 = vmatpush.msra.mxu0 0.0
      %11307 = vmatpush.msra.mxu0 0.0
      %11308 = vmatpush.msra.mxu0 0.0
      %11309 = vmatpush.msra.mxu0 0.0
      %11310 = vmatpush.msra.mxu0 0.0
      %11311 = vmatpush.msra.mxu0 0.0
      %11312 = vmatpush.msra.mxu0 0.0
      %11313 = vmatpush.msra.mxu0 0.0
      %v11314 = vand.u32 %v9414, 4294901760
      %v11315 = vsub.f32 %v9414, %v11314
      %v11316 = vand.u32 %v11315, 4294901760
      %v11317 = vsub.f32 %v11315, %v11316
      %v11318 = vand.u32 %v11317, 4294901760
      %11319 = vmatpush.msra.mxu0 %v11318
      %v11320 = vand.u32 %v9413, 4294901760
      %v11321 = vsub.f32 %v9413, %v11320
      %v11322 = vand.u32 %v11321, 4294901760
      %v11323 = vsub.f32 %v11321, %v11322
      %v11324 = vand.u32 %v11323, 4294901760
      %11325 = vmatpush.msra.mxu0 %v11324
      %v11326 = vand.u32 %v9412, 4294901760
      %v11327 = vsub.f32 %v9412, %v11326
      %v11328 = vand.u32 %v11327, 4294901760
      %v11329 = vsub.f32 %v11327, %v11328
      %v11330 = vand.u32 %v11329, 4294901760
      %11331 = vmatpush.msra.mxu0 %v11330
      %v11332 = vand.u32 %v9411, 4294901760
      %v11333 = vsub.f32 %v9411, %v11332
      %v11334 = vand.u32 %v11333, 4294901760
      %v11335 = vsub.f32 %v11333, %v11334
      %v11336 = vand.u32 %v11335, 4294901760
      %11337 = vmatpush.msra.mxu0 %v11336
      %v11338 = vand.u32 %v9421, 4294901760
      %11339 = vmatmul.f32.gmra.mxu0 %v11338
      %v11340 = vpop.f32.mrf.mxu0
      %v11341 = vadd.f32 %v11172, %v11340
      %v11342 = vand.u32 %v9424, 4294901760
      %11343 = vmatmul.f32.gmra.mxu0 %v11342
      %v11344 = vpop.f32.mrf.mxu0
      %v11345 = vadd.f32 %v11180, %v11344
      %v11346 = vand.u32 %v9427, 4294901760
      %11347 = vmatmul.f32.gmra.mxu0 %v11346
      %v11348 = vpop.f32.mrf.mxu0
      %v11349 = vadd.f32 %v11188, %v11348
      %v11350 = vand.u32 %v9430, 4294901760
      %11351 = vmatmul.f32.gmra.mxu0 %v11350
      %v11352 = vpop.f32.mrf.mxu0
      %v11353 = vadd.f32 %v11196, %v11352
      %v11354 = vand.u32 %v9433, 4294901760
      %11355 = vmatmul.f32.gmra.mxu0 %v11354
      %v11356 = vpop.f32.mrf.mxu0
      %v11357 = vadd.f32 %v11204, %v11356
      %v11358 = vand.u32 %v9436, 4294901760
      %11359 = vmatmul.f32.gmra.mxu0 %v11358
      %v11360 = vpop.f32.mrf.mxu0
      %v11361 = vadd.f32 %v11212, %v11360
      %v11362 = vand.u32 %v9439, 4294901760
      %11363 = vmatmul.f32.gmra.mxu0 %v11362
      %v11364 = vpop.f32.mrf.mxu0
      %v11365 = vadd.f32 %v11220, %v11364
      %v11366 = vand.u32 %v9442, 4294901760
      %11367 = vmatmul.f32.gmra.mxu0 %v11366
      %v11368 = vpop.f32.mrf.mxu0
      %v11369 = vadd.f32 %v11228, %v11368
      %v11370 = vand.u32 %v9445, 4294901760
      %11371 = vmatmul.f32.gmra.mxu0 %v11370
      %v11372 = vpop.f32.mrf.mxu0
      %v11373 = vadd.f32 %v11236, %v11372
      %v11374 = vand.u32 %v9448, 4294901760
      %11375 = vmatmul.f32.gmra.mxu0 %v11374
      %v11376 = vpop.f32.mrf.mxu0
      %v11377 = vadd.f32 %v11244, %v11376
      %v11378 = vand.u32 %v9451, 4294901760
      %11379 = vmatmul.f32.gmra.mxu0 %v11378
      %v11380 = vpop.f32.mrf.mxu0
      %v11381 = vadd.f32 %v11252, %v11380
      %v11382 = vand.u32 %v9454, 4294901760
      %11383 = vmatmul.f32.gmra.mxu0 %v11382
      %v11384 = vpop.f32.mrf.mxu0
      %v11385 = vadd.f32 %v11260, %v11384
      %v11386 = vand.u32 %v9457, 4294901760
      %11387 = vmatmul.f32.gmra.mxu0 %v11386
      %v11388 = vpop.f32.mrf.mxu0
      %v11389 = vadd.f32 %v11268, %v11388
      %v11390 = vand.u32 %v9460, 4294901760
      %11391 = vmatmul.f32.gmra.mxu0 %v11390
      %v11392 = vpop.f32.mrf.mxu0
      %v11393 = vadd.f32 %v11276, %v11392
      %v11394 = vand.u32 %v9463, 4294901760
      %11395 = vmatmul.f32.gmra.mxu0 %v11394
      %v11396 = vpop.f32.mrf.mxu0
      %v11397 = vadd.f32 %v11284, %v11396
      %v11398 = vand.u32 %v9466, 4294901760
      %11399 = vmatmul.f32.gmra.mxu0 %v11398
      %v11400 = vpop.f32.mrf.mxu0
      %v11401 = vadd.f32 %v11292, %v11400
      %v11402 = vand.u32 %v9469, 4294901760
      %11403 = vmatmul.f32.gmra.mxu0 %v11402
      %v11404 = vpop.f32.mrf.mxu0
      %v11405 = vadd.f32 %v11300, %v11404
      %11406 = vdwg.mxu0
      %11407 = vmatpush.msra.mxu0 0.0
      %11408 = vmatpush.msra.mxu0 0.0
      %11409 = vmatpush.msra.mxu0 0.0
      %11410 = vmatpush.msra.mxu0 0.0
      %11411 = vmatpush.msra.mxu0 0.0
      %11412 = vmatpush.msra.mxu0 0.0
      %11413 = vmatpush.msra.mxu0 0.0
      %11414 = vmatpush.msra.mxu0 0.0
      %11415 = vmatpush.msra.mxu0 0.0
      %11416 = vmatpush.msra.mxu0 0.0
      %11417 = vmatpush.msra.mxu0 0.0
      %11418 = vmatpush.msra.mxu0 0.0
      %v11419 = vand.u32 %v9414, 4294901760
      %v11420 = vsub.f32 %v9414, %v11419
      %11421 = vmatpush.msra.mxu0 %v11420
      %v11422 = vand.u32 %v9413, 4294901760
      %v11423 = vsub.f32 %v9413, %v11422
      %11424 = vmatpush.msra.mxu0 %v11423
      %v11425 = vand.u32 %v9412, 4294901760
      %v11426 = vsub.f32 %v9412, %v11425
      %11427 = vmatpush.msra.mxu0 %v11426
      %v11428 = vand.u32 %v9411, 4294901760
      %v11429 = vsub.f32 %v9411, %v11428
      %11430 = vmatpush.msra.mxu0 %v11429
      %v11431 = vand.u32 %v9421, 4294901760
      %v11432 = vsub.f32 %v9421, %v11431
      %11433 = vmatmul.f32.gmra.mxu0 %v11432
      %v11434 = vpop.f32.mrf.mxu0
      %v11435 = vadd.f32 %v11341, %v11434
      %v11436 = vand.u32 %v9424, 4294901760
      %v11437 = vsub.f32 %v9424, %v11436
      %11438 = vmatmul.f32.gmra.mxu0 %v11437
      %v11439 = vpop.f32.mrf.mxu0
      %v11440 = vadd.f32 %v11345, %v11439
      %v11441 = vand.u32 %v9427, 4294901760
      %v11442 = vsub.f32 %v9427, %v11441
      %11443 = vmatmul.f32.gmra.mxu0 %v11442
      %v11444 = vpop.f32.mrf.mxu0
      %v11445 = vadd.f32 %v11349, %v11444
      %v11446 = vand.u32 %v9430, 4294901760
      %v11447 = vsub.f32 %v9430, %v11446
      %11448 = vmatmul.f32.gmra.mxu0 %v11447
      %v11449 = vpop.f32.mrf.mxu0
      %v11450 = vadd.f32 %v11353, %v11449
      %v11451 = vand.u32 %v9433, 4294901760
      %v11452 = vsub.f32 %v9433, %v11451
      %11453 = vmatmul.f32.gmra.mxu0 %v11452
      %v11454 = vpop.f32.mrf.mxu0
      %v11455 = vadd.f32 %v11357, %v11454
      %v11456 = vand.u32 %v9436, 4294901760
      %v11457 = vsub.f32 %v9436, %v11456
      %11458 = vmatmul.f32.gmra.mxu0 %v11457
      %v11459 = vpop.f32.mrf.mxu0
      %v11460 = vadd.f32 %v11361, %v11459
      %v11461 = vand.u32 %v9439, 4294901760
      %v11462 = vsub.f32 %v9439, %v11461
      %11463 = vmatmul.f32.gmra.mxu0 %v11462
      %v11464 = vpop.f32.mrf.mxu0
      %v11465 = vadd.f32 %v11365, %v11464
      %v11466 = vand.u32 %v9442, 4294901760
      %v11467 = vsub.f32 %v9442, %v11466
      %11468 = vmatmul.f32.gmra.mxu0 %v11467
      %v11469 = vpop.f32.mrf.mxu0
      %v11470 = vadd.f32 %v11369, %v11469
      %v11471 = vand.u32 %v9445, 4294901760
      %v11472 = vsub.f32 %v9445, %v11471
      %11473 = vmatmul.f32.gmra.mxu0 %v11472
      %v11474 = vpop.f32.mrf.mxu0
      %v11475 = vadd.f32 %v11373, %v11474
      %v11476 = vand.u32 %v9448, 4294901760
      %v11477 = vsub.f32 %v9448, %v11476
      %11478 = vmatmul.f32.gmra.mxu0 %v11477
      %v11479 = vpop.f32.mrf.mxu0
      %v11480 = vadd.f32 %v11377, %v11479
      %v11481 = vand.u32 %v9451, 4294901760
      %v11482 = vsub.f32 %v9451, %v11481
      %11483 = vmatmul.f32.gmra.mxu0 %v11482
      %v11484 = vpop.f32.mrf.mxu0
      %v11485 = vadd.f32 %v11381, %v11484
      %v11486 = vand.u32 %v9454, 4294901760
      %v11487 = vsub.f32 %v9454, %v11486
      %11488 = vmatmul.f32.gmra.mxu0 %v11487
      %v11489 = vpop.f32.mrf.mxu0
      %v11490 = vadd.f32 %v11385, %v11489
      %v11491 = vand.u32 %v9457, 4294901760
      %v11492 = vsub.f32 %v9457, %v11491
      %11493 = vmatmul.f32.gmra.mxu0 %v11492
      %v11494 = vpop.f32.mrf.mxu0
      %v11495 = vadd.f32 %v11389, %v11494
      %v11496 = vand.u32 %v9460, 4294901760
      %v11497 = vsub.f32 %v9460, %v11496
      %11498 = vmatmul.f32.gmra.mxu0 %v11497
      %v11499 = vpop.f32.mrf.mxu0
      %v11500 = vadd.f32 %v11393, %v11499
      %v11501 = vand.u32 %v9463, 4294901760
      %v11502 = vsub.f32 %v9463, %v11501
      %11503 = vmatmul.f32.gmra.mxu0 %v11502
      %v11504 = vpop.f32.mrf.mxu0
      %v11505 = vadd.f32 %v11397, %v11504
      %v11506 = vand.u32 %v9466, 4294901760
      %v11507 = vsub.f32 %v9466, %v11506
      %11508 = vmatmul.f32.gmra.mxu0 %v11507
      %v11509 = vpop.f32.mrf.mxu0
      %v11510 = vadd.f32 %v11401, %v11509
      %v11511 = vand.u32 %v9469, 4294901760
      %v11512 = vsub.f32 %v9469, %v11511
      %11513 = vmatmul.f32.gmra.mxu0 %v11512
      %v11514 = vpop.f32.mrf.mxu0
      %v11515 = vadd.f32 %v11405, %v11514
      %11516 = vdwg.mxu0
      %11517 = vmatpush.msra.mxu0 0.0
      %11518 = vmatpush.msra.mxu0 0.0
      %11519 = vmatpush.msra.mxu0 0.0
      %11520 = vmatpush.msra.mxu0 0.0
      %11521 = vmatpush.msra.mxu0 0.0
      %11522 = vmatpush.msra.mxu0 0.0
      %11523 = vmatpush.msra.mxu0 0.0
      %11524 = vmatpush.msra.mxu0 0.0
      %11525 = vmatpush.msra.mxu0 0.0
      %11526 = vmatpush.msra.mxu0 0.0
      %11527 = vmatpush.msra.mxu0 0.0
      %11528 = vmatpush.msra.mxu0 0.0
      %v11529 = vand.u32 %v9414, 4294901760
      %11530 = vmatpush.msra.mxu0 %v11529
      %v11531 = vand.u32 %v9413, 4294901760
      %11532 = vmatpush.msra.mxu0 %v11531
      %v11533 = vand.u32 %v9412, 4294901760
      %11534 = vmatpush.msra.mxu0 %v11533
      %v11535 = vand.u32 %v9411, 4294901760
      %11536 = vmatpush.msra.mxu0 %v11535
      %v11537 = vand.u32 %v9421, 4294901760
      %v11538 = vsub.f32 %v9421, %v11537
      %v11539 = vand.u32 %v11538, 4294901760
      %11540 = vmatmul.f32.gmra.mxu0 %v11539
      %v11541 = vpop.f32.mrf.mxu0
      %v11542 = vadd.f32 %v11435, %v11541
      %v11543 = vand.u32 %v9424, 4294901760
      %v11544 = vsub.f32 %v9424, %v11543
      %v11545 = vand.u32 %v11544, 4294901760
      %11546 = vmatmul.f32.gmra.mxu0 %v11545
      %v11547 = vpop.f32.mrf.mxu0
      %v11548 = vadd.f32 %v11440, %v11547
      %v11549 = vand.u32 %v9427, 4294901760
      %v11550 = vsub.f32 %v9427, %v11549
      %v11551 = vand.u32 %v11550, 4294901760
      %11552 = vmatmul.f32.gmra.mxu0 %v11551
      %v11553 = vpop.f32.mrf.mxu0
      %v11554 = vadd.f32 %v11445, %v11553
      %v11555 = vand.u32 %v9430, 4294901760
      %v11556 = vsub.f32 %v9430, %v11555
      %v11557 = vand.u32 %v11556, 4294901760
      %11558 = vmatmul.f32.gmra.mxu0 %v11557
      %v11559 = vpop.f32.mrf.mxu0
      %v11560 = vadd.f32 %v11450, %v11559
      %v11561 = vand.u32 %v9433, 4294901760
      %v11562 = vsub.f32 %v9433, %v11561
      %v11563 = vand.u32 %v11562, 4294901760
      %11564 = vmatmul.f32.gmra.mxu0 %v11563
      %v11565 = vpop.f32.mrf.mxu0
      %v11566 = vadd.f32 %v11455, %v11565
      %v11567 = vand.u32 %v9436, 4294901760
      %v11568 = vsub.f32 %v9436, %v11567
      %v11569 = vand.u32 %v11568, 4294901760
      %11570 = vmatmul.f32.gmra.mxu0 %v11569
      %v11571 = vpop.f32.mrf.mxu0
      %v11572 = vadd.f32 %v11460, %v11571
      %v11573 = vand.u32 %v9439, 4294901760
      %v11574 = vsub.f32 %v9439, %v11573
      %v11575 = vand.u32 %v11574, 4294901760
      %11576 = vmatmul.f32.gmra.mxu0 %v11575
      %v11577 = vpop.f32.mrf.mxu0
      %v11578 = vadd.f32 %v11465, %v11577
      %v11579 = vand.u32 %v9442, 4294901760
      %v11580 = vsub.f32 %v9442, %v11579
      %v11581 = vand.u32 %v11580, 4294901760
      %11582 = vmatmul.f32.gmra.mxu0 %v11581
      %v11583 = vpop.f32.mrf.mxu0
      %v11584 = vadd.f32 %v11470, %v11583
      %v11585 = vand.u32 %v9445, 4294901760
      %v11586 = vsub.f32 %v9445, %v11585
      %v11587 = vand.u32 %v11586, 4294901760
      %11588 = vmatmul.f32.gmra.mxu0 %v11587
      %v11589 = vpop.f32.mrf.mxu0
      %v11590 = vadd.f32 %v11475, %v11589
      %v11591 = vand.u32 %v9448, 4294901760
      %v11592 = vsub.f32 %v9448, %v11591
      %v11593 = vand.u32 %v11592, 4294901760
      %11594 = vmatmul.f32.gmra.mxu0 %v11593
      %v11595 = vpop.f32.mrf.mxu0
      %v11596 = vadd.f32 %v11480, %v11595
      %v11597 = vand.u32 %v9451, 4294901760
      %v11598 = vsub.f32 %v9451, %v11597
      %v11599 = vand.u32 %v11598, 4294901760
      %11600 = vmatmul.f32.gmra.mxu0 %v11599
      %v11601 = vpop.f32.mrf.mxu0
      %v11602 = vadd.f32 %v11485, %v11601
      %v11603 = vand.u32 %v9454, 4294901760
      %v11604 = vsub.f32 %v9454, %v11603
      %v11605 = vand.u32 %v11604, 4294901760
      %11606 = vmatmul.f32.gmra.mxu0 %v11605
      %v11607 = vpop.f32.mrf.mxu0
      %v11608 = vadd.f32 %v11490, %v11607
      %v11609 = vand.u32 %v9457, 4294901760
      %v11610 = vsub.f32 %v9457, %v11609
      %v11611 = vand.u32 %v11610, 4294901760
      %11612 = vmatmul.f32.gmra.mxu0 %v11611
      %v11613 = vpop.f32.mrf.mxu0
      %v11614 = vadd.f32 %v11495, %v11613
      %v11615 = vand.u32 %v9460, 4294901760
      %v11616 = vsub.f32 %v9460, %v11615
      %v11617 = vand.u32 %v11616, 4294901760
      %11618 = vmatmul.f32.gmra.mxu0 %v11617
      %v11619 = vpop.f32.mrf.mxu0
      %v11620 = vadd.f32 %v11500, %v11619
      %v11621 = vand.u32 %v9463, 4294901760
      %v11622 = vsub.f32 %v9463, %v11621
      %v11623 = vand.u32 %v11622, 4294901760
      %11624 = vmatmul.f32.gmra.mxu0 %v11623
      %v11625 = vpop.f32.mrf.mxu0
      %v11626 = vadd.f32 %v11505, %v11625
      %v11627 = vand.u32 %v9466, 4294901760
      %v11628 = vsub.f32 %v9466, %v11627
      %v11629 = vand.u32 %v11628, 4294901760
      %11630 = vmatmul.f32.gmra.mxu0 %v11629
      %v11631 = vpop.f32.mrf.mxu0
      %v11632 = vadd.f32 %v11510, %v11631
      %v11633 = vand.u32 %v9469, 4294901760
      %v11634 = vsub.f32 %v9469, %v11633
      %v11635 = vand.u32 %v11634, 4294901760
      %11636 = vmatmul.f32.gmra.mxu0 %v11635
      %v11637 = vpop.f32.mrf.mxu0
      %v11638 = vadd.f32 %v11515, %v11637
      %11639 = vdwg.mxu0
      %11640 = vmatpush.msra.mxu0 0.0
      %11641 = vmatpush.msra.mxu0 0.0
      %11642 = vmatpush.msra.mxu0 0.0
      %11643 = vmatpush.msra.mxu0 0.0
      %11644 = vmatpush.msra.mxu0 0.0
      %11645 = vmatpush.msra.mxu0 0.0
      %11646 = vmatpush.msra.mxu0 0.0
      %11647 = vmatpush.msra.mxu0 0.0
      %11648 = vmatpush.msra.mxu0 0.0
      %11649 = vmatpush.msra.mxu0 0.0
      %11650 = vmatpush.msra.mxu0 0.0
      %11651 = vmatpush.msra.mxu0 0.0
      %v11652 = vand.u32 %v9414, 4294901760
      %v11653 = vsub.f32 %v9414, %v11652
      %v11654 = vand.u32 %v11653, 4294901760
      %11655 = vmatpush.msra.mxu0 %v11654
      %v11656 = vand.u32 %v9413, 4294901760
      %v11657 = vsub.f32 %v9413, %v11656
      %v11658 = vand.u32 %v11657, 4294901760
      %11659 = vmatpush.msra.mxu0 %v11658
      %v11660 = vand.u32 %v9412, 4294901760
      %v11661 = vsub.f32 %v9412, %v11660
      %v11662 = vand.u32 %v11661, 4294901760
      %11663 = vmatpush.msra.mxu0 %v11662
      %v11664 = vand.u32 %v9411, 4294901760
      %v11665 = vsub.f32 %v9411, %v11664
      %v11666 = vand.u32 %v11665, 4294901760
      %11667 = vmatpush.msra.mxu0 %v11666
      %v11668 = vand.u32 %v9421, 4294901760
      %11669 = vmatmul.f32.gmra.mxu0 %v11668
      %v11670 = vpop.f32.mrf.mxu0
      %v11671 = vadd.f32 %v11542, %v11670
      %v11672 = vand.u32 %v9424, 4294901760
      %11673 = vmatmul.f32.gmra.mxu0 %v11672
      %v11674 = vpop.f32.mrf.mxu0
      %v11675 = vadd.f32 %v11548, %v11674
      %v11676 = vand.u32 %v9427, 4294901760
      %11677 = vmatmul.f32.gmra.mxu0 %v11676
      %v11678 = vpop.f32.mrf.mxu0
      %v11679 = vadd.f32 %v11554, %v11678
      %v11680 = vand.u32 %v9430, 4294901760
      %11681 = vmatmul.f32.gmra.mxu0 %v11680
      %v11682 = vpop.f32.mrf.mxu0
      %v11683 = vadd.f32 %v11560, %v11682
      %v11684 = vand.u32 %v9433, 4294901760
      %11685 = vmatmul.f32.gmra.mxu0 %v11684
      %v11686 = vpop.f32.mrf.mxu0
      %v11687 = vadd.f32 %v11566, %v11686
      %v11688 = vand.u32 %v9436, 4294901760
      %11689 = vmatmul.f32.gmra.mxu0 %v11688
      %v11690 = vpop.f32.mrf.mxu0
      %v11691 = vadd.f32 %v11572, %v11690
      %v11692 = vand.u32 %v9439, 4294901760
      %11693 = vmatmul.f32.gmra.mxu0 %v11692
      %v11694 = vpop.f32.mrf.mxu0
      %v11695 = vadd.f32 %v11578, %v11694
      %v11696 = vand.u32 %v9442, 4294901760
      %11697 = vmatmul.f32.gmra.mxu0 %v11696
      %v11698 = vpop.f32.mrf.mxu0
      %v11699 = vadd.f32 %v11584, %v11698
      %v11700 = vand.u32 %v9445, 4294901760
      %11701 = vmatmul.f32.gmra.mxu0 %v11700
      %v11702 = vpop.f32.mrf.mxu0
      %v11703 = vadd.f32 %v11590, %v11702
      %v11704 = vand.u32 %v9448, 4294901760
      %11705 = vmatmul.f32.gmra.mxu0 %v11704
      %v11706 = vpop.f32.mrf.mxu0
      %v11707 = vadd.f32 %v11596, %v11706
      %v11708 = vand.u32 %v9451, 4294901760
      %11709 = vmatmul.f32.gmra.mxu0 %v11708
      %v11710 = vpop.f32.mrf.mxu0
      %v11711 = vadd.f32 %v11602, %v11710
      %v11712 = vand.u32 %v9454, 4294901760
      %11713 = vmatmul.f32.gmra.mxu0 %v11712
      %v11714 = vpop.f32.mrf.mxu0
      %v11715 = vadd.f32 %v11608, %v11714
      %v11716 = vand.u32 %v9457, 4294901760
      %11717 = vmatmul.f32.gmra.mxu0 %v11716
      %v11718 = vpop.f32.mrf.mxu0
      %v11719 = vadd.f32 %v11614, %v11718
      %v11720 = vand.u32 %v9460, 4294901760
      %11721 = vmatmul.f32.gmra.mxu0 %v11720
      %v11722 = vpop.f32.mrf.mxu0
      %v11723 = vadd.f32 %v11620, %v11722
      %v11724 = vand.u32 %v9463, 4294901760
      %11725 = vmatmul.f32.gmra.mxu0 %v11724
      %v11726 = vpop.f32.mrf.mxu0
      %v11727 = vadd.f32 %v11626, %v11726
      %v11728 = vand.u32 %v9466, 4294901760
      %11729 = vmatmul.f32.gmra.mxu0 %v11728
      %v11730 = vpop.f32.mrf.mxu0
      %v11731 = vadd.f32 %v11632, %v11730
      %v11732 = vand.u32 %v9469, 4294901760
      %11733 = vmatmul.f32.gmra.mxu0 %v11732
      %v11734 = vpop.f32.mrf.mxu0
      %v11735 = vadd.f32 %v11638, %v11734
      %11736 = vdwg.mxu0
      %11737 = vmatpush.msra.mxu0 0.0
      %11738 = vmatpush.msra.mxu0 0.0
      %11739 = vmatpush.msra.mxu0 0.0
      %11740 = vmatpush.msra.mxu0 0.0
      %11741 = vmatpush.msra.mxu0 0.0
      %11742 = vmatpush.msra.mxu0 0.0
      %11743 = vmatpush.msra.mxu0 0.0
      %11744 = vmatpush.msra.mxu0 0.0
      %11745 = vmatpush.msra.mxu0 0.0
      %11746 = vmatpush.msra.mxu0 0.0
      %11747 = vmatpush.msra.mxu0 0.0
      %11748 = vmatpush.msra.mxu0 0.0
      %v11749 = vand.u32 %v9414, 4294901760
      %11750 = vmatpush.msra.mxu0 %v11749
      %v11751 = vand.u32 %v9413, 4294901760
      %11752 = vmatpush.msra.mxu0 %v11751
      %v11753 = vand.u32 %v9412, 4294901760
      %11754 = vmatpush.msra.mxu0 %v11753
      %v11755 = vand.u32 %v9411, 4294901760
      %11756 = vmatpush.msra.mxu0 %v11755
      %v11757 = vand.u32 %v9421, 4294901760
      %11758 = vmatmul.f32.gmra.mxu0 %v11757
      %v11759 = vpop.f32.mrf.mxu0
      %v11760 = vadd.f32 %v11671, %v11759
      %v11761 = vand.u32 %v9424, 4294901760
      %11762 = vmatmul.f32.gmra.mxu0 %v11761
      %v11763 = vpop.f32.mrf.mxu0
      %v11764 = vadd.f32 %v11675, %v11763
      %v11765 = vand.u32 %v9427, 4294901760
      %11766 = vmatmul.f32.gmra.mxu0 %v11765
      %v11767 = vpop.f32.mrf.mxu0
      %v11768 = vadd.f32 %v11679, %v11767
      %v11769 = vand.u32 %v9430, 4294901760
      %11770 = vmatmul.f32.gmra.mxu0 %v11769
      %v11771 = vpop.f32.mrf.mxu0
      %v11772 = vadd.f32 %v11683, %v11771
      %v11773 = vand.u32 %v9433, 4294901760
      %11774 = vmatmul.f32.gmra.mxu0 %v11773
      %v11775 = vpop.f32.mrf.mxu0
      %v11776 = vadd.f32 %v11687, %v11775
      %v11777 = vand.u32 %v9436, 4294901760
      %11778 = vmatmul.f32.gmra.mxu0 %v11777
      %v11779 = vpop.f32.mrf.mxu0
      %v11780 = vadd.f32 %v11691, %v11779
      %v11781 = vand.u32 %v9439, 4294901760
      %11782 = vmatmul.f32.gmra.mxu0 %v11781
      %v11783 = vpop.f32.mrf.mxu0
      %v11784 = vadd.f32 %v11695, %v11783
      %v11785 = vand.u32 %v9442, 4294901760
      %11786 = vmatmul.f32.gmra.mxu0 %v11785
      %v11787 = vpop.f32.mrf.mxu0
      %v11788 = vadd.f32 %v11699, %v11787
      %v11789 = vand.u32 %v9445, 4294901760
      %11790 = vmatmul.f32.gmra.mxu0 %v11789
      %v11791 = vpop.f32.mrf.mxu0
      %v11792 = vadd.f32 %v11703, %v11791
      %v11793 = vand.u32 %v9448, 4294901760
      %11794 = vmatmul.f32.gmra.mxu0 %v11793
      %v11795 = vpop.f32.mrf.mxu0
      %v11796 = vadd.f32 %v11707, %v11795
      %v11797 = vand.u32 %v9451, 4294901760
      %11798 = vmatmul.f32.gmra.mxu0 %v11797
      %v11799 = vpop.f32.mrf.mxu0
      %v11800 = vadd.f32 %v11711, %v11799
      %v11801 = vand.u32 %v9454, 4294901760
      %11802 = vmatmul.f32.gmra.mxu0 %v11801
      %v11803 = vpop.f32.mrf.mxu0
      %v11804 = vadd.f32 %v11715, %v11803
      %v11805 = vand.u32 %v9457, 4294901760
      %11806 = vmatmul.f32.gmra.mxu0 %v11805
      %v11807 = vpop.f32.mrf.mxu0
      %v11808 = vadd.f32 %v11719, %v11807
      %v11809 = vand.u32 %v9460, 4294901760
      %11810 = vmatmul.f32.gmra.mxu0 %v11809
      %v11811 = vpop.f32.mrf.mxu0
      %v11812 = vadd.f32 %v11723, %v11811
      %v11813 = vand.u32 %v9463, 4294901760
      %11814 = vmatmul.f32.gmra.mxu0 %v11813
      %v11815 = vpop.f32.mrf.mxu0
      %v11816 = vadd.f32 %v11727, %v11815
      %v11817 = vand.u32 %v9466, 4294901760
      %11818 = vmatmul.f32.gmra.mxu0 %v11817
      %v11819 = vpop.f32.mrf.mxu0
      %v11820 = vadd.f32 %v11731, %v11819
      %v11821 = vand.u32 %v9469, 4294901760
      %11822 = vmatmul.f32.gmra.mxu0 %v11821
      %v11823 = vpop.f32.mrf.mxu0
      %v11824 = vadd.f32 %v11735, %v11823
      %11825 = vdwg.mxu0
      %11826 = vst.msk [vmem:[%s224] sm:$0xff] %vm1450, %v11760
      %11827 = vst.msk [vmem:[%s224 + $0x8] sm:$0xff] %vm1450, %v11764
      %11828 = vst.msk [vmem:[%s224 + $0x10] sm:$0xff] %vm1450, %v11768
      %11829 = vst.msk [vmem:[%s224 + $0x18] sm:$0xff] %vm1450, %v11772
      %11830 = vst.msk [vmem:[%s224 + $0x20] sm:$0xff] %vm1450, %v11776
      %11831 = vst.msk [vmem:[%s224 + $0x28] sm:$0xff] %vm1450, %v11780
      %11832 = vst.msk [vmem:[%s224 + $0x30] sm:$0xff] %vm1450, %v11784
      %11833 = vst.msk [vmem:[%s224 + $0x38] sm:$0xff] %vm1450, %v11788
      %11834 = vst.msk [vmem:[%s224 + $0x40] sm:$0xff] %vm1450, %v11792
      %11835 = vst.msk [vmem:[%s224 + $0x48] sm:$0xff] %vm1450, %v11796
      %11836 = vst.msk [vmem:[%s224 + $0x50] sm:$0xff] %vm1450, %v11800
      %11837 = vst.msk [vmem:[%s224 + $0x58] sm:$0xff] %vm1450, %v11804
      %11838 = vst.msk [vmem:[%s224 + $0x60] sm:$0xff] %vm1450, %v11808
      %11839 = vst.msk [vmem:[%s224 + $0x68] sm:$0xff] %vm1450, %v11812
      %11840 = vst.msk [vmem:[%s224 + $0x70] sm:$0xff] %vm1450, %v11816
      %11841 = vst.msk [vmem:[%s224 + $0x78] sm:$0xff] %vm1450, %v11820
      %vm11842 = vcmask 260096
      %11843 = vst.msk [vmem:[%s224 + $0x80] sm:$0x7f] %vm11842, %v11824
      %p11844 = scmp.lt.s32.totalorder %s16, 1
      %s11845 = scalar_select %p11844, %s16, 1
      %s11846 = smul.addr %s11845, 17
      %s11847 = smul.addr %s11846, 8
      %s11848 = scalar_lea.vmem %s5, %s11847
      // Predicated region
      $region41: #{tpu_custom_call.1} parent=39 // pred_check
        %p11849 = pneg %p144
      $region42: #{tpu_custom_call.1} parent=39 // pred_check_branch
        %11851 = sbr.rel (%p11849) target = $region44
      $region43: #{tpu_custom_call.1} parent=39 // pred_region
        _
      $region44: #{tpu_custom_call.1} parent=39 // pred_fallthru
        _
    $region40: #{tpu_custom_call.1} parent=5 // pred_fallthru
      _
    %p11852 = scmp.le.s32.totalorder 2, %s11
    // Predicated region
    $region45: #{tpu_custom_call.1} parent=5 // pred_check
      %p11853 = pneg %p11852
    $region46: #{tpu_custom_call.1} parent=5 // pred_check_branch
      %11855 = sbr.rel (%p11853) target = $region48
    $region47: #{tpu_custom_call.1} parent=5 // pred_region
      %s11856 = ssub.s32 %s11, 2
      // Predicated region
      $region49: #{tpu_custom_call.1} parent=47 // pred_check
        %p11857 = pneg %p150
      $region50: #{tpu_custom_call.1} parent=47 // pred_check_branch
        %11859 = sbr.rel (%p11857) target = $region52
      $region51: #{tpu_custom_call.1} parent=47 // pred_region
        %p11860 = scmp.lt.s32.totalorder %s17, 1
        %s11861 = scalar_select %p11860, %s17, 1
        %s11862 = smul.addr %s11861, 17
        %s11863 = smul.addr %s11862, 8
        %s11864 = scalar_lea.vmem %s5, %s11863
      $region52: #{tpu_custom_call.1} parent=47 // pred_fallthru
        _
    $region48: #{tpu_custom_call.1} parent=5 // pred_fallthru
      _
  $region6: #{tpu_custom_call.1} parent=0 // loop_footer
    %s15 = sadd.s32 1, %s11
  $region7: #{tpu_custom_call.1} parent=0 // loop_footer_branch
    %10 = sbr.rel target = $region3
  $region8: #{tpu_custom_call.1} parent=0 // loop_exit
    _

</llo_original>
